<compile_context>
chip_gen: v6e
topology: v6e:2x2x1
jax: 0.10.0
libtpu: 0.0.40
codegen_flags: <defaults>
</compile_context>

<pallas_src>
import jax
import jax.numpy as jnp
from jax.experimental import pallas as pl
from jax.experimental.pallas import tpu as pltpu

_EPS = 1e-5
_LANE = 128


# ----------------------------- small helpers -----------------------------

def _round_up(x, m):
    return (x + m - 1) // m * m


def _pad_last(x, c):
    pad = c - x.shape[-1]
    if pad == 0:
        return x
    cfg = [(0, 0)] * (x.ndim - 1) + [(0, pad)]
    return jnp.pad(x, cfg)


def _row_tile(m, cap=512):
    """Largest divisor of m that is <= cap and (multiple of 8 or == m)."""
    cap = min(cap, m)
    for t in range(cap, 0, -1):
        if m % t == 0 and (t % 8 == 0 or t == m):
            return t
    return m


def _conv_row_tile(hh, wp, k, co, budget_bytes=6 << 20):
    """Largest divisor of hh whose double-buffered block footprint fits the budget.

    Budget is conservative so the default scoped VMEM limit works on v5e (16 MiB),
    v6e (32 MiB) and v7x (32 MiB scoped / 64 MiB physical).
    """
    best = 1
    for th in range(1, hh + 1):
        if hh % th:
            continue
        byts = (2 * th * wp * k * 2          # double-buffered input tile (bf16)
                + 2 * th * (wp - 2) * co * 2  # double-buffered output tile (bf16)
                + 3 * k * co * 2)             # resident packed weight (bf16)
        if byts <= budget_bytes:
            best = th
    return best


# ----------------------------- Pallas kernels -----------------------------

def convt_kernel(x_ref, w_ref, b_ref, o_ref):
    # x: (tm, Cin_p) bf16, w: (Cin_p, 4*Co_p) bf16, b: (1, 4*Co_p) f32
    # ConvTranspose2d(k=2, s=2) == per-input-pixel matmul producing the 2x2xCout block.
    y = jnp.dot(x_ref[...], w_ref[...], preferred_element_type=jnp.float32)
    o_ref[...] = (y + b_ref[...]).astype(o_ref.dtype)


def conv3x3_sums_kernel(x_ref, w_ref, o_ref, ps_ref):
    # x_ref : (1, th, Wp, K)   kh-expanded, W-padded input rows (bf16), K = 3*Cg
    # w_ref : (3, K, Co_p)     packed weight, one (K, Co_p) matrix per kw tap (bf16)
    # o_ref : (1, th, Ww, Co_p) raw conv output (bf16)
    # ps_ref: (1, 1, 2, Co_p)  per-tile [sum, sum_of_squares] for BatchNorm (f32)
    th = o_ref.shape[1]
    ww = o_ref.shape[2]
    co = o_ref.shape[3]
    k = x_ref.shape[3]

    acc = jnp.zeros((th * ww, co), jnp.float32)
    for kw in range(3):                      # 3 shifted taps, done in VMEM (no im2col)
        xs = x_ref[0, :, kw:kw + ww, :]      # (th, Ww, K)
        acc = acc + jnp.dot(xs.reshape(th * ww, k), w_ref[kw],
                            preferred_element_type=jnp.float32)

    o_ref[0] = acc.reshape(th, ww, co).astype(o_ref.dtype)
    ps_ref[0, 0, 0:1, :] = jnp.sum(acc, axis=0, keepdims=True)
    ps_ref[0, 0, 1:2, :] = jnp.sum(acc * acc, axis=0, keepdims=True)


def bn_relu_kernel(x_ref, s_ref, t_ref, o_ref):
    # x: (tm, Co_p) bf16 raw conv output; s/t: (1, Co_p) f32 fused scale/shift.
    x = x_ref[...].astype(jnp.float32)
    o_ref[...] = jnp.maximum(x * s_ref[...] + t_ref[...], 0.0).astype(o_ref.dtype)


# ----------------------------- pallas_call wrappers -----------------------------

def _convt(x2, w2, b2):
    m, cin_p = x2.shape
    ko = w2.shape[1]
    tm = _row_tile(m, 512)
    return pl.pallas_call(
        convt_kernel,
        grid=(m // tm,),
        in_specs=[pl.BlockSpec((tm, cin_p), lambda i: (i, 0)),
                  pl.BlockSpec((cin_p, ko), lambda i: (0, 0)),
                  pl.BlockSpec((1, ko), lambda i: (0, 0))],
        out_specs=pl.BlockSpec((tm, ko), lambda i: (i, 0)),
        out_shape=jax.ShapeDtypeStruct((m, ko), jnp.bfloat16),
        compiler_params=pltpu.CompilerParams(dimension_semantics=("parallel",)),
    )(x2, w2, b2)


def _conv3x3_pass1(rows, wk, co_p):
    n, hh, wp, k = rows.shape
    ww = wp - 2
    th = _conv_row_tile(hh, wp, k, co_p)
    nh = hh // th
    return pl.pallas_call(
        conv3x3_sums_kernel,
        grid=(n, nh),
        in_specs=[pl.BlockSpec((1, th, wp, k), lambda b, i: (b, i, 0, 0)),
                  pl.BlockSpec((3, k, co_p), lambda b, i: (0, 0, 0))],
        out_specs=(pl.BlockSpec((1, th, ww, co_p), lambda b, i: (b, i, 0, 0)),
                   pl.BlockSpec((1, 1, 2, co_p), lambda b, i: (b, i, 0, 0))),
        out_shape=(jax.ShapeDtypeStruct((n, hh, ww, co_p), jnp.bfloat16),
                   jax.ShapeDtypeStruct((n, nh, 2, co_p), jnp.float32)),
        compiler_params=pltpu.CompilerParams(
            dimension_semantics=("parallel", "parallel")),
    )(rows, wk)


def _bn_relu(x_flat, scale, shift):
    m, c = x_flat.shape
    tm = _row_tile(m, 1024)
    return pl.pallas_call(
        bn_relu_kernel,
        grid=(m // tm,),
        in_specs=[pl.BlockSpec((tm, c), lambda i: (i, 0)),
                  pl.BlockSpec((1, c), lambda i: (0, 0)),
                  pl.BlockSpec((1, c), lambda i: (0, 0))],
        out_specs=pl.BlockSpec((tm, c), lambda i: (i, 0)),
        out_shape=jax.ShapeDtypeStruct((m, c), jnp.bfloat16),
        compiler_params=pltpu.CompilerParams(dimension_semantics=("parallel",)),
    )(x_flat, scale, shift)


# ----------------------------- layout / packing glue (XLA) -----------------------------

def _rows3(feats):
    """kh-expansion: stack rows (h-1, h, h+1) of zero-padded NHWC maps along channels.

    feats: list of (N, Hh, Ww, Cp) bf16 arrays (already channel-padded).
    Returns (N, Hh, Ww+2, 3 * sum(Cp)); channel order = [kh0:(f0,f1,..), kh1:(...), kh2:(...)].
    This fuses the torch.cat channel concat into the same gather.
    """
    hh = feats[0].shape[1]
    padded = [jnp.pad(f, ((0, 0), (1, 1), (1, 1), (0, 0))) for f in feats]
    parts = []
    for kh in range(3):
        for p in padded:
            parts.append(p[:, kh:kh + hh])
    return jnp.concatenate(parts, axis=-1)


def _pack_conv3x3_weight(w, groups, co_p):
    """Pack (3, 3, Cin, Co) conv weight into (3, 3*sum(Cpad), Co_p), one matrix per kw.

    groups: list of (n_real_channels, n_padded_channels) in the same order as the
    channel groups of the kh-expanded input.
    """
    co = w.shape[-1]
    per_kw = []
    for kw in range(3):
        rows = []
        for kh in range(3):
            off = 0
            for creal, cpad in groups:
                blk = jnp.zeros((cpad, co_p), jnp.float32)
                blk = blk.at[:creal, :co].set(w[kh, kw, off:off + creal, :])
                rows.append(blk)
                off += creal
        per_kw.append(jnp.concatenate(rows, axis=0))
    return jnp.stack(per_kw, axis=0).astype(jnp.bfloat16)


def _bn_scale_shift(ps, count, gamma_p, beta_p):
    """Finish the BN reduction (tiny: (N, nh, 2, Co_p) -> (2, Co_p)) and fuse into scale/shift."""
    s = jnp.sum(ps, axis=(0, 1))                      # (2, Co_p) f32
    mean = s[0] / count
    var = jnp.maximum(s[1] / count - mean * mean, 0.0)  # biased variance (training mode)
    inv = jax.lax.rsqrt(var + _EPS)
    scale = gamma_p * inv
    shift = beta_p - mean * scale
    return scale.reshape(1, -1), shift.reshape(1, -1)
    # TODO(synk): BatchNorm running_mean/running_var updates are not emitted; the
    # per-channel sum/sumsq in `ps` could be returned if training-state parity is needed.


# ----------------------------- forward -----------------------------

def up_forward(x_nchw, skip_nchw, params):
    """Forward of UP(in_ch, out_ch). x: (N, in_ch, H, W), skip: (N, in_ch-out_ch, 2H, 2W)."""
    wt, bt, w1, g1, b1, w2, g2, b2 = params
    n, cin, h, w = x_nchw.shape
    cout = wt.shape[-1]
    cs = skip_nchw.shape[1]
    hh, wo = 2 * h, 2 * w

    cin_p = _round_up(cin, _LANE)
    cs_p = _round_up(cs, _LANE)
    co_p = _round_up(cout, _LANE)

    x = _pad_last(jnp.transpose(x_nchw, (0, 2, 3, 1)), cin_p).astype(jnp.bfloat16)
    skip = _pad_last(jnp.transpose(skip_nchw, (0, 2, 3, 1)), cs_p).astype(jnp.bfloat16)

    # --- ConvTranspose2d(k=2, s=2, pad=0): tiled per-pixel matmul ---
    wt_p = jnp.zeros((cin_p, 2, 2, co_p), jnp.float32).at[:cin, :, :, :cout].set(wt)
    wt2 = wt_p.reshape(cin_p, 4 * co_p).astype(jnp.bfloat16)
    bt2 = jnp.zeros((4, co_p), jnp.float32).at[:, :cout].set(
        jnp.broadcast_to(bt, (4, cout))).reshape(1, 4 * co_p)
    up4 = _convt(x.reshape(n * h * w, cin_p), wt2, bt2)        # (N*H*W, 4*Co_p)
    up = jnp.transpose(up4.reshape(n, h, w, 2, 2, co_p),
                       (0, 1, 3, 2, 4, 5)).reshape(n, hh, wo, co_p)
    # TODO(synk): fuse this 2x2 pixel scatter into the convT kernel out_spec (needs a
    # rank-5 in-kernel transpose) to save one XLA pass over the upsampled map.

    # Output spatial size matches the skip by construction, so the torch branch
    # `if x.size() != x_skipped.size(): x = F.resize(...)` is never taken.
    # TODO(synk): F.resize fallback not implemented (F is undefined in the source module).

    count = jnp.float32(n * hh * wo)

    # --- conv1 (3x3, pad=1, no bias) + BN(batch stats) + ReLU ---
    rows1 = _rows3([skip, up])                                  # cat fused into the gather
    wk1 = _pack_conv3x3_weight(w1, [(cs, cs_p), (cout, co_p)], co_p)
    c1, ps1 = _conv3x3_pass1(rows1, wk1, co_p)
    sc1, sh1 = _bn_scale_shift(ps1, count, _pad_last(g1, co_p), _pad_last(b1, co_p))
    h1 = _bn_relu(c1.reshape(n * hh * wo, co_p), sc1, sh1).reshape(n, hh, wo, co_p)

    # --- conv2 (3x3, pad=1, no bias) + BN(batch stats) + ReLU ---
    rows2 = _rows3([h1])
    wk2 = _pack_conv3x3_weight(w2, [(cout, co_p)], co_p)
    c2, ps2 = _conv3x3_pass1(rows2, wk2, co_p)
    sc2, sh2 = _bn_scale_shift(ps2, count, _pad_last(g2, co_p), _pad_last(b2, co_p))
    h2 = _bn_relu(c2.reshape(n * hh * wo, co_p), sc2, sh2).reshape(n, hh, wo, co_p)

    out = h2[..., :cout].astype(jnp.float32)
    return jnp.transpose(out, (0, 3, 1, 2))                     # back to NCHW


def init_params(key, in_ch, out_ch):
    ks = jax.random.split(key, 4)
    # ConvTranspose2d weight stored as (Cin, kH, kW, Cout) (== torch (Cin, Cout, kH, kW) permuted)
    wt = 0.1 * jax.random.normal(ks[0], (in_ch, 2, 2, out_ch), jnp.float32)
    bt = 0.1 * jax.random.normal(ks[1], (out_ch,), jnp.float32)
    # Conv2d weights stored as (kH, kW, Cin, Cout); BN affine params default gamma=1, beta=0
    w1 = 0.1 * jax.random.normal(ks[2], (3, 3, in_ch, out_ch), jnp.float32)
    g1 = jnp.ones((out_ch,), jnp.float32)
    b1 = jnp.zeros((out_ch,), jnp.float32)
    w2 = 0.1 * jax.random.normal(ks[3], (3, 3, out_ch, out_ch), jnp.float32)
    g2 = jnp.ones((out_ch,), jnp.float32)
    b2 = jnp.zeros((out_ch,), jnp.float32)
    return (wt, bt, w1, g1, b1, w2, g2, b2)


if __name__ == "__main__":
    in_ch, out_ch = 8, 4
    N, H, W = 2, 8, 8  # decoder feature 8x8 -> upsampled to 16x16 to match the skip

    key = jax.random.PRNGKey(0)
    kp, kx, ksk = jax.random.split(key, 3)
    params = init_params(kp, in_ch, out_ch)

    x = jax.random.normal(kx, (N, in_ch, H, W), jnp.float32)
    x_skipped = jax.random.normal(ksk, (N, in_ch - out_ch, 2 * H, 2 * W), jnp.float32)

    out = jax.jit(up_forward)(x, x_skipped, params)
    out = jax.block_until_ready(out)
    assert out.shape == (N, out_ch, 2 * H, 2 * W), out.shape
    assert bool(jnp.all(jnp.isfinite(out)))
    print("KERNEL_OK")
</pallas_src>

<mosaic_0001>
module attributes {stable_mosaic.version = 11 : i64} {
  func.func @convt_kernel(%arg0: i32, %arg1: memref<128x128xbf16, #tpu.memory_space<vmem>>, %arg2: memref<128x512xbf16, #tpu.memory_space<vmem>>, %arg3: memref<1x512xf32, #tpu.memory_space<vmem>>, %arg4: memref<128x512xbf16, #tpu.memory_space<vmem>>) attributes {dimension_semantics = [#tpu.dimension_semantics<parallel>], iteration_bounds = array<i64: 1>, scalar_prefetch = 0 : i64, scratch_operands = 0 : i64, tpu.core_type = #tpu.core_type<tc>, window_params = [{transform_indices = @transform_0, window_bounds = array<i64: 128, 128>}, {pipeline_mode = #tpu.pipeline_mode<synchronous>, transform_indices = @transform_1, window_bounds = array<i64: 128, 512>}, {pipeline_mode = #tpu.pipeline_mode<synchronous>, transform_indices = @transform_2, window_bounds = array<i64: 1, 512>}, {transform_indices = @transform_3, window_bounds = array<i64: 128, 512>}]} {
    %c0 = arith.constant 0 : index
    %c0_0 = arith.constant 0 : index
    %0 = vector.load %arg1[%c0, %c0_0] : memref<128x128xbf16, #tpu.memory_space<vmem>>, vector<128x128xbf16>
    %c0_1 = arith.constant 0 : index
    %c0_2 = arith.constant 0 : index
    %1 = vector.load %arg2[%c0_1, %c0_2] : memref<128x512xbf16, #tpu.memory_space<vmem>>, vector<128x512xbf16>
    %cst = arith.constant dense<0.000000e+00> : vector<128x512xf32>
    %2 = tpu.matmul %0, %1, %cst {dimension_numbers = #tpu.dot_dimension_numbers<[1], [0], [0], [1], [0, 0, 1, 1], [], []>} : vector<128x128xbf16>, vector<128x512xbf16>, vector<128x512xf32> -> vector<128x512xf32>
    %c0_3 = arith.constant 0 : index
    %c0_4 = arith.constant 0 : index
    %3 = vector.load %arg3[%c0_3, %c0_4] : memref<1x512xf32, #tpu.memory_space<vmem>>, vector<1x512xf32>
    %4 = vector.broadcast %3 : vector<1x512xf32> to vector<128x512xf32>
    %5 = arith.addf %2, %4 : vector<128x512xf32>
    %6 = arith.truncf %5 : vector<128x512xf32> to vector<128x512xbf16>
    %c0_5 = arith.constant 0 : index
    %c0_6 = arith.constant 0 : index
    %7 = vector.load %arg4[%c0_5, %c0_6] : memref<128x512xbf16, #tpu.memory_space<vmem>>, vector<128x512xbf16>
    tpu.vector_store %arg4[%c0_5, %c0_6], %6 {strides = array<i32>} : memref<128x512xbf16, #tpu.memory_space<vmem>>, vector<128x512xbf16>,
    return
  }
  func.func @transform_0(%arg0: i32) -> (i32, i32) {
    %c0_i32 = arith.constant 0 : i32
    %c0_i32_0 = arith.constant 0 : i32
    return %arg0, %c0_i32 : i32, i32
  }
  func.func @transform_1(%arg0: i32) -> (i32, i32) {
    %c0_i32 = arith.constant 0 : i32
    %c0_i32_0 = arith.constant 0 : i32
    %c0_i32_1 = arith.constant 0 : i32
    return %c0_i32, %c0_i32_0 : i32, i32
  }
  func.func @transform_2(%arg0: i32) -> (i32, i32) {
    %c0_i32 = arith.constant 0 : i32
    %c0_i32_0 = arith.constant 0 : i32
    %c0_i32_1 = arith.constant 0 : i32
    return %c0_i32, %c0_i32_0 : i32, i32
  }
  func.func @transform_3(%arg0: i32) -> (i32, i32) {
    %c0_i32 = arith.constant 0 : i32
    %c0_i32_0 = arith.constant 0 : i32
    return %arg0, %c0_i32 : i32, i32
  }
}

module attributes {stable_mosaic.version = 11 : i64} {
  func.func @conv3x3_sums_kernel(%arg0: i32, %arg1: i32, %arg2: memref<1x16x18x768xbf16, #tpu.memory_space<vmem>>, %arg3: memref<3x768x128xbf16, #tpu.memory_space<vmem>>, %arg4: memref<1x16x16x128xbf16, #tpu.memory_space<vmem>>, %arg5: memref<1x1x2x128xf32, #tpu.memory_space<vmem>>) attributes {dimension_semantics = [#tpu.dimension_semantics<parallel>, #tpu.dimension_semantics<parallel>], iteration_bounds = array<i64: 2, 1>, scalar_prefetch = 0 : i64, scratch_operands = 0 : i64, tpu.core_type = #tpu.core_type<tc>, window_params = [{transform_indices = @transform_0, window_bounds = array<i64: 1, 16, 18, 768>}, {pipeline_mode = #tpu.pipeline_mode<synchronous>, transform_indices = @transform_1, window_bounds = array<i64: 3, 768, 128>}, {transform_indices = @transform_2, window_bounds = array<i64: 1, 16, 16, 128>}, {transform_indices = @transform_3, window_bounds = array<i64: 1, 1, 2, 128>}]} {
    %cst = arith.constant 0.000000e+00 : f32
    %0 = vector.broadcast %cst : f32 to vector<256x128xf32>
    %c0 = arith.constant 0 : index
    %c0_0 = arith.constant 0 : index
    %c0_1 = arith.constant 0 : index
    %c0_2 = arith.constant 0 : index
    %1 = vector.load %arg2[%c0, %c0_0, %c0_1, %c0_2] : memref<1x16x18x768xbf16, #tpu.memory_space<vmem>>, vector<1x16x16x768xbf16>
    %2 = vector.shape_cast %1 : vector<1x16x16x768xbf16> to vector<16x16x768xbf16>
    %3 = vector.shape_cast %2 : vector<16x16x768xbf16> to vector<256x768xbf16>
    %c0_3 = arith.constant 0 : index
    %c0_4 = arith.constant 0 : index
    %c0_5 = arith.constant 0 : index
    %4 = vector.load %arg3[%c0_3, %c0_4, %c0_5] : memref<3x768x128xbf16, #tpu.memory_space<vmem>>, vector<1x768x128xbf16>
    %5 = vector.shape_cast %4 : vector<1x768x128xbf16> to vector<768x128xbf16>
    %cst_6 = arith.constant dense<0.000000e+00> : vector<256x128xf32>
    %6 = tpu.matmul %3, %5, %cst_6 {dimension_numbers = #tpu.dot_dimension_numbers<[1], [0], [0], [1], [0, 0, 1, 1], [], []>} : vector<256x768xbf16>, vector<768x128xbf16>, vector<256x128xf32> -> vector<256x128xf32>
    %7 = arith.addf %0, %6 : vector<256x128xf32>
    %c0_7 = arith.constant 0 : index
    %c0_8 = arith.constant 0 : index
    %c1 = arith.constant 1 : index
    %c0_9 = arith.constant 0 : index
    %8 = vector.load %arg2[%c0_7, %c0_8, %c1, %c0_9] : memref<1x16x18x768xbf16, #tpu.memory_space<vmem>>, vector<1x16x16x768xbf16>
    %9 = vector.shape_cast %8 : vector<1x16x16x768xbf16> to vector<16x16x768xbf16>
    %10 = vector.shape_cast %9 : vector<16x16x768xbf16> to vector<256x768xbf16>
    %c1_10 = arith.constant 1 : index
    %c0_11 = arith.constant 0 : index
    %c0_12 = arith.constant 0 : index
    %11 = vector.load %arg3[%c1_10, %c0_11, %c0_12] : memref<3x768x128xbf16, #tpu.memory_space<vmem>>, vector<1x768x128xbf16>
    %12 = vector.shape_cast %11 : vector<1x768x128xbf16> to vector<768x128xbf16>
    %cst_13 = arith.constant dense<0.000000e+00> : vector<256x128xf32>
    %13 = tpu.matmul %10, %12, %cst_13 {dimension_numbers = #tpu.dot_dimension_numbers<[1], [0], [0], [1], [0, 0, 1, 1], [], []>} : vector<256x768xbf16>, vector<768x128xbf16>, vector<256x128xf32> -> vector<256x128xf32>
    %14 = arith.addf %7, %13 : vector<256x128xf32>
    %c0_14 = arith.constant 0 : index
    %c0_15 = arith.constant 0 : index
    %c2 = arith.constant 2 : index
    %c0_16 = arith.constant 0 : index
    %15 = vector.load %arg2[%c0_14, %c0_15, %c2, %c0_16] : memref<1x16x18x768xbf16, #tpu.memory_space<vmem>>, vector<1x16x16x768xbf16>
    %16 = vector.shape_cast %15 : vector<1x16x16x768xbf16> to vector<16x16x768xbf16>
    %17 = vector.shape_cast %16 : vector<16x16x768xbf16> to vector<256x768xbf16>
    %c2_17 = arith.constant 2 : index
    %c0_18 = arith.constant 0 : index
    %c0_19 = arith.constant 0 : index
    %18 = vector.load %arg3[%c2_17, %c0_18, %c0_19] : memref<3x768x128xbf16, #tpu.memory_space<vmem>>, vector<1x768x128xbf16>
    %19 = vector.shape_cast %18 : vector<1x768x128xbf16> to vector<768x128xbf16>
    %cst_20 = arith.constant dense<0.000000e+00> : vector<256x128xf32>
    %20 = tpu.matmul %17, %19, %cst_20 {dimension_numbers = #tpu.dot_dimension_numbers<[1], [0], [0], [1], [0, 0, 1, 1], [], []>} : vector<256x768xbf16>, vector<768x128xbf16>, vector<256x128xf32> -> vector<256x128xf32>
    %21 = arith.addf %14, %20 : vector<256x128xf32>
    %22 = vector.shape_cast %21 : vector<256x128xf32> to vector<16x16x128xf32>
    %23 = arith.truncf %22 : vector<16x16x128xf32> to vector<16x16x128xbf16>
    %c0_21 = arith.constant 0 : index
    %c0_22 = arith.constant 0 : index
    %c0_23 = arith.constant 0 : index
    %c0_24 = arith.constant 0 : index
    %24 = vector.load %arg4[%c0_21, %c0_22, %c0_23, %c0_24] : memref<1x16x16x128xbf16, #tpu.memory_space<vmem>>, vector<1x16x16x128xbf16>
    %25 = vector.shape_cast %24 : vector<1x16x16x128xbf16> to vector<16x16x128xbf16>
    %26 = vector.shape_cast %23 : vector<16x16x128xbf16> to vector<1x16x16x128xbf16>
    tpu.vector_store %arg4[%c0_21, %c0_22, %c0_23, %c0_24], %26 {strides = array<i32>} : memref<1x16x16x128xbf16, #tpu.memory_space<vmem>>, vector<1x16x16x128xbf16>,
    %cst_25 = arith.constant dense<0.000000e+00> : vector<128xf32>
    %27 = vector.multi_reduction <add>, %21, %cst_25 [0] : vector<256x128xf32> to vector<128xf32>
    %28 = vector.shape_cast %27 : vector<128xf32> to vector<1x128xf32>
    %c0_26 = arith.constant 0 : index
    %c0_27 = arith.constant 0 : index
    %c0_28 = arith.constant 0 : index
    %c0_29 = arith.constant 0 : index
    %29 = vector.load %arg5[%c0_26, %c0_27, %c0_28, %c0_29] : memref<1x1x2x128xf32, #tpu.memory_space<vmem>>, vector<1x1x1x128xf32>
    %30 = vector.shape_cast %29 : vector<1x1x1x128xf32> to vector<1x128xf32>
    %31 = vector.shape_cast %28 : vector<1x128xf32> to vector<1x1x1x128xf32>
    tpu.vector_store %arg5[%c0_26, %c0_27, %c0_28, %c0_29], %31 {strides = array<i32>} : memref<1x1x2x128xf32, #tpu.memory_space<vmem>>, vector<1x1x1x128xf32>,
    %32 = arith.mulf %21, %21 : vector<256x128xf32>
    %cst_30 = arith.constant dense<0.000000e+00> : vector<128xf32>
    %33 = vector.multi_reduction <add>, %32, %cst_30 [0] : vector<256x128xf32> to vector<128xf32>
    %34 = vector.shape_cast %33 : vector<128xf32> to vector<1x128xf32>
    %c0_31 = arith.constant 0 : index
    %c0_32 = arith.constant 0 : index
    %c1_33 = arith.constant 1 : index
    %c0_34 = arith.constant 0 : index
    %35 = vector.load %arg5[%c0_31, %c0_32, %c1_33, %c0_34] : memref<1x1x2x128xf32, #tpu.memory_space<vmem>>, vector<1x1x1x128xf32>
    %36 = vector.shape_cast %35 : vector<1x1x1x128xf32> to vector<1x128xf32>
    %37 = vector.shape_cast %34 : vector<1x128xf32> to vector<1x1x1x128xf32>
    tpu.vector_store %arg5[%c0_31, %c0_32, %c1_33, %c0_34], %37 {strides = array<i32>} : memref<1x1x2x128xf32, #tpu.memory_space<vmem>>, vector<1x1x1x128xf32>,
    return
  }
  func.func @transform_0(%arg0: i32, %arg1: i32) -> (i32, i32, i32, i32) {
    %c0_i32 = arith.constant 0 : i32
    %c0_i32_0 = arith.constant 0 : i32
    %c0_i32_1 = arith.constant 0 : i32
    return %arg0, %arg1, %c0_i32, %c0_i32_0 : i32, i32, i32, i32
  }
  func.func @transform_1(%arg0: i32, %arg1: i32) -> (i32, i32, i32) {
    %c0_i32 = arith.constant 0 : i32
    %c0_i32_0 = arith.constant 0 : i32
    %c0_i32_1 = arith.constant 0 : i32
    %c0_i32_2 = arith.constant 0 : i32
    return %c0_i32, %c0_i32_0, %c0_i32_1 : i32, i32, i32
  }
  func.func @transform_2(%arg0: i32, %arg1: i32) -> (i32, i32, i32, i32) {
    %c0_i32 = arith.constant 0 : i32
    %c0_i32_0 = arith.constant 0 : i32
    %c0_i32_1 = arith.constant 0 : i32
    return %arg0, %arg1, %c0_i32, %c0_i32_0 : i32, i32, i32, i32
  }
  func.func @transform_3(%arg0: i32, %arg1: i32) -> (i32, i32, i32, i32) {
    %c0_i32 = arith.constant 0 : i32
    %c0_i32_0 = arith.constant 0 : i32
    %c0_i32_1 = arith.constant 0 : i32
    return %arg0, %arg1, %c0_i32, %c0_i32_0 : i32, i32, i32, i32
  }
}

module attributes {stable_mosaic.version = 11 : i64} {
  func.func @bn_relu_kernel(%arg0: i32, %arg1: memref<512x128xbf16, #tpu.memory_space<vmem>>, %arg2: memref<1x128xf32, #tpu.memory_space<vmem>>, %arg3: memref<1x128xf32, #tpu.memory_space<vmem>>, %arg4: memref<512x128xbf16, #tpu.memory_space<vmem>>) attributes {dimension_semantics = [#tpu.dimension_semantics<parallel>], iteration_bounds = array<i64: 1>, scalar_prefetch = 0 : i64, scratch_operands = 0 : i64, tpu.core_type = #tpu.core_type<tc>, window_params = [{transform_indices = @transform_0, window_bounds = array<i64: 512, 128>}, {pipeline_mode = #tpu.pipeline_mode<synchronous>, transform_indices = @transform_1, window_bounds = array<i64: 1, 128>}, {pipeline_mode = #tpu.pipeline_mode<synchronous>, transform_indices = @transform_2, window_bounds = array<i64: 1, 128>}, {transform_indices = @transform_3, window_bounds = array<i64: 512, 128>}]} {
    %c0 = arith.constant 0 : index
    %c0_0 = arith.constant 0 : index
    %0 = vector.load %arg1[%c0, %c0_0] : memref<512x128xbf16, #tpu.memory_space<vmem>>, vector<512x128xbf16>
    %1 = arith.extf %0 : vector<512x128xbf16> to vector<512x128xf32>
    %c0_1 = arith.constant 0 : index
    %c0_2 = arith.constant 0 : index
    %2 = vector.load %arg2[%c0_1, %c0_2] : memref<1x128xf32, #tpu.memory_space<vmem>>, vector<1x128xf32>
    %3 = vector.broadcast %2 : vector<1x128xf32> to vector<512x128xf32>
    %4 = arith.mulf %1, %3 : vector<512x128xf32>
    %c0_3 = arith.constant 0 : index
    %c0_4 = arith.constant 0 : index
    %5 = vector.load %arg3[%c0_3, %c0_4] : memref<1x128xf32, #tpu.memory_space<vmem>>, vector<1x128xf32>
    %6 = vector.broadcast %5 : vector<1x128xf32> to vector<512x128xf32>
    %7 = arith.addf %4, %6 : vector<512x128xf32>
    %cst = arith.constant 0.000000e+00 : f32
    %8 = vector.broadcast %cst : f32 to vector<512x128xf32>
    %9 = arith.maximumf %7, %8 : vector<512x128xf32>
    %10 = arith.truncf %9 : vector<512x128xf32> to vector<512x128xbf16>
    %c0_5 = arith.constant 0 : index
    %c0_6 = arith.constant 0 : index
    %11 = vector.load %arg4[%c0_5, %c0_6] : memref<512x128xbf16, #tpu.memory_space<vmem>>, vector<512x128xbf16>
    tpu.vector_store %arg4[%c0_5, %c0_6], %10 {strides = array<i32>} : memref<512x128xbf16, #tpu.memory_space<vmem>>, vector<512x128xbf16>,
    return
  }
  func.func @transform_0(%arg0: i32) -> (i32, i32) {
    %c0_i32 = arith.constant 0 : i32
    %c0_i32_0 = arith.constant 0 : i32
    return %arg0, %c0_i32 : i32, i32
  }
  func.func @transform_1(%arg0: i32) -> (i32, i32) {
    %c0_i32 = arith.constant 0 : i32
    %c0_i32_0 = arith.constant 0 : i32
    %c0_i32_1 = arith.constant 0 : i32
    return %c0_i32, %c0_i32_0 : i32, i32
  }
  func.func @transform_2(%arg0: i32) -> (i32, i32) {
    %c0_i32 = arith.constant 0 : i32
    %c0_i32_0 = arith.constant 0 : i32
    %c0_i32_1 = arith.constant 0 : i32
    return %c0_i32, %c0_i32_0 : i32, i32
  }
  func.func @transform_3(%arg0: i32) -> (i32, i32) {
    %c0_i32 = arith.constant 0 : i32
    %c0_i32_0 = arith.constant 0 : i32
    return %arg0, %c0_i32 : i32, i32
  }
}

module attributes {stable_mosaic.version = 11 : i64} {
  func.func @conv3x3_sums_kernel(%arg0: i32, %arg1: i32, %arg2: memref<1x16x18x384xbf16, #tpu.memory_space<vmem>>, %arg3: memref<3x384x128xbf16, #tpu.memory_space<vmem>>, %arg4: memref<1x16x16x128xbf16, #tpu.memory_space<vmem>>, %arg5: memref<1x1x2x128xf32, #tpu.memory_space<vmem>>) attributes {dimension_semantics = [#tpu.dimension_semantics<parallel>, #tpu.dimension_semantics<parallel>], iteration_bounds = array<i64: 2, 1>, scalar_prefetch = 0 : i64, scratch_operands = 0 : i64, tpu.core_type = #tpu.core_type<tc>, window_params = [{transform_indices = @transform_0, window_bounds = array<i64: 1, 16, 18, 384>}, {pipeline_mode = #tpu.pipeline_mode<synchronous>, transform_indices = @transform_1, window_bounds = array<i64: 3, 384, 128>}, {transform_indices = @transform_2, window_bounds = array<i64: 1, 16, 16, 128>}, {transform_indices = @transform_3, window_bounds = array<i64: 1, 1, 2, 128>}]} {
    %cst = arith.constant 0.000000e+00 : f32
    %0 = vector.broadcast %cst : f32 to vector<256x128xf32>
    %c0 = arith.constant 0 : index
    %c0_0 = arith.constant 0 : index
    %c0_1 = arith.constant 0 : index
    %c0_2 = arith.constant 0 : index
    %1 = vector.load %arg2[%c0, %c0_0, %c0_1, %c0_2] : memref<1x16x18x384xbf16, #tpu.memory_space<vmem>>, vector<1x16x16x384xbf16>
    %2 = vector.shape_cast %1 : vector<1x16x16x384xbf16> to vector<16x16x384xbf16>
    %3 = vector.shape_cast %2 : vector<16x16x384xbf16> to vector<256x384xbf16>
    %c0_3 = arith.constant 0 : index
    %c0_4 = arith.constant 0 : index
    %c0_5 = arith.constant 0 : index
    %4 = vector.load %arg3[%c0_3, %c0_4, %c0_5] : memref<3x384x128xbf16, #tpu.memory_space<vmem>>, vector<1x384x128xbf16>
    %5 = vector.shape_cast %4 : vector<1x384x128xbf16> to vector<384x128xbf16>
    %cst_6 = arith.constant dense<0.000000e+00> : vector<256x128xf32>
    %6 = tpu.matmul %3, %5, %cst_6 {dimension_numbers = #tpu.dot_dimension_numbers<[1], [0], [0], [1], [0, 0, 1, 1], [], []>} : vector<256x384xbf16>, vector<384x128xbf16>, vector<256x128xf32> -> vector<256x128xf32>
    %7 = arith.addf %0, %6 : vector<256x128xf32>
    %c0_7 = arith.constant 0 : index
    %c0_8 = arith.constant 0 : index
    %c1 = arith.constant 1 : index
    %c0_9 = arith.constant 0 : index
    %8 = vector.load %arg2[%c0_7, %c0_8, %c1, %c0_9] : memref<1x16x18x384xbf16, #tpu.memory_space<vmem>>, vector<1x16x16x384xbf16>
    %9 = vector.shape_cast %8 : vector<1x16x16x384xbf16> to vector<16x16x384xbf16>
    %10 = vector.shape_cast %9 : vector<16x16x384xbf16> to vector<256x384xbf16>
    %c1_10 = arith.constant 1 : index
    %c0_11 = arith.constant 0 : index
    %c0_12 = arith.constant 0 : index
    %11 = vector.load %arg3[%c1_10, %c0_11, %c0_12] : memref<3x384x128xbf16, #tpu.memory_space<vmem>>, vector<1x384x128xbf16>
    %12 = vector.shape_cast %11 : vector<1x384x128xbf16> to vector<384x128xbf16>
    %cst_13 = arith.constant dense<0.000000e+00> : vector<256x128xf32>
    %13 = tpu.matmul %10, %12, %cst_13 {dimension_numbers = #tpu.dot_dimension_numbers<[1], [0], [0], [1], [0, 0, 1, 1], [], []>} : vector<256x384xbf16>, vector<384x128xbf16>, vector<256x128xf32> -> vector<256x128xf32>
    %14 = arith.addf %7, %13 : vector<256x128xf32>
    %c0_14 = arith.constant 0 : index
    %c0_15 = arith.constant 0 : index
    %c2 = arith.constant 2 : index
    %c0_16 = arith.constant 0 : index
    %15 = vector.load %arg2[%c0_14, %c0_15, %c2, %c0_16] : memref<1x16x18x384xbf16, #tpu.memory_space<vmem>>, vector<1x16x16x384xbf16>
    %16 = vector.shape_cast %15 : vector<1x16x16x384xbf16> to vector<16x16x384xbf16>
    %17 = vector.shape_cast %16 : vector<16x16x384xbf16> to vector<256x384xbf16>
    %c2_17 = arith.constant 2 : index
    %c0_18 = arith.constant 0 : index
    %c0_19 = arith.constant 0 : index
    %18 = vector.load %arg3[%c2_17, %c0_18, %c0_19] : memref<3x384x128xbf16, #tpu.memory_space<vmem>>, vector<1x384x128xbf16>
    %19 = vector.shape_cast %18 : vector<1x384x128xbf16> to vector<384x128xbf16>
    %cst_20 = arith.constant dense<0.000000e+00> : vector<256x128xf32>
    %20 = tpu.matmul %17, %19, %cst_20 {dimension_numbers = #tpu.dot_dimension_numbers<[1], [0], [0], [1], [0, 0, 1, 1], [], []>} : vector<256x384xbf16>, vector<384x128xbf16>, vector<256x128xf32> -> vector<256x128xf32>
    %21 = arith.addf %14, %20 : vector<256x128xf32>
    %22 = vector.shape_cast %21 : vector<256x128xf32> to vector<16x16x128xf32>
    %23 = arith.truncf %22 : vector<16x16x128xf32> to vector<16x16x128xbf16>
    %c0_21 = arith.constant 0 : index
    %c0_22 = arith.constant 0 : index
    %c0_23 = arith.constant 0 : index
    %c0_24 = arith.constant 0 : index
    %24 = vector.load %arg4[%c0_21, %c0_22, %c0_23, %c0_24] : memref<1x16x16x128xbf16, #tpu.memory_space<vmem>>, vector<1x16x16x128xbf16>
    %25 = vector.shape_cast %24 : vector<1x16x16x128xbf16> to vector<16x16x128xbf16>
    %26 = vector.shape_cast %23 : vector<16x16x128xbf16> to vector<1x16x16x128xbf16>
    tpu.vector_store %arg4[%c0_21, %c0_22, %c0_23, %c0_24], %26 {strides = array<i32>} : memref<1x16x16x128xbf16, #tpu.memory_space<vmem>>, vector<1x16x16x128xbf16>,
    %cst_25 = arith.constant dense<0.000000e+00> : vector<128xf32>
    %27 = vector.multi_reduction <add>, %21, %cst_25 [0] : vector<256x128xf32> to vector<128xf32>
    %28 = vector.shape_cast %27 : vector<128xf32> to vector<1x128xf32>
    %c0_26 = arith.constant 0 : index
    %c0_27 = arith.constant 0 : index
    %c0_28 = arith.constant 0 : index
    %c0_29 = arith.constant 0 : index
    %29 = vector.load %arg5[%c0_26, %c0_27, %c0_28, %c0_29] : memref<1x1x2x128xf32, #tpu.memory_space<vmem>>, vector<1x1x1x128xf32>
    %30 = vector.shape_cast %29 : vector<1x1x1x128xf32> to vector<1x128xf32>
    %31 = vector.shape_cast %28 : vector<1x128xf32> to vector<1x1x1x128xf32>
    tpu.vector_store %arg5[%c0_26, %c0_27, %c0_28, %c0_29], %31 {strides = array<i32>} : memref<1x1x2x128xf32, #tpu.memory_space<vmem>>, vector<1x1x1x128xf32>,
    %32 = arith.mulf %21, %21 : vector<256x128xf32>
    %cst_30 = arith.constant dense<0.000000e+00> : vector<128xf32>
    %33 = vector.multi_reduction <add>, %32, %cst_30 [0] : vector<256x128xf32> to vector<128xf32>
    %34 = vector.shape_cast %33 : vector<128xf32> to vector<1x128xf32>
    %c0_31 = arith.constant 0 : index
    %c0_32 = arith.constant 0 : index
    %c1_33 = arith.constant 1 : index
    %c0_34 = arith.constant 0 : index
    %35 = vector.load %arg5[%c0_31, %c0_32, %c1_33, %c0_34] : memref<1x1x2x128xf32, #tpu.memory_space<vmem>>, vector<1x1x1x128xf32>
    %36 = vector.shape_cast %35 : vector<1x1x1x128xf32> to vector<1x128xf32>
    %37 = vector.shape_cast %34 : vector<1x128xf32> to vector<1x1x1x128xf32>
    tpu.vector_store %arg5[%c0_31, %c0_32, %c1_33, %c0_34], %37 {strides = array<i32>} : memref<1x1x2x128xf32, #tpu.memory_space<vmem>>, vector<1x1x1x128xf32>,
    return
  }
  func.func @transform_0(%arg0: i32, %arg1: i32) -> (i32, i32, i32, i32) {
    %c0_i32 = arith.constant 0 : i32
    %c0_i32_0 = arith.constant 0 : i32
    %c0_i32_1 = arith.constant 0 : i32
    return %arg0, %arg1, %c0_i32, %c0_i32_0 : i32, i32, i32, i32
  }
  func.func @transform_1(%arg0: i32, %arg1: i32) -> (i32, i32, i32) {
    %c0_i32 = arith.constant 0 : i32
    %c0_i32_0 = arith.constant 0 : i32
    %c0_i32_1 = arith.constant 0 : i32
    %c0_i32_2 = arith.constant 0 : i32
    return %c0_i32, %c0_i32_0, %c0_i32_1 : i32, i32, i32
  }
  func.func @transform_2(%arg0: i32, %arg1: i32) -> (i32, i32, i32, i32) {
    %c0_i32 = arith.constant 0 : i32
    %c0_i32_0 = arith.constant 0 : i32
    %c0_i32_1 = arith.constant 0 : i32
    return %arg0, %arg1, %c0_i32, %c0_i32_0 : i32, i32, i32, i32
  }
  func.func @transform_3(%arg0: i32, %arg1: i32) -> (i32, i32, i32, i32) {
    %c0_i32 = arith.constant 0 : i32
    %c0_i32_0 = arith.constant 0 : i32
    %c0_i32_1 = arith.constant 0 : i32
    return %arg0, %arg1, %c0_i32, %c0_i32_0 : i32, i32, i32, i32
  }
}

</mosaic_0001>

<llo_original>
// kernel: up_forward.5
$region0: #{up_forward.5}
  #allocation0 [shape = 'u32[]', space=smem, size = 0x4, offset = 0x4, fixed_abs, tag = 'smem constant byte address 0x4 - core index']
  #allocation1 [shape = 'u32[144,128]{1,0:T(1,128)}', space=vmem, size = 0x12000, scoped, tag = 'internal scratch']
  %s0 = inlined_call_operand.vmem [shape: bf16[128,128], index: 0, kind: input, shape index: {}]
  %s1 = inlined_call_operand.vmem [shape: bf16[128,512], index: 1, kind: input, shape index: {}]
  %s2 = inlined_call_operand.vmem [shape: f32[1,512], index: 2, kind: input, shape index: {}]
  %s3 = inlined_call_operand.vmem [shape: bf16[128,512], index: 3, kind: output, shape index: {}]
  %s4 = sld [smem:[#allocation0]]
  $region22: #{up_forward.5} parent=0
    _
  %s6 = ssub.s32 1, %s4
  %s7 = scalar_select 0, %s6, %s4
  // Predicated region
  $region2: #{up_forward.5} parent=0 // pred_check
    _
  $region3: #{up_forward.5} parent=0 // pred_check_branch
    %9 = sbr.rel (0) target = $region5
  $region4: #{up_forward.5} parent=0 // pred_region
    _
  $region5: #{up_forward.5} parent=0 // pred_fallthru
    _
  // Predicated region
  $region6: #{up_forward.5} parent=0 // pred_check
    _
  $region7: #{up_forward.5} parent=0 // pred_check_branch
    %11 = sbr.rel (0) target = $region9
  $region8: #{up_forward.5} parent=0 // pred_region
    _
  $region9: #{up_forward.5} parent=0 // pred_fallthru
    _
  // Predicated region
  $region10: #{up_forward.5} parent=0 // pred_check
    _
  $region11: #{up_forward.5} parent=0 // pred_check_branch
    %13 = sbr.rel (0) target = $region13
  $region12: #{up_forward.5} parent=0 // pred_region
    _
  $region13: #{up_forward.5} parent=0 // pred_fallthru
    _
  %v15 = vld [vmem:[%s0] sm:$0xf]
  %v16 = vld [vmem:[%s0 + $0x4] sm:$0xf]
  %v17 = vld [vmem:[%s0 + $0x8] sm:$0xf]
  %v18 = vld [vmem:[%s0 + $0xc] sm:$0xf]
  %v19 = vld [vmem:[%s0 + $0x10] sm:$0xf]
  %v20 = vld [vmem:[%s0 + $0x14] sm:$0xf]
  %v21 = vld [vmem:[%s0 + $0x18] sm:$0xf]
  %v22 = vld [vmem:[%s0 + $0x1c] sm:$0xf]
  %v23 = vld [vmem:[%s0 + $0x20] sm:$0xf]
  %v24 = vld [vmem:[%s0 + $0x24] sm:$0xf]
  %v25 = vld [vmem:[%s0 + $0x28] sm:$0xf]
  %v26 = vld [vmem:[%s0 + $0x2c] sm:$0xf]
  %v27 = vld [vmem:[%s0 + $0x30] sm:$0xf]
  %v28 = vld [vmem:[%s0 + $0x34] sm:$0xf]
  %v29 = vld [vmem:[%s0 + $0x38] sm:$0xf]
  %v30 = vld [vmem:[%s0 + $0x3c] sm:$0xf]
  %v31 = vld [vmem:[%s1] sm:$0xff]
  %v32 = vld [vmem:[%s1 + $0x8] sm:$0xff]
  %v33 = vld [vmem:[%s1 + $0x10] sm:$0xff]
  %v34 = vld [vmem:[%s1 + $0x18] sm:$0xff]
  %v35 = vld [vmem:[%s1 + $0x20] sm:$0xff]
  %v36 = vld [vmem:[%s1 + $0x28] sm:$0xff]
  %v37 = vld [vmem:[%s1 + $0x30] sm:$0xff]
  %v38 = vld [vmem:[%s1 + $0x38] sm:$0xff]
  %v39 = vld [vmem:[%s1 + $0x40] sm:$0xff]
  %v40 = vld [vmem:[%s1 + $0x48] sm:$0xff]
  %v41 = vld [vmem:[%s1 + $0x50] sm:$0xff]
  %v42 = vld [vmem:[%s1 + $0x58] sm:$0xff]
  %v43 = vld [vmem:[%s1 + $0x60] sm:$0xff]
  %v44 = vld [vmem:[%s1 + $0x68] sm:$0xff]
  %v45 = vld [vmem:[%s1 + $0x70] sm:$0xff]
  %v46 = vld [vmem:[%s1 + $0x78] sm:$0xff]
  %v47 = vld [vmem:[%s1 + $0x80] sm:$0xff]
  %v48 = vld [vmem:[%s1 + $0x88] sm:$0xff]
  %v49 = vld [vmem:[%s1 + $0x90] sm:$0xff]
  %v50 = vld [vmem:[%s1 + $0x98] sm:$0xff]
  %v51 = vld [vmem:[%s1 + $0xa0] sm:$0xff]
  %v52 = vld [vmem:[%s1 + $0xa8] sm:$0xff]
  %v53 = vld [vmem:[%s1 + $0xb0] sm:$0xff]
  %v54 = vld [vmem:[%s1 + $0xb8] sm:$0xff]
  %v55 = vld [vmem:[%s1 + $0xc0] sm:$0xff]
  %v56 = vld [vmem:[%s1 + $0xc8] sm:$0xff]
  %v57 = vld [vmem:[%s1 + $0xd0] sm:$0xff]
  %v58 = vld [vmem:[%s1 + $0xd8] sm:$0xff]
  %v59 = vld [vmem:[%s1 + $0xe0] sm:$0xff]
  %v60 = vld [vmem:[%s1 + $0xe8] sm:$0xff]
  %v61 = vld [vmem:[%s1 + $0xf0] sm:$0xff]
  %v62 = vld [vmem:[%s1 + $0xf8] sm:$0xff]
  %v63 = vld [vmem:[%s2] sm:$0xf]
  %v65 = vlaneseq
  %v66 = vshrl.u32 %v65, 7
  %v67 = vsub.s32 0, %v66
  %v68 = vrot.slane %v63, %v67
  %v69 = vlaneseq
  %v70 = vshrl.u32 %v69, 7
  %v71 = vsub.s32 1, %v70
  %v72 = vrot.slane %v63, %v71
  %v73 = vlaneseq
  %v74 = vshrl.u32 %v73, 7
  %v75 = vsub.s32 2, %v74
  %v76 = vrot.slane %v63, %v75
  %v77 = vlaneseq
  %v78 = vshrl.u32 %v77, 7
  %v79 = vsub.s32 3, %v78
  %v80 = vrot.slane %v63, %v79
  %v101 = vunpack.c.l.b16 %v15
  %v102 = vunpack.c.l.b16 %v16
  %v103 = vunpack.c.l.b16 %v17
  %v104 = vunpack.c.l.b16 %v18
  %v105 = vunpack.c.l.b16 %v19
  %v106 = vunpack.c.l.b16 %v20
  %v107 = vunpack.c.l.b16 %v21
  %v108 = vunpack.c.l.b16 %v22
  %v109 = vunpack.c.l.b16 %v23
  %v110 = vunpack.c.l.b16 %v24
  %v111 = vunpack.c.l.b16 %v25
  %v112 = vunpack.c.l.b16 %v26
  %v113 = vunpack.c.l.b16 %v27
  %v114 = vunpack.c.l.b16 %v28
  %v115 = vunpack.c.l.b16 %v29
  %v116 = vunpack.c.l.b16 %v30
  %v117 = vpack.c.b16 %v102, %v101
  %v118 = vpack.c.b16 %v104, %v103
  %v119 = vpack.c.b16 %v106, %v105
  %v120 = vpack.c.b16 %v108, %v107
  %v121 = vpack.c.b16 %v110, %v109
  %v122 = vpack.c.b16 %v112, %v111
  %v123 = vpack.c.b16 %v114, %v113
  %v124 = vpack.c.b16 %v116, %v115
  %v165 = vunpack.c.l.b16 %v31
  %v166 = vunpack.c.h.b16 %v31
  %v167 = vunpack.c.l.b16 %v32
  %v168 = vunpack.c.h.b16 %v32
  %v169 = vunpack.c.l.b16 %v33
  %v170 = vunpack.c.h.b16 %v33
  %v171 = vunpack.c.l.b16 %v34
  %v172 = vunpack.c.h.b16 %v34
  %v173 = vunpack.c.l.b16 %v35
  %v174 = vunpack.c.h.b16 %v35
  %v175 = vunpack.c.l.b16 %v36
  %v176 = vunpack.c.h.b16 %v36
  %v177 = vunpack.c.l.b16 %v37
  %v178 = vunpack.c.h.b16 %v37
  %v179 = vunpack.c.l.b16 %v38
  %v180 = vunpack.c.h.b16 %v38
  %v181 = vunpack.c.l.b16 %v39
  %v182 = vunpack.c.h.b16 %v39
  %v183 = vunpack.c.l.b16 %v40
  %v184 = vunpack.c.h.b16 %v40
  %v185 = vunpack.c.l.b16 %v41
  %v186 = vunpack.c.h.b16 %v41
  %v187 = vunpack.c.l.b16 %v42
  %v188 = vunpack.c.h.b16 %v42
  %v189 = vunpack.c.l.b16 %v43
  %v190 = vunpack.c.h.b16 %v43
  %v191 = vunpack.c.l.b16 %v44
  %v192 = vunpack.c.h.b16 %v44
  %v193 = vunpack.c.l.b16 %v45
  %v194 = vunpack.c.h.b16 %v45
  %v195 = vunpack.c.l.b16 %v46
  %v196 = vunpack.c.h.b16 %v46
  %v197 = vunpack.c.l.b16 %v47
  %v198 = vunpack.c.h.b16 %v47
  %v199 = vunpack.c.l.b16 %v48
  %v200 = vunpack.c.h.b16 %v48
  %v201 = vunpack.c.l.b16 %v49
  %v202 = vunpack.c.h.b16 %v49
  %v203 = vunpack.c.l.b16 %v50
  %v204 = vunpack.c.h.b16 %v50
  %v205 = vunpack.c.l.b16 %v51
  %v206 = vunpack.c.h.b16 %v51
  %v207 = vunpack.c.l.b16 %v52
  %v208 = vunpack.c.h.b16 %v52
  %v209 = vunpack.c.l.b16 %v53
  %v210 = vunpack.c.h.b16 %v53
  %v211 = vunpack.c.l.b16 %v54
  %v212 = vunpack.c.h.b16 %v54
  %v213 = vunpack.c.l.b16 %v55
  %v214 = vunpack.c.h.b16 %v55
  %v215 = vunpack.c.l.b16 %v56
  %v216 = vunpack.c.h.b16 %v56
  %v217 = vunpack.c.l.b16 %v57
  %v218 = vunpack.c.h.b16 %v57
  %v219 = vunpack.c.l.b16 %v58
  %v220 = vunpack.c.h.b16 %v58
  %v221 = vunpack.c.l.b16 %v59
  %v222 = vunpack.c.h.b16 %v59
  %v223 = vunpack.c.l.b16 %v60
  %v224 = vunpack.c.h.b16 %v60
  %v225 = vunpack.c.l.b16 %v61
  %v226 = vunpack.c.h.b16 %v61
  %v227 = vunpack.c.l.b16 %v62
  %v228 = vunpack.c.h.b16 %v62
  %v229 = vpack.c.b16 %v169, %v165
  %v230 = vpack.c.b16 %v170, %v166
  %v231 = vpack.c.b16 %v171, %v167
  %v232 = vpack.c.b16 %v172, %v168
  %v233 = vpack.c.b16 %v177, %v173
  %v234 = vpack.c.b16 %v178, %v174
  %v235 = vpack.c.b16 %v179, %v175
  %v236 = vpack.c.b16 %v180, %v176
  %v237 = vpack.c.b16 %v185, %v181
  %v238 = vpack.c.b16 %v186, %v182
  %v239 = vpack.c.b16 %v187, %v183
  %v240 = vpack.c.b16 %v188, %v184
  %v241 = vpack.c.b16 %v193, %v189
  %v242 = vpack.c.b16 %v194, %v190
  %v243 = vpack.c.b16 %v195, %v191
  %v244 = vpack.c.b16 %v196, %v192
  %v245 = vpack.c.b16 %v201, %v197
  %v246 = vpack.c.b16 %v202, %v198
  %v247 = vpack.c.b16 %v203, %v199
  %v248 = vpack.c.b16 %v204, %v200
  %v249 = vpack.c.b16 %v209, %v205
  %v250 = vpack.c.b16 %v210, %v206
  %v251 = vpack.c.b16 %v211, %v207
  %v252 = vpack.c.b16 %v212, %v208
  %v253 = vpack.c.b16 %v217, %v213
  %v254 = vpack.c.b16 %v218, %v214
  %v255 = vpack.c.b16 %v219, %v215
  %v256 = vpack.c.b16 %v220, %v216
  %v257 = vpack.c.b16 %v225, %v221
  %v258 = vpack.c.b16 %v226, %v222
  %v259 = vpack.c.b16 %v227, %v223
  %v260 = vpack.c.b16 %v228, %v224
  %293 = vmatprep.subr.bf16.mxu0 %v258
  %294 = vmatpush1.bf16.msra.mxu0 %v257
  %295 = vmatprep.subr.bf16.mxu0 %v254
  %296 = vmatpush1.bf16.msra.mxu0 %v253
  %297 = vmatprep.subr.bf16.mxu0 %v250
  %298 = vmatpush1.bf16.msra.mxu0 %v249
  %299 = vmatprep.subr.bf16.mxu0 %v246
  %300 = vmatpush1.bf16.msra.mxu0 %v245
  %301 = vmatprep.subr.bf16.mxu0 %v242
  %302 = vmatpush1.bf16.msra.mxu0 %v241
  %303 = vmatprep.subr.bf16.mxu0 %v238
  %304 = vmatpush1.bf16.msra.mxu0 %v237
  %305 = vmatprep.subr.bf16.mxu0 %v234
  %306 = vmatpush1.bf16.msra.mxu0 %v233
  %307 = vmatprep.subr.bf16.mxu0 %v230
  %308 = vmatpush1.bf16.msra.mxu0 %v229
  %309 = vmatprep.subr.bf16.mxu0 0
  %310 = vmatpush2.bf16.msra.mxu0 0
  %311 = vmatprep.subr.bf16.mxu0 0
  %312 = vmatpush2.bf16.msra.mxu0 0
  %313 = vmatprep.subr.bf16.mxu0 0
  %314 = vmatpush2.bf16.msra.mxu0 0
  %315 = vmatprep.subr.bf16.mxu0 0
  %316 = vmatpush2.bf16.msra.mxu0 0
  %317 = vmatprep.subr.bf16.mxu0 0
  %318 = vmatpush2.bf16.msra.mxu0 0
  %319 = vmatprep.subr.bf16.mxu0 0
  %320 = vmatpush2.bf16.msra.mxu0 0
  %321 = vmatprep.subr.bf16.mxu0 0
  %322 = vmatpush2.bf16.msra.mxu0 0
  %323 = vmatprep.subr.bf16.mxu0 0
  %324 = vmatpush2.bf16.msra.mxu0 0
  %325 = vmatprep.mubr.bf16.mxu0 0
  %326 = vmatmul.mubr.bf16.gmra.mxu0 %v117
  %v327 = vpop.f32.mrf.mxu0
  %v328 = vadd.f32 %v68, %v327
  %v329 = vpop.f32.mrf.mxu0
  %v330 = vadd.f32 %v72, %v329
  %v331 = vpop.f32.mrf.mxu0
  %v332 = vadd.f32 %v68, %v331
  %v333 = vpop.f32.mrf.mxu0
  %v334 = vadd.f32 %v72, %v333
  %335 = vmatprep.mubr.bf16.mxu0 0
  %336 = vmatmul.mubr.bf16.gmra.mxu0 %v118
  %v337 = vpop.f32.mrf.mxu0
  %v338 = vadd.f32 %v68, %v337
  %v339 = vpop.f32.mrf.mxu0
  %v340 = vadd.f32 %v72, %v339
  %v341 = vpop.f32.mrf.mxu0
  %v342 = vadd.f32 %v68, %v341
  %v343 = vpop.f32.mrf.mxu0
  %v344 = vadd.f32 %v72, %v343
  %345 = vmatprep.mubr.bf16.mxu0 0
  %346 = vmatmul.mubr.bf16.gmra.mxu0 %v119
  %v347 = vpop.f32.mrf.mxu0
  %v348 = vadd.f32 %v68, %v347
  %v349 = vpop.f32.mrf.mxu0
  %v350 = vadd.f32 %v72, %v349
  %v351 = vpop.f32.mrf.mxu0
  %v352 = vadd.f32 %v68, %v351
  %v353 = vpop.f32.mrf.mxu0
  %v354 = vadd.f32 %v72, %v353
  %355 = vmatprep.mubr.bf16.mxu0 0
  %356 = vmatmul.mubr.bf16.gmra.mxu0 %v120
  %v357 = vpop.f32.mrf.mxu0
  %v358 = vadd.f32 %v68, %v357
  %v359 = vpop.f32.mrf.mxu0
  %v360 = vadd.f32 %v72, %v359
  %v361 = vpop.f32.mrf.mxu0
  %v362 = vadd.f32 %v68, %v361
  %v363 = vpop.f32.mrf.mxu0
  %v364 = vadd.f32 %v72, %v363
  %365 = vmatprep.mubr.bf16.mxu0 0
  %366 = vmatmul.mubr.bf16.gmra.mxu0 %v121
  %v367 = vpop.f32.mrf.mxu0
  %v368 = vadd.f32 %v68, %v367
  %v369 = vpop.f32.mrf.mxu0
  %v370 = vadd.f32 %v72, %v369
  %v371 = vpop.f32.mrf.mxu0
  %v372 = vadd.f32 %v68, %v371
  %v373 = vpop.f32.mrf.mxu0
  %v374 = vadd.f32 %v72, %v373
  %375 = vmatprep.mubr.bf16.mxu0 0
  %376 = vmatmul.mubr.bf16.gmra.mxu0 %v122
  %v377 = vpop.f32.mrf.mxu0
  %v378 = vadd.f32 %v68, %v377
  %v379 = vpop.f32.mrf.mxu0
  %v380 = vadd.f32 %v72, %v379
  %v381 = vpop.f32.mrf.mxu0
  %v382 = vadd.f32 %v68, %v381
  %v383 = vpop.f32.mrf.mxu0
  %v384 = vadd.f32 %v72, %v383
  %385 = vmatprep.mubr.bf16.mxu0 0
  %386 = vmatmul.mubr.bf16.gmra.mxu0 %v123
  %v387 = vpop.f32.mrf.mxu0
  %v388 = vadd.f32 %v68, %v387
  %v389 = vpop.f32.mrf.mxu0
  %v390 = vadd.f32 %v72, %v389
  %v391 = vpop.f32.mrf.mxu0
  %v392 = vadd.f32 %v68, %v391
  %v393 = vpop.f32.mrf.mxu0
  %v394 = vadd.f32 %v72, %v393
  %395 = vmatprep.mubr.bf16.mxu0 0
  %396 = vmatmul.mubr.bf16.gmra.mxu0 %v124
  %v397 = vpop.f32.mrf.mxu0
  %v398 = vadd.f32 %v68, %v397
  %v399 = vpop.f32.mrf.mxu0
  %v400 = vadd.f32 %v72, %v399
  %v401 = vpop.f32.mrf.mxu0
  %v402 = vadd.f32 %v68, %v401
  %v403 = vpop.f32.mrf.mxu0
  %v404 = vadd.f32 %v72, %v403
  %405 = vdwg.mxu0
  %406 = vmatprep.subr.bf16.mxu0 %v260
  %407 = vmatpush1.bf16.msra.mxu0 %v259
  %408 = vmatprep.subr.bf16.mxu0 %v256
  %409 = vmatpush1.bf16.msra.mxu0 %v255
  %410 = vmatprep.subr.bf16.mxu0 %v252
  %411 = vmatpush1.bf16.msra.mxu0 %v251
  %412 = vmatprep.subr.bf16.mxu0 %v248
  %413 = vmatpush1.bf16.msra.mxu0 %v247
  %414 = vmatprep.subr.bf16.mxu0 %v244
  %415 = vmatpush1.bf16.msra.mxu0 %v243
  %416 = vmatprep.subr.bf16.mxu0 %v240
  %417 = vmatpush1.bf16.msra.mxu0 %v239
  %418 = vmatprep.subr.bf16.mxu0 %v236
  %419 = vmatpush1.bf16.msra.mxu0 %v235
  %420 = vmatprep.subr.bf16.mxu0 %v232
  %421 = vmatpush1.bf16.msra.mxu0 %v231
  %422 = vmatprep.subr.bf16.mxu0 0
  %423 = vmatpush2.bf16.msra.mxu0 0
  %424 = vmatprep.subr.bf16.mxu0 0
  %425 = vmatpush2.bf16.msra.mxu0 0
  %426 = vmatprep.subr.bf16.mxu0 0
  %427 = vmatpush2.bf16.msra.mxu0 0
  %428 = vmatprep.subr.bf16.mxu0 0
  %429 = vmatpush2.bf16.msra.mxu0 0
  %430 = vmatprep.subr.bf16.mxu0 0
  %431 = vmatpush2.bf16.msra.mxu0 0
  %432 = vmatprep.subr.bf16.mxu0 0
  %433 = vmatpush2.bf16.msra.mxu0 0
  %434 = vmatprep.subr.bf16.mxu0 0
  %435 = vmatpush2.bf16.msra.mxu0 0
  %436 = vmatprep.subr.bf16.mxu0 0
  %437 = vmatpush2.bf16.msra.mxu0 0
  %438 = vmatprep.mubr.bf16.mxu0 0
  %439 = vmatmul.mubr.bf16.gmra.mxu0 %v117
  %v440 = vpop.f32.mrf.mxu0
  %v441 = vadd.f32 %v76, %v440
  %v442 = vpop.f32.mrf.mxu0
  %v443 = vadd.f32 %v80, %v442
  %v444 = vpop.f32.mrf.mxu0
  %v445 = vadd.f32 %v76, %v444
  %v446 = vpop.f32.mrf.mxu0
  %v447 = vadd.f32 %v80, %v446
  %448 = vmatprep.mubr.bf16.mxu0 0
  %449 = vmatmul.mubr.bf16.gmra.mxu0 %v118
  %v450 = vpop.f32.mrf.mxu0
  %v451 = vadd.f32 %v76, %v450
  %v452 = vpop.f32.mrf.mxu0
  %v453 = vadd.f32 %v80, %v452
  %v454 = vpop.f32.mrf.mxu0
  %v455 = vadd.f32 %v76, %v454
  %v456 = vpop.f32.mrf.mxu0
  %v457 = vadd.f32 %v80, %v456
  %458 = vmatprep.mubr.bf16.mxu0 0
  %459 = vmatmul.mubr.bf16.gmra.mxu0 %v119
  %v460 = vpop.f32.mrf.mxu0
  %v461 = vadd.f32 %v76, %v460
  %v462 = vpop.f32.mrf.mxu0
  %v463 = vadd.f32 %v80, %v462
  %v464 = vpop.f32.mrf.mxu0
  %v465 = vadd.f32 %v76, %v464
  %v466 = vpop.f32.mrf.mxu0
  %v467 = vadd.f32 %v80, %v466
  %468 = vmatprep.mubr.bf16.mxu0 0
  %469 = vmatmul.mubr.bf16.gmra.mxu0 %v120
  %v470 = vpop.f32.mrf.mxu0
  %v471 = vadd.f32 %v76, %v470
  %v472 = vpop.f32.mrf.mxu0
  %v473 = vadd.f32 %v80, %v472
  %v474 = vpop.f32.mrf.mxu0
  %v475 = vadd.f32 %v76, %v474
  %v476 = vpop.f32.mrf.mxu0
  %v477 = vadd.f32 %v80, %v476
  %478 = vmatprep.mubr.bf16.mxu0 0
  %479 = vmatmul.mubr.bf16.gmra.mxu0 %v121
  %v480 = vpop.f32.mrf.mxu0
  %v481 = vadd.f32 %v76, %v480
  %v482 = vpop.f32.mrf.mxu0
  %v483 = vadd.f32 %v80, %v482
  %v484 = vpop.f32.mrf.mxu0
  %v485 = vadd.f32 %v76, %v484
  %v486 = vpop.f32.mrf.mxu0
  %v487 = vadd.f32 %v80, %v486
  %488 = vmatprep.mubr.bf16.mxu0 0
  %489 = vmatmul.mubr.bf16.gmra.mxu0 %v122
  %v490 = vpop.f32.mrf.mxu0
  %v491 = vadd.f32 %v76, %v490
  %v492 = vpop.f32.mrf.mxu0
  %v493 = vadd.f32 %v80, %v492
  %v494 = vpop.f32.mrf.mxu0
  %v495 = vadd.f32 %v76, %v494
  %v496 = vpop.f32.mrf.mxu0
  %v497 = vadd.f32 %v80, %v496
  %498 = vmatprep.mubr.bf16.mxu0 0
  %499 = vmatmul.mubr.bf16.gmra.mxu0 %v123
  %v500 = vpop.f32.mrf.mxu0
  %v501 = vadd.f32 %v76, %v500
  %v502 = vpop.f32.mrf.mxu0
  %v503 = vadd.f32 %v80, %v502
  %v504 = vpop.f32.mrf.mxu0
  %v505 = vadd.f32 %v76, %v504
  %v506 = vpop.f32.mrf.mxu0
  %v507 = vadd.f32 %v80, %v506
  %508 = vmatprep.mubr.bf16.mxu0 0
  %509 = vmatmul.mubr.bf16.gmra.mxu0 %v124
  %v510 = vpop.f32.mrf.mxu0
  %v511 = vadd.f32 %v76, %v510
  %v512 = vpop.f32.mrf.mxu0
  %v513 = vadd.f32 %v80, %v512
  %v514 = vpop.f32.mrf.mxu0
  %v515 = vadd.f32 %v76, %v514
  %v516 = vpop.f32.mrf.mxu0
  %v517 = vadd.f32 %v80, %v516
  %518 = vdwg.mxu0
  %v519 = vpack.c.bf16 %v332, %v328
  %v520 = vpack.c.bf16 %v334, %v330
  %v521 = vpack.c.bf16 %v445, %v441
  %v522 = vpack.c.bf16 %v447, %v443
  %v523 = vpack.c.bf16 %v342, %v338
  %v524 = vpack.c.bf16 %v344, %v340
  %v525 = vpack.c.bf16 %v455, %v451
  %v526 = vpack.c.bf16 %v457, %v453
  %v527 = vpack.c.bf16 %v352, %v348
  %v528 = vpack.c.bf16 %v354, %v350
  %v529 = vpack.c.bf16 %v465, %v461
  %v530 = vpack.c.bf16 %v467, %v463
  %v531 = vpack.c.bf16 %v362, %v358
  %v532 = vpack.c.bf16 %v364, %v360
  %v533 = vpack.c.bf16 %v475, %v471
  %v534 = vpack.c.bf16 %v477, %v473
  %v535 = vpack.c.bf16 %v372, %v368
  %v536 = vpack.c.bf16 %v374, %v370
  %v537 = vpack.c.bf16 %v485, %v481
  %v538 = vpack.c.bf16 %v487, %v483
  %v539 = vpack.c.bf16 %v382, %v378
  %v540 = vpack.c.bf16 %v384, %v380
  %v541 = vpack.c.bf16 %v495, %v491
  %v542 = vpack.c.bf16 %v497, %v493
  %v543 = vpack.c.bf16 %v392, %v388
  %v544 = vpack.c.bf16 %v394, %v390
  %v545 = vpack.c.bf16 %v505, %v501
  %v546 = vpack.c.bf16 %v507, %v503
  %v547 = vpack.c.bf16 %v402, %v398
  %v548 = vpack.c.bf16 %v404, %v400
  %v549 = vpack.c.bf16 %v515, %v511
  %v550 = vpack.c.bf16 %v517, %v513
  %v583 = vunpack.c.l.b16 %v519
  %v584 = vunpack.c.l.b16 %v520
  %v585 = vunpack.c.l.b16 %v521
  %v586 = vunpack.c.l.b16 %v522
  %v587 = vunpack.c.h.b16 %v519
  %v588 = vunpack.c.h.b16 %v520
  %v589 = vunpack.c.h.b16 %v521
  %v590 = vunpack.c.h.b16 %v522
  %v591 = vunpack.c.l.b16 %v523
  %v592 = vunpack.c.l.b16 %v524
  %v593 = vunpack.c.l.b16 %v525
  %v594 = vunpack.c.l.b16 %v526
  %v595 = vunpack.c.h.b16 %v523
  %v596 = vunpack.c.h.b16 %v524
  %v597 = vunpack.c.h.b16 %v525
  %v598 = vunpack.c.h.b16 %v526
  %v599 = vunpack.c.l.b16 %v527
  %v600 = vunpack.c.l.b16 %v528
  %v601 = vunpack.c.l.b16 %v529
  %v602 = vunpack.c.l.b16 %v530
  %v603 = vunpack.c.h.b16 %v527
  %v604 = vunpack.c.h.b16 %v528
  %v605 = vunpack.c.h.b16 %v529
  %v606 = vunpack.c.h.b16 %v530
  %v607 = vunpack.c.l.b16 %v531
  %v608 = vunpack.c.l.b16 %v532
  %v609 = vunpack.c.l.b16 %v533
  %v610 = vunpack.c.l.b16 %v534
  %v611 = vunpack.c.h.b16 %v531
  %v612 = vunpack.c.h.b16 %v532
  %v613 = vunpack.c.h.b16 %v533
  %v614 = vunpack.c.h.b16 %v534
  %v615 = vunpack.c.l.b16 %v535
  %v616 = vunpack.c.l.b16 %v536
  %v617 = vunpack.c.l.b16 %v537
  %v618 = vunpack.c.l.b16 %v538
  %v619 = vunpack.c.h.b16 %v535
  %v620 = vunpack.c.h.b16 %v536
  %v621 = vunpack.c.h.b16 %v537
  %v622 = vunpack.c.h.b16 %v538
  %v623 = vunpack.c.l.b16 %v539
  %v624 = vunpack.c.l.b16 %v540
  %v625 = vunpack.c.l.b16 %v541
  %v626 = vunpack.c.l.b16 %v542
  %v627 = vunpack.c.h.b16 %v539
  %v628 = vunpack.c.h.b16 %v540
  %v629 = vunpack.c.h.b16 %v541
  %v630 = vunpack.c.h.b16 %v542
  %v631 = vunpack.c.l.b16 %v543
  %v632 = vunpack.c.l.b16 %v544
  %v633 = vunpack.c.l.b16 %v545
  %v634 = vunpack.c.l.b16 %v546
  %v635 = vunpack.c.h.b16 %v543
  %v636 = vunpack.c.h.b16 %v544
  %v637 = vunpack.c.h.b16 %v545
  %v638 = vunpack.c.h.b16 %v546
  %v639 = vunpack.c.l.b16 %v547
  %v640 = vunpack.c.l.b16 %v548
  %v641 = vunpack.c.l.b16 %v549
  %v642 = vunpack.c.l.b16 %v550
  %v643 = vunpack.c.h.b16 %v547
  %v644 = vunpack.c.h.b16 %v548
  %v645 = vunpack.c.h.b16 %v549
  %v646 = vunpack.c.h.b16 %v550
  %v647 = vpack.c.b16 %v584, %v583
  %v648 = vpack.c.b16 %v586, %v585
  %v649 = vpack.c.b16 %v588, %v587
  %v650 = vpack.c.b16 %v590, %v589
  %v651 = vpack.c.b16 %v592, %v591
  %v652 = vpack.c.b16 %v594, %v593
  %v653 = vpack.c.b16 %v596, %v595
  %v654 = vpack.c.b16 %v598, %v597
  %v655 = vpack.c.b16 %v600, %v599
  %v656 = vpack.c.b16 %v602, %v601
  %v657 = vpack.c.b16 %v604, %v603
  %v658 = vpack.c.b16 %v606, %v605
  %v659 = vpack.c.b16 %v608, %v607
  %v660 = vpack.c.b16 %v610, %v609
  %v661 = vpack.c.b16 %v612, %v611
  %v662 = vpack.c.b16 %v614, %v613
  %v663 = vpack.c.b16 %v616, %v615
  %v664 = vpack.c.b16 %v618, %v617
  %v665 = vpack.c.b16 %v620, %v619
  %v666 = vpack.c.b16 %v622, %v621
  %v667 = vpack.c.b16 %v624, %v623
  %v668 = vpack.c.b16 %v626, %v625
  %v669 = vpack.c.b16 %v628, %v627
  %v670 = vpack.c.b16 %v630, %v629
  %v671 = vpack.c.b16 %v632, %v631
  %v672 = vpack.c.b16 %v634, %v633
  %v673 = vpack.c.b16 %v636, %v635
  %v674 = vpack.c.b16 %v638, %v637
  %v675 = vpack.c.b16 %v640, %v639
  %v676 = vpack.c.b16 %v642, %v641
  %v677 = vpack.c.b16 %v644, %v643
  %v678 = vpack.c.b16 %v646, %v645
  %711 = vst [vmem:[%s3] sm:$0xff] %v647
  %712 = vst [vmem:[%s3 + $0x8] sm:$0xff] %v648
  %713 = vst [vmem:[%s3 + $0x10] sm:$0xff] %v649
  %714 = vst [vmem:[%s3 + $0x18] sm:$0xff] %v650
  %715 = vst [vmem:[%s3 + $0x20] sm:$0xff] %v651
  %716 = vst [vmem:[%s3 + $0x28] sm:$0xff] %v652
  %717 = vst [vmem:[%s3 + $0x30] sm:$0xff] %v653
  %718 = vst [vmem:[%s3 + $0x38] sm:$0xff] %v654
  %719 = vst [vmem:[%s3 + $0x40] sm:$0xff] %v655
  %720 = vst [vmem:[%s3 + $0x48] sm:$0xff] %v656
  %721 = vst [vmem:[%s3 + $0x50] sm:$0xff] %v657
  %722 = vst [vmem:[%s3 + $0x58] sm:$0xff] %v658
  %723 = vst [vmem:[%s3 + $0x60] sm:$0xff] %v659
  %724 = vst [vmem:[%s3 + $0x68] sm:$0xff] %v660
  %725 = vst [vmem:[%s3 + $0x70] sm:$0xff] %v661
  %726 = vst [vmem:[%s3 + $0x78] sm:$0xff] %v662
  %727 = vst [vmem:[%s3 + $0x80] sm:$0xff] %v663
  %728 = vst [vmem:[%s3 + $0x88] sm:$0xff] %v664
  %729 = vst [vmem:[%s3 + $0x90] sm:$0xff] %v665
  %730 = vst [vmem:[%s3 + $0x98] sm:$0xff] %v666
  %731 = vst [vmem:[%s3 + $0xa0] sm:$0xff] %v667
  %732 = vst [vmem:[%s3 + $0xa8] sm:$0xff] %v668
  %733 = vst [vmem:[%s3 + $0xb0] sm:$0xff] %v669
  %734 = vst [vmem:[%s3 + $0xb8] sm:$0xff] %v670
  %735 = vst [vmem:[%s3 + $0xc0] sm:$0xff] %v671
  %736 = vst [vmem:[%s3 + $0xc8] sm:$0xff] %v672
  %737 = vst [vmem:[%s3 + $0xd0] sm:$0xff] %v673
  %738 = vst [vmem:[%s3 + $0xd8] sm:$0xff] %v674
  %739 = vst [vmem:[%s3 + $0xe0] sm:$0xff] %v675
  %740 = vst [vmem:[%s3 + $0xe8] sm:$0xff] %v676
  %741 = vst [vmem:[%s3 + $0xf0] sm:$0xff] %v677
  %742 = vst [vmem:[%s3 + $0xf8] sm:$0xff] %v678
  // Predicated region
  $region14: #{up_forward.5} parent=0 // pred_check
    _
  $region15: #{up_forward.5} parent=0 // pred_check_branch
    %744 = sbr.rel (0) target = $region17
  $region16: #{up_forward.5} parent=0 // pred_region
    _
  $region17: #{up_forward.5} parent=0 // pred_fallthru
    _
  // Predicated region
  $region18: #{up_forward.5} parent=0 // pred_check
    _
  $region19: #{up_forward.5} parent=0 // pred_check_branch
    %746 = sbr.rel (0) target = $region21
  $region20: #{up_forward.5} parent=0 // pred_region
    _
  $region21: #{up_forward.5} parent=0 // pred_fallthru
    _

// kernel: up_forward.7
$region0: #{up_forward.7}
  #allocation0 [shape = 'u32[]', space=smem, size = 0x4, offset = 0x4, fixed_abs, tag = 'smem constant byte address 0x4 - core index']
  #allocation1 [shape = 'u32[144,128]{1,0:T(1,128)}', space=vmem, size = 0x12000, scoped, tag = 'internal scratch']
  %s0 = inlined_call_operand.vmem [shape: bf16[512,128], index: 0, kind: input, shape index: {}]
  %s1 = inlined_call_operand.vmem [shape: f32[1,128], index: 1, kind: input, shape index: {}]
  %s2 = inlined_call_operand.vmem [shape: f32[1,128], index: 2, kind: input, shape index: {}]
  %s3 = inlined_call_operand.vmem [shape: bf16[512,128], index: 3, kind: output, shape index: {}]
  %s4 = sld [smem:[#allocation0]]
  $region22: #{up_forward.7} parent=0
    _
  %s6 = ssub.s32 1, %s4
  %s7 = scalar_select 0, %s6, %s4
  // Predicated region
  $region2: #{up_forward.7} parent=0 // pred_check
    _
  $region3: #{up_forward.7} parent=0 // pred_check_branch
    %9 = sbr.rel (0) target = $region5
  $region4: #{up_forward.7} parent=0 // pred_region
    _
  $region5: #{up_forward.7} parent=0 // pred_fallthru
    _
  // Predicated region
  $region6: #{up_forward.7} parent=0 // pred_check
    _
  $region7: #{up_forward.7} parent=0 // pred_check_branch
    %11 = sbr.rel (0) target = $region9
  $region8: #{up_forward.7} parent=0 // pred_region
    _
  $region9: #{up_forward.7} parent=0 // pred_fallthru
    _
  // Predicated region
  $region10: #{up_forward.7} parent=0 // pred_check
    _
  $region11: #{up_forward.7} parent=0 // pred_check_branch
    %13 = sbr.rel (0) target = $region13
  $region12: #{up_forward.7} parent=0 // pred_region
    _
  $region13: #{up_forward.7} parent=0 // pred_fallthru
    _
  %v14 = vld [vmem:[%s0] sm:$0xf]
  %v15 = vld [vmem:[%s0 + $0x4] sm:$0xf]
  %v16 = vld [vmem:[%s0 + $0x8] sm:$0xf]
  %v17 = vld [vmem:[%s0 + $0xc] sm:$0xf]
  %v18 = vld [vmem:[%s0 + $0x10] sm:$0xf]
  %v19 = vld [vmem:[%s0 + $0x14] sm:$0xf]
  %v20 = vld [vmem:[%s0 + $0x18] sm:$0xf]
  %v21 = vld [vmem:[%s0 + $0x1c] sm:$0xf]
  %v22 = vld [vmem:[%s0 + $0x20] sm:$0xf]
  %v23 = vld [vmem:[%s0 + $0x24] sm:$0xf]
  %v24 = vld [vmem:[%s0 + $0x28] sm:$0xf]
  %v25 = vld [vmem:[%s0 + $0x2c] sm:$0xf]
  %v26 = vld [vmem:[%s0 + $0x30] sm:$0xf]
  %v27 = vld [vmem:[%s0 + $0x34] sm:$0xf]
  %v28 = vld [vmem:[%s0 + $0x38] sm:$0xf]
  %v29 = vld [vmem:[%s0 + $0x3c] sm:$0xf]
  %v30 = vld [vmem:[%s0 + $0x40] sm:$0xf]
  %v31 = vld [vmem:[%s0 + $0x44] sm:$0xf]
  %v32 = vld [vmem:[%s0 + $0x48] sm:$0xf]
  %v33 = vld [vmem:[%s0 + $0x4c] sm:$0xf]
  %v34 = vld [vmem:[%s0 + $0x50] sm:$0xf]
  %v35 = vld [vmem:[%s0 + $0x54] sm:$0xf]
  %v36 = vld [vmem:[%s0 + $0x58] sm:$0xf]
  %v37 = vld [vmem:[%s0 + $0x5c] sm:$0xf]
  %v38 = vld [vmem:[%s0 + $0x60] sm:$0xf]
  %v39 = vld [vmem:[%s0 + $0x64] sm:$0xf]
  %v40 = vld [vmem:[%s0 + $0x68] sm:$0xf]
  %v41 = vld [vmem:[%s0 + $0x6c] sm:$0xf]
  %v42 = vld [vmem:[%s0 + $0x70] sm:$0xf]
  %v43 = vld [vmem:[%s0 + $0x74] sm:$0xf]
  %v44 = vld [vmem:[%s0 + $0x78] sm:$0xf]
  %v45 = vld [vmem:[%s0 + $0x7c] sm:$0xf]
  %v46 = vld [vmem:[%s0 + $0x80] sm:$0xf]
  %v47 = vld [vmem:[%s0 + $0x84] sm:$0xf]
  %v48 = vld [vmem:[%s0 + $0x88] sm:$0xf]
  %v49 = vld [vmem:[%s0 + $0x8c] sm:$0xf]
  %v50 = vld [vmem:[%s0 + $0x90] sm:$0xf]
  %v51 = vld [vmem:[%s0 + $0x94] sm:$0xf]
  %v52 = vld [vmem:[%s0 + $0x98] sm:$0xf]
  %v53 = vld [vmem:[%s0 + $0x9c] sm:$0xf]
  %v54 = vld [vmem:[%s0 + $0xa0] sm:$0xf]
  %v55 = vld [vmem:[%s0 + $0xa4] sm:$0xf]
  %v56 = vld [vmem:[%s0 + $0xa8] sm:$0xf]
  %v57 = vld [vmem:[%s0 + $0xac] sm:$0xf]
  %v58 = vld [vmem:[%s0 + $0xb0] sm:$0xf]
  %v59 = vld [vmem:[%s0 + $0xb4] sm:$0xf]
  %v60 = vld [vmem:[%s0 + $0xb8] sm:$0xf]
  %v61 = vld [vmem:[%s0 + $0xbc] sm:$0xf]
  %v62 = vld [vmem:[%s0 + $0xc0] sm:$0xf]
  %v63 = vld [vmem:[%s0 + $0xc4] sm:$0xf]
  %v64 = vld [vmem:[%s0 + $0xc8] sm:$0xf]
  %v65 = vld [vmem:[%s0 + $0xcc] sm:$0xf]
  %v66 = vld [vmem:[%s0 + $0xd0] sm:$0xf]
  %v67 = vld [vmem:[%s0 + $0xd4] sm:$0xf]
  %v68 = vld [vmem:[%s0 + $0xd8] sm:$0xf]
  %v69 = vld [vmem:[%s0 + $0xdc] sm:$0xf]
  %v70 = vld [vmem:[%s0 + $0xe0] sm:$0xf]
  %v71 = vld [vmem:[%s0 + $0xe4] sm:$0xf]
  %v72 = vld [vmem:[%s0 + $0xe8] sm:$0xf]
  %v73 = vld [vmem:[%s0 + $0xec] sm:$0xf]
  %v74 = vld [vmem:[%s0 + $0xf0] sm:$0xf]
  %v75 = vld [vmem:[%s0 + $0xf4] sm:$0xf]
  %v76 = vld [vmem:[%s0 + $0xf8] sm:$0xf]
  %v77 = vld [vmem:[%s0 + $0xfc] sm:$0xf]
  %v78 = vunpack.c.l.bf16 %v14
  %v79 = vunpack.c.l.bf16 %v15
  %v80 = vunpack.c.l.bf16 %v16
  %v81 = vunpack.c.l.bf16 %v17
  %v82 = vunpack.c.l.bf16 %v18
  %v83 = vunpack.c.l.bf16 %v19
  %v84 = vunpack.c.l.bf16 %v20
  %v85 = vunpack.c.l.bf16 %v21
  %v86 = vunpack.c.l.bf16 %v22
  %v87 = vunpack.c.l.bf16 %v23
  %v88 = vunpack.c.l.bf16 %v24
  %v89 = vunpack.c.l.bf16 %v25
  %v90 = vunpack.c.l.bf16 %v26
  %v91 = vunpack.c.l.bf16 %v27
  %v92 = vunpack.c.l.bf16 %v28
  %v93 = vunpack.c.l.bf16 %v29
  %v94 = vunpack.c.l.bf16 %v30
  %v95 = vunpack.c.l.bf16 %v31
  %v96 = vunpack.c.l.bf16 %v32
  %v97 = vunpack.c.l.bf16 %v33
  %v98 = vunpack.c.l.bf16 %v34
  %v99 = vunpack.c.l.bf16 %v35
  %v100 = vunpack.c.l.bf16 %v36
  %v101 = vunpack.c.l.bf16 %v37
  %v102 = vunpack.c.l.bf16 %v38
  %v103 = vunpack.c.l.bf16 %v39
  %v104 = vunpack.c.l.bf16 %v40
  %v105 = vunpack.c.l.bf16 %v41
  %v106 = vunpack.c.l.bf16 %v42
  %v107 = vunpack.c.l.bf16 %v43
  %v108 = vunpack.c.l.bf16 %v44
  %v109 = vunpack.c.l.bf16 %v45
  %v110 = vunpack.c.l.bf16 %v46
  %v111 = vunpack.c.l.bf16 %v47
  %v112 = vunpack.c.l.bf16 %v48
  %v113 = vunpack.c.l.bf16 %v49
  %v114 = vunpack.c.l.bf16 %v50
  %v115 = vunpack.c.l.bf16 %v51
  %v116 = vunpack.c.l.bf16 %v52
  %v117 = vunpack.c.l.bf16 %v53
  %v118 = vunpack.c.l.bf16 %v54
  %v119 = vunpack.c.l.bf16 %v55
  %v120 = vunpack.c.l.bf16 %v56
  %v121 = vunpack.c.l.bf16 %v57
  %v122 = vunpack.c.l.bf16 %v58
  %v123 = vunpack.c.l.bf16 %v59
  %v124 = vunpack.c.l.bf16 %v60
  %v125 = vunpack.c.l.bf16 %v61
  %v126 = vunpack.c.l.bf16 %v62
  %v127 = vunpack.c.l.bf16 %v63
  %v128 = vunpack.c.l.bf16 %v64
  %v129 = vunpack.c.l.bf16 %v65
  %v130 = vunpack.c.l.bf16 %v66
  %v131 = vunpack.c.l.bf16 %v67
  %v132 = vunpack.c.l.bf16 %v68
  %v133 = vunpack.c.l.bf16 %v69
  %v134 = vunpack.c.l.bf16 %v70
  %v135 = vunpack.c.l.bf16 %v71
  %v136 = vunpack.c.l.bf16 %v72
  %v137 = vunpack.c.l.bf16 %v73
  %v138 = vunpack.c.l.bf16 %v74
  %v139 = vunpack.c.l.bf16 %v75
  %v140 = vunpack.c.l.bf16 %v76
  %v141 = vunpack.c.l.bf16 %v77
  %v142 = vld [vmem:[%s1] sm:$0x1]
  %v144 = vlaneseq
  %v145 = vshrl.u32 %v144, 7
  %v146 = vsub.s32 0, %v145
  %v147 = vrot.slane %v142, %v146
  %v149 = vmul.f32 %v78, %v147
  %v150 = vmul.f32 %v79, %v147
  %v151 = vmul.f32 %v80, %v147
  %v152 = vmul.f32 %v81, %v147
  %v153 = vmul.f32 %v82, %v147
  %v154 = vmul.f32 %v83, %v147
  %v155 = vmul.f32 %v84, %v147
  %v156 = vmul.f32 %v85, %v147
  %v157 = vmul.f32 %v86, %v147
  %v158 = vmul.f32 %v87, %v147
  %v159 = vmul.f32 %v88, %v147
  %v160 = vmul.f32 %v89, %v147
  %v161 = vmul.f32 %v90, %v147
  %v162 = vmul.f32 %v91, %v147
  %v163 = vmul.f32 %v92, %v147
  %v164 = vmul.f32 %v93, %v147
  %v165 = vmul.f32 %v94, %v147
  %v166 = vmul.f32 %v95, %v147
  %v167 = vmul.f32 %v96, %v147
  %v168 = vmul.f32 %v97, %v147
  %v169 = vmul.f32 %v98, %v147
  %v170 = vmul.f32 %v99, %v147
  %v171 = vmul.f32 %v100, %v147
  %v172 = vmul.f32 %v101, %v147
  %v173 = vmul.f32 %v102, %v147
  %v174 = vmul.f32 %v103, %v147
  %v175 = vmul.f32 %v104, %v147
  %v176 = vmul.f32 %v105, %v147
  %v177 = vmul.f32 %v106, %v147
  %v178 = vmul.f32 %v107, %v147
  %v179 = vmul.f32 %v108, %v147
  %v180 = vmul.f32 %v109, %v147
  %v181 = vmul.f32 %v110, %v147
  %v182 = vmul.f32 %v111, %v147
  %v183 = vmul.f32 %v112, %v147
  %v184 = vmul.f32 %v113, %v147
  %v185 = vmul.f32 %v114, %v147
  %v186 = vmul.f32 %v115, %v147
  %v187 = vmul.f32 %v116, %v147
  %v188 = vmul.f32 %v117, %v147
  %v189 = vmul.f32 %v118, %v147
  %v190 = vmul.f32 %v119, %v147
  %v191 = vmul.f32 %v120, %v147
  %v192 = vmul.f32 %v121, %v147
  %v193 = vmul.f32 %v122, %v147
  %v194 = vmul.f32 %v123, %v147
  %v195 = vmul.f32 %v124, %v147
  %v196 = vmul.f32 %v125, %v147
  %v197 = vmul.f32 %v126, %v147
  %v198 = vmul.f32 %v127, %v147
  %v199 = vmul.f32 %v128, %v147
  %v200 = vmul.f32 %v129, %v147
  %v201 = vmul.f32 %v130, %v147
  %v202 = vmul.f32 %v131, %v147
  %v203 = vmul.f32 %v132, %v147
  %v204 = vmul.f32 %v133, %v147
  %v205 = vmul.f32 %v134, %v147
  %v206 = vmul.f32 %v135, %v147
  %v207 = vmul.f32 %v136, %v147
  %v208 = vmul.f32 %v137, %v147
  %v209 = vmul.f32 %v138, %v147
  %v210 = vmul.f32 %v139, %v147
  %v211 = vmul.f32 %v140, %v147
  %v212 = vmul.f32 %v141, %v147
  %v213 = vld [vmem:[%s2] sm:$0x1]
  %v215 = vlaneseq
  %v216 = vshrl.u32 %v215, 7
  %v217 = vsub.s32 0, %v216
  %v218 = vrot.slane %v213, %v217
  %v220 = vadd.f32 %v149, %v218
  %v221 = vadd.f32 %v150, %v218
  %v222 = vadd.f32 %v151, %v218
  %v223 = vadd.f32 %v152, %v218
  %v224 = vadd.f32 %v153, %v218
  %v225 = vadd.f32 %v154, %v218
  %v226 = vadd.f32 %v155, %v218
  %v227 = vadd.f32 %v156, %v218
  %v228 = vadd.f32 %v157, %v218
  %v229 = vadd.f32 %v158, %v218
  %v230 = vadd.f32 %v159, %v218
  %v231 = vadd.f32 %v160, %v218
  %v232 = vadd.f32 %v161, %v218
  %v233 = vadd.f32 %v162, %v218
  %v234 = vadd.f32 %v163, %v218
  %v235 = vadd.f32 %v164, %v218
  %v236 = vadd.f32 %v165, %v218
  %v237 = vadd.f32 %v166, %v218
  %v238 = vadd.f32 %v167, %v218
  %v239 = vadd.f32 %v168, %v218
  %v240 = vadd.f32 %v169, %v218
  %v241 = vadd.f32 %v170, %v218
  %v242 = vadd.f32 %v171, %v218
  %v243 = vadd.f32 %v172, %v218
  %v244 = vadd.f32 %v173, %v218
  %v245 = vadd.f32 %v174, %v218
  %v246 = vadd.f32 %v175, %v218
  %v247 = vadd.f32 %v176, %v218
  %v248 = vadd.f32 %v177, %v218
  %v249 = vadd.f32 %v178, %v218
  %v250 = vadd.f32 %v179, %v218
  %v251 = vadd.f32 %v180, %v218
  %v252 = vadd.f32 %v181, %v218
  %v253 = vadd.f32 %v182, %v218
  %v254 = vadd.f32 %v183, %v218
  %v255 = vadd.f32 %v184, %v218
  %v256 = vadd.f32 %v185, %v218
  %v257 = vadd.f32 %v186, %v218
  %v258 = vadd.f32 %v187, %v218
  %v259 = vadd.f32 %v188, %v218
  %v260 = vadd.f32 %v189, %v218
  %v261 = vadd.f32 %v190, %v218
  %v262 = vadd.f32 %v191, %v218
  %v263 = vadd.f32 %v192, %v218
  %v264 = vadd.f32 %v193, %v218
  %v265 = vadd.f32 %v194, %v218
  %v266 = vadd.f32 %v195, %v218
  %v267 = vadd.f32 %v196, %v218
  %v268 = vadd.f32 %v197, %v218
  %v269 = vadd.f32 %v198, %v218
  %v270 = vadd.f32 %v199, %v218
  %v271 = vadd.f32 %v200, %v218
  %v272 = vadd.f32 %v201, %v218
  %v273 = vadd.f32 %v202, %v218
  %v274 = vadd.f32 %v203, %v218
  %v275 = vadd.f32 %v204, %v218
  %v276 = vadd.f32 %v205, %v218
  %v277 = vadd.f32 %v206, %v218
  %v278 = vadd.f32 %v207, %v218
  %v279 = vadd.f32 %v208, %v218
  %v280 = vadd.f32 %v209, %v218
  %v281 = vadd.f32 %v210, %v218
  %v282 = vadd.f32 %v211, %v218
  %v283 = vadd.f32 %v212, %v218
  %v284 = vmax.f32 %v220, 0.0
  %v285 = vmax.f32 %v221, 0.0
  %v286 = vmax.f32 %v222, 0.0
  %v287 = vmax.f32 %v223, 0.0
  %v288 = vmax.f32 %v224, 0.0
  %v289 = vmax.f32 %v225, 0.0
  %v290 = vmax.f32 %v226, 0.0
  %v291 = vmax.f32 %v227, 0.0
  %v292 = vmax.f32 %v228, 0.0
  %v293 = vmax.f32 %v229, 0.0
  %v294 = vmax.f32 %v230, 0.0
  %v295 = vmax.f32 %v231, 0.0
  %v296 = vmax.f32 %v232, 0.0
  %v297 = vmax.f32 %v233, 0.0
  %v298 = vmax.f32 %v234, 0.0
  %v299 = vmax.f32 %v235, 0.0
  %v300 = vmax.f32 %v236, 0.0
  %v301 = vmax.f32 %v237, 0.0
  %v302 = vmax.f32 %v238, 0.0
  %v303 = vmax.f32 %v239, 0.0
  %v304 = vmax.f32 %v240, 0.0
  %v305 = vmax.f32 %v241, 0.0
  %v306 = vmax.f32 %v242, 0.0
  %v307 = vmax.f32 %v243, 0.0
  %v308 = vmax.f32 %v244, 0.0
  %v309 = vmax.f32 %v245, 0.0
  %v310 = vmax.f32 %v246, 0.0
  %v311 = vmax.f32 %v247, 0.0
  %v312 = vmax.f32 %v248, 0.0
  %v313 = vmax.f32 %v249, 0.0
  %v314 = vmax.f32 %v250, 0.0
  %v315 = vmax.f32 %v251, 0.0
  %v316 = vmax.f32 %v252, 0.0
  %v317 = vmax.f32 %v253, 0.0
  %v318 = vmax.f32 %v254, 0.0
  %v319 = vmax.f32 %v255, 0.0
  %v320 = vmax.f32 %v256, 0.0
  %v321 = vmax.f32 %v257, 0.0
  %v322 = vmax.f32 %v258, 0.0
  %v323 = vmax.f32 %v259, 0.0
  %v324 = vmax.f32 %v260, 0.0
  %v325 = vmax.f32 %v261, 0.0
  %v326 = vmax.f32 %v262, 0.0
  %v327 = vmax.f32 %v263, 0.0
  %v328 = vmax.f32 %v264, 0.0
  %v329 = vmax.f32 %v265, 0.0
  %v330 = vmax.f32 %v266, 0.0
  %v331 = vmax.f32 %v267, 0.0
  %v332 = vmax.f32 %v268, 0.0
  %v333 = vmax.f32 %v269, 0.0
  %v334 = vmax.f32 %v270, 0.0
  %v335 = vmax.f32 %v271, 0.0
  %v336 = vmax.f32 %v272, 0.0
  %v337 = vmax.f32 %v273, 0.0
  %v338 = vmax.f32 %v274, 0.0
  %v339 = vmax.f32 %v275, 0.0
  %v340 = vmax.f32 %v276, 0.0
  %v341 = vmax.f32 %v277, 0.0
  %v342 = vmax.f32 %v278, 0.0
  %v343 = vmax.f32 %v279, 0.0
  %v344 = vmax.f32 %v280, 0.0
  %v345 = vmax.f32 %v281, 0.0
  %v346 = vmax.f32 %v282, 0.0
  %v347 = vmax.f32 %v283, 0.0
  %v348 = vpack.c.bf16 %v285, %v284
  %v349 = vpack.c.bf16 %v287, %v286
  %v350 = vpack.c.bf16 %v289, %v288
  %v351 = vpack.c.bf16 %v291, %v290
  %v352 = vpack.c.bf16 %v293, %v292
  %v353 = vpack.c.bf16 %v295, %v294
  %v354 = vpack.c.bf16 %v297, %v296
  %v355 = vpack.c.bf16 %v299, %v298
  %v356 = vpack.c.bf16 %v301, %v300
  %v357 = vpack.c.bf16 %v303, %v302
  %v358 = vpack.c.bf16 %v305, %v304
  %v359 = vpack.c.bf16 %v307, %v306
  %v360 = vpack.c.bf16 %v309, %v308
  %v361 = vpack.c.bf16 %v311, %v310
  %v362 = vpack.c.bf16 %v313, %v312
  %v363 = vpack.c.bf16 %v315, %v314
  %v364 = vpack.c.bf16 %v317, %v316
  %v365 = vpack.c.bf16 %v319, %v318
  %v366 = vpack.c.bf16 %v321, %v320
  %v367 = vpack.c.bf16 %v323, %v322
  %v368 = vpack.c.bf16 %v325, %v324
  %v369 = vpack.c.bf16 %v327, %v326
  %v370 = vpack.c.bf16 %v329, %v328
  %v371 = vpack.c.bf16 %v331, %v330
  %v372 = vpack.c.bf16 %v333, %v332
  %v373 = vpack.c.bf16 %v335, %v334
  %v374 = vpack.c.bf16 %v337, %v336
  %v375 = vpack.c.bf16 %v339, %v338
  %v376 = vpack.c.bf16 %v341, %v340
  %v377 = vpack.c.bf16 %v343, %v342
  %v378 = vpack.c.bf16 %v345, %v344
  %v379 = vpack.c.bf16 %v347, %v346
  %v412 = vunpack.c.l.b16 %v348
  %v413 = vunpack.c.h.b16 %v348
  %v414 = vunpack.c.l.b16 %v349
  %v415 = vunpack.c.h.b16 %v349
  %v416 = vunpack.c.l.b16 %v350
  %v417 = vunpack.c.h.b16 %v350
  %v418 = vunpack.c.l.b16 %v351
  %v419 = vunpack.c.h.b16 %v351
  %v420 = vunpack.c.l.b16 %v352
  %v421 = vunpack.c.h.b16 %v352
  %v422 = vunpack.c.l.b16 %v353
  %v423 = vunpack.c.h.b16 %v353
  %v424 = vunpack.c.l.b16 %v354
  %v425 = vunpack.c.h.b16 %v354
  %v426 = vunpack.c.l.b16 %v355
  %v427 = vunpack.c.h.b16 %v355
  %v428 = vunpack.c.l.b16 %v356
  %v429 = vunpack.c.h.b16 %v356
  %v430 = vunpack.c.l.b16 %v357
  %v431 = vunpack.c.h.b16 %v357
  %v432 = vunpack.c.l.b16 %v358
  %v433 = vunpack.c.h.b16 %v358
  %v434 = vunpack.c.l.b16 %v359
  %v435 = vunpack.c.h.b16 %v359
  %v436 = vunpack.c.l.b16 %v360
  %v437 = vunpack.c.h.b16 %v360
  %v438 = vunpack.c.l.b16 %v361
  %v439 = vunpack.c.h.b16 %v361
  %v440 = vunpack.c.l.b16 %v362
  %v441 = vunpack.c.h.b16 %v362
  %v442 = vunpack.c.l.b16 %v363
  %v443 = vunpack.c.h.b16 %v363
  %v444 = vunpack.c.l.b16 %v364
  %v445 = vunpack.c.h.b16 %v364
  %v446 = vunpack.c.l.b16 %v365
  %v447 = vunpack.c.h.b16 %v365
  %v448 = vunpack.c.l.b16 %v366
  %v449 = vunpack.c.h.b16 %v366
  %v450 = vunpack.c.l.b16 %v367
  %v451 = vunpack.c.h.b16 %v367
  %v452 = vunpack.c.l.b16 %v368
  %v453 = vunpack.c.h.b16 %v368
  %v454 = vunpack.c.l.b16 %v369
  %v455 = vunpack.c.h.b16 %v369
  %v456 = vunpack.c.l.b16 %v370
  %v457 = vunpack.c.h.b16 %v370
  %v458 = vunpack.c.l.b16 %v371
  %v459 = vunpack.c.h.b16 %v371
  %v460 = vunpack.c.l.b16 %v372
  %v461 = vunpack.c.h.b16 %v372
  %v462 = vunpack.c.l.b16 %v373
  %v463 = vunpack.c.h.b16 %v373
  %v464 = vunpack.c.l.b16 %v374
  %v465 = vunpack.c.h.b16 %v374
  %v466 = vunpack.c.l.b16 %v375
  %v467 = vunpack.c.h.b16 %v375
  %v468 = vunpack.c.l.b16 %v376
  %v469 = vunpack.c.h.b16 %v376
  %v470 = vunpack.c.l.b16 %v377
  %v471 = vunpack.c.h.b16 %v377
  %v472 = vunpack.c.l.b16 %v378
  %v473 = vunpack.c.h.b16 %v378
  %v474 = vunpack.c.l.b16 %v379
  %v475 = vunpack.c.h.b16 %v379
  %v476 = vpack.c.b16 %v412, %v412
  %v477 = vpack.c.b16 %v413, %v413
  %v478 = vpack.c.b16 %v414, %v414
  %v479 = vpack.c.b16 %v415, %v415
  %v480 = vpack.c.b16 %v416, %v416
  %v481 = vpack.c.b16 %v417, %v417
  %v482 = vpack.c.b16 %v418, %v418
  %v483 = vpack.c.b16 %v419, %v419
  %v484 = vpack.c.b16 %v420, %v420
  %v485 = vpack.c.b16 %v421, %v421
  %v486 = vpack.c.b16 %v422, %v422
  %v487 = vpack.c.b16 %v423, %v423
  %v488 = vpack.c.b16 %v424, %v424
  %v489 = vpack.c.b16 %v425, %v425
  %v490 = vpack.c.b16 %v426, %v426
  %v491 = vpack.c.b16 %v427, %v427
  %v492 = vpack.c.b16 %v428, %v428
  %v493 = vpack.c.b16 %v429, %v429
  %v494 = vpack.c.b16 %v430, %v430
  %v495 = vpack.c.b16 %v431, %v431
  %v496 = vpack.c.b16 %v432, %v432
  %v497 = vpack.c.b16 %v433, %v433
  %v498 = vpack.c.b16 %v434, %v434
  %v499 = vpack.c.b16 %v435, %v435
  %v500 = vpack.c.b16 %v436, %v436
  %v501 = vpack.c.b16 %v437, %v437
  %v502 = vpack.c.b16 %v438, %v438
  %v503 = vpack.c.b16 %v439, %v439
  %v504 = vpack.c.b16 %v440, %v440
  %v505 = vpack.c.b16 %v441, %v441
  %v506 = vpack.c.b16 %v442, %v442
  %v507 = vpack.c.b16 %v443, %v443
  %v508 = vpack.c.b16 %v444, %v444
  %v509 = vpack.c.b16 %v445, %v445
  %v510 = vpack.c.b16 %v446, %v446
  %v511 = vpack.c.b16 %v447, %v447
  %v512 = vpack.c.b16 %v448, %v448
  %v513 = vpack.c.b16 %v449, %v449
  %v514 = vpack.c.b16 %v450, %v450
  %v515 = vpack.c.b16 %v451, %v451
  %v516 = vpack.c.b16 %v452, %v452
  %v517 = vpack.c.b16 %v453, %v453
  %v518 = vpack.c.b16 %v454, %v454
  %v519 = vpack.c.b16 %v455, %v455
  %v520 = vpack.c.b16 %v456, %v456
  %v521 = vpack.c.b16 %v457, %v457
  %v522 = vpack.c.b16 %v458, %v458
  %v523 = vpack.c.b16 %v459, %v459
  %v524 = vpack.c.b16 %v460, %v460
  %v525 = vpack.c.b16 %v461, %v461
  %v526 = vpack.c.b16 %v462, %v462
  %v527 = vpack.c.b16 %v463, %v463
  %v528 = vpack.c.b16 %v464, %v464
  %v529 = vpack.c.b16 %v465, %v465
  %v530 = vpack.c.b16 %v466, %v466
  %v531 = vpack.c.b16 %v467, %v467
  %v532 = vpack.c.b16 %v468, %v468
  %v533 = vpack.c.b16 %v469, %v469
  %v534 = vpack.c.b16 %v470, %v470
  %v535 = vpack.c.b16 %v471, %v471
  %v536 = vpack.c.b16 %v472, %v472
  %v537 = vpack.c.b16 %v473, %v473
  %v538 = vpack.c.b16 %v474, %v474
  %v539 = vpack.c.b16 %v475, %v475
  %604 = vst [vmem:[%s3] sm:$0xf] %v476
  %605 = vst [vmem:[%s3 + $0x4] sm:$0xf] %v477
  %606 = vst [vmem:[%s3 + $0x8] sm:$0xf] %v478
  %607 = vst [vmem:[%s3 + $0xc] sm:$0xf] %v479
  %608 = vst [vmem:[%s3 + $0x10] sm:$0xf] %v480
  %609 = vst [vmem:[%s3 + $0x14] sm:$0xf] %v481
  %610 = vst [vmem:[%s3 + $0x18] sm:$0xf] %v482
  %611 = vst [vmem:[%s3 + $0x1c] sm:$0xf] %v483
  %612 = vst [vmem:[%s3 + $0x20] sm:$0xf] %v484
  %613 = vst [vmem:[%s3 + $0x24] sm:$0xf] %v485
  %614 = vst [vmem:[%s3 + $0x28] sm:$0xf] %v486
  %615 = vst [vmem:[%s3 + $0x2c] sm:$0xf] %v487
  %616 = vst [vmem:[%s3 + $0x30] sm:$0xf] %v488
  %617 = vst [vmem:[%s3 + $0x34] sm:$0xf] %v489
  %618 = vst [vmem:[%s3 + $0x38] sm:$0xf] %v490
  %619 = vst [vmem:[%s3 + $0x3c] sm:$0xf] %v491
  %620 = vst [vmem:[%s3 + $0x40] sm:$0xf] %v492
  %621 = vst [vmem:[%s3 + $0x44] sm:$0xf] %v493
  %622 = vst [vmem:[%s3 + $0x48] sm:$0xf] %v494
  %623 = vst [vmem:[%s3 + $0x4c] sm:$0xf] %v495
  %624 = vst [vmem:[%s3 + $0x50] sm:$0xf] %v496
  %625 = vst [vmem:[%s3 + $0x54] sm:$0xf] %v497
  %626 = vst [vmem:[%s3 + $0x58] sm:$0xf] %v498
  %627 = vst [vmem:[%s3 + $0x5c] sm:$0xf] %v499
  %628 = vst [vmem:[%s3 + $0x60] sm:$0xf] %v500
  %629 = vst [vmem:[%s3 + $0x64] sm:$0xf] %v501
  %630 = vst [vmem:[%s3 + $0x68] sm:$0xf] %v502
  %631 = vst [vmem:[%s3 + $0x6c] sm:$0xf] %v503
  %632 = vst [vmem:[%s3 + $0x70] sm:$0xf] %v504
  %633 = vst [vmem:[%s3 + $0x74] sm:$0xf] %v505
  %634 = vst [vmem:[%s3 + $0x78] sm:$0xf] %v506
  %635 = vst [vmem:[%s3 + $0x7c] sm:$0xf] %v507
  %636 = vst [vmem:[%s3 + $0x80] sm:$0xf] %v508
  %637 = vst [vmem:[%s3 + $0x84] sm:$0xf] %v509
  %638 = vst [vmem:[%s3 + $0x88] sm:$0xf] %v510
  %639 = vst [vmem:[%s3 + $0x8c] sm:$0xf] %v511
  %640 = vst [vmem:[%s3 + $0x90] sm:$0xf] %v512
  %641 = vst [vmem:[%s3 + $0x94] sm:$0xf] %v513
  %642 = vst [vmem:[%s3 + $0x98] sm:$0xf] %v514
  %643 = vst [vmem:[%s3 + $0x9c] sm:$0xf] %v515
  %644 = vst [vmem:[%s3 + $0xa0] sm:$0xf] %v516
  %645 = vst [vmem:[%s3 + $0xa4] sm:$0xf] %v517
  %646 = vst [vmem:[%s3 + $0xa8] sm:$0xf] %v518
  %647 = vst [vmem:[%s3 + $0xac] sm:$0xf] %v519
  %648 = vst [vmem:[%s3 + $0xb0] sm:$0xf] %v520
  %649 = vst [vmem:[%s3 + $0xb4] sm:$0xf] %v521
  %650 = vst [vmem:[%s3 + $0xb8] sm:$0xf] %v522
  %651 = vst [vmem:[%s3 + $0xbc] sm:$0xf] %v523
  %652 = vst [vmem:[%s3 + $0xc0] sm:$0xf] %v524
  %653 = vst [vmem:[%s3 + $0xc4] sm:$0xf] %v525
  %654 = vst [vmem:[%s3 + $0xc8] sm:$0xf] %v526
  %655 = vst [vmem:[%s3 + $0xcc] sm:$0xf] %v527
  %656 = vst [vmem:[%s3 + $0xd0] sm:$0xf] %v528
  %657 = vst [vmem:[%s3 + $0xd4] sm:$0xf] %v529
  %658 = vst [vmem:[%s3 + $0xd8] sm:$0xf] %v530
  %659 = vst [vmem:[%s3 + $0xdc] sm:$0xf] %v531
  %660 = vst [vmem:[%s3 + $0xe0] sm:$0xf] %v532
  %661 = vst [vmem:[%s3 + $0xe4] sm:$0xf] %v533
  %662 = vst [vmem:[%s3 + $0xe8] sm:$0xf] %v534
  %663 = vst [vmem:[%s3 + $0xec] sm:$0xf] %v535
  %664 = vst [vmem:[%s3 + $0xf0] sm:$0xf] %v536
  %665 = vst [vmem:[%s3 + $0xf4] sm:$0xf] %v537
  %666 = vst [vmem:[%s3 + $0xf8] sm:$0xf] %v538
  %667 = vst [vmem:[%s3 + $0xfc] sm:$0xf] %v539
  // Predicated region
  $region14: #{up_forward.7} parent=0 // pred_check
    _
  $region15: #{up_forward.7} parent=0 // pred_check_branch
    %669 = sbr.rel (0) target = $region17
  $region16: #{up_forward.7} parent=0 // pred_region
    _
  $region17: #{up_forward.7} parent=0 // pred_fallthru
    _
  // Predicated region
  $region18: #{up_forward.7} parent=0 // pred_check
    _
  $region19: #{up_forward.7} parent=0 // pred_check_branch
    %671 = sbr.rel (0) target = $region21
  $region20: #{up_forward.7} parent=0 // pred_region
    _
  $region21: #{up_forward.7} parent=0 // pred_fallthru
    _

// kernel: up_forward.6
$region0: #{up_forward.6}
  #allocation0 [shape = 'u32[]', space=smem, size = 0x4, offset = 0x4, fixed_abs, tag = 'smem constant byte address 0x4 - core index']
  #allocation1 [shape = 'u32[144,128]{1,0:T(1,128)}', space=vmem, size = 0x12000, scoped, tag = 'internal scratch']
  %s0 = inlined_call_operand.vmem [shape: bf16[2,16,18,768], index: 0, kind: input, shape index: {}]
  %s1 = inlined_call_operand.vmem [shape: bf16[3,768,128], index: 1, kind: input, shape index: {}]
  %s2 = inlined_call_operand.vmem [shape: bf16[2,16,16,128], index: 2, kind: output, shape index: {0}]
  %s3 = inlined_call_operand.vmem [shape: f32[2,1,2,128], index: 3, kind: output, shape index: {1}]
  %4 = xla_tuple %s2, %s3
  %s5 = sld [smem:[#allocation0]]
  $region49: #{up_forward.6} parent=0
    _
  %s7 = ssub.s32 1, %s5
  %s8 = scalar_select 0, %s7, %s5
  loop: start=0, step=1, limit=4
  $region2: #{up_forward.6} parent=0 // loop_pre_header
    _
  $region3: #{up_forward.6} parent=0 // loop_header
    %s10 = sphi 0, %s14
    %p11 = scmp.ge.s32.totalorder %s10, 4
    %s17 = sphi 0, %s29
    %s18 = sphi 0, %s25
    %s19 = sphi 0, %s17
    %s20 = sphi 0, %s18
    %s21 = sphi 0, %s19
    %s22 = sphi 0, %s20
    %s34 = sphi 0, %s36
    %s37 = sphi 0, %s34
    %s38 = sphi 0, %s37
    %s54 = sphi 0, %s38
    %s58 = sphi 0, %s58
    %s60 = sphi 0, %s58
    %s61 = sphi 0, %s60
    %s75 = sphi 0, %s61
    %s83 = sphi 0, %s85
    %s86 = sphi 0, %s83
    %s87 = sphi 0, %s86
    %s103 = sphi 0, %s87
    %s111 = sphi 0, %s113
    %s114 = sphi 0, %s111
    %s115 = sphi 0, %s114
    %s131 = sphi 0, %s115
  $region4: #{up_forward.6} parent=0 // loop_header_branch
    %13 = sbr.rel (%p11) target = $region8
  $region5: #{up_forward.6} parent=0 // loop_body
    %s15 = ssub.s32 %s10, 1
    %s16 = ssub.s32 %s10, 2
    %s23 = sadd.s32 1, %s18
    %p24 = scmp.ge.s32.totalorder %s23, 1
    %s25 = scalar_select %p24, 0, %s23
    %s26 = sadd.s32 1, %s17
    %s27 = scalar_select %p24, %s26, %s17
    %p28 = scmp.ge.s32.totalorder %s27, 2
    %s29 = scalar_select %p28, 0, %s27
    %s30 = ssub.s32 %s17, %s29
    %s31 = ssub.s32 %s18, %s25
    %s32 = sor.u32 %s30, %s31
    %p33 = scmp.eq.s32.totalorder %s32, 0
    %s35 = sadd.s32 %s34, 1
    %s36 = scalar_select %p33, %s34, %s35
    %p39 = pneg %p33
    %p40 = scmp.eq.s32.totalorder %s10, 1
    %p41 = por %p39, %p40
    %p42 = scmp.ne.s32.totalorder %s34, %s37
    %p43 = scmp.eq.s32.totalorder %s10, 0
    %p44 = por %p42, %p43
    %p45 = scmp.ne.s32.totalorder %s34, %s37
    %p46 = scmp.eq.s32.totalorder %s15, 1
    %p47 = por %p45, %p46
    %p48 = scmp.ne.s32.totalorder %s37, %s38
    %p49 = scmp.eq.s32.totalorder %s15, 0
    %p50 = por %p48, %p49
    %p51 = scmp.ne.s32.totalorder %s37, %s38
    %p52 = scmp.eq.s32.totalorder %s16, 1
    %p53 = por %p51, %p52
    %p55 = scmp.ne.s32.totalorder %s38, %s54
    %p56 = scmp.eq.s32.totalorder %s16, 0
    %p57 = por %p55, %p56
    %s59 = sadd.s32 %s58, 1
    %p62 = scmp.eq.s32.totalorder %s10, 1
    %p63 = scmp.ne.s32.totalorder %s58, %s60
    %p64 = scmp.eq.s32.totalorder %s10, 0
    %p65 = por %p63, %p64
    %p66 = scmp.ne.s32.totalorder %s58, %s60
    %p67 = scmp.eq.s32.totalorder %s15, 1
    %p68 = por %p66, %p67
    %p69 = scmp.ne.s32.totalorder %s60, %s61
    %p70 = scmp.eq.s32.totalorder %s15, 0
    %p71 = por %p69, %p70
    %p72 = scmp.ne.s32.totalorder %s60, %s61
    %p73 = scmp.eq.s32.totalorder %s16, 1
    %p74 = por %p72, %p73
    %p76 = scmp.ne.s32.totalorder %s61, %s75
    %p77 = scmp.eq.s32.totalorder %s16, 0
    %p78 = por %p76, %p77
    %s79 = ssub.s32 %s17, %s29
    %s80 = ssub.s32 %s18, %s25
    %s81 = sor.u32 %s79, %s80
    %p82 = scmp.eq.s32.totalorder %s81, 0
    %s84 = sadd.s32 %s83, 1
    %s85 = scalar_select %p82, %s83, %s84
    %p88 = pneg %p82
    %p89 = scmp.eq.s32.totalorder %s10, 1
    %p90 = por %p88, %p89
    %p91 = scmp.ne.s32.totalorder %s83, %s86
    %p92 = scmp.eq.s32.totalorder %s10, 0
    %p93 = por %p91, %p92
    %p94 = scmp.ne.s32.totalorder %s83, %s86
    %p95 = scmp.eq.s32.totalorder %s15, 1
    %p96 = por %p94, %p95
    %p97 = scmp.ne.s32.totalorder %s86, %s87
    %p98 = scmp.eq.s32.totalorder %s15, 0
    %p99 = por %p97, %p98
    %p100 = scmp.ne.s32.totalorder %s86, %s87
    %p101 = scmp.eq.s32.totalorder %s16, 1
    %p102 = por %p100, %p101
    %p104 = scmp.ne.s32.totalorder %s87, %s103
    %p105 = scmp.eq.s32.totalorder %s16, 0
    %p106 = por %p104, %p105
    %s107 = ssub.s32 %s17, %s29
    %s108 = ssub.s32 %s18, %s25
    %s109 = sor.u32 %s107, %s108
    %p110 = scmp.eq.s32.totalorder %s109, 0
    %s112 = sadd.s32 %s111, 1
    %s113 = scalar_select %p110, %s111, %s112
    %p116 = pneg %p110
    %p117 = scmp.eq.s32.totalorder %s10, 1
    %p118 = por %p116, %p117
    %p119 = scmp.ne.s32.totalorder %s111, %s114
    %p120 = scmp.eq.s32.totalorder %s10, 0
    %p121 = por %p119, %p120
    %p122 = scmp.ne.s32.totalorder %s111, %s114
    %p123 = scmp.eq.s32.totalorder %s15, 1
    %p124 = por %p122, %p123
    %p125 = scmp.ne.s32.totalorder %s114, %s115
    %p126 = scmp.eq.s32.totalorder %s15, 0
    %p127 = por %p125, %p126
    %p128 = scmp.ne.s32.totalorder %s114, %s115
    %p129 = scmp.eq.s32.totalorder %s16, 1
    %p130 = por %p128, %p129
    %p132 = scmp.ne.s32.totalorder %s115, %s131
    %p133 = scmp.eq.s32.totalorder %s16, 0
    %p134 = por %p132, %p133
    %p135 = scmp.le.s32.totalorder 1, %s10
    %p136 = scmp.lt.s32.totalorder %s10, 3
    %p137 = pnand %p135, %p136
    %p138 = pneg %p137
    // Predicated region
    $region9: #{up_forward.6} parent=5 // pred_check
      _
    $region10: #{up_forward.6} parent=5 // pred_check_branch
      %140 = sbr.rel (%p137) target = $region12
    $region11: #{up_forward.6} parent=5 // pred_region
      %s141 = ssub.s32 %s10, 1
      // Predicated region
      $region13: #{up_forward.6} parent=11 // pred_check
        %p142 = pneg %p71
      $region14: #{up_forward.6} parent=11 // pred_check_branch
        %144 = sbr.rel (%p142) target = $region16
      $region15: #{up_forward.6} parent=11 // pred_region
        _
      $region16: #{up_forward.6} parent=11 // pred_fallthru
        _
    $region12: #{up_forward.6} parent=5 // pred_fallthru
      _
    %p145 = scmp.lt.s32.totalorder %s10, 2
    // Predicated region
    $region17: #{up_forward.6} parent=5 // pred_check
      %p146 = pneg %p145
    $region18: #{up_forward.6} parent=5 // pred_check_branch
      %148 = sbr.rel (%p146) target = $region20
    $region19: #{up_forward.6} parent=5 // pred_region
      // Predicated region
      $region21: #{up_forward.6} parent=19 // pred_check
        %p149 = pneg %p44
      $region22: #{up_forward.6} parent=19 // pred_check_branch
        %151 = sbr.rel (%p149) target = $region24
      $region23: #{up_forward.6} parent=19 // pred_region
        %s152 = smul.u32 16, %s18
        %p153 = scmp.lt.s32.totalorder %s17, 1
        %s154 = scalar_select %p153, %s17, 1
        %p155 = scmp.lt.s32.totalorder %s152, 15
        %s156 = scalar_select %p155, %s152, 15
        %s157 = smul.addr %s156, 18
        %s158 = smul.addr %s154, 288
        %s159 = sadd.s32 %s157, %s158
        %s160 = smul.addr %s159, 4
        %s161 = scalar_lea.vmem %s0, %s160
        %s162 = smul.u32 16, %s18
      $region24: #{up_forward.6} parent=19 // pred_fallthru
        _
    $region20: #{up_forward.6} parent=5 // pred_fallthru
      _
    %p163 = scmp.le.s32.totalorder 1, %s10
    %p164 = scmp.lt.s32.totalorder %s10, 3
    %p165 = pnand %p163, %p164
    %p166 = pneg %p165
    // Predicated region
    $region25: #{up_forward.6} parent=5 // pred_check
      _
    $region26: #{up_forward.6} parent=5 // pred_check_branch
      %168 = sbr.rel (%p165) target = $region28
    $region27: #{up_forward.6} parent=5 // pred_region
      %s169 = ssub.s32 %s10, 1
      %s170 = smul.u32 16, %s20
      %p171 = scmp.lt.s32.totalorder %s19, 1
      %s172 = scalar_select %p171, %s19, 1
      %p173 = scmp.lt.s32.totalorder %s170, 15
      %s174 = scalar_select %p173, %s170, 15
      %s175 = smul.addr %s174, 18
      %s176 = smul.addr %s172, 288
      %s177 = sadd.s32 %s175, %s176
      %s178 = smul.addr %s177, 4
      %s179 = scalar_lea.vmem %s0, %s178
      %p180 = pneg %p50
      %p181 = pneg %p47
      %p182 = pneg %p71
      %p183 = pneg %p68
      %p184 = pneg %p99
      %p185 = pneg %p96
      %s186 = smul.u32 16, %s20
      %p187 = scmp.lt.s32.totalorder %s19, 1
      %s188 = scalar_select %p187, %s19, 1
      %p189 = scmp.lt.s32.totalorder %s186, 15
      %s190 = scalar_select %p189, %s186, 15
      %s191 = smul.addr %s190, 2
      %s192 = smul.addr %s188, 32
      %s193 = sadd.s32 %s191, %s192
      %s194 = smul.addr %s193, 4
      %s195 = scalar_lea.vmem %s2, %s194
      %p196 = pneg %p127
      %p197 = pneg %p124
      %p198 = scmp.lt.s32.totalorder %s19, 1
      %s199 = scalar_select %p198, %s19, 1
      %p200 = scmp.lt.s32.totalorder %s20, 0
      %s201 = scalar_select %p200, %s20, 0
      %s202 = sadd.s32 %s201, %s199
      %s203 = smul.addr %s202, 2
      %s204 = scalar_lea.vmem %s3, %s203
      %s205 = smul.u32 16, %s20
      %p206 = scmp.lt.s32.totalorder %s19, 1
      %s207 = scalar_select %p206, %s19, 1
      %p208 = scmp.lt.s32.totalorder %s205, 15
      %s209 = scalar_select %p208, %s205, 15
      %s210 = smul.addr %s209, 18
      %s211 = smul.addr %s207, 288
      %s212 = sadd.s32 %s210, %s211
      %s213 = smul.addr %s212, 4
      %s214 = scalar_lea.vmem %s0, %s213
      %s215 = smul.u32 16, %s20
      %s216 = smul.u32 16, %s20
      %p217 = scmp.lt.s32.totalorder %s19, 1
      %s218 = scalar_select %p217, %s19, 1
      %p219 = scmp.lt.s32.totalorder %s216, 15
      %s220 = scalar_select %p219, %s216, 15
      %s221 = smul.addr %s220, 2
      %s222 = smul.addr %s218, 32
      %s223 = sadd.s32 %s221, %s222
      %s224 = smul.addr %s223, 4
      %s225 = scalar_lea.vmem %s2, %s224
      %s226 = smul.u32 16, %s20
      %p227 = scmp.lt.s32.totalorder %s19, 1
      %s228 = scalar_select %p227, %s19, 1
      %p229 = scmp.lt.s32.totalorder %s20, 0
      %s230 = scalar_select %p229, %s20, 0
      %s231 = sadd.s32 %s230, %s228
      %s232 = smul.addr %s231, 2
      %s233 = scalar_lea.vmem %s3, %s232
      %v235 = vld [vmem:[%s214] sm:$0xff]
      %v236 = vld [vmem:[%s214 + $0x8] sm:$0xff]
      %v237 = vld [vmem:[%s214 + $0x10] sm:$0xff]
      %v238 = vld [vmem:[%s214 + $0x18] sm:$0xff]
      %v239 = vld [vmem:[%s214 + $0x20] sm:$0xff]
      %v240 = vld [vmem:[%s214 + $0x28] sm:$0xff]
      %v241 = vld [vmem:[%s214 + $0x48] sm:$0xff]
      %v242 = vld [vmem:[%s214 + $0x50] sm:$0xff]
      %v243 = vld [vmem:[%s214 + $0x58] sm:$0xff]
      %v244 = vld [vmem:[%s214 + $0x60] sm:$0xff]
      %v245 = vld [vmem:[%s214 + $0x68] sm:$0xff]
      %v246 = vld [vmem:[%s214 + $0x70] sm:$0xff]
      %v247 = vld [vmem:[%s214 + $0x90] sm:$0xff]
      %v248 = vld [vmem:[%s214 + $0x98] sm:$0xff]
      %v249 = vld [vmem:[%s214 + $0xa0] sm:$0xff]
      %v250 = vld [vmem:[%s214 + $0xa8] sm:$0xff]
      %v251 = vld [vmem:[%s214 + $0xb0] sm:$0xff]
      %v252 = vld [vmem:[%s214 + $0xb8] sm:$0xff]
      %v253 = vld [vmem:[%s214 + $0xd8] sm:$0xff]
      %v254 = vld [vmem:[%s214 + $0xe0] sm:$0xff]
      %v255 = vld [vmem:[%s214 + $0xe8] sm:$0xff]
      %v256 = vld [vmem:[%s214 + $0xf0] sm:$0xff]
      %v257 = vld [vmem:[%s214 + $0xf8] sm:$0xff]
      %v258 = vld [vmem:[%s214 + $0x100] sm:$0xff]
      %v259 = vld [vmem:[%s214 + $0x120] sm:$0xff]
      %v260 = vld [vmem:[%s214 + $0x128] sm:$0xff]
      %v261 = vld [vmem:[%s214 + $0x130] sm:$0xff]
      %v262 = vld [vmem:[%s214 + $0x138] sm:$0xff]
      %v263 = vld [vmem:[%s214 + $0x140] sm:$0xff]
      %v264 = vld [vmem:[%s214 + $0x148] sm:$0xff]
      %v265 = vld [vmem:[%s214 + $0x168] sm:$0xff]
      %v266 = vld [vmem:[%s214 + $0x170] sm:$0xff]
      %v267 = vld [vmem:[%s214 + $0x178] sm:$0xff]
      %v268 = vld [vmem:[%s214 + $0x180] sm:$0xff]
      %v269 = vld [vmem:[%s214 + $0x188] sm:$0xff]
      %v270 = vld [vmem:[%s214 + $0x190] sm:$0xff]
      %v271 = vld [vmem:[%s214 + $0x1b0] sm:$0xff]
      %v272 = vld [vmem:[%s214 + $0x1b8] sm:$0xff]
      %v273 = vld [vmem:[%s214 + $0x1c0] sm:$0xff]
      %v274 = vld [vmem:[%s214 + $0x1c8] sm:$0xff]
      %v275 = vld [vmem:[%s214 + $0x1d0] sm:$0xff]
      %v276 = vld [vmem:[%s214 + $0x1d8] sm:$0xff]
      %v277 = vld [vmem:[%s214 + $0x1f8] sm:$0xff]
      %v278 = vld [vmem:[%s214 + $0x200] sm:$0xff]
      %v279 = vld [vmem:[%s214 + $0x208] sm:$0xff]
      %v280 = vld [vmem:[%s214 + $0x210] sm:$0xff]
      %v281 = vld [vmem:[%s214 + $0x218] sm:$0xff]
      %v282 = vld [vmem:[%s214 + $0x220] sm:$0xff]
      %v283 = vld [vmem:[%s214 + $0x240] sm:$0xff]
      %v284 = vld [vmem:[%s214 + $0x248] sm:$0xff]
      %v285 = vld [vmem:[%s214 + $0x250] sm:$0xff]
      %v286 = vld [vmem:[%s214 + $0x258] sm:$0xff]
      %v287 = vld [vmem:[%s214 + $0x260] sm:$0xff]
      %v288 = vld [vmem:[%s214 + $0x268] sm:$0xff]
      %v289 = vld [vmem:[%s214 + $0x288] sm:$0xff]
      %v290 = vld [vmem:[%s214 + $0x290] sm:$0xff]
      %v291 = vld [vmem:[%s214 + $0x298] sm:$0xff]
      %v292 = vld [vmem:[%s214 + $0x2a0] sm:$0xff]
      %v293 = vld [vmem:[%s214 + $0x2a8] sm:$0xff]
      %v294 = vld [vmem:[%s214 + $0x2b0] sm:$0xff]
      %v295 = vld [vmem:[%s214 + $0x2d0] sm:$0xff]
      %v296 = vld [vmem:[%s214 + $0x2d8] sm:$0xff]
      %v297 = vld [vmem:[%s214 + $0x2e0] sm:$0xff]
      %v298 = vld [vmem:[%s214 + $0x2e8] sm:$0xff]
      %v299 = vld [vmem:[%s214 + $0x2f0] sm:$0xff]
      %v300 = vld [vmem:[%s214 + $0x2f8] sm:$0xff]
      %v301 = vld [vmem:[%s214 + $0x318] sm:$0xff]
      %v302 = vld [vmem:[%s214 + $0x320] sm:$0xff]
      %v303 = vld [vmem:[%s214 + $0x328] sm:$0xff]
      %v304 = vld [vmem:[%s214 + $0x330] sm:$0xff]
      %v305 = vld [vmem:[%s214 + $0x338] sm:$0xff]
      %v306 = vld [vmem:[%s214 + $0x340] sm:$0xff]
      %v307 = vld [vmem:[%s214 + $0x360] sm:$0xff]
      %v308 = vld [vmem:[%s214 + $0x368] sm:$0xff]
      %v309 = vld [vmem:[%s214 + $0x370] sm:$0xff]
      %v310 = vld [vmem:[%s214 + $0x378] sm:$0xff]
      %v311 = vld [vmem:[%s214 + $0x380] sm:$0xff]
      %v312 = vld [vmem:[%s214 + $0x388] sm:$0xff]
      %v313 = vld [vmem:[%s214 + $0x3a8] sm:$0xff]
      %v314 = vld [vmem:[%s214 + $0x3b0] sm:$0xff]
      %v315 = vld [vmem:[%s214 + $0x3b8] sm:$0xff]
      %v316 = vld [vmem:[%s214 + $0x3c0] sm:$0xff]
      %v317 = vld [vmem:[%s214 + $0x3c8] sm:$0xff]
      %v318 = vld [vmem:[%s214 + $0x3d0] sm:$0xff]
      %v319 = vld [vmem:[%s214 + $0x3f0] sm:$0xff]
      %v320 = vld [vmem:[%s214 + $0x3f8] sm:$0xff]
      %v321 = vld [vmem:[%s214 + $0x400] sm:$0xff]
      %v322 = vld [vmem:[%s214 + $0x408] sm:$0xff]
      %v323 = vld [vmem:[%s214 + $0x410] sm:$0xff]
      %v324 = vld [vmem:[%s214 + $0x418] sm:$0xff]
      %v325 = vld [vmem:[%s214 + $0x438] sm:$0xff]
      %v326 = vld [vmem:[%s214 + $0x440] sm:$0xff]
      %v327 = vld [vmem:[%s214 + $0x448] sm:$0xff]
      %v328 = vld [vmem:[%s214 + $0x450] sm:$0xff]
      %v329 = vld [vmem:[%s214 + $0x458] sm:$0xff]
      %v330 = vld [vmem:[%s214 + $0x460] sm:$0xff]
      %v331 = vld [vmem:[%s1] sm:$0xf]
      %v332 = vld [vmem:[%s1 + $0x4] sm:$0xf]
      %v333 = vld [vmem:[%s1 + $0x8] sm:$0xf]
      %v334 = vld [vmem:[%s1 + $0xc] sm:$0xf]
      %v335 = vld [vmem:[%s1 + $0x10] sm:$0xf]
      %v336 = vld [vmem:[%s1 + $0x14] sm:$0xf]
      %v337 = vld [vmem:[%s1 + $0x18] sm:$0xf]
      %v338 = vld [vmem:[%s1 + $0x1c] sm:$0xf]
      %v339 = vld [vmem:[%s1 + $0x20] sm:$0xf]
      %v340 = vld [vmem:[%s1 + $0x24] sm:$0xf]
      %v341 = vld [vmem:[%s1 + $0x28] sm:$0xf]
      %v342 = vld [vmem:[%s1 + $0x2c] sm:$0xf]
      %v343 = vld [vmem:[%s1 + $0x30] sm:$0xf]
      %v344 = vld [vmem:[%s1 + $0x34] sm:$0xf]
      %v345 = vld [vmem:[%s1 + $0x38] sm:$0xf]
      %v346 = vld [vmem:[%s1 + $0x3c] sm:$0xf]
      %v347 = vld [vmem:[%s1 + $0x40] sm:$0xf]
      %v348 = vld [vmem:[%s1 + $0x44] sm:$0xf]
      %v349 = vld [vmem:[%s1 + $0x48] sm:$0xf]
      %v350 = vld [vmem:[%s1 + $0x4c] sm:$0xf]
      %v351 = vld [vmem:[%s1 + $0x50] sm:$0xf]
      %v352 = vld [vmem:[%s1 + $0x54] sm:$0xf]
      %v353 = vld [vmem:[%s1 + $0x58] sm:$0xf]
      %v354 = vld [vmem:[%s1 + $0x5c] sm:$0xf]
      %v355 = vld [vmem:[%s1 + $0x60] sm:$0xf]
      %v356 = vld [vmem:[%s1 + $0x64] sm:$0xf]
      %v357 = vld [vmem:[%s1 + $0x68] sm:$0xf]
      %v358 = vld [vmem:[%s1 + $0x6c] sm:$0xf]
      %v359 = vld [vmem:[%s1 + $0x70] sm:$0xf]
      %v360 = vld [vmem:[%s1 + $0x74] sm:$0xf]
      %v361 = vld [vmem:[%s1 + $0x78] sm:$0xf]
      %v362 = vld [vmem:[%s1 + $0x7c] sm:$0xf]
      %v363 = vld [vmem:[%s1 + $0x80] sm:$0xf]
      %v364 = vld [vmem:[%s1 + $0x84] sm:$0xf]
      %v365 = vld [vmem:[%s1 + $0x88] sm:$0xf]
      %v366 = vld [vmem:[%s1 + $0x8c] sm:$0xf]
      %v367 = vld [vmem:[%s1 + $0x90] sm:$0xf]
      %v368 = vld [vmem:[%s1 + $0x94] sm:$0xf]
      %v369 = vld [vmem:[%s1 + $0x98] sm:$0xf]
      %v370 = vld [vmem:[%s1 + $0x9c] sm:$0xf]
      %v371 = vld [vmem:[%s1 + $0xa0] sm:$0xf]
      %v372 = vld [vmem:[%s1 + $0xa4] sm:$0xf]
      %v373 = vld [vmem:[%s1 + $0xa8] sm:$0xf]
      %v374 = vld [vmem:[%s1 + $0xac] sm:$0xf]
      %v375 = vld [vmem:[%s1 + $0xb0] sm:$0xf]
      %v376 = vld [vmem:[%s1 + $0xb4] sm:$0xf]
      %v377 = vld [vmem:[%s1 + $0xb8] sm:$0xf]
      %v378 = vld [vmem:[%s1 + $0xbc] sm:$0xf]
      %v379 = vld [vmem:[%s1 + $0xc0] sm:$0xf]
      %v380 = vld [vmem:[%s1 + $0xc4] sm:$0xf]
      %v381 = vld [vmem:[%s1 + $0xc8] sm:$0xf]
      %v382 = vld [vmem:[%s1 + $0xcc] sm:$0xf]
      %v383 = vld [vmem:[%s1 + $0xd0] sm:$0xf]
      %v384 = vld [vmem:[%s1 + $0xd4] sm:$0xf]
      %v385 = vld [vmem:[%s1 + $0xd8] sm:$0xf]
      %v386 = vld [vmem:[%s1 + $0xdc] sm:$0xf]
      %v387 = vld [vmem:[%s1 + $0xe0] sm:$0xf]
      %v388 = vld [vmem:[%s1 + $0xe4] sm:$0xf]
      %v389 = vld [vmem:[%s1 + $0xe8] sm:$0xf]
      %v390 = vld [vmem:[%s1 + $0xec] sm:$0xf]
      %v391 = vld [vmem:[%s1 + $0xf0] sm:$0xf]
      %v392 = vld [vmem:[%s1 + $0xf4] sm:$0xf]
      %v393 = vld [vmem:[%s1 + $0xf8] sm:$0xf]
      %v394 = vld [vmem:[%s1 + $0xfc] sm:$0xf]
      %v395 = vld [vmem:[%s1 + $0x100] sm:$0xf]
      %v396 = vld [vmem:[%s1 + $0x104] sm:$0xf]
      %v397 = vld [vmem:[%s1 + $0x108] sm:$0xf]
      %v398 = vld [vmem:[%s1 + $0x10c] sm:$0xf]
      %v399 = vld [vmem:[%s1 + $0x110] sm:$0xf]
      %v400 = vld [vmem:[%s1 + $0x114] sm:$0xf]
      %v401 = vld [vmem:[%s1 + $0x118] sm:$0xf]
      %v402 = vld [vmem:[%s1 + $0x11c] sm:$0xf]
      %v403 = vld [vmem:[%s1 + $0x120] sm:$0xf]
      %v404 = vld [vmem:[%s1 + $0x124] sm:$0xf]
      %v405 = vld [vmem:[%s1 + $0x128] sm:$0xf]
      %v406 = vld [vmem:[%s1 + $0x12c] sm:$0xf]
      %v407 = vld [vmem:[%s1 + $0x130] sm:$0xf]
      %v408 = vld [vmem:[%s1 + $0x134] sm:$0xf]
      %v409 = vld [vmem:[%s1 + $0x138] sm:$0xf]
      %v410 = vld [vmem:[%s1 + $0x13c] sm:$0xf]
      %v411 = vld [vmem:[%s1 + $0x140] sm:$0xf]
      %v412 = vld [vmem:[%s1 + $0x144] sm:$0xf]
      %v413 = vld [vmem:[%s1 + $0x148] sm:$0xf]
      %v414 = vld [vmem:[%s1 + $0x14c] sm:$0xf]
      %v415 = vld [vmem:[%s1 + $0x150] sm:$0xf]
      %v416 = vld [vmem:[%s1 + $0x154] sm:$0xf]
      %v417 = vld [vmem:[%s1 + $0x158] sm:$0xf]
      %v418 = vld [vmem:[%s1 + $0x15c] sm:$0xf]
      %v419 = vld [vmem:[%s1 + $0x160] sm:$0xf]
      %v420 = vld [vmem:[%s1 + $0x164] sm:$0xf]
      %v421 = vld [vmem:[%s1 + $0x168] sm:$0xf]
      %v422 = vld [vmem:[%s1 + $0x16c] sm:$0xf]
      %v423 = vld [vmem:[%s1 + $0x170] sm:$0xf]
      %v424 = vld [vmem:[%s1 + $0x174] sm:$0xf]
      %v425 = vld [vmem:[%s1 + $0x178] sm:$0xf]
      %v426 = vld [vmem:[%s1 + $0x17c] sm:$0xf]
      %v427 = vld [vmem:[%s214 + $0x30] sm:$0x11]
      %v428 = vld [vmem:[%s214 + $0x38] sm:$0x11]
      %v429 = vld [vmem:[%s214 + $0x40] sm:$0x11]
      %v430 = vld [vmem:[%s214 + $0x78] sm:$0x11]
      %v431 = vld [vmem:[%s214 + $0x80] sm:$0x11]
      %v432 = vld [vmem:[%s214 + $0x88] sm:$0x11]
      %v433 = vld [vmem:[%s214 + $0xc0] sm:$0x11]
      %v434 = vld [vmem:[%s214 + $0xc8] sm:$0x11]
      %v435 = vld [vmem:[%s214 + $0xd0] sm:$0x11]
      %v436 = vld [vmem:[%s214 + $0x108] sm:$0x11]
      %v437 = vld [vmem:[%s214 + $0x110] sm:$0x11]
      %v438 = vld [vmem:[%s214 + $0x118] sm:$0x11]
      %v439 = vld [vmem:[%s214 + $0x150] sm:$0x11]
      %v440 = vld [vmem:[%s214 + $0x158] sm:$0x11]
      %v441 = vld [vmem:[%s214 + $0x160] sm:$0x11]
      %v442 = vld [vmem:[%s214 + $0x198] sm:$0x11]
      %v443 = vld [vmem:[%s214 + $0x1a0] sm:$0x11]
      %v444 = vld [vmem:[%s214 + $0x1a8] sm:$0x11]
      %v445 = vld [vmem:[%s214 + $0x1e0] sm:$0x11]
      %v446 = vld [vmem:[%s214 + $0x1e8] sm:$0x11]
      %v447 = vld [vmem:[%s214 + $0x1f0] sm:$0x11]
      %v448 = vld [vmem:[%s214 + $0x228] sm:$0x11]
      %v449 = vld [vmem:[%s214 + $0x230] sm:$0x11]
      %v450 = vld [vmem:[%s214 + $0x238] sm:$0x11]
      %v451 = vld [vmem:[%s214 + $0x270] sm:$0x11]
      %v452 = vld [vmem:[%s214 + $0x278] sm:$0x11]
      %v453 = vld [vmem:[%s214 + $0x280] sm:$0x11]
      %v454 = vld [vmem:[%s214 + $0x2b8] sm:$0x11]
      %v455 = vld [vmem:[%s214 + $0x2c0] sm:$0x11]
      %v456 = vld [vmem:[%s214 + $0x2c8] sm:$0x11]
      %v457 = vld [vmem:[%s214 + $0x300] sm:$0x11]
      %v458 = vld [vmem:[%s214 + $0x308] sm:$0x11]
      %v459 = vld [vmem:[%s214 + $0x310] sm:$0x11]
      %v460 = vld [vmem:[%s214 + $0x348] sm:$0x11]
      %v461 = vld [vmem:[%s214 + $0x350] sm:$0x11]
      %v462 = vld [vmem:[%s214 + $0x358] sm:$0x11]
      %v463 = vld [vmem:[%s214 + $0x390] sm:$0x11]
      %v464 = vld [vmem:[%s214 + $0x398] sm:$0x11]
      %v465 = vld [vmem:[%s214 + $0x3a0] sm:$0x11]
      %v466 = vld [vmem:[%s214 + $0x3d8] sm:$0x11]
      %v467 = vld [vmem:[%s214 + $0x3e0] sm:$0x11]
      %v468 = vld [vmem:[%s214 + $0x3e8] sm:$0x11]
      %v469 = vld [vmem:[%s214 + $0x420] sm:$0x11]
      %v470 = vld [vmem:[%s214 + $0x428] sm:$0x11]
      %v471 = vld [vmem:[%s214 + $0x430] sm:$0x11]
      %v472 = vld [vmem:[%s214 + $0x468] sm:$0x11]
      %v473 = vld [vmem:[%s214 + $0x470] sm:$0x11]
      %v474 = vld [vmem:[%s214 + $0x478] sm:$0x11]
      %vm475 = vsmask.f32 3328
      %vm476 = vsmask.f32 7440
      %vm477 = vmor %vm475, %vm476
      %v479 = vshrl.u32 %v235, 16
      %v481 = vrot.slane %v479, 4
      %v482 = vshll.u32 %v235, 16
      %v484 = vrot.slane %v482, 5
      %v485 = vor.u32 %v481, %v484
      %v486 = vrot.slane %v485, 4
      %v488 = vshll.u32 %v238, 16
      %v490 = vrot.slane %v488, 5
      %v491 = vsel %vm477, %v486, %v490
      %v493 = vshrl.u32 %v236, 16
      %v495 = vrot.slane %v493, 4
      %v496 = vshll.u32 %v236, 16
      %v498 = vrot.slane %v496, 5
      %v499 = vor.u32 %v495, %v498
      %v500 = vrot.slane %v499, 4
      %v502 = vshll.u32 %v239, 16
      %v504 = vrot.slane %v502, 5
      %v505 = vsel %vm477, %v500, %v504
      %v507 = vshrl.u32 %v237, 16
      %v509 = vrot.slane %v507, 4
      %v510 = vshll.u32 %v237, 16
      %v512 = vrot.slane %v510, 5
      %v513 = vor.u32 %v509, %v512
      %v514 = vrot.slane %v513, 4
      %v516 = vshll.u32 %v240, 16
      %v518 = vrot.slane %v516, 5
      %v519 = vsel %vm477, %v514, %v518
      %v520 = vshrl.u32 %v238, 16
      %v522 = vrot.slane %v520, 4
      %v523 = vor.u32 %v522, %v490
      %v524 = vrot.slane %v523, 4
      %v526 = vshll.u32 %v427, 16
      %v528 = vrot.slane %v526, 5
      %v529 = vsel %vm477, %v524, %v528
      %v530 = vshrl.u32 %v239, 16
      %v532 = vrot.slane %v530, 4
      %v533 = vor.u32 %v532, %v504
      %v534 = vrot.slane %v533, 4
      %v536 = vshll.u32 %v428, 16
      %v538 = vrot.slane %v536, 5
      %v539 = vsel %vm477, %v534, %v538
      %v540 = vshrl.u32 %v240, 16
      %v542 = vrot.slane %v540, 4
      %v543 = vor.u32 %v542, %v518
      %v544 = vrot.slane %v543, 4
      %v546 = vshll.u32 %v429, 16
      %v548 = vrot.slane %v546, 5
      %v549 = vsel %vm477, %v544, %v548
      %v551 = vshrl.u32 %v241, 16
      %v553 = vrot.slane %v551, 4
      %v554 = vshll.u32 %v241, 16
      %v556 = vrot.slane %v554, 5
      %v557 = vor.u32 %v553, %v556
      %v558 = vrot.slane %v557, 4
      %v560 = vshll.u32 %v244, 16
      %v562 = vrot.slane %v560, 5
      %v563 = vsel %vm477, %v558, %v562
      %v565 = vshrl.u32 %v242, 16
      %v567 = vrot.slane %v565, 4
      %v568 = vshll.u32 %v242, 16
      %v570 = vrot.slane %v568, 5
      %v571 = vor.u32 %v567, %v570
      %v572 = vrot.slane %v571, 4
      %v574 = vshll.u32 %v245, 16
      %v576 = vrot.slane %v574, 5
      %v577 = vsel %vm477, %v572, %v576
      %v579 = vshrl.u32 %v243, 16
      %v581 = vrot.slane %v579, 4
      %v582 = vshll.u32 %v243, 16
      %v584 = vrot.slane %v582, 5
      %v585 = vor.u32 %v581, %v584
      %v586 = vrot.slane %v585, 4
      %v588 = vshll.u32 %v246, 16
      %v590 = vrot.slane %v588, 5
      %v591 = vsel %vm477, %v586, %v590
      %v592 = vshrl.u32 %v244, 16
      %v594 = vrot.slane %v592, 4
      %v595 = vor.u32 %v594, %v562
      %v596 = vrot.slane %v595, 4
      %v598 = vshll.u32 %v430, 16
      %v600 = vrot.slane %v598, 5
      %v601 = vsel %vm477, %v596, %v600
      %v602 = vshrl.u32 %v245, 16
      %v604 = vrot.slane %v602, 4
      %v605 = vor.u32 %v604, %v576
      %v606 = vrot.slane %v605, 4
      %v608 = vshll.u32 %v431, 16
      %v610 = vrot.slane %v608, 5
      %v611 = vsel %vm477, %v606, %v610
      %v612 = vshrl.u32 %v246, 16
      %v614 = vrot.slane %v612, 4
      %v615 = vor.u32 %v614, %v590
      %v616 = vrot.slane %v615, 4
      %v618 = vshll.u32 %v432, 16
      %v620 = vrot.slane %v618, 5
      %v621 = vsel %vm477, %v616, %v620
      %v623 = vshrl.u32 %v247, 16
      %v625 = vrot.slane %v623, 4
      %v626 = vshll.u32 %v247, 16
      %v628 = vrot.slane %v626, 5
      %v629 = vor.u32 %v625, %v628
      %v630 = vrot.slane %v629, 4
      %v632 = vshll.u32 %v250, 16
      %v634 = vrot.slane %v632, 5
      %v635 = vsel %vm477, %v630, %v634
      %v637 = vshrl.u32 %v248, 16
      %v639 = vrot.slane %v637, 4
      %v640 = vshll.u32 %v248, 16
      %v642 = vrot.slane %v640, 5
      %v643 = vor.u32 %v639, %v642
      %v644 = vrot.slane %v643, 4
      %v646 = vshll.u32 %v251, 16
      %v648 = vrot.slane %v646, 5
      %v649 = vsel %vm477, %v644, %v648
      %v651 = vshrl.u32 %v249, 16
      %v653 = vrot.slane %v651, 4
      %v654 = vshll.u32 %v249, 16
      %v656 = vrot.slane %v654, 5
      %v657 = vor.u32 %v653, %v656
      %v658 = vrot.slane %v657, 4
      %v660 = vshll.u32 %v252, 16
      %v662 = vrot.slane %v660, 5
      %v663 = vsel %vm477, %v658, %v662
      %v664 = vshrl.u32 %v250, 16
      %v666 = vrot.slane %v664, 4
      %v667 = vor.u32 %v666, %v634
      %v668 = vrot.slane %v667, 4
      %v670 = vshll.u32 %v433, 16
      %v672 = vrot.slane %v670, 5
      %v673 = vsel %vm477, %v668, %v672
      %v674 = vshrl.u32 %v251, 16
      %v676 = vrot.slane %v674, 4
      %v677 = vor.u32 %v676, %v648
      %v678 = vrot.slane %v677, 4
      %v680 = vshll.u32 %v434, 16
      %v682 = vrot.slane %v680, 5
      %v683 = vsel %vm477, %v678, %v682
      %v684 = vshrl.u32 %v252, 16
      %v686 = vrot.slane %v684, 4
      %v687 = vor.u32 %v686, %v662
      %v688 = vrot.slane %v687, 4
      %v690 = vshll.u32 %v435, 16
      %v692 = vrot.slane %v690, 5
      %v693 = vsel %vm477, %v688, %v692
      %v695 = vshrl.u32 %v253, 16
      %v697 = vrot.slane %v695, 4
      %v698 = vshll.u32 %v253, 16
      %v700 = vrot.slane %v698, 5
      %v701 = vor.u32 %v697, %v700
      %v702 = vrot.slane %v701, 4
      %v704 = vshll.u32 %v256, 16
      %v706 = vrot.slane %v704, 5
      %v707 = vsel %vm477, %v702, %v706
      %v709 = vshrl.u32 %v254, 16
      %v711 = vrot.slane %v709, 4
      %v712 = vshll.u32 %v254, 16
      %v714 = vrot.slane %v712, 5
      %v715 = vor.u32 %v711, %v714
      %v716 = vrot.slane %v715, 4
      %v718 = vshll.u32 %v257, 16
      %v720 = vrot.slane %v718, 5
      %v721 = vsel %vm477, %v716, %v720
      %v723 = vshrl.u32 %v255, 16
      %v725 = vrot.slane %v723, 4
      %v726 = vshll.u32 %v255, 16
      %v728 = vrot.slane %v726, 5
      %v729 = vor.u32 %v725, %v728
      %v730 = vrot.slane %v729, 4
      %v732 = vshll.u32 %v258, 16
      %v734 = vrot.slane %v732, 5
      %v735 = vsel %vm477, %v730, %v734
      %v736 = vshrl.u32 %v256, 16
      %v738 = vrot.slane %v736, 4
      %v739 = vor.u32 %v738, %v706
      %v740 = vrot.slane %v739, 4
      %v742 = vshll.u32 %v436, 16
      %v744 = vrot.slane %v742, 5
      %v745 = vsel %vm477, %v740, %v744
      %v746 = vshrl.u32 %v257, 16
      %v748 = vrot.slane %v746, 4
      %v749 = vor.u32 %v748, %v720
      %v750 = vrot.slane %v749, 4
      %v752 = vshll.u32 %v437, 16
      %v754 = vrot.slane %v752, 5
      %v755 = vsel %vm477, %v750, %v754
      %v756 = vshrl.u32 %v258, 16
      %v758 = vrot.slane %v756, 4
      %v759 = vor.u32 %v758, %v734
      %v760 = vrot.slane %v759, 4
      %v762 = vshll.u32 %v438, 16
      %v764 = vrot.slane %v762, 5
      %v765 = vsel %vm477, %v760, %v764
      %v767 = vshrl.u32 %v259, 16
      %v769 = vrot.slane %v767, 4
      %v770 = vshll.u32 %v259, 16
      %v772 = vrot.slane %v770, 5
      %v773 = vor.u32 %v769, %v772
      %v774 = vrot.slane %v773, 4
      %v776 = vshll.u32 %v262, 16
      %v778 = vrot.slane %v776, 5
      %v779 = vsel %vm477, %v774, %v778
      %v781 = vshrl.u32 %v260, 16
      %v783 = vrot.slane %v781, 4
      %v784 = vshll.u32 %v260, 16
      %v786 = vrot.slane %v784, 5
      %v787 = vor.u32 %v783, %v786
      %v788 = vrot.slane %v787, 4
      %v790 = vshll.u32 %v263, 16
      %v792 = vrot.slane %v790, 5
      %v793 = vsel %vm477, %v788, %v792
      %v795 = vshrl.u32 %v261, 16
      %v797 = vrot.slane %v795, 4
      %v798 = vshll.u32 %v261, 16
      %v800 = vrot.slane %v798, 5
      %v801 = vor.u32 %v797, %v800
      %v802 = vrot.slane %v801, 4
      %v804 = vshll.u32 %v264, 16
      %v806 = vrot.slane %v804, 5
      %v807 = vsel %vm477, %v802, %v806
      %v808 = vshrl.u32 %v262, 16
      %v810 = vrot.slane %v808, 4
      %v811 = vor.u32 %v810, %v778
      %v812 = vrot.slane %v811, 4
      %v814 = vshll.u32 %v439, 16
      %v816 = vrot.slane %v814, 5
      %v817 = vsel %vm477, %v812, %v816
      %v818 = vshrl.u32 %v263, 16
      %v820 = vrot.slane %v818, 4
      %v821 = vor.u32 %v820, %v792
      %v822 = vrot.slane %v821, 4
      %v824 = vshll.u32 %v440, 16
      %v826 = vrot.slane %v824, 5
      %v827 = vsel %vm477, %v822, %v826
      %v828 = vshrl.u32 %v264, 16
      %v830 = vrot.slane %v828, 4
      %v831 = vor.u32 %v830, %v806
      %v832 = vrot.slane %v831, 4
      %v834 = vshll.u32 %v441, 16
      %v836 = vrot.slane %v834, 5
      %v837 = vsel %vm477, %v832, %v836
      %v839 = vshrl.u32 %v265, 16
      %v841 = vrot.slane %v839, 4
      %v842 = vshll.u32 %v265, 16
      %v844 = vrot.slane %v842, 5
      %v845 = vor.u32 %v841, %v844
      %v846 = vrot.slane %v845, 4
      %v848 = vshll.u32 %v268, 16
      %v850 = vrot.slane %v848, 5
      %v851 = vsel %vm477, %v846, %v850
      %v853 = vshrl.u32 %v266, 16
      %v855 = vrot.slane %v853, 4
      %v856 = vshll.u32 %v266, 16
      %v858 = vrot.slane %v856, 5
      %v859 = vor.u32 %v855, %v858
      %v860 = vrot.slane %v859, 4
      %v862 = vshll.u32 %v269, 16
      %v864 = vrot.slane %v862, 5
      %v865 = vsel %vm477, %v860, %v864
      %v867 = vshrl.u32 %v267, 16
      %v869 = vrot.slane %v867, 4
      %v870 = vshll.u32 %v267, 16
      %v872 = vrot.slane %v870, 5
      %v873 = vor.u32 %v869, %v872
      %v874 = vrot.slane %v873, 4
      %v876 = vshll.u32 %v270, 16
      %v878 = vrot.slane %v876, 5
      %v879 = vsel %vm477, %v874, %v878
      %v880 = vshrl.u32 %v268, 16
      %v882 = vrot.slane %v880, 4
      %v883 = vor.u32 %v882, %v850
      %v884 = vrot.slane %v883, 4
      %v886 = vshll.u32 %v442, 16
      %v888 = vrot.slane %v886, 5
      %v889 = vsel %vm477, %v884, %v888
      %v890 = vshrl.u32 %v269, 16
      %v892 = vrot.slane %v890, 4
      %v893 = vor.u32 %v892, %v864
      %v894 = vrot.slane %v893, 4
      %v896 = vshll.u32 %v443, 16
      %v898 = vrot.slane %v896, 5
      %v899 = vsel %vm477, %v894, %v898
      %v900 = vshrl.u32 %v270, 16
      %v902 = vrot.slane %v900, 4
      %v903 = vor.u32 %v902, %v878
      %v904 = vrot.slane %v903, 4
      %v906 = vshll.u32 %v444, 16
      %v908 = vrot.slane %v906, 5
      %v909 = vsel %vm477, %v904, %v908
      %v911 = vshrl.u32 %v271, 16
      %v913 = vrot.slane %v911, 4
      %v914 = vshll.u32 %v271, 16
      %v916 = vrot.slane %v914, 5
      %v917 = vor.u32 %v913, %v916
      %v918 = vrot.slane %v917, 4
      %v920 = vshll.u32 %v274, 16
      %v922 = vrot.slane %v920, 5
      %v923 = vsel %vm477, %v918, %v922
      %v925 = vshrl.u32 %v272, 16
      %v927 = vrot.slane %v925, 4
      %v928 = vshll.u32 %v272, 16
      %v930 = vrot.slane %v928, 5
      %v931 = vor.u32 %v927, %v930
      %v932 = vrot.slane %v931, 4
      %v934 = vshll.u32 %v275, 16
      %v936 = vrot.slane %v934, 5
      %v937 = vsel %vm477, %v932, %v936
      %v939 = vshrl.u32 %v273, 16
      %v941 = vrot.slane %v939, 4
      %v942 = vshll.u32 %v273, 16
      %v944 = vrot.slane %v942, 5
      %v945 = vor.u32 %v941, %v944
      %v946 = vrot.slane %v945, 4
      %v948 = vshll.u32 %v276, 16
      %v950 = vrot.slane %v948, 5
      %v951 = vsel %vm477, %v946, %v950
      %v952 = vshrl.u32 %v274, 16
      %v954 = vrot.slane %v952, 4
      %v955 = vor.u32 %v954, %v922
      %v956 = vrot.slane %v955, 4
      %v958 = vshll.u32 %v445, 16
      %v960 = vrot.slane %v958, 5
      %v961 = vsel %vm477, %v956, %v960
      %v962 = vshrl.u32 %v275, 16
      %v964 = vrot.slane %v962, 4
      %v965 = vor.u32 %v964, %v936
      %v966 = vrot.slane %v965, 4
      %v968 = vshll.u32 %v446, 16
      %v970 = vrot.slane %v968, 5
      %v971 = vsel %vm477, %v966, %v970
      %v972 = vshrl.u32 %v276, 16
      %v974 = vrot.slane %v972, 4
      %v975 = vor.u32 %v974, %v950
      %v976 = vrot.slane %v975, 4
      %v978 = vshll.u32 %v447, 16
      %v980 = vrot.slane %v978, 5
      %v981 = vsel %vm477, %v976, %v980
      %v983 = vshrl.u32 %v277, 16
      %v985 = vrot.slane %v983, 4
      %v986 = vshll.u32 %v277, 16
      %v988 = vrot.slane %v986, 5
      %v989 = vor.u32 %v985, %v988
      %v990 = vrot.slane %v989, 4
      %v992 = vshll.u32 %v280, 16
      %v994 = vrot.slane %v992, 5
      %v995 = vsel %vm477, %v990, %v994
      %v997 = vshrl.u32 %v278, 16
      %v999 = vrot.slane %v997, 4
      %v1000 = vshll.u32 %v278, 16
      %v1002 = vrot.slane %v1000, 5
      %v1003 = vor.u32 %v999, %v1002
      %v1004 = vrot.slane %v1003, 4
      %v1006 = vshll.u32 %v281, 16
      %v1008 = vrot.slane %v1006, 5
      %v1009 = vsel %vm477, %v1004, %v1008
      %v1011 = vshrl.u32 %v279, 16
      %v1013 = vrot.slane %v1011, 4
      %v1014 = vshll.u32 %v279, 16
      %v1016 = vrot.slane %v1014, 5
      %v1017 = vor.u32 %v1013, %v1016
      %v1018 = vrot.slane %v1017, 4
      %v1020 = vshll.u32 %v282, 16
      %v1022 = vrot.slane %v1020, 5
      %v1023 = vsel %vm477, %v1018, %v1022
      %v1024 = vshrl.u32 %v280, 16
      %v1026 = vrot.slane %v1024, 4
      %v1027 = vor.u32 %v1026, %v994
      %v1028 = vrot.slane %v1027, 4
      %v1030 = vshll.u32 %v448, 16
      %v1032 = vrot.slane %v1030, 5
      %v1033 = vsel %vm477, %v1028, %v1032
      %v1034 = vshrl.u32 %v281, 16
      %v1036 = vrot.slane %v1034, 4
      %v1037 = vor.u32 %v1036, %v1008
      %v1038 = vrot.slane %v1037, 4
      %v1040 = vshll.u32 %v449, 16
      %v1042 = vrot.slane %v1040, 5
      %v1043 = vsel %vm477, %v1038, %v1042
      %v1044 = vshrl.u32 %v282, 16
      %v1046 = vrot.slane %v1044, 4
      %v1047 = vor.u32 %v1046, %v1022
      %v1048 = vrot.slane %v1047, 4
      %v1050 = vshll.u32 %v450, 16
      %v1052 = vrot.slane %v1050, 5
      %v1053 = vsel %vm477, %v1048, %v1052
      %v1055 = vshrl.u32 %v283, 16
      %v1057 = vrot.slane %v1055, 4
      %v1058 = vshll.u32 %v283, 16
      %v1060 = vrot.slane %v1058, 5
      %v1061 = vor.u32 %v1057, %v1060
      %v1062 = vrot.slane %v1061, 4
      %v1064 = vshll.u32 %v286, 16
      %v1066 = vrot.slane %v1064, 5
      %v1067 = vsel %vm477, %v1062, %v1066
      %v1069 = vshrl.u32 %v284, 16
      %v1071 = vrot.slane %v1069, 4
      %v1072 = vshll.u32 %v284, 16
      %v1074 = vrot.slane %v1072, 5
      %v1075 = vor.u32 %v1071, %v1074
      %v1076 = vrot.slane %v1075, 4
      %v1078 = vshll.u32 %v287, 16
      %v1080 = vrot.slane %v1078, 5
      %v1081 = vsel %vm477, %v1076, %v1080
      %v1083 = vshrl.u32 %v285, 16
      %v1085 = vrot.slane %v1083, 4
      %v1086 = vshll.u32 %v285, 16
      %v1088 = vrot.slane %v1086, 5
      %v1089 = vor.u32 %v1085, %v1088
      %v1090 = vrot.slane %v1089, 4
      %v1092 = vshll.u32 %v288, 16
      %v1094 = vrot.slane %v1092, 5
      %v1095 = vsel %vm477, %v1090, %v1094
      %v1096 = vshrl.u32 %v286, 16
      %v1098 = vrot.slane %v1096, 4
      %v1099 = vor.u32 %v1098, %v1066
      %v1100 = vrot.slane %v1099, 4
      %v1102 = vshll.u32 %v451, 16
      %v1104 = vrot.slane %v1102, 5
      %v1105 = vsel %vm477, %v1100, %v1104
      %v1106 = vshrl.u32 %v287, 16
      %v1108 = vrot.slane %v1106, 4
      %v1109 = vor.u32 %v1108, %v1080
      %v1110 = vrot.slane %v1109, 4
      %v1112 = vshll.u32 %v452, 16
      %v1114 = vrot.slane %v1112, 5
      %v1115 = vsel %vm477, %v1110, %v1114
      %v1116 = vshrl.u32 %v288, 16
      %v1118 = vrot.slane %v1116, 4
      %v1119 = vor.u32 %v1118, %v1094
      %v1120 = vrot.slane %v1119, 4
      %v1122 = vshll.u32 %v453, 16
      %v1124 = vrot.slane %v1122, 5
      %v1125 = vsel %vm477, %v1120, %v1124
      %v1127 = vshrl.u32 %v289, 16
      %v1129 = vrot.slane %v1127, 4
      %v1130 = vshll.u32 %v289, 16
      %v1132 = vrot.slane %v1130, 5
      %v1133 = vor.u32 %v1129, %v1132
      %v1134 = vrot.slane %v1133, 4
      %v1136 = vshll.u32 %v292, 16
      %v1138 = vrot.slane %v1136, 5
      %v1139 = vsel %vm477, %v1134, %v1138
      %v1141 = vshrl.u32 %v290, 16
      %v1143 = vrot.slane %v1141, 4
      %v1144 = vshll.u32 %v290, 16
      %v1146 = vrot.slane %v1144, 5
      %v1147 = vor.u32 %v1143, %v1146
      %v1148 = vrot.slane %v1147, 4
      %v1150 = vshll.u32 %v293, 16
      %v1152 = vrot.slane %v1150, 5
      %v1153 = vsel %vm477, %v1148, %v1152
      %v1155 = vshrl.u32 %v291, 16
      %v1157 = vrot.slane %v1155, 4
      %v1158 = vshll.u32 %v291, 16
      %v1160 = vrot.slane %v1158, 5
      %v1161 = vor.u32 %v1157, %v1160
      %v1162 = vrot.slane %v1161, 4
      %v1164 = vshll.u32 %v294, 16
      %v1166 = vrot.slane %v1164, 5
      %v1167 = vsel %vm477, %v1162, %v1166
      %v1168 = vshrl.u32 %v292, 16
      %v1170 = vrot.slane %v1168, 4
      %v1171 = vor.u32 %v1170, %v1138
      %v1172 = vrot.slane %v1171, 4
      %v1174 = vshll.u32 %v454, 16
      %v1176 = vrot.slane %v1174, 5
      %v1177 = vsel %vm477, %v1172, %v1176
      %v1178 = vshrl.u32 %v293, 16
      %v1180 = vrot.slane %v1178, 4
      %v1181 = vor.u32 %v1180, %v1152
      %v1182 = vrot.slane %v1181, 4
      %v1184 = vshll.u32 %v455, 16
      %v1186 = vrot.slane %v1184, 5
      %v1187 = vsel %vm477, %v1182, %v1186
      %v1188 = vshrl.u32 %v294, 16
      %v1190 = vrot.slane %v1188, 4
      %v1191 = vor.u32 %v1190, %v1166
      %v1192 = vrot.slane %v1191, 4
      %v1194 = vshll.u32 %v456, 16
      %v1196 = vrot.slane %v1194, 5
      %v1197 = vsel %vm477, %v1192, %v1196
      %v1199 = vshrl.u32 %v295, 16
      %v1201 = vrot.slane %v1199, 4
      %v1202 = vshll.u32 %v295, 16
      %v1204 = vrot.slane %v1202, 5
      %v1205 = vor.u32 %v1201, %v1204
      %v1206 = vrot.slane %v1205, 4
      %v1208 = vshll.u32 %v298, 16
      %v1210 = vrot.slane %v1208, 5
      %v1211 = vsel %vm477, %v1206, %v1210
      %v1213 = vshrl.u32 %v296, 16
      %v1215 = vrot.slane %v1213, 4
      %v1216 = vshll.u32 %v296, 16
      %v1218 = vrot.slane %v1216, 5
      %v1219 = vor.u32 %v1215, %v1218
      %v1220 = vrot.slane %v1219, 4
      %v1222 = vshll.u32 %v299, 16
      %v1224 = vrot.slane %v1222, 5
      %v1225 = vsel %vm477, %v1220, %v1224
      %v1227 = vshrl.u32 %v297, 16
      %v1229 = vrot.slane %v1227, 4
      %v1230 = vshll.u32 %v297, 16
      %v1232 = vrot.slane %v1230, 5
      %v1233 = vor.u32 %v1229, %v1232
      %v1234 = vrot.slane %v1233, 4
      %v1236 = vshll.u32 %v300, 16
      %v1238 = vrot.slane %v1236, 5
      %v1239 = vsel %vm477, %v1234, %v1238
      %v1240 = vshrl.u32 %v298, 16
      %v1242 = vrot.slane %v1240, 4
      %v1243 = vor.u32 %v1242, %v1210
      %v1244 = vrot.slane %v1243, 4
      %v1246 = vshll.u32 %v457, 16
      %v1248 = vrot.slane %v1246, 5
      %v1249 = vsel %vm477, %v1244, %v1248
      %v1250 = vshrl.u32 %v299, 16
      %v1252 = vrot.slane %v1250, 4
      %v1253 = vor.u32 %v1252, %v1224
      %v1254 = vrot.slane %v1253, 4
      %v1256 = vshll.u32 %v458, 16
      %v1258 = vrot.slane %v1256, 5
      %v1259 = vsel %vm477, %v1254, %v1258
      %v1260 = vshrl.u32 %v300, 16
      %v1262 = vrot.slane %v1260, 4
      %v1263 = vor.u32 %v1262, %v1238
      %v1264 = vrot.slane %v1263, 4
      %v1266 = vshll.u32 %v459, 16
      %v1268 = vrot.slane %v1266, 5
      %v1269 = vsel %vm477, %v1264, %v1268
      %v1271 = vshrl.u32 %v301, 16
      %v1273 = vrot.slane %v1271, 4
      %v1274 = vshll.u32 %v301, 16
      %v1276 = vrot.slane %v1274, 5
      %v1277 = vor.u32 %v1273, %v1276
      %v1278 = vrot.slane %v1277, 4
      %v1280 = vshll.u32 %v304, 16
      %v1282 = vrot.slane %v1280, 5
      %v1283 = vsel %vm477, %v1278, %v1282
      %v1285 = vshrl.u32 %v302, 16
      %v1287 = vrot.slane %v1285, 4
      %v1288 = vshll.u32 %v302, 16
      %v1290 = vrot.slane %v1288, 5
      %v1291 = vor.u32 %v1287, %v1290
      %v1292 = vrot.slane %v1291, 4
      %v1294 = vshll.u32 %v305, 16
      %v1296 = vrot.slane %v1294, 5
      %v1297 = vsel %vm477, %v1292, %v1296
      %v1299 = vshrl.u32 %v303, 16
      %v1301 = vrot.slane %v1299, 4
      %v1302 = vshll.u32 %v303, 16
      %v1304 = vrot.slane %v1302, 5
      %v1305 = vor.u32 %v1301, %v1304
      %v1306 = vrot.slane %v1305, 4
      %v1308 = vshll.u32 %v306, 16
      %v1310 = vrot.slane %v1308, 5
      %v1311 = vsel %vm477, %v1306, %v1310
      %v1312 = vshrl.u32 %v304, 16
      %v1314 = vrot.slane %v1312, 4
      %v1315 = vor.u32 %v1314, %v1282
      %v1316 = vrot.slane %v1315, 4
      %v1318 = vshll.u32 %v460, 16
      %v1320 = vrot.slane %v1318, 5
      %v1321 = vsel %vm477, %v1316, %v1320
      %v1322 = vshrl.u32 %v305, 16
      %v1324 = vrot.slane %v1322, 4
      %v1325 = vor.u32 %v1324, %v1296
      %v1326 = vrot.slane %v1325, 4
      %v1328 = vshll.u32 %v461, 16
      %v1330 = vrot.slane %v1328, 5
      %v1331 = vsel %vm477, %v1326, %v1330
      %v1332 = vshrl.u32 %v306, 16
      %v1334 = vrot.slane %v1332, 4
      %v1335 = vor.u32 %v1334, %v1310
      %v1336 = vrot.slane %v1335, 4
      %v1338 = vshll.u32 %v462, 16
      %v1340 = vrot.slane %v1338, 5
      %v1341 = vsel %vm477, %v1336, %v1340
      %v1343 = vshrl.u32 %v307, 16
      %v1345 = vrot.slane %v1343, 4
      %v1346 = vshll.u32 %v307, 16
      %v1348 = vrot.slane %v1346, 5
      %v1349 = vor.u32 %v1345, %v1348
      %v1350 = vrot.slane %v1349, 4
      %v1352 = vshll.u32 %v310, 16
      %v1354 = vrot.slane %v1352, 5
      %v1355 = vsel %vm477, %v1350, %v1354
      %v1357 = vshrl.u32 %v308, 16
      %v1359 = vrot.slane %v1357, 4
      %v1360 = vshll.u32 %v308, 16
      %v1362 = vrot.slane %v1360, 5
      %v1363 = vor.u32 %v1359, %v1362
      %v1364 = vrot.slane %v1363, 4
      %v1366 = vshll.u32 %v311, 16
      %v1368 = vrot.slane %v1366, 5
      %v1369 = vsel %vm477, %v1364, %v1368
      %v1371 = vshrl.u32 %v309, 16
      %v1373 = vrot.slane %v1371, 4
      %v1374 = vshll.u32 %v309, 16
      %v1376 = vrot.slane %v1374, 5
      %v1377 = vor.u32 %v1373, %v1376
      %v1378 = vrot.slane %v1377, 4
      %v1380 = vshll.u32 %v312, 16
      %v1382 = vrot.slane %v1380, 5
      %v1383 = vsel %vm477, %v1378, %v1382
      %v1384 = vshrl.u32 %v310, 16
      %v1386 = vrot.slane %v1384, 4
      %v1387 = vor.u32 %v1386, %v1354
      %v1388 = vrot.slane %v1387, 4
      %v1390 = vshll.u32 %v463, 16
      %v1392 = vrot.slane %v1390, 5
      %v1393 = vsel %vm477, %v1388, %v1392
      %v1394 = vshrl.u32 %v311, 16
      %v1396 = vrot.slane %v1394, 4
      %v1397 = vor.u32 %v1396, %v1368
      %v1398 = vrot.slane %v1397, 4
      %v1400 = vshll.u32 %v464, 16
      %v1402 = vrot.slane %v1400, 5
      %v1403 = vsel %vm477, %v1398, %v1402
      %v1404 = vshrl.u32 %v312, 16
      %v1406 = vrot.slane %v1404, 4
      %v1407 = vor.u32 %v1406, %v1382
      %v1408 = vrot.slane %v1407, 4
      %v1410 = vshll.u32 %v465, 16
      %v1412 = vrot.slane %v1410, 5
      %v1413 = vsel %vm477, %v1408, %v1412
      %v1415 = vshrl.u32 %v313, 16
      %v1417 = vrot.slane %v1415, 4
      %v1418 = vshll.u32 %v313, 16
      %v1420 = vrot.slane %v1418, 5
      %v1421 = vor.u32 %v1417, %v1420
      %v1422 = vrot.slane %v1421, 4
      %v1424 = vshll.u32 %v316, 16
      %v1426 = vrot.slane %v1424, 5
      %v1427 = vsel %vm477, %v1422, %v1426
      %v1429 = vshrl.u32 %v314, 16
      %v1431 = vrot.slane %v1429, 4
      %v1432 = vshll.u32 %v314, 16
      %v1434 = vrot.slane %v1432, 5
      %v1435 = vor.u32 %v1431, %v1434
      %v1436 = vrot.slane %v1435, 4
      %v1438 = vshll.u32 %v317, 16
      %v1440 = vrot.slane %v1438, 5
      %v1441 = vsel %vm477, %v1436, %v1440
      %v1443 = vshrl.u32 %v315, 16
      %v1445 = vrot.slane %v1443, 4
      %v1446 = vshll.u32 %v315, 16
      %v1448 = vrot.slane %v1446, 5
      %v1449 = vor.u32 %v1445, %v1448
      %v1450 = vrot.slane %v1449, 4
      %v1452 = vshll.u32 %v318, 16
      %v1454 = vrot.slane %v1452, 5
      %v1455 = vsel %vm477, %v1450, %v1454
      %v1456 = vshrl.u32 %v316, 16
      %v1458 = vrot.slane %v1456, 4
      %v1459 = vor.u32 %v1458, %v1426
      %v1460 = vrot.slane %v1459, 4
      %v1462 = vshll.u32 %v466, 16
      %v1464 = vrot.slane %v1462, 5
      %v1465 = vsel %vm477, %v1460, %v1464
      %v1466 = vshrl.u32 %v317, 16
      %v1468 = vrot.slane %v1466, 4
      %v1469 = vor.u32 %v1468, %v1440
      %v1470 = vrot.slane %v1469, 4
      %v1472 = vshll.u32 %v467, 16
      %v1474 = vrot.slane %v1472, 5
      %v1475 = vsel %vm477, %v1470, %v1474
      %v1476 = vshrl.u32 %v318, 16
      %v1478 = vrot.slane %v1476, 4
      %v1479 = vor.u32 %v1478, %v1454
      %v1480 = vrot.slane %v1479, 4
      %v1482 = vshll.u32 %v468, 16
      %v1484 = vrot.slane %v1482, 5
      %v1485 = vsel %vm477, %v1480, %v1484
      %v1487 = vshrl.u32 %v319, 16
      %v1489 = vrot.slane %v1487, 4
      %v1490 = vshll.u32 %v319, 16
      %v1492 = vrot.slane %v1490, 5
      %v1493 = vor.u32 %v1489, %v1492
      %v1494 = vrot.slane %v1493, 4
      %v1496 = vshll.u32 %v322, 16
      %v1498 = vrot.slane %v1496, 5
      %v1499 = vsel %vm477, %v1494, %v1498
      %v1501 = vshrl.u32 %v320, 16
      %v1503 = vrot.slane %v1501, 4
      %v1504 = vshll.u32 %v320, 16
      %v1506 = vrot.slane %v1504, 5
      %v1507 = vor.u32 %v1503, %v1506
      %v1508 = vrot.slane %v1507, 4
      %v1510 = vshll.u32 %v323, 16
      %v1512 = vrot.slane %v1510, 5
      %v1513 = vsel %vm477, %v1508, %v1512
      %v1515 = vshrl.u32 %v321, 16
      %v1517 = vrot.slane %v1515, 4
      %v1518 = vshll.u32 %v321, 16
      %v1520 = vrot.slane %v1518, 5
      %v1521 = vor.u32 %v1517, %v1520
      %v1522 = vrot.slane %v1521, 4
      %v1524 = vshll.u32 %v324, 16
      %v1526 = vrot.slane %v1524, 5
      %v1527 = vsel %vm477, %v1522, %v1526
      %v1528 = vshrl.u32 %v322, 16
      %v1530 = vrot.slane %v1528, 4
      %v1531 = vor.u32 %v1530, %v1498
      %v1532 = vrot.slane %v1531, 4
      %v1534 = vshll.u32 %v469, 16
      %v1536 = vrot.slane %v1534, 5
      %v1537 = vsel %vm477, %v1532, %v1536
      %v1538 = vshrl.u32 %v323, 16
      %v1540 = vrot.slane %v1538, 4
      %v1541 = vor.u32 %v1540, %v1512
      %v1542 = vrot.slane %v1541, 4
      %v1544 = vshll.u32 %v470, 16
      %v1546 = vrot.slane %v1544, 5
      %v1547 = vsel %vm477, %v1542, %v1546
      %v1548 = vshrl.u32 %v324, 16
      %v1550 = vrot.slane %v1548, 4
      %v1551 = vor.u32 %v1550, %v1526
      %v1552 = vrot.slane %v1551, 4
      %v1554 = vshll.u32 %v471, 16
      %v1556 = vrot.slane %v1554, 5
      %v1557 = vsel %vm477, %v1552, %v1556
      %v1559 = vshrl.u32 %v325, 16
      %v1561 = vrot.slane %v1559, 4
      %v1562 = vshll.u32 %v325, 16
      %v1564 = vrot.slane %v1562, 5
      %v1565 = vor.u32 %v1561, %v1564
      %v1566 = vrot.slane %v1565, 4
      %v1568 = vshll.u32 %v328, 16
      %v1570 = vrot.slane %v1568, 5
      %v1571 = vsel %vm477, %v1566, %v1570
      %v1573 = vshrl.u32 %v326, 16
      %v1575 = vrot.slane %v1573, 4
      %v1576 = vshll.u32 %v326, 16
      %v1578 = vrot.slane %v1576, 5
      %v1579 = vor.u32 %v1575, %v1578
      %v1580 = vrot.slane %v1579, 4
      %v1582 = vshll.u32 %v329, 16
      %v1584 = vrot.slane %v1582, 5
      %v1585 = vsel %vm477, %v1580, %v1584
      %v1587 = vshrl.u32 %v327, 16
      %v1589 = vrot.slane %v1587, 4
      %v1590 = vshll.u32 %v327, 16
      %v1592 = vrot.slane %v1590, 5
      %v1593 = vor.u32 %v1589, %v1592
      %v1594 = vrot.slane %v1593, 4
      %v1596 = vshll.u32 %v330, 16
      %v1598 = vrot.slane %v1596, 5
      %v1599 = vsel %vm477, %v1594, %v1598
      %v1600 = vshrl.u32 %v328, 16
      %v1602 = vrot.slane %v1600, 4
      %v1603 = vor.u32 %v1602, %v1570
      %v1604 = vrot.slane %v1603, 4
      %v1606 = vshll.u32 %v472, 16
      %v1608 = vrot.slane %v1606, 5
      %v1609 = vsel %vm477, %v1604, %v1608
      %v1610 = vshrl.u32 %v329, 16
      %v1612 = vrot.slane %v1610, 4
      %v1613 = vor.u32 %v1612, %v1584
      %v1614 = vrot.slane %v1613, 4
      %v1616 = vshll.u32 %v473, 16
      %v1618 = vrot.slane %v1616, 5
      %v1619 = vsel %vm477, %v1614, %v1618
      %v1620 = vshrl.u32 %v330, 16
      %v1622 = vrot.slane %v1620, 4
      %v1623 = vor.u32 %v1622, %v1598
      %v1624 = vrot.slane %v1623, 4
      %v1626 = vshll.u32 %v474, 16
      %v1628 = vrot.slane %v1626, 5
      %v1629 = vsel %vm477, %v1624, %v1628
      %s1630 = scalar_lea.vmem %s1, 384
      %v1631 = vld [vmem:[%s1630] sm:$0xf]
      %v1632 = vld [vmem:[%s1630 + $0x4] sm:$0xf]
      %v1633 = vld [vmem:[%s1630 + $0x8] sm:$0xf]
      %v1634 = vld [vmem:[%s1630 + $0xc] sm:$0xf]
      %v1635 = vld [vmem:[%s1630 + $0x10] sm:$0xf]
      %v1636 = vld [vmem:[%s1630 + $0x14] sm:$0xf]
      %v1637 = vld [vmem:[%s1630 + $0x18] sm:$0xf]
      %v1638 = vld [vmem:[%s1630 + $0x1c] sm:$0xf]
      %v1639 = vld [vmem:[%s1630 + $0x20] sm:$0xf]
      %v1640 = vld [vmem:[%s1630 + $0x24] sm:$0xf]
      %v1641 = vld [vmem:[%s1630 + $0x28] sm:$0xf]
      %v1642 = vld [vmem:[%s1630 + $0x2c] sm:$0xf]
      %v1643 = vld [vmem:[%s1630 + $0x30] sm:$0xf]
      %v1644 = vld [vmem:[%s1630 + $0x34] sm:$0xf]
      %v1645 = vld [vmem:[%s1630 + $0x38] sm:$0xf]
      %v1646 = vld [vmem:[%s1630 + $0x3c] sm:$0xf]
      %v1647 = vld [vmem:[%s1630 + $0x40] sm:$0xf]
      %v1648 = vld [vmem:[%s1630 + $0x44] sm:$0xf]
      %v1649 = vld [vmem:[%s1630 + $0x48] sm:$0xf]
      %v1650 = vld [vmem:[%s1630 + $0x4c] sm:$0xf]
      %v1651 = vld [vmem:[%s1630 + $0x50] sm:$0xf]
      %v1652 = vld [vmem:[%s1630 + $0x54] sm:$0xf]
      %v1653 = vld [vmem:[%s1630 + $0x58] sm:$0xf]
      %v1654 = vld [vmem:[%s1630 + $0x5c] sm:$0xf]
      %v1655 = vld [vmem:[%s1630 + $0x60] sm:$0xf]
      %v1656 = vld [vmem:[%s1630 + $0x64] sm:$0xf]
      %v1657 = vld [vmem:[%s1630 + $0x68] sm:$0xf]
      %v1658 = vld [vmem:[%s1630 + $0x6c] sm:$0xf]
      %v1659 = vld [vmem:[%s1630 + $0x70] sm:$0xf]
      %v1660 = vld [vmem:[%s1630 + $0x74] sm:$0xf]
      %v1661 = vld [vmem:[%s1630 + $0x78] sm:$0xf]
      %v1662 = vld [vmem:[%s1630 + $0x7c] sm:$0xf]
      %v1663 = vld [vmem:[%s1630 + $0x80] sm:$0xf]
      %v1664 = vld [vmem:[%s1630 + $0x84] sm:$0xf]
      %v1665 = vld [vmem:[%s1630 + $0x88] sm:$0xf]
      %v1666 = vld [vmem:[%s1630 + $0x8c] sm:$0xf]
      %v1667 = vld [vmem:[%s1630 + $0x90] sm:$0xf]
      %v1668 = vld [vmem:[%s1630 + $0x94] sm:$0xf]
      %v1669 = vld [vmem:[%s1630 + $0x98] sm:$0xf]
      %v1670 = vld [vmem:[%s1630 + $0x9c] sm:$0xf]
      %v1671 = vld [vmem:[%s1630 + $0xa0] sm:$0xf]
      %v1672 = vld [vmem:[%s1630 + $0xa4] sm:$0xf]
      %v1673 = vld [vmem:[%s1630 + $0xa8] sm:$0xf]
      %v1674 = vld [vmem:[%s1630 + $0xac] sm:$0xf]
      %v1675 = vld [vmem:[%s1630 + $0xb0] sm:$0xf]
      %v1676 = vld [vmem:[%s1630 + $0xb4] sm:$0xf]
      %v1677 = vld [vmem:[%s1630 + $0xb8] sm:$0xf]
      %v1678 = vld [vmem:[%s1630 + $0xbc] sm:$0xf]
      %v1679 = vld [vmem:[%s1630 + $0xc0] sm:$0xf]
      %v1680 = vld [vmem:[%s1630 + $0xc4] sm:$0xf]
      %v1681 = vld [vmem:[%s1630 + $0xc8] sm:$0xf]
      %v1682 = vld [vmem:[%s1630 + $0xcc] sm:$0xf]
      %v1683 = vld [vmem:[%s1630 + $0xd0] sm:$0xf]
      %v1684 = vld [vmem:[%s1630 + $0xd4] sm:$0xf]
      %v1685 = vld [vmem:[%s1630 + $0xd8] sm:$0xf]
      %v1686 = vld [vmem:[%s1630 + $0xdc] sm:$0xf]
      %v1687 = vld [vmem:[%s1630 + $0xe0] sm:$0xf]
      %v1688 = vld [vmem:[%s1630 + $0xe4] sm:$0xf]
      %v1689 = vld [vmem:[%s1630 + $0xe8] sm:$0xf]
      %v1690 = vld [vmem:[%s1630 + $0xec] sm:$0xf]
      %v1691 = vld [vmem:[%s1630 + $0xf0] sm:$0xf]
      %v1692 = vld [vmem:[%s1630 + $0xf4] sm:$0xf]
      %v1693 = vld [vmem:[%s1630 + $0xf8] sm:$0xf]
      %v1694 = vld [vmem:[%s1630 + $0xfc] sm:$0xf]
      %v1695 = vld [vmem:[%s1630 + $0x100] sm:$0xf]
      %v1696 = vld [vmem:[%s1630 + $0x104] sm:$0xf]
      %v1697 = vld [vmem:[%s1630 + $0x108] sm:$0xf]
      %v1698 = vld [vmem:[%s1630 + $0x10c] sm:$0xf]
      %v1699 = vld [vmem:[%s1630 + $0x110] sm:$0xf]
      %v1700 = vld [vmem:[%s1630 + $0x114] sm:$0xf]
      %v1701 = vld [vmem:[%s1630 + $0x118] sm:$0xf]
      %v1702 = vld [vmem:[%s1630 + $0x11c] sm:$0xf]
      %v1703 = vld [vmem:[%s1630 + $0x120] sm:$0xf]
      %v1704 = vld [vmem:[%s1630 + $0x124] sm:$0xf]
      %v1705 = vld [vmem:[%s1630 + $0x128] sm:$0xf]
      %v1706 = vld [vmem:[%s1630 + $0x12c] sm:$0xf]
      %v1707 = vld [vmem:[%s1630 + $0x130] sm:$0xf]
      %v1708 = vld [vmem:[%s1630 + $0x134] sm:$0xf]
      %v1709 = vld [vmem:[%s1630 + $0x138] sm:$0xf]
      %v1710 = vld [vmem:[%s1630 + $0x13c] sm:$0xf]
      %v1711 = vld [vmem:[%s1630 + $0x140] sm:$0xf]
      %v1712 = vld [vmem:[%s1630 + $0x144] sm:$0xf]
      %v1713 = vld [vmem:[%s1630 + $0x148] sm:$0xf]
      %v1714 = vld [vmem:[%s1630 + $0x14c] sm:$0xf]
      %v1715 = vld [vmem:[%s1630 + $0x150] sm:$0xf]
      %v1716 = vld [vmem:[%s1630 + $0x154] sm:$0xf]
      %v1717 = vld [vmem:[%s1630 + $0x158] sm:$0xf]
      %v1718 = vld [vmem:[%s1630 + $0x15c] sm:$0xf]
      %v1719 = vld [vmem:[%s1630 + $0x160] sm:$0xf]
      %v1720 = vld [vmem:[%s1630 + $0x164] sm:$0xf]
      %v1721 = vld [vmem:[%s1630 + $0x168] sm:$0xf]
      %v1722 = vld [vmem:[%s1630 + $0x16c] sm:$0xf]
      %v1723 = vld [vmem:[%s1630 + $0x170] sm:$0xf]
      %v1724 = vld [vmem:[%s1630 + $0x174] sm:$0xf]
      %v1725 = vld [vmem:[%s1630 + $0x178] sm:$0xf]
      %v1726 = vld [vmem:[%s1630 + $0x17c] sm:$0xf]
      %v1727 = vunpack.c.l.b16 %v491
      %v1728 = vunpack.c.h.b16 %v491
      %v1729 = vunpack.c.l.b16 %v505
      %v1730 = vunpack.c.h.b16 %v505
      %v1731 = vunpack.c.l.b16 %v519
      %v1732 = vunpack.c.h.b16 %v519
      %v1733 = vunpack.c.l.b16 %v529
      %v1734 = vunpack.c.h.b16 %v529
      %v1735 = vunpack.c.l.b16 %v539
      %v1736 = vunpack.c.h.b16 %v539
      %v1737 = vunpack.c.l.b16 %v549
      %v1738 = vunpack.c.h.b16 %v549
      %v1739 = vunpack.c.l.b16 %v563
      %v1740 = vunpack.c.h.b16 %v563
      %v1741 = vunpack.c.l.b16 %v577
      %v1742 = vunpack.c.h.b16 %v577
      %v1743 = vunpack.c.l.b16 %v591
      %v1744 = vunpack.c.h.b16 %v591
      %v1745 = vunpack.c.l.b16 %v601
      %v1746 = vunpack.c.h.b16 %v601
      %v1747 = vunpack.c.l.b16 %v611
      %v1748 = vunpack.c.h.b16 %v611
      %v1749 = vunpack.c.l.b16 %v621
      %v1750 = vunpack.c.h.b16 %v621
      %v1751 = vunpack.c.l.b16 %v635
      %v1752 = vunpack.c.h.b16 %v635
      %v1753 = vunpack.c.l.b16 %v649
      %v1754 = vunpack.c.h.b16 %v649
      %v1755 = vunpack.c.l.b16 %v663
      %v1756 = vunpack.c.h.b16 %v663
      %v1757 = vunpack.c.l.b16 %v673
      %v1758 = vunpack.c.h.b16 %v673
      %v1759 = vunpack.c.l.b16 %v683
      %v1760 = vunpack.c.h.b16 %v683
      %v1761 = vunpack.c.l.b16 %v693
      %v1762 = vunpack.c.h.b16 %v693
      %v1763 = vunpack.c.l.b16 %v707
      %v1764 = vunpack.c.h.b16 %v707
      %v1765 = vunpack.c.l.b16 %v721
      %v1766 = vunpack.c.h.b16 %v721
      %v1767 = vunpack.c.l.b16 %v735
      %v1768 = vunpack.c.h.b16 %v735
      %v1769 = vunpack.c.l.b16 %v745
      %v1770 = vunpack.c.h.b16 %v745
      %v1771 = vunpack.c.l.b16 %v755
      %v1772 = vunpack.c.h.b16 %v755
      %v1773 = vunpack.c.l.b16 %v765
      %v1774 = vunpack.c.h.b16 %v765
      %v1775 = vunpack.c.l.b16 %v779
      %v1776 = vunpack.c.h.b16 %v779
      %v1777 = vunpack.c.l.b16 %v793
      %v1778 = vunpack.c.h.b16 %v793
      %v1779 = vunpack.c.l.b16 %v807
      %v1780 = vunpack.c.h.b16 %v807
      %v1781 = vunpack.c.l.b16 %v817
      %v1782 = vunpack.c.h.b16 %v817
      %v1783 = vunpack.c.l.b16 %v827
      %v1784 = vunpack.c.h.b16 %v827
      %v1785 = vunpack.c.l.b16 %v837
      %v1786 = vunpack.c.h.b16 %v837
      %v1787 = vunpack.c.l.b16 %v851
      %v1788 = vunpack.c.h.b16 %v851
      %v1789 = vunpack.c.l.b16 %v865
      %v1790 = vunpack.c.h.b16 %v865
      %v1791 = vunpack.c.l.b16 %v879
      %v1792 = vunpack.c.h.b16 %v879
      %v1793 = vunpack.c.l.b16 %v889
      %v1794 = vunpack.c.h.b16 %v889
      %v1795 = vunpack.c.l.b16 %v899
      %v1796 = vunpack.c.h.b16 %v899
      %v1797 = vunpack.c.l.b16 %v909
      %v1798 = vunpack.c.h.b16 %v909
      %v1799 = vunpack.c.l.b16 %v923
      %v1800 = vunpack.c.h.b16 %v923
      %v1801 = vunpack.c.l.b16 %v937
      %v1802 = vunpack.c.h.b16 %v937
      %v1803 = vunpack.c.l.b16 %v951
      %v1804 = vunpack.c.h.b16 %v951
      %v1805 = vunpack.c.l.b16 %v961
      %v1806 = vunpack.c.h.b16 %v961
      %v1807 = vunpack.c.l.b16 %v971
      %v1808 = vunpack.c.h.b16 %v971
      %v1809 = vunpack.c.l.b16 %v981
      %v1810 = vunpack.c.h.b16 %v981
      %v1811 = vunpack.c.l.b16 %v995
      %v1812 = vunpack.c.h.b16 %v995
      %v1813 = vunpack.c.l.b16 %v1009
      %v1814 = vunpack.c.h.b16 %v1009
      %v1815 = vunpack.c.l.b16 %v1023
      %v1816 = vunpack.c.h.b16 %v1023
      %v1817 = vunpack.c.l.b16 %v1033
      %v1818 = vunpack.c.h.b16 %v1033
      %v1819 = vunpack.c.l.b16 %v1043
      %v1820 = vunpack.c.h.b16 %v1043
      %v1821 = vunpack.c.l.b16 %v1053
      %v1822 = vunpack.c.h.b16 %v1053
      %v1823 = vunpack.c.l.b16 %v1067
      %v1824 = vunpack.c.h.b16 %v1067
      %v1825 = vunpack.c.l.b16 %v1081
      %v1826 = vunpack.c.h.b16 %v1081
      %v1827 = vunpack.c.l.b16 %v1095
      %v1828 = vunpack.c.h.b16 %v1095
      %v1829 = vunpack.c.l.b16 %v1105
      %v1830 = vunpack.c.h.b16 %v1105
      %v1831 = vunpack.c.l.b16 %v1115
      %v1832 = vunpack.c.h.b16 %v1115
      %v1833 = vunpack.c.l.b16 %v1125
      %v1834 = vunpack.c.h.b16 %v1125
      %v1835 = vunpack.c.l.b16 %v1139
      %v1836 = vunpack.c.h.b16 %v1139
      %v1837 = vunpack.c.l.b16 %v1153
      %v1838 = vunpack.c.h.b16 %v1153
      %v1839 = vunpack.c.l.b16 %v1167
      %v1840 = vunpack.c.h.b16 %v1167
      %v1841 = vunpack.c.l.b16 %v1177
      %v1842 = vunpack.c.h.b16 %v1177
      %v1843 = vunpack.c.l.b16 %v1187
      %v1844 = vunpack.c.h.b16 %v1187
      %v1845 = vunpack.c.l.b16 %v1197
      %v1846 = vunpack.c.h.b16 %v1197
      %v1847 = vunpack.c.l.b16 %v1211
      %v1848 = vunpack.c.h.b16 %v1211
      %v1849 = vunpack.c.l.b16 %v1225
      %v1850 = vunpack.c.h.b16 %v1225
      %v1851 = vunpack.c.l.b16 %v1239
      %v1852 = vunpack.c.h.b16 %v1239
      %v1853 = vunpack.c.l.b16 %v1249
      %v1854 = vunpack.c.h.b16 %v1249
      %v1855 = vunpack.c.l.b16 %v1259
      %v1856 = vunpack.c.h.b16 %v1259
      %v1857 = vunpack.c.l.b16 %v1269
      %v1858 = vunpack.c.h.b16 %v1269
      %v1859 = vunpack.c.l.b16 %v1283
      %v1860 = vunpack.c.h.b16 %v1283
      %v1861 = vunpack.c.l.b16 %v1297
      %v1862 = vunpack.c.h.b16 %v1297
      %v1863 = vunpack.c.l.b16 %v1311
      %v1864 = vunpack.c.h.b16 %v1311
      %v1865 = vunpack.c.l.b16 %v1321
      %v1866 = vunpack.c.h.b16 %v1321
      %v1867 = vunpack.c.l.b16 %v1331
      %v1868 = vunpack.c.h.b16 %v1331
      %v1869 = vunpack.c.l.b16 %v1341
      %v1870 = vunpack.c.h.b16 %v1341
      %v1871 = vunpack.c.l.b16 %v1355
      %v1872 = vunpack.c.h.b16 %v1355
      %v1873 = vunpack.c.l.b16 %v1369
      %v1874 = vunpack.c.h.b16 %v1369
      %v1875 = vunpack.c.l.b16 %v1383
      %v1876 = vunpack.c.h.b16 %v1383
      %v1877 = vunpack.c.l.b16 %v1393
      %v1878 = vunpack.c.h.b16 %v1393
      %v1879 = vunpack.c.l.b16 %v1403
      %v1880 = vunpack.c.h.b16 %v1403
      %v1881 = vunpack.c.l.b16 %v1413
      %v1882 = vunpack.c.h.b16 %v1413
      %v1883 = vunpack.c.l.b16 %v1427
      %v1884 = vunpack.c.h.b16 %v1427
      %v1885 = vunpack.c.l.b16 %v1441
      %v1886 = vunpack.c.h.b16 %v1441
      %v1887 = vunpack.c.l.b16 %v1455
      %v1888 = vunpack.c.h.b16 %v1455
      %v1889 = vunpack.c.l.b16 %v1465
      %v1890 = vunpack.c.h.b16 %v1465
      %v1891 = vunpack.c.l.b16 %v1475
      %v1892 = vunpack.c.h.b16 %v1475
      %v1893 = vunpack.c.l.b16 %v1485
      %v1894 = vunpack.c.h.b16 %v1485
      %v1895 = vunpack.c.l.b16 %v1499
      %v1896 = vunpack.c.h.b16 %v1499
      %v1897 = vunpack.c.l.b16 %v1513
      %v1898 = vunpack.c.h.b16 %v1513
      %v1899 = vunpack.c.l.b16 %v1527
      %v1900 = vunpack.c.h.b16 %v1527
      %v1901 = vunpack.c.l.b16 %v1537
      %v1902 = vunpack.c.h.b16 %v1537
      %v1903 = vunpack.c.l.b16 %v1547
      %v1904 = vunpack.c.h.b16 %v1547
      %v1905 = vunpack.c.l.b16 %v1557
      %v1906 = vunpack.c.h.b16 %v1557
      %v1907 = vunpack.c.l.b16 %v1571
      %v1908 = vunpack.c.h.b16 %v1571
      %v1909 = vunpack.c.l.b16 %v1585
      %v1910 = vunpack.c.h.b16 %v1585
      %v1911 = vunpack.c.l.b16 %v1599
      %v1912 = vunpack.c.h.b16 %v1599
      %v1913 = vunpack.c.l.b16 %v1609
      %v1914 = vunpack.c.h.b16 %v1609
      %v1915 = vunpack.c.l.b16 %v1619
      %v1916 = vunpack.c.h.b16 %v1619
      %v1917 = vunpack.c.l.b16 %v1629
      %v1918 = vunpack.c.h.b16 %v1629
      %v1919 = vpack.c.b16 %v1733, %v1727
      %v1920 = vpack.c.b16 %v1734, %v1728
      %v1921 = vpack.c.b16 %v1735, %v1729
      %v1922 = vpack.c.b16 %v1736, %v1730
      %v1923 = vpack.c.b16 %v1737, %v1731
      %v1924 = vpack.c.b16 %v1738, %v1732
      %v1925 = vpack.c.b16 %v1745, %v1739
      %v1926 = vpack.c.b16 %v1746, %v1740
      %v1927 = vpack.c.b16 %v1747, %v1741
      %v1928 = vpack.c.b16 %v1748, %v1742
      %v1929 = vpack.c.b16 %v1749, %v1743
      %v1930 = vpack.c.b16 %v1750, %v1744
      %v1931 = vpack.c.b16 %v1757, %v1751
      %v1932 = vpack.c.b16 %v1758, %v1752
      %v1933 = vpack.c.b16 %v1759, %v1753
      %v1934 = vpack.c.b16 %v1760, %v1754
      %v1935 = vpack.c.b16 %v1761, %v1755
      %v1936 = vpack.c.b16 %v1762, %v1756
      %v1937 = vpack.c.b16 %v1769, %v1763
      %v1938 = vpack.c.b16 %v1770, %v1764
      %v1939 = vpack.c.b16 %v1771, %v1765
      %v1940 = vpack.c.b16 %v1772, %v1766
      %v1941 = vpack.c.b16 %v1773, %v1767
      %v1942 = vpack.c.b16 %v1774, %v1768
      %v1943 = vpack.c.b16 %v1781, %v1775
      %v1944 = vpack.c.b16 %v1782, %v1776
      %v1945 = vpack.c.b16 %v1783, %v1777
      %v1946 = vpack.c.b16 %v1784, %v1778
      %v1947 = vpack.c.b16 %v1785, %v1779
      %v1948 = vpack.c.b16 %v1786, %v1780
      %v1949 = vpack.c.b16 %v1793, %v1787
      %v1950 = vpack.c.b16 %v1794, %v1788
      %v1951 = vpack.c.b16 %v1795, %v1789
      %v1952 = vpack.c.b16 %v1796, %v1790
      %v1953 = vpack.c.b16 %v1797, %v1791
      %v1954 = vpack.c.b16 %v1798, %v1792
      %v1955 = vpack.c.b16 %v1805, %v1799
      %v1956 = vpack.c.b16 %v1806, %v1800
      %v1957 = vpack.c.b16 %v1807, %v1801
      %v1958 = vpack.c.b16 %v1808, %v1802
      %v1959 = vpack.c.b16 %v1809, %v1803
      %v1960 = vpack.c.b16 %v1810, %v1804
      %v1961 = vpack.c.b16 %v1817, %v1811
      %v1962 = vpack.c.b16 %v1818, %v1812
      %v1963 = vpack.c.b16 %v1819, %v1813
      %v1964 = vpack.c.b16 %v1820, %v1814
      %v1965 = vpack.c.b16 %v1821, %v1815
      %v1966 = vpack.c.b16 %v1822, %v1816
      %v1967 = vpack.c.b16 %v1829, %v1823
      %v1968 = vpack.c.b16 %v1830, %v1824
      %v1969 = vpack.c.b16 %v1831, %v1825
      %v1970 = vpack.c.b16 %v1832, %v1826
      %v1971 = vpack.c.b16 %v1833, %v1827
      %v1972 = vpack.c.b16 %v1834, %v1828
      %v1973 = vpack.c.b16 %v1841, %v1835
      %v1974 = vpack.c.b16 %v1842, %v1836
      %v1975 = vpack.c.b16 %v1843, %v1837
      %v1976 = vpack.c.b16 %v1844, %v1838
      %v1977 = vpack.c.b16 %v1845, %v1839
      %v1978 = vpack.c.b16 %v1846, %v1840
      %v1979 = vpack.c.b16 %v1853, %v1847
      %v1980 = vpack.c.b16 %v1854, %v1848
      %v1981 = vpack.c.b16 %v1855, %v1849
      %v1982 = vpack.c.b16 %v1856, %v1850
      %v1983 = vpack.c.b16 %v1857, %v1851
      %v1984 = vpack.c.b16 %v1858, %v1852
      %v1985 = vpack.c.b16 %v1865, %v1859
      %v1986 = vpack.c.b16 %v1866, %v1860
      %v1987 = vpack.c.b16 %v1867, %v1861
      %v1988 = vpack.c.b16 %v1868, %v1862
      %v1989 = vpack.c.b16 %v1869, %v1863
      %v1990 = vpack.c.b16 %v1870, %v1864
      %v1991 = vpack.c.b16 %v1877, %v1871
      %v1992 = vpack.c.b16 %v1878, %v1872
      %v1993 = vpack.c.b16 %v1879, %v1873
      %v1994 = vpack.c.b16 %v1880, %v1874
      %v1995 = vpack.c.b16 %v1881, %v1875
      %v1996 = vpack.c.b16 %v1882, %v1876
      %v1997 = vpack.c.b16 %v1889, %v1883
      %v1998 = vpack.c.b16 %v1890, %v1884
      %v1999 = vpack.c.b16 %v1891, %v1885
      %v2000 = vpack.c.b16 %v1892, %v1886
      %v2001 = vpack.c.b16 %v1893, %v1887
      %v2002 = vpack.c.b16 %v1894, %v1888
      %v2003 = vpack.c.b16 %v1901, %v1895
      %v2004 = vpack.c.b16 %v1902, %v1896
      %v2005 = vpack.c.b16 %v1903, %v1897
      %v2006 = vpack.c.b16 %v1904, %v1898
      %v2007 = vpack.c.b16 %v1905, %v1899
      %v2008 = vpack.c.b16 %v1906, %v1900
      %v2009 = vpack.c.b16 %v1913, %v1907
      %v2010 = vpack.c.b16 %v1914, %v1908
      %v2011 = vpack.c.b16 %v1915, %v1909
      %v2012 = vpack.c.b16 %v1916, %v1910
      %v2013 = vpack.c.b16 %v1917, %v1911
      %v2014 = vpack.c.b16 %v1918, %v1912
      %v2207 = vunpack.c.l.b16 %v1631
      %v2208 = vunpack.c.l.b16 %v1632
      %v2209 = vunpack.c.l.b16 %v1633
      %v2210 = vunpack.c.l.b16 %v1634
      %v2211 = vunpack.c.l.b16 %v1635
      %v2212 = vunpack.c.l.b16 %v1636
      %v2213 = vunpack.c.l.b16 %v1637
      %v2214 = vunpack.c.l.b16 %v1638
      %v2215 = vunpack.c.l.b16 %v1639
      %v2216 = vunpack.c.l.b16 %v1640
      %v2217 = vunpack.c.l.b16 %v1641
      %v2218 = vunpack.c.l.b16 %v1642
      %v2219 = vunpack.c.l.b16 %v1643
      %v2220 = vunpack.c.l.b16 %v1644
      %v2221 = vunpack.c.l.b16 %v1645
      %v2222 = vunpack.c.l.b16 %v1646
      %v2223 = vunpack.c.l.b16 %v1647
      %v2224 = vunpack.c.l.b16 %v1648
      %v2225 = vunpack.c.l.b16 %v1649
      %v2226 = vunpack.c.l.b16 %v1650
      %v2227 = vunpack.c.l.b16 %v1651
      %v2228 = vunpack.c.l.b16 %v1652
      %v2229 = vunpack.c.l.b16 %v1653
      %v2230 = vunpack.c.l.b16 %v1654
      %v2231 = vunpack.c.l.b16 %v1655
      %v2232 = vunpack.c.l.b16 %v1656
      %v2233 = vunpack.c.l.b16 %v1657
      %v2234 = vunpack.c.l.b16 %v1658
      %v2235 = vunpack.c.l.b16 %v1659
      %v2236 = vunpack.c.l.b16 %v1660
      %v2237 = vunpack.c.l.b16 %v1661
      %v2238 = vunpack.c.l.b16 %v1662
      %v2239 = vunpack.c.l.b16 %v1663
      %v2240 = vunpack.c.l.b16 %v1664
      %v2241 = vunpack.c.l.b16 %v1665
      %v2242 = vunpack.c.l.b16 %v1666
      %v2243 = vunpack.c.l.b16 %v1667
      %v2244 = vunpack.c.l.b16 %v1668
      %v2245 = vunpack.c.l.b16 %v1669
      %v2246 = vunpack.c.l.b16 %v1670
      %v2247 = vunpack.c.l.b16 %v1671
      %v2248 = vunpack.c.l.b16 %v1672
      %v2249 = vunpack.c.l.b16 %v1673
      %v2250 = vunpack.c.l.b16 %v1674
      %v2251 = vunpack.c.l.b16 %v1675
      %v2252 = vunpack.c.l.b16 %v1676
      %v2253 = vunpack.c.l.b16 %v1677
      %v2254 = vunpack.c.l.b16 %v1678
      %v2255 = vunpack.c.l.b16 %v1679
      %v2256 = vunpack.c.l.b16 %v1680
      %v2257 = vunpack.c.l.b16 %v1681
      %v2258 = vunpack.c.l.b16 %v1682
      %v2259 = vunpack.c.l.b16 %v1683
      %v2260 = vunpack.c.l.b16 %v1684
      %v2261 = vunpack.c.l.b16 %v1685
      %v2262 = vunpack.c.l.b16 %v1686
      %v2263 = vunpack.c.l.b16 %v1687
      %v2264 = vunpack.c.l.b16 %v1688
      %v2265 = vunpack.c.l.b16 %v1689
      %v2266 = vunpack.c.l.b16 %v1690
      %v2267 = vunpack.c.l.b16 %v1691
      %v2268 = vunpack.c.l.b16 %v1692
      %v2269 = vunpack.c.l.b16 %v1693
      %v2270 = vunpack.c.l.b16 %v1694
      %v2271 = vunpack.c.l.b16 %v1695
      %v2272 = vunpack.c.l.b16 %v1696
      %v2273 = vunpack.c.l.b16 %v1697
      %v2274 = vunpack.c.l.b16 %v1698
      %v2275 = vunpack.c.l.b16 %v1699
      %v2276 = vunpack.c.l.b16 %v1700
      %v2277 = vunpack.c.l.b16 %v1701
      %v2278 = vunpack.c.l.b16 %v1702
      %v2279 = vunpack.c.l.b16 %v1703
      %v2280 = vunpack.c.l.b16 %v1704
      %v2281 = vunpack.c.l.b16 %v1705
      %v2282 = vunpack.c.l.b16 %v1706
      %v2283 = vunpack.c.l.b16 %v1707
      %v2284 = vunpack.c.l.b16 %v1708
      %v2285 = vunpack.c.l.b16 %v1709
      %v2286 = vunpack.c.l.b16 %v1710
      %v2287 = vunpack.c.l.b16 %v1711
      %v2288 = vunpack.c.l.b16 %v1712
      %v2289 = vunpack.c.l.b16 %v1713
      %v2290 = vunpack.c.l.b16 %v1714
      %v2291 = vunpack.c.l.b16 %v1715
      %v2292 = vunpack.c.l.b16 %v1716
      %v2293 = vunpack.c.l.b16 %v1717
      %v2294 = vunpack.c.l.b16 %v1718
      %v2295 = vunpack.c.l.b16 %v1719
      %v2296 = vunpack.c.l.b16 %v1720
      %v2297 = vunpack.c.l.b16 %v1721
      %v2298 = vunpack.c.l.b16 %v1722
      %v2299 = vunpack.c.l.b16 %v1723
      %v2300 = vunpack.c.l.b16 %v1724
      %v2301 = vunpack.c.l.b16 %v1725
      %v2302 = vunpack.c.l.b16 %v1726
      %v2303 = vpack.c.b16 %v2208, %v2207
      %v2304 = vpack.c.b16 %v2210, %v2209
      %v2305 = vpack.c.b16 %v2212, %v2211
      %v2306 = vpack.c.b16 %v2214, %v2213
      %v2307 = vpack.c.b16 %v2216, %v2215
      %v2308 = vpack.c.b16 %v2218, %v2217
      %v2309 = vpack.c.b16 %v2220, %v2219
      %v2310 = vpack.c.b16 %v2222, %v2221
      %v2311 = vpack.c.b16 %v2224, %v2223
      %v2312 = vpack.c.b16 %v2226, %v2225
      %v2313 = vpack.c.b16 %v2228, %v2227
      %v2314 = vpack.c.b16 %v2230, %v2229
      %v2315 = vpack.c.b16 %v2232, %v2231
      %v2316 = vpack.c.b16 %v2234, %v2233
      %v2317 = vpack.c.b16 %v2236, %v2235
      %v2318 = vpack.c.b16 %v2238, %v2237
      %v2319 = vpack.c.b16 %v2240, %v2239
      %v2320 = vpack.c.b16 %v2242, %v2241
      %v2321 = vpack.c.b16 %v2244, %v2243
      %v2322 = vpack.c.b16 %v2246, %v2245
      %v2323 = vpack.c.b16 %v2248, %v2247
      %v2324 = vpack.c.b16 %v2250, %v2249
      %v2325 = vpack.c.b16 %v2252, %v2251
      %v2326 = vpack.c.b16 %v2254, %v2253
      %v2327 = vpack.c.b16 %v2256, %v2255
      %v2328 = vpack.c.b16 %v2258, %v2257
      %v2329 = vpack.c.b16 %v2260, %v2259
      %v2330 = vpack.c.b16 %v2262, %v2261
      %v2331 = vpack.c.b16 %v2264, %v2263
      %v2332 = vpack.c.b16 %v2266, %v2265
      %v2333 = vpack.c.b16 %v2268, %v2267
      %v2334 = vpack.c.b16 %v2270, %v2269
      %v2335 = vpack.c.b16 %v2272, %v2271
      %v2336 = vpack.c.b16 %v2274, %v2273
      %v2337 = vpack.c.b16 %v2276, %v2275
      %v2338 = vpack.c.b16 %v2278, %v2277
      %v2339 = vpack.c.b16 %v2280, %v2279
      %v2340 = vpack.c.b16 %v2282, %v2281
      %v2341 = vpack.c.b16 %v2284, %v2283
      %v2342 = vpack.c.b16 %v2286, %v2285
      %v2343 = vpack.c.b16 %v2288, %v2287
      %v2344 = vpack.c.b16 %v2290, %v2289
      %v2345 = vpack.c.b16 %v2292, %v2291
      %v2346 = vpack.c.b16 %v2294, %v2293
      %v2347 = vpack.c.b16 %v2296, %v2295
      %v2348 = vpack.c.b16 %v2298, %v2297
      %v2349 = vpack.c.b16 %v2300, %v2299
      %v2350 = vpack.c.b16 %v2302, %v2301
      %2399 = vmatprep.subr.bf16.mxu0 0
      %2400 = vmatpush1.bf16.msra.mxu0 %v2310
      %2401 = vmatprep.subr.bf16.mxu0 0
      %2402 = vmatpush1.bf16.msra.mxu0 %v2309
      %2403 = vmatprep.subr.bf16.mxu0 0
      %2404 = vmatpush1.bf16.msra.mxu0 %v2308
      %2405 = vmatprep.subr.bf16.mxu0 0
      %2406 = vmatpush1.bf16.msra.mxu0 %v2307
      %2407 = vmatprep.subr.bf16.mxu0 0
      %2408 = vmatpush1.bf16.msra.mxu0 %v2306
      %2409 = vmatprep.subr.bf16.mxu0 0
      %2410 = vmatpush1.bf16.msra.mxu0 %v2305
      %2411 = vmatprep.subr.bf16.mxu0 0
      %2412 = vmatpush1.bf16.msra.mxu0 %v2304
      %2413 = vmatprep.subr.bf16.mxu0 0
      %2414 = vmatpush1.bf16.msra.mxu0 %v2303
      %2415 = vmatprep.subr.bf16.mxu0 0
      %2416 = vmatpush2.bf16.msra.mxu0 %v2318
      %2417 = vmatprep.subr.bf16.mxu0 0
      %2418 = vmatpush2.bf16.msra.mxu0 %v2317
      %2419 = vmatprep.subr.bf16.mxu0 0
      %2420 = vmatpush2.bf16.msra.mxu0 %v2316
      %2421 = vmatprep.subr.bf16.mxu0 0
      %2422 = vmatpush2.bf16.msra.mxu0 %v2315
      %2423 = vmatprep.subr.bf16.mxu0 0
      %2424 = vmatpush2.bf16.msra.mxu0 %v2314
      %2425 = vmatprep.subr.bf16.mxu0 0
      %2426 = vmatpush2.bf16.msra.mxu0 %v2313
      %2427 = vmatprep.subr.bf16.mxu0 0
      %2428 = vmatpush2.bf16.msra.mxu0 %v2312
      %2429 = vmatprep.subr.bf16.mxu0 0
      %2430 = vmatpush2.bf16.msra.mxu0 %v2311
      %2431 = vmatprep.mubr.bf16.mxu0 %v1920
      %2432 = vmatmul.mubr.bf16.gmra.mxu0 %v1919
      %v2433 = vpop.f32.mrf.mxu0
      %v2434 = vadd.f32 0.0, %v2433
      %v2435 = vpop.f32.mrf.mxu0
      %v2436 = vpop.f32.mrf.mxu0
      %v2437 = vadd.f32 0.0, %v2436
      %v2438 = vpop.f32.mrf.mxu0
      %2439 = vmatprep.mubr.bf16.mxu0 %v1926
      %2440 = vmatmul.mubr.bf16.gmra.mxu0 %v1925
      %v2441 = vpop.f32.mrf.mxu0
      %v2442 = vadd.f32 0.0, %v2441
      %v2443 = vpop.f32.mrf.mxu0
      %v2444 = vpop.f32.mrf.mxu0
      %v2445 = vadd.f32 0.0, %v2444
      %v2446 = vpop.f32.mrf.mxu0
      %2447 = vmatprep.mubr.bf16.mxu0 %v1932
      %2448 = vmatmul.mubr.bf16.gmra.mxu0 %v1931
      %v2449 = vpop.f32.mrf.mxu0
      %v2450 = vadd.f32 0.0, %v2449
      %v2451 = vpop.f32.mrf.mxu0
      %v2452 = vpop.f32.mrf.mxu0
      %v2453 = vadd.f32 0.0, %v2452
      %v2454 = vpop.f32.mrf.mxu0
      %2455 = vmatprep.mubr.bf16.mxu0 %v1938
      %2456 = vmatmul.mubr.bf16.gmra.mxu0 %v1937
      %v2457 = vpop.f32.mrf.mxu0
      %v2458 = vadd.f32 0.0, %v2457
      %v2459 = vpop.f32.mrf.mxu0
      %v2460 = vpop.f32.mrf.mxu0
      %v2461 = vadd.f32 0.0, %v2460
      %v2462 = vpop.f32.mrf.mxu0
      %2463 = vmatprep.mubr.bf16.mxu0 %v1944
      %2464 = vmatmul.mubr.bf16.gmra.mxu0 %v1943
      %v2465 = vpop.f32.mrf.mxu0
      %v2466 = vadd.f32 0.0, %v2465
      %v2467 = vpop.f32.mrf.mxu0
      %v2468 = vpop.f32.mrf.mxu0
      %v2469 = vadd.f32 0.0, %v2468
      %v2470 = vpop.f32.mrf.mxu0
      %2471 = vmatprep.mubr.bf16.mxu0 %v1950
      %2472 = vmatmul.mubr.bf16.gmra.mxu0 %v1949
      %v2473 = vpop.f32.mrf.mxu0
      %v2474 = vadd.f32 0.0, %v2473
      %v2475 = vpop.f32.mrf.mxu0
      %v2476 = vpop.f32.mrf.mxu0
      %v2477 = vadd.f32 0.0, %v2476
      %v2478 = vpop.f32.mrf.mxu0
      %2479 = vmatprep.mubr.bf16.mxu0 %v1956
      %2480 = vmatmul.mubr.bf16.gmra.mxu0 %v1955
      %v2481 = vpop.f32.mrf.mxu0
      %v2482 = vadd.f32 0.0, %v2481
      %v2483 = vpop.f32.mrf.mxu0
      %v2484 = vpop.f32.mrf.mxu0
      %v2485 = vadd.f32 0.0, %v2484
      %v2486 = vpop.f32.mrf.mxu0
      %2487 = vmatprep.mubr.bf16.mxu0 %v1962
      %2488 = vmatmul.mubr.bf16.gmra.mxu0 %v1961
      %v2489 = vpop.f32.mrf.mxu0
      %v2490 = vadd.f32 0.0, %v2489
      %v2491 = vpop.f32.mrf.mxu0
      %v2492 = vpop.f32.mrf.mxu0
      %v2493 = vadd.f32 0.0, %v2492
      %v2494 = vpop.f32.mrf.mxu0
      %2495 = vmatprep.mubr.bf16.mxu0 %v1968
      %2496 = vmatmul.mubr.bf16.gmra.mxu0 %v1967
      %v2497 = vpop.f32.mrf.mxu0
      %v2498 = vadd.f32 0.0, %v2497
      %v2499 = vpop.f32.mrf.mxu0
      %v2500 = vpop.f32.mrf.mxu0
      %v2501 = vadd.f32 0.0, %v2500
      %v2502 = vpop.f32.mrf.mxu0
      %2503 = vmatprep.mubr.bf16.mxu0 %v1974
      %2504 = vmatmul.mubr.bf16.gmra.mxu0 %v1973
      %v2505 = vpop.f32.mrf.mxu0
      %v2506 = vadd.f32 0.0, %v2505
      %v2507 = vpop.f32.mrf.mxu0
      %v2508 = vpop.f32.mrf.mxu0
      %v2509 = vadd.f32 0.0, %v2508
      %v2510 = vpop.f32.mrf.mxu0
      %2511 = vmatprep.mubr.bf16.mxu0 %v1980
      %2512 = vmatmul.mubr.bf16.gmra.mxu0 %v1979
      %v2513 = vpop.f32.mrf.mxu0
      %v2514 = vadd.f32 0.0, %v2513
      %v2515 = vpop.f32.mrf.mxu0
      %v2516 = vpop.f32.mrf.mxu0
      %v2517 = vadd.f32 0.0, %v2516
      %v2518 = vpop.f32.mrf.mxu0
      %2519 = vmatprep.mubr.bf16.mxu0 %v1986
      %2520 = vmatmul.mubr.bf16.gmra.mxu0 %v1985
      %v2521 = vpop.f32.mrf.mxu0
      %v2522 = vadd.f32 0.0, %v2521
      %v2523 = vpop.f32.mrf.mxu0
      %v2524 = vpop.f32.mrf.mxu0
      %v2525 = vadd.f32 0.0, %v2524
      %v2526 = vpop.f32.mrf.mxu0
      %2527 = vmatprep.mubr.bf16.mxu0 %v1992
      %2528 = vmatmul.mubr.bf16.gmra.mxu0 %v1991
      %v2529 = vpop.f32.mrf.mxu0
      %v2530 = vadd.f32 0.0, %v2529
      %v2531 = vpop.f32.mrf.mxu0
      %v2532 = vpop.f32.mrf.mxu0
      %v2533 = vadd.f32 0.0, %v2532
      %v2534 = vpop.f32.mrf.mxu0
      %2535 = vmatprep.mubr.bf16.mxu0 %v1998
      %2536 = vmatmul.mubr.bf16.gmra.mxu0 %v1997
      %v2537 = vpop.f32.mrf.mxu0
      %v2538 = vadd.f32 0.0, %v2537
      %v2539 = vpop.f32.mrf.mxu0
      %v2540 = vpop.f32.mrf.mxu0
      %v2541 = vadd.f32 0.0, %v2540
      %v2542 = vpop.f32.mrf.mxu0
      %2543 = vmatprep.mubr.bf16.mxu0 %v2004
      %2544 = vmatmul.mubr.bf16.gmra.mxu0 %v2003
      %v2545 = vpop.f32.mrf.mxu0
      %v2546 = vadd.f32 0.0, %v2545
      %v2547 = vpop.f32.mrf.mxu0
      %v2548 = vpop.f32.mrf.mxu0
      %v2549 = vadd.f32 0.0, %v2548
      %v2550 = vpop.f32.mrf.mxu0
      %2551 = vmatprep.mubr.bf16.mxu0 %v2010
      %2552 = vmatmul.mubr.bf16.gmra.mxu0 %v2009
      %v2553 = vpop.f32.mrf.mxu0
      %v2554 = vadd.f32 0.0, %v2553
      %v2555 = vpop.f32.mrf.mxu0
      %v2556 = vpop.f32.mrf.mxu0
      %v2557 = vadd.f32 0.0, %v2556
      %v2558 = vpop.f32.mrf.mxu0
      %2559 = vdwg.mxu0
      %2560 = vmatprep.subr.bf16.mxu0 0
      %2561 = vmatpush1.bf16.msra.mxu0 %v2326
      %2562 = vmatprep.subr.bf16.mxu0 0
      %2563 = vmatpush1.bf16.msra.mxu0 %v2325
      %2564 = vmatprep.subr.bf16.mxu0 0
      %2565 = vmatpush1.bf16.msra.mxu0 %v2324
      %2566 = vmatprep.subr.bf16.mxu0 0
      %2567 = vmatpush1.bf16.msra.mxu0 %v2323
      %2568 = vmatprep.subr.bf16.mxu0 0
      %2569 = vmatpush1.bf16.msra.mxu0 %v2322
      %2570 = vmatprep.subr.bf16.mxu0 0
      %2571 = vmatpush1.bf16.msra.mxu0 %v2321
      %2572 = vmatprep.subr.bf16.mxu0 0
      %2573 = vmatpush1.bf16.msra.mxu0 %v2320
      %2574 = vmatprep.subr.bf16.mxu0 0
      %2575 = vmatpush1.bf16.msra.mxu0 %v2319
      %2576 = vmatprep.subr.bf16.mxu0 0
      %2577 = vmatpush2.bf16.msra.mxu0 %v2334
      %2578 = vmatprep.subr.bf16.mxu0 0
      %2579 = vmatpush2.bf16.msra.mxu0 %v2333
      %2580 = vmatprep.subr.bf16.mxu0 0
      %2581 = vmatpush2.bf16.msra.mxu0 %v2332
      %2582 = vmatprep.subr.bf16.mxu0 0
      %2583 = vmatpush2.bf16.msra.mxu0 %v2331
      %2584 = vmatprep.subr.bf16.mxu0 0
      %2585 = vmatpush2.bf16.msra.mxu0 %v2330
      %2586 = vmatprep.subr.bf16.mxu0 0
      %2587 = vmatpush2.bf16.msra.mxu0 %v2329
      %2588 = vmatprep.subr.bf16.mxu0 0
      %2589 = vmatpush2.bf16.msra.mxu0 %v2328
      %2590 = vmatprep.subr.bf16.mxu0 0
      %2591 = vmatpush2.bf16.msra.mxu0 %v2327
      %2592 = vmatprep.mubr.bf16.mxu0 %v1922
      %2593 = vmatmul.mubr.bf16.gmra.mxu0 %v1921
      %v2594 = vpop.f32.mrf.mxu0
      %v2595 = vadd.f32 %v2434, %v2594
      %v2596 = vpop.f32.mrf.mxu0
      %v2597 = vpop.f32.mrf.mxu0
      %v2598 = vadd.f32 %v2437, %v2597
      %v2599 = vpop.f32.mrf.mxu0
      %2600 = vmatprep.mubr.bf16.mxu0 %v1928
      %2601 = vmatmul.mubr.bf16.gmra.mxu0 %v1927
      %v2602 = vpop.f32.mrf.mxu0
      %v2603 = vadd.f32 %v2442, %v2602
      %v2604 = vpop.f32.mrf.mxu0
      %v2605 = vpop.f32.mrf.mxu0
      %v2606 = vadd.f32 %v2445, %v2605
      %v2607 = vpop.f32.mrf.mxu0
      %2608 = vmatprep.mubr.bf16.mxu0 %v1934
      %2609 = vmatmul.mubr.bf16.gmra.mxu0 %v1933
      %v2610 = vpop.f32.mrf.mxu0
      %v2611 = vadd.f32 %v2450, %v2610
      %v2612 = vpop.f32.mrf.mxu0
      %v2613 = vpop.f32.mrf.mxu0
      %v2614 = vadd.f32 %v2453, %v2613
      %v2615 = vpop.f32.mrf.mxu0
      %2616 = vmatprep.mubr.bf16.mxu0 %v1940
      %2617 = vmatmul.mubr.bf16.gmra.mxu0 %v1939
      %v2618 = vpop.f32.mrf.mxu0
      %v2619 = vadd.f32 %v2458, %v2618
      %v2620 = vpop.f32.mrf.mxu0
      %v2621 = vpop.f32.mrf.mxu0
      %v2622 = vadd.f32 %v2461, %v2621
      %v2623 = vpop.f32.mrf.mxu0
      %2624 = vmatprep.mubr.bf16.mxu0 %v1946
      %2625 = vmatmul.mubr.bf16.gmra.mxu0 %v1945
      %v2626 = vpop.f32.mrf.mxu0
      %v2627 = vadd.f32 %v2466, %v2626
      %v2628 = vpop.f32.mrf.mxu0
      %v2629 = vpop.f32.mrf.mxu0
      %v2630 = vadd.f32 %v2469, %v2629
      %v2631 = vpop.f32.mrf.mxu0
      %2632 = vmatprep.mubr.bf16.mxu0 %v1952
      %2633 = vmatmul.mubr.bf16.gmra.mxu0 %v1951
      %v2634 = vpop.f32.mrf.mxu0
      %v2635 = vadd.f32 %v2474, %v2634
      %v2636 = vpop.f32.mrf.mxu0
      %v2637 = vpop.f32.mrf.mxu0
      %v2638 = vadd.f32 %v2477, %v2637
      %v2639 = vpop.f32.mrf.mxu0
      %2640 = vmatprep.mubr.bf16.mxu0 %v1958
      %2641 = vmatmul.mubr.bf16.gmra.mxu0 %v1957
      %v2642 = vpop.f32.mrf.mxu0
      %v2643 = vadd.f32 %v2482, %v2642
      %v2644 = vpop.f32.mrf.mxu0
      %v2645 = vpop.f32.mrf.mxu0
      %v2646 = vadd.f32 %v2485, %v2645
      %v2647 = vpop.f32.mrf.mxu0
      %2648 = vmatprep.mubr.bf16.mxu0 %v1964
      %2649 = vmatmul.mubr.bf16.gmra.mxu0 %v1963
      %v2650 = vpop.f32.mrf.mxu0
      %v2651 = vadd.f32 %v2490, %v2650
      %v2652 = vpop.f32.mrf.mxu0
      %v2653 = vpop.f32.mrf.mxu0
      %v2654 = vadd.f32 %v2493, %v2653
      %v2655 = vpop.f32.mrf.mxu0
      %2656 = vmatprep.mubr.bf16.mxu0 %v1970
      %2657 = vmatmul.mubr.bf16.gmra.mxu0 %v1969
      %v2658 = vpop.f32.mrf.mxu0
      %v2659 = vadd.f32 %v2498, %v2658
      %v2660 = vpop.f32.mrf.mxu0
      %v2661 = vpop.f32.mrf.mxu0
      %v2662 = vadd.f32 %v2501, %v2661
      %v2663 = vpop.f32.mrf.mxu0
      %2664 = vmatprep.mubr.bf16.mxu0 %v1976
      %2665 = vmatmul.mubr.bf16.gmra.mxu0 %v1975
      %v2666 = vpop.f32.mrf.mxu0
      %v2667 = vadd.f32 %v2506, %v2666
      %v2668 = vpop.f32.mrf.mxu0
      %v2669 = vpop.f32.mrf.mxu0
      %v2670 = vadd.f32 %v2509, %v2669
      %v2671 = vpop.f32.mrf.mxu0
      %2672 = vmatprep.mubr.bf16.mxu0 %v1982
      %2673 = vmatmul.mubr.bf16.gmra.mxu0 %v1981
      %v2674 = vpop.f32.mrf.mxu0
      %v2675 = vadd.f32 %v2514, %v2674
      %v2676 = vpop.f32.mrf.mxu0
      %v2677 = vpop.f32.mrf.mxu0
      %v2678 = vadd.f32 %v2517, %v2677
      %v2679 = vpop.f32.mrf.mxu0
      %2680 = vmatprep.mubr.bf16.mxu0 %v1988
      %2681 = vmatmul.mubr.bf16.gmra.mxu0 %v1987
      %v2682 = vpop.f32.mrf.mxu0
      %v2683 = vadd.f32 %v2522, %v2682
      %v2684 = vpop.f32.mrf.mxu0
      %v2685 = vpop.f32.mrf.mxu0
      %v2686 = vadd.f32 %v2525, %v2685
      %v2687 = vpop.f32.mrf.mxu0
      %2688 = vmatprep.mubr.bf16.mxu0 %v1994
      %2689 = vmatmul.mubr.bf16.gmra.mxu0 %v1993
      %v2690 = vpop.f32.mrf.mxu0
      %v2691 = vadd.f32 %v2530, %v2690
      %v2692 = vpop.f32.mrf.mxu0
      %v2693 = vpop.f32.mrf.mxu0
      %v2694 = vadd.f32 %v2533, %v2693
      %v2695 = vpop.f32.mrf.mxu0
      %2696 = vmatprep.mubr.bf16.mxu0 %v2000
      %2697 = vmatmul.mubr.bf16.gmra.mxu0 %v1999
      %v2698 = vpop.f32.mrf.mxu0
      %v2699 = vadd.f32 %v2538, %v2698
      %v2700 = vpop.f32.mrf.mxu0
      %v2701 = vpop.f32.mrf.mxu0
      %v2702 = vadd.f32 %v2541, %v2701
      %v2703 = vpop.f32.mrf.mxu0
      %2704 = vmatprep.mubr.bf16.mxu0 %v2006
      %2705 = vmatmul.mubr.bf16.gmra.mxu0 %v2005
      %v2706 = vpop.f32.mrf.mxu0
      %v2707 = vadd.f32 %v2546, %v2706
      %v2708 = vpop.f32.mrf.mxu0
      %v2709 = vpop.f32.mrf.mxu0
      %v2710 = vadd.f32 %v2549, %v2709
      %v2711 = vpop.f32.mrf.mxu0
      %2712 = vmatprep.mubr.bf16.mxu0 %v2012
      %2713 = vmatmul.mubr.bf16.gmra.mxu0 %v2011
      %v2714 = vpop.f32.mrf.mxu0
      %v2715 = vadd.f32 %v2554, %v2714
      %v2716 = vpop.f32.mrf.mxu0
      %v2717 = vpop.f32.mrf.mxu0
      %v2718 = vadd.f32 %v2557, %v2717
      %v2719 = vpop.f32.mrf.mxu0
      %2720 = vdwg.mxu0
      %2721 = vmatprep.subr.bf16.mxu0 0
      %2722 = vmatpush1.bf16.msra.mxu0 %v2342
      %2723 = vmatprep.subr.bf16.mxu0 0
      %2724 = vmatpush1.bf16.msra.mxu0 %v2341
      %2725 = vmatprep.subr.bf16.mxu0 0
      %2726 = vmatpush1.bf16.msra.mxu0 %v2340
      %2727 = vmatprep.subr.bf16.mxu0 0
      %2728 = vmatpush1.bf16.msra.mxu0 %v2339
      %2729 = vmatprep.subr.bf16.mxu0 0
      %2730 = vmatpush1.bf16.msra.mxu0 %v2338
      %2731 = vmatprep.subr.bf16.mxu0 0
      %2732 = vmatpush1.bf16.msra.mxu0 %v2337
      %2733 = vmatprep.subr.bf16.mxu0 0
      %2734 = vmatpush1.bf16.msra.mxu0 %v2336
      %2735 = vmatprep.subr.bf16.mxu0 0
      %2736 = vmatpush1.bf16.msra.mxu0 %v2335
      %2737 = vmatprep.subr.bf16.mxu0 0
      %2738 = vmatpush2.bf16.msra.mxu0 %v2350
      %2739 = vmatprep.subr.bf16.mxu0 0
      %2740 = vmatpush2.bf16.msra.mxu0 %v2349
      %2741 = vmatprep.subr.bf16.mxu0 0
      %2742 = vmatpush2.bf16.msra.mxu0 %v2348
      %2743 = vmatprep.subr.bf16.mxu0 0
      %2744 = vmatpush2.bf16.msra.mxu0 %v2347
      %2745 = vmatprep.subr.bf16.mxu0 0
      %2746 = vmatpush2.bf16.msra.mxu0 %v2346
      %2747 = vmatprep.subr.bf16.mxu0 0
      %2748 = vmatpush2.bf16.msra.mxu0 %v2345
      %2749 = vmatprep.subr.bf16.mxu0 0
      %2750 = vmatpush2.bf16.msra.mxu0 %v2344
      %2751 = vmatprep.subr.bf16.mxu0 0
      %2752 = vmatpush2.bf16.msra.mxu0 %v2343
      %2753 = vmatprep.mubr.bf16.mxu0 %v1924
      %2754 = vmatmul.mubr.bf16.gmra.mxu0 %v1923
      %v2755 = vpop.f32.mrf.mxu0
      %v2756 = vadd.f32 %v2595, %v2755
      %v2757 = vpop.f32.mrf.mxu0
      %v2758 = vpop.f32.mrf.mxu0
      %v2759 = vadd.f32 %v2598, %v2758
      %v2760 = vpop.f32.mrf.mxu0
      %2761 = vmatprep.mubr.bf16.mxu0 %v1930
      %2762 = vmatmul.mubr.bf16.gmra.mxu0 %v1929
      %v2763 = vpop.f32.mrf.mxu0
      %v2764 = vadd.f32 %v2603, %v2763
      %v2765 = vpop.f32.mrf.mxu0
      %v2766 = vpop.f32.mrf.mxu0
      %v2767 = vadd.f32 %v2606, %v2766
      %v2768 = vpop.f32.mrf.mxu0
      %2769 = vmatprep.mubr.bf16.mxu0 %v1936
      %2770 = vmatmul.mubr.bf16.gmra.mxu0 %v1935
      %v2771 = vpop.f32.mrf.mxu0
      %v2772 = vadd.f32 %v2611, %v2771
      %v2773 = vpop.f32.mrf.mxu0
      %v2774 = vpop.f32.mrf.mxu0
      %v2775 = vadd.f32 %v2614, %v2774
      %v2776 = vpop.f32.mrf.mxu0
      %2777 = vmatprep.mubr.bf16.mxu0 %v1942
      %2778 = vmatmul.mubr.bf16.gmra.mxu0 %v1941
      %v2779 = vpop.f32.mrf.mxu0
      %v2780 = vadd.f32 %v2619, %v2779
      %v2781 = vpop.f32.mrf.mxu0
      %v2782 = vpop.f32.mrf.mxu0
      %v2783 = vadd.f32 %v2622, %v2782
      %v2784 = vpop.f32.mrf.mxu0
      %2785 = vmatprep.mubr.bf16.mxu0 %v1948
      %2786 = vmatmul.mubr.bf16.gmra.mxu0 %v1947
      %v2787 = vpop.f32.mrf.mxu0
      %v2788 = vadd.f32 %v2627, %v2787
      %v2789 = vpop.f32.mrf.mxu0
      %v2790 = vpop.f32.mrf.mxu0
      %v2791 = vadd.f32 %v2630, %v2790
      %v2792 = vpop.f32.mrf.mxu0
      %2793 = vmatprep.mubr.bf16.mxu0 %v1954
      %2794 = vmatmul.mubr.bf16.gmra.mxu0 %v1953
      %v2795 = vpop.f32.mrf.mxu0
      %v2796 = vadd.f32 %v2635, %v2795
      %v2797 = vpop.f32.mrf.mxu0
      %v2798 = vpop.f32.mrf.mxu0
      %v2799 = vadd.f32 %v2638, %v2798
      %v2800 = vpop.f32.mrf.mxu0
      %2801 = vmatprep.mubr.bf16.mxu0 %v1960
      %2802 = vmatmul.mubr.bf16.gmra.mxu0 %v1959
      %v2803 = vpop.f32.mrf.mxu0
      %v2804 = vadd.f32 %v2643, %v2803
      %v2805 = vpop.f32.mrf.mxu0
      %v2806 = vpop.f32.mrf.mxu0
      %v2807 = vadd.f32 %v2646, %v2806
      %v2808 = vpop.f32.mrf.mxu0
      %2809 = vmatprep.mubr.bf16.mxu0 %v1966
      %2810 = vmatmul.mubr.bf16.gmra.mxu0 %v1965
      %v2811 = vpop.f32.mrf.mxu0
      %v2812 = vadd.f32 %v2651, %v2811
      %v2813 = vpop.f32.mrf.mxu0
      %v2814 = vpop.f32.mrf.mxu0
      %v2815 = vadd.f32 %v2654, %v2814
      %v2816 = vpop.f32.mrf.mxu0
      %2817 = vmatprep.mubr.bf16.mxu0 %v1972
      %2818 = vmatmul.mubr.bf16.gmra.mxu0 %v1971
      %v2819 = vpop.f32.mrf.mxu0
      %v2820 = vadd.f32 %v2659, %v2819
      %v2821 = vpop.f32.mrf.mxu0
      %v2822 = vpop.f32.mrf.mxu0
      %v2823 = vadd.f32 %v2662, %v2822
      %v2824 = vpop.f32.mrf.mxu0
      %2825 = vmatprep.mubr.bf16.mxu0 %v1978
      %2826 = vmatmul.mubr.bf16.gmra.mxu0 %v1977
      %v2827 = vpop.f32.mrf.mxu0
      %v2828 = vadd.f32 %v2667, %v2827
      %v2829 = vpop.f32.mrf.mxu0
      %v2830 = vpop.f32.mrf.mxu0
      %v2831 = vadd.f32 %v2670, %v2830
      %v2832 = vpop.f32.mrf.mxu0
      %2833 = vmatprep.mubr.bf16.mxu0 %v1984
      %2834 = vmatmul.mubr.bf16.gmra.mxu0 %v1983
      %v2835 = vpop.f32.mrf.mxu0
      %v2836 = vadd.f32 %v2675, %v2835
      %v2837 = vpop.f32.mrf.mxu0
      %v2838 = vpop.f32.mrf.mxu0
      %v2839 = vadd.f32 %v2678, %v2838
      %v2840 = vpop.f32.mrf.mxu0
      %2841 = vmatprep.mubr.bf16.mxu0 %v1990
      %2842 = vmatmul.mubr.bf16.gmra.mxu0 %v1989
      %v2843 = vpop.f32.mrf.mxu0
      %v2844 = vadd.f32 %v2683, %v2843
      %v2845 = vpop.f32.mrf.mxu0
      %v2846 = vpop.f32.mrf.mxu0
      %v2847 = vadd.f32 %v2686, %v2846
      %v2848 = vpop.f32.mrf.mxu0
      %2849 = vmatprep.mubr.bf16.mxu0 %v1996
      %2850 = vmatmul.mubr.bf16.gmra.mxu0 %v1995
      %v2851 = vpop.f32.mrf.mxu0
      %v2852 = vadd.f32 %v2691, %v2851
      %v2853 = vpop.f32.mrf.mxu0
      %v2854 = vpop.f32.mrf.mxu0
      %v2855 = vadd.f32 %v2694, %v2854
      %v2856 = vpop.f32.mrf.mxu0
      %2857 = vmatprep.mubr.bf16.mxu0 %v2002
      %2858 = vmatmul.mubr.bf16.gmra.mxu0 %v2001
      %v2859 = vpop.f32.mrf.mxu0
      %v2860 = vadd.f32 %v2699, %v2859
      %v2861 = vpop.f32.mrf.mxu0
      %v2862 = vpop.f32.mrf.mxu0
      %v2863 = vadd.f32 %v2702, %v2862
      %v2864 = vpop.f32.mrf.mxu0
      %2865 = vmatprep.mubr.bf16.mxu0 %v2008
      %2866 = vmatmul.mubr.bf16.gmra.mxu0 %v2007
      %v2867 = vpop.f32.mrf.mxu0
      %v2868 = vadd.f32 %v2707, %v2867
      %v2869 = vpop.f32.mrf.mxu0
      %v2870 = vpop.f32.mrf.mxu0
      %v2871 = vadd.f32 %v2710, %v2870
      %v2872 = vpop.f32.mrf.mxu0
      %2873 = vmatprep.mubr.bf16.mxu0 %v2014
      %2874 = vmatmul.mubr.bf16.gmra.mxu0 %v2013
      %v2875 = vpop.f32.mrf.mxu0
      %v2876 = vadd.f32 %v2715, %v2875
      %v2877 = vpop.f32.mrf.mxu0
      %v2878 = vpop.f32.mrf.mxu0
      %v2879 = vadd.f32 %v2718, %v2878
      %v2880 = vpop.f32.mrf.mxu0
      %2881 = vdwg.mxu0
      %v2978 = vunpack.c.l.b16 %v235
      %v2979 = vunpack.c.h.b16 %v235
      %v2980 = vunpack.c.l.b16 %v236
      %v2981 = vunpack.c.h.b16 %v236
      %v2982 = vunpack.c.l.b16 %v237
      %v2983 = vunpack.c.h.b16 %v237
      %v2984 = vunpack.c.l.b16 %v238
      %v2985 = vunpack.c.h.b16 %v238
      %v2986 = vunpack.c.l.b16 %v239
      %v2987 = vunpack.c.h.b16 %v239
      %v2988 = vunpack.c.l.b16 %v240
      %v2989 = vunpack.c.h.b16 %v240
      %v2990 = vunpack.c.l.b16 %v241
      %v2991 = vunpack.c.h.b16 %v241
      %v2992 = vunpack.c.l.b16 %v242
      %v2993 = vunpack.c.h.b16 %v242
      %v2994 = vunpack.c.l.b16 %v243
      %v2995 = vunpack.c.h.b16 %v243
      %v2996 = vunpack.c.l.b16 %v244
      %v2997 = vunpack.c.h.b16 %v244
      %v2998 = vunpack.c.l.b16 %v245
      %v2999 = vunpack.c.h.b16 %v245
      %v3000 = vunpack.c.l.b16 %v246
      %v3001 = vunpack.c.h.b16 %v246
      %v3002 = vunpack.c.l.b16 %v247
      %v3003 = vunpack.c.h.b16 %v247
      %v3004 = vunpack.c.l.b16 %v248
      %v3005 = vunpack.c.h.b16 %v248
      %v3006 = vunpack.c.l.b16 %v249
      %v3007 = vunpack.c.h.b16 %v249
      %v3008 = vunpack.c.l.b16 %v250
      %v3009 = vunpack.c.h.b16 %v250
      %v3010 = vunpack.c.l.b16 %v251
      %v3011 = vunpack.c.h.b16 %v251
      %v3012 = vunpack.c.l.b16 %v252
      %v3013 = vunpack.c.h.b16 %v252
      %v3014 = vunpack.c.l.b16 %v253
      %v3015 = vunpack.c.h.b16 %v253
      %v3016 = vunpack.c.l.b16 %v254
      %v3017 = vunpack.c.h.b16 %v254
      %v3018 = vunpack.c.l.b16 %v255
      %v3019 = vunpack.c.h.b16 %v255
      %v3020 = vunpack.c.l.b16 %v256
      %v3021 = vunpack.c.h.b16 %v256
      %v3022 = vunpack.c.l.b16 %v257
      %v3023 = vunpack.c.h.b16 %v257
      %v3024 = vunpack.c.l.b16 %v258
      %v3025 = vunpack.c.h.b16 %v258
      %v3026 = vunpack.c.l.b16 %v259
      %v3027 = vunpack.c.h.b16 %v259
      %v3028 = vunpack.c.l.b16 %v260
      %v3029 = vunpack.c.h.b16 %v260
      %v3030 = vunpack.c.l.b16 %v261
      %v3031 = vunpack.c.h.b16 %v261
      %v3032 = vunpack.c.l.b16 %v262
      %v3033 = vunpack.c.h.b16 %v262
      %v3034 = vunpack.c.l.b16 %v263
      %v3035 = vunpack.c.h.b16 %v263
      %v3036 = vunpack.c.l.b16 %v264
      %v3037 = vunpack.c.h.b16 %v264
      %v3038 = vunpack.c.l.b16 %v265
      %v3039 = vunpack.c.h.b16 %v265
      %v3040 = vunpack.c.l.b16 %v266
      %v3041 = vunpack.c.h.b16 %v266
      %v3042 = vunpack.c.l.b16 %v267
      %v3043 = vunpack.c.h.b16 %v267
      %v3044 = vunpack.c.l.b16 %v268
      %v3045 = vunpack.c.h.b16 %v268
      %v3046 = vunpack.c.l.b16 %v269
      %v3047 = vunpack.c.h.b16 %v269
      %v3048 = vunpack.c.l.b16 %v270
      %v3049 = vunpack.c.h.b16 %v270
      %v3050 = vunpack.c.l.b16 %v271
      %v3051 = vunpack.c.h.b16 %v271
      %v3052 = vunpack.c.l.b16 %v272
      %v3053 = vunpack.c.h.b16 %v272
      %v3054 = vunpack.c.l.b16 %v273
      %v3055 = vunpack.c.h.b16 %v273
      %v3056 = vunpack.c.l.b16 %v274
      %v3057 = vunpack.c.h.b16 %v274
      %v3058 = vunpack.c.l.b16 %v275
      %v3059 = vunpack.c.h.b16 %v275
      %v3060 = vunpack.c.l.b16 %v276
      %v3061 = vunpack.c.h.b16 %v276
      %v3062 = vunpack.c.l.b16 %v277
      %v3063 = vunpack.c.h.b16 %v277
      %v3064 = vunpack.c.l.b16 %v278
      %v3065 = vunpack.c.h.b16 %v278
      %v3066 = vunpack.c.l.b16 %v279
      %v3067 = vunpack.c.h.b16 %v279
      %v3068 = vunpack.c.l.b16 %v280
      %v3069 = vunpack.c.h.b16 %v280
      %v3070 = vunpack.c.l.b16 %v281
      %v3071 = vunpack.c.h.b16 %v281
      %v3072 = vunpack.c.l.b16 %v282
      %v3073 = vunpack.c.h.b16 %v282
      %v3074 = vunpack.c.l.b16 %v283
      %v3075 = vunpack.c.h.b16 %v283
      %v3076 = vunpack.c.l.b16 %v284
      %v3077 = vunpack.c.h.b16 %v284
      %v3078 = vunpack.c.l.b16 %v285
      %v3079 = vunpack.c.h.b16 %v285
      %v3080 = vunpack.c.l.b16 %v286
      %v3081 = vunpack.c.h.b16 %v286
      %v3082 = vunpack.c.l.b16 %v287
      %v3083 = vunpack.c.h.b16 %v287
      %v3084 = vunpack.c.l.b16 %v288
      %v3085 = vunpack.c.h.b16 %v288
      %v3086 = vunpack.c.l.b16 %v289
      %v3087 = vunpack.c.h.b16 %v289
      %v3088 = vunpack.c.l.b16 %v290
      %v3089 = vunpack.c.h.b16 %v290
      %v3090 = vunpack.c.l.b16 %v291
      %v3091 = vunpack.c.h.b16 %v291
      %v3092 = vunpack.c.l.b16 %v292
      %v3093 = vunpack.c.h.b16 %v292
      %v3094 = vunpack.c.l.b16 %v293
      %v3095 = vunpack.c.h.b16 %v293
      %v3096 = vunpack.c.l.b16 %v294
      %v3097 = vunpack.c.h.b16 %v294
      %v3098 = vunpack.c.l.b16 %v295
      %v3099 = vunpack.c.h.b16 %v295
      %v3100 = vunpack.c.l.b16 %v296
      %v3101 = vunpack.c.h.b16 %v296
      %v3102 = vunpack.c.l.b16 %v297
      %v3103 = vunpack.c.h.b16 %v297
      %v3104 = vunpack.c.l.b16 %v298
      %v3105 = vunpack.c.h.b16 %v298
      %v3106 = vunpack.c.l.b16 %v299
      %v3107 = vunpack.c.h.b16 %v299
      %v3108 = vunpack.c.l.b16 %v300
      %v3109 = vunpack.c.h.b16 %v300
      %v3110 = vunpack.c.l.b16 %v301
      %v3111 = vunpack.c.h.b16 %v301
      %v3112 = vunpack.c.l.b16 %v302
      %v3113 = vunpack.c.h.b16 %v302
      %v3114 = vunpack.c.l.b16 %v303
      %v3115 = vunpack.c.h.b16 %v303
      %v3116 = vunpack.c.l.b16 %v304
      %v3117 = vunpack.c.h.b16 %v304
      %v3118 = vunpack.c.l.b16 %v305
      %v3119 = vunpack.c.h.b16 %v305
      %v3120 = vunpack.c.l.b16 %v306
      %v3121 = vunpack.c.h.b16 %v306
      %v3122 = vunpack.c.l.b16 %v307
      %v3123 = vunpack.c.h.b16 %v307
      %v3124 = vunpack.c.l.b16 %v308
      %v3125 = vunpack.c.h.b16 %v308
      %v3126 = vunpack.c.l.b16 %v309
      %v3127 = vunpack.c.h.b16 %v309
      %v3128 = vunpack.c.l.b16 %v310
      %v3129 = vunpack.c.h.b16 %v310
      %v3130 = vunpack.c.l.b16 %v311
      %v3131 = vunpack.c.h.b16 %v311
      %v3132 = vunpack.c.l.b16 %v312
      %v3133 = vunpack.c.h.b16 %v312
      %v3134 = vunpack.c.l.b16 %v313
      %v3135 = vunpack.c.h.b16 %v313
      %v3136 = vunpack.c.l.b16 %v314
      %v3137 = vunpack.c.h.b16 %v314
      %v3138 = vunpack.c.l.b16 %v315
      %v3139 = vunpack.c.h.b16 %v315
      %v3140 = vunpack.c.l.b16 %v316
      %v3141 = vunpack.c.h.b16 %v316
      %v3142 = vunpack.c.l.b16 %v317
      %v3143 = vunpack.c.h.b16 %v317
      %v3144 = vunpack.c.l.b16 %v318
      %v3145 = vunpack.c.h.b16 %v318
      %v3146 = vunpack.c.l.b16 %v319
      %v3147 = vunpack.c.h.b16 %v319
      %v3148 = vunpack.c.l.b16 %v320
      %v3149 = vunpack.c.h.b16 %v320
      %v3150 = vunpack.c.l.b16 %v321
      %v3151 = vunpack.c.h.b16 %v321
      %v3152 = vunpack.c.l.b16 %v322
      %v3153 = vunpack.c.h.b16 %v322
      %v3154 = vunpack.c.l.b16 %v323
      %v3155 = vunpack.c.h.b16 %v323
      %v3156 = vunpack.c.l.b16 %v324
      %v3157 = vunpack.c.h.b16 %v324
      %v3158 = vunpack.c.l.b16 %v325
      %v3159 = vunpack.c.h.b16 %v325
      %v3160 = vunpack.c.l.b16 %v326
      %v3161 = vunpack.c.h.b16 %v326
      %v3162 = vunpack.c.l.b16 %v327
      %v3163 = vunpack.c.h.b16 %v327
      %v3164 = vunpack.c.l.b16 %v328
      %v3165 = vunpack.c.h.b16 %v328
      %v3166 = vunpack.c.l.b16 %v329
      %v3167 = vunpack.c.h.b16 %v329
      %v3168 = vunpack.c.l.b16 %v330
      %v3169 = vunpack.c.h.b16 %v330
      %v3170 = vpack.c.b16 %v2984, %v2978
      %v3171 = vpack.c.b16 %v2985, %v2979
      %v3172 = vpack.c.b16 %v2986, %v2980
      %v3173 = vpack.c.b16 %v2987, %v2981
      %v3174 = vpack.c.b16 %v2988, %v2982
      %v3175 = vpack.c.b16 %v2989, %v2983
      %v3176 = vpack.c.b16 %v2996, %v2990
      %v3177 = vpack.c.b16 %v2997, %v2991
      %v3178 = vpack.c.b16 %v2998, %v2992
      %v3179 = vpack.c.b16 %v2999, %v2993
      %v3180 = vpack.c.b16 %v3000, %v2994
      %v3181 = vpack.c.b16 %v3001, %v2995
      %v3182 = vpack.c.b16 %v3008, %v3002
      %v3183 = vpack.c.b16 %v3009, %v3003
      %v3184 = vpack.c.b16 %v3010, %v3004
      %v3185 = vpack.c.b16 %v3011, %v3005
      %v3186 = vpack.c.b16 %v3012, %v3006
      %v3187 = vpack.c.b16 %v3013, %v3007
      %v3188 = vpack.c.b16 %v3020, %v3014
      %v3189 = vpack.c.b16 %v3021, %v3015
      %v3190 = vpack.c.b16 %v3022, %v3016
      %v3191 = vpack.c.b16 %v3023, %v3017
      %v3192 = vpack.c.b16 %v3024, %v3018
      %v3193 = vpack.c.b16 %v3025, %v3019
      %v3194 = vpack.c.b16 %v3032, %v3026
      %v3195 = vpack.c.b16 %v3033, %v3027
      %v3196 = vpack.c.b16 %v3034, %v3028
      %v3197 = vpack.c.b16 %v3035, %v3029
      %v3198 = vpack.c.b16 %v3036, %v3030
      %v3199 = vpack.c.b16 %v3037, %v3031
      %v3200 = vpack.c.b16 %v3044, %v3038
      %v3201 = vpack.c.b16 %v3045, %v3039
      %v3202 = vpack.c.b16 %v3046, %v3040
      %v3203 = vpack.c.b16 %v3047, %v3041
      %v3204 = vpack.c.b16 %v3048, %v3042
      %v3205 = vpack.c.b16 %v3049, %v3043
      %v3206 = vpack.c.b16 %v3056, %v3050
      %v3207 = vpack.c.b16 %v3057, %v3051
      %v3208 = vpack.c.b16 %v3058, %v3052
      %v3209 = vpack.c.b16 %v3059, %v3053
      %v3210 = vpack.c.b16 %v3060, %v3054
      %v3211 = vpack.c.b16 %v3061, %v3055
      %v3212 = vpack.c.b16 %v3068, %v3062
      %v3213 = vpack.c.b16 %v3069, %v3063
      %v3214 = vpack.c.b16 %v3070, %v3064
      %v3215 = vpack.c.b16 %v3071, %v3065
      %v3216 = vpack.c.b16 %v3072, %v3066
      %v3217 = vpack.c.b16 %v3073, %v3067
      %v3218 = vpack.c.b16 %v3080, %v3074
      %v3219 = vpack.c.b16 %v3081, %v3075
      %v3220 = vpack.c.b16 %v3082, %v3076
      %v3221 = vpack.c.b16 %v3083, %v3077
      %v3222 = vpack.c.b16 %v3084, %v3078
      %v3223 = vpack.c.b16 %v3085, %v3079
      %v3224 = vpack.c.b16 %v3092, %v3086
      %v3225 = vpack.c.b16 %v3093, %v3087
      %v3226 = vpack.c.b16 %v3094, %v3088
      %v3227 = vpack.c.b16 %v3095, %v3089
      %v3228 = vpack.c.b16 %v3096, %v3090
      %v3229 = vpack.c.b16 %v3097, %v3091
      %v3230 = vpack.c.b16 %v3104, %v3098
      %v3231 = vpack.c.b16 %v3105, %v3099
      %v3232 = vpack.c.b16 %v3106, %v3100
      %v3233 = vpack.c.b16 %v3107, %v3101
      %v3234 = vpack.c.b16 %v3108, %v3102
      %v3235 = vpack.c.b16 %v3109, %v3103
      %v3236 = vpack.c.b16 %v3116, %v3110
      %v3237 = vpack.c.b16 %v3117, %v3111
      %v3238 = vpack.c.b16 %v3118, %v3112
      %v3239 = vpack.c.b16 %v3119, %v3113
      %v3240 = vpack.c.b16 %v3120, %v3114
      %v3241 = vpack.c.b16 %v3121, %v3115
      %v3242 = vpack.c.b16 %v3128, %v3122
      %v3243 = vpack.c.b16 %v3129, %v3123
      %v3244 = vpack.c.b16 %v3130, %v3124
      %v3245 = vpack.c.b16 %v3131, %v3125
      %v3246 = vpack.c.b16 %v3132, %v3126
      %v3247 = vpack.c.b16 %v3133, %v3127
      %v3248 = vpack.c.b16 %v3140, %v3134
      %v3249 = vpack.c.b16 %v3141, %v3135
      %v3250 = vpack.c.b16 %v3142, %v3136
      %v3251 = vpack.c.b16 %v3143, %v3137
      %v3252 = vpack.c.b16 %v3144, %v3138
      %v3253 = vpack.c.b16 %v3145, %v3139
      %v3254 = vpack.c.b16 %v3152, %v3146
      %v3255 = vpack.c.b16 %v3153, %v3147
      %v3256 = vpack.c.b16 %v3154, %v3148
      %v3257 = vpack.c.b16 %v3155, %v3149
      %v3258 = vpack.c.b16 %v3156, %v3150
      %v3259 = vpack.c.b16 %v3157, %v3151
      %v3260 = vpack.c.b16 %v3164, %v3158
      %v3261 = vpack.c.b16 %v3165, %v3159
      %v3262 = vpack.c.b16 %v3166, %v3160
      %v3263 = vpack.c.b16 %v3167, %v3161
      %v3264 = vpack.c.b16 %v3168, %v3162
      %v3265 = vpack.c.b16 %v3169, %v3163
      %v3458 = vunpack.c.l.b16 %v331
      %v3459 = vunpack.c.l.b16 %v332
      %v3460 = vunpack.c.l.b16 %v333
      %v3461 = vunpack.c.l.b16 %v334
      %v3462 = vunpack.c.l.b16 %v335
      %v3463 = vunpack.c.l.b16 %v336
      %v3464 = vunpack.c.l.b16 %v337
      %v3465 = vunpack.c.l.b16 %v338
      %v3466 = vunpack.c.l.b16 %v339
      %v3467 = vunpack.c.l.b16 %v340
      %v3468 = vunpack.c.l.b16 %v341
      %v3469 = vunpack.c.l.b16 %v342
      %v3470 = vunpack.c.l.b16 %v343
      %v3471 = vunpack.c.l.b16 %v344
      %v3472 = vunpack.c.l.b16 %v345
      %v3473 = vunpack.c.l.b16 %v346
      %v3474 = vunpack.c.l.b16 %v347
      %v3475 = vunpack.c.l.b16 %v348
      %v3476 = vunpack.c.l.b16 %v349
      %v3477 = vunpack.c.l.b16 %v350
      %v3478 = vunpack.c.l.b16 %v351
      %v3479 = vunpack.c.l.b16 %v352
      %v3480 = vunpack.c.l.b16 %v353
      %v3481 = vunpack.c.l.b16 %v354
      %v3482 = vunpack.c.l.b16 %v355
      %v3483 = vunpack.c.l.b16 %v356
      %v3484 = vunpack.c.l.b16 %v357
      %v3485 = vunpack.c.l.b16 %v358
      %v3486 = vunpack.c.l.b16 %v359
      %v3487 = vunpack.c.l.b16 %v360
      %v3488 = vunpack.c.l.b16 %v361
      %v3489 = vunpack.c.l.b16 %v362
      %v3490 = vunpack.c.l.b16 %v363
      %v3491 = vunpack.c.l.b16 %v364
      %v3492 = vunpack.c.l.b16 %v365
      %v3493 = vunpack.c.l.b16 %v366
      %v3494 = vunpack.c.l.b16 %v367
      %v3495 = vunpack.c.l.b16 %v368
      %v3496 = vunpack.c.l.b16 %v369
      %v3497 = vunpack.c.l.b16 %v370
      %v3498 = vunpack.c.l.b16 %v371
      %v3499 = vunpack.c.l.b16 %v372
      %v3500 = vunpack.c.l.b16 %v373
      %v3501 = vunpack.c.l.b16 %v374
      %v3502 = vunpack.c.l.b16 %v375
      %v3503 = vunpack.c.l.b16 %v376
      %v3504 = vunpack.c.l.b16 %v377
      %v3505 = vunpack.c.l.b16 %v378
      %v3506 = vunpack.c.l.b16 %v379
      %v3507 = vunpack.c.l.b16 %v380
      %v3508 = vunpack.c.l.b16 %v381
      %v3509 = vunpack.c.l.b16 %v382
      %v3510 = vunpack.c.l.b16 %v383
      %v3511 = vunpack.c.l.b16 %v384
      %v3512 = vunpack.c.l.b16 %v385
      %v3513 = vunpack.c.l.b16 %v386
      %v3514 = vunpack.c.l.b16 %v387
      %v3515 = vunpack.c.l.b16 %v388
      %v3516 = vunpack.c.l.b16 %v389
      %v3517 = vunpack.c.l.b16 %v390
      %v3518 = vunpack.c.l.b16 %v391
      %v3519 = vunpack.c.l.b16 %v392
      %v3520 = vunpack.c.l.b16 %v393
      %v3521 = vunpack.c.l.b16 %v394
      %v3522 = vunpack.c.l.b16 %v395
      %v3523 = vunpack.c.l.b16 %v396
      %v3524 = vunpack.c.l.b16 %v397
      %v3525 = vunpack.c.l.b16 %v398
      %v3526 = vunpack.c.l.b16 %v399
      %v3527 = vunpack.c.l.b16 %v400
      %v3528 = vunpack.c.l.b16 %v401
      %v3529 = vunpack.c.l.b16 %v402
      %v3530 = vunpack.c.l.b16 %v403
      %v3531 = vunpack.c.l.b16 %v404
      %v3532 = vunpack.c.l.b16 %v405
      %v3533 = vunpack.c.l.b16 %v406
      %v3534 = vunpack.c.l.b16 %v407
      %v3535 = vunpack.c.l.b16 %v408
      %v3536 = vunpack.c.l.b16 %v409
      %v3537 = vunpack.c.l.b16 %v410
      %v3538 = vunpack.c.l.b16 %v411
      %v3539 = vunpack.c.l.b16 %v412
      %v3540 = vunpack.c.l.b16 %v413
      %v3541 = vunpack.c.l.b16 %v414
      %v3542 = vunpack.c.l.b16 %v415
      %v3543 = vunpack.c.l.b16 %v416
      %v3544 = vunpack.c.l.b16 %v417
      %v3545 = vunpack.c.l.b16 %v418
      %v3546 = vunpack.c.l.b16 %v419
      %v3547 = vunpack.c.l.b16 %v420
      %v3548 = vunpack.c.l.b16 %v421
      %v3549 = vunpack.c.l.b16 %v422
      %v3550 = vunpack.c.l.b16 %v423
      %v3551 = vunpack.c.l.b16 %v424
      %v3552 = vunpack.c.l.b16 %v425
      %v3553 = vunpack.c.l.b16 %v426
      %v3554 = vpack.c.b16 %v3459, %v3458
      %v3555 = vpack.c.b16 %v3461, %v3460
      %v3556 = vpack.c.b16 %v3463, %v3462
      %v3557 = vpack.c.b16 %v3465, %v3464
      %v3558 = vpack.c.b16 %v3467, %v3466
      %v3559 = vpack.c.b16 %v3469, %v3468
      %v3560 = vpack.c.b16 %v3471, %v3470
      %v3561 = vpack.c.b16 %v3473, %v3472
      %v3562 = vpack.c.b16 %v3475, %v3474
      %v3563 = vpack.c.b16 %v3477, %v3476
      %v3564 = vpack.c.b16 %v3479, %v3478
      %v3565 = vpack.c.b16 %v3481, %v3480
      %v3566 = vpack.c.b16 %v3483, %v3482
      %v3567 = vpack.c.b16 %v3485, %v3484
      %v3568 = vpack.c.b16 %v3487, %v3486
      %v3569 = vpack.c.b16 %v3489, %v3488
      %v3570 = vpack.c.b16 %v3491, %v3490
      %v3571 = vpack.c.b16 %v3493, %v3492
      %v3572 = vpack.c.b16 %v3495, %v3494
      %v3573 = vpack.c.b16 %v3497, %v3496
      %v3574 = vpack.c.b16 %v3499, %v3498
      %v3575 = vpack.c.b16 %v3501, %v3500
      %v3576 = vpack.c.b16 %v3503, %v3502
      %v3577 = vpack.c.b16 %v3505, %v3504
      %v3578 = vpack.c.b16 %v3507, %v3506
      %v3579 = vpack.c.b16 %v3509, %v3508
      %v3580 = vpack.c.b16 %v3511, %v3510
      %v3581 = vpack.c.b16 %v3513, %v3512
      %v3582 = vpack.c.b16 %v3515, %v3514
      %v3583 = vpack.c.b16 %v3517, %v3516
      %v3584 = vpack.c.b16 %v3519, %v3518
      %v3585 = vpack.c.b16 %v3521, %v3520
      %v3586 = vpack.c.b16 %v3523, %v3522
      %v3587 = vpack.c.b16 %v3525, %v3524
      %v3588 = vpack.c.b16 %v3527, %v3526
      %v3589 = vpack.c.b16 %v3529, %v3528
      %v3590 = vpack.c.b16 %v3531, %v3530
      %v3591 = vpack.c.b16 %v3533, %v3532
      %v3592 = vpack.c.b16 %v3535, %v3534
      %v3593 = vpack.c.b16 %v3537, %v3536
      %v3594 = vpack.c.b16 %v3539, %v3538
      %v3595 = vpack.c.b16 %v3541, %v3540
      %v3596 = vpack.c.b16 %v3543, %v3542
      %v3597 = vpack.c.b16 %v3545, %v3544
      %v3598 = vpack.c.b16 %v3547, %v3546
      %v3599 = vpack.c.b16 %v3549, %v3548
      %v3600 = vpack.c.b16 %v3551, %v3550
      %v3601 = vpack.c.b16 %v3553, %v3552
      %3650 = vmatprep.subr.bf16.mxu0 0
      %3651 = vmatpush1.bf16.msra.mxu0 %v3561
      %3652 = vmatprep.subr.bf16.mxu0 0
      %3653 = vmatpush1.bf16.msra.mxu0 %v3560
      %3654 = vmatprep.subr.bf16.mxu0 0
      %3655 = vmatpush1.bf16.msra.mxu0 %v3559
      %3656 = vmatprep.subr.bf16.mxu0 0
      %3657 = vmatpush1.bf16.msra.mxu0 %v3558
      %3658 = vmatprep.subr.bf16.mxu0 0
      %3659 = vmatpush1.bf16.msra.mxu0 %v3557
      %3660 = vmatprep.subr.bf16.mxu0 0
      %3661 = vmatpush1.bf16.msra.mxu0 %v3556
      %3662 = vmatprep.subr.bf16.mxu0 0
      %3663 = vmatpush1.bf16.msra.mxu0 %v3555
      %3664 = vmatprep.subr.bf16.mxu0 0
      %3665 = vmatpush1.bf16.msra.mxu0 %v3554
      %3666 = vmatprep.subr.bf16.mxu0 0
      %3667 = vmatpush2.bf16.msra.mxu0 %v3569
      %3668 = vmatprep.subr.bf16.mxu0 0
      %3669 = vmatpush2.bf16.msra.mxu0 %v3568
      %3670 = vmatprep.subr.bf16.mxu0 0
      %3671 = vmatpush2.bf16.msra.mxu0 %v3567
      %3672 = vmatprep.subr.bf16.mxu0 0
      %3673 = vmatpush2.bf16.msra.mxu0 %v3566
      %3674 = vmatprep.subr.bf16.mxu0 0
      %3675 = vmatpush2.bf16.msra.mxu0 %v3565
      %3676 = vmatprep.subr.bf16.mxu0 0
      %3677 = vmatpush2.bf16.msra.mxu0 %v3564
      %3678 = vmatprep.subr.bf16.mxu0 0
      %3679 = vmatpush2.bf16.msra.mxu0 %v3563
      %3680 = vmatprep.subr.bf16.mxu0 0
      %3681 = vmatpush2.bf16.msra.mxu0 %v3562
      %3682 = vmatprep.mubr.bf16.mxu0 %v3171
      %3683 = vmatmul.mubr.bf16.gmra.mxu0 %v3170
      %v3684 = vpop.f32.mrf.mxu0
      %v3685 = vadd.f32 %v2756, %v3684
      %v3686 = vpop.f32.mrf.mxu0
      %v3687 = vpop.f32.mrf.mxu0
      %v3688 = vadd.f32 %v2759, %v3687
      %v3689 = vpop.f32.mrf.mxu0
      %3690 = vmatprep.mubr.bf16.mxu0 %v3177
      %3691 = vmatmul.mubr.bf16.gmra.mxu0 %v3176
      %v3692 = vpop.f32.mrf.mxu0
      %v3693 = vadd.f32 %v2764, %v3692
      %v3694 = vpop.f32.mrf.mxu0
      %v3695 = vpop.f32.mrf.mxu0
      %v3696 = vadd.f32 %v2767, %v3695
      %v3697 = vpop.f32.mrf.mxu0
      %3698 = vmatprep.mubr.bf16.mxu0 %v3183
      %3699 = vmatmul.mubr.bf16.gmra.mxu0 %v3182
      %v3700 = vpop.f32.mrf.mxu0
      %v3701 = vadd.f32 %v2772, %v3700
      %v3702 = vpop.f32.mrf.mxu0
      %v3703 = vpop.f32.mrf.mxu0
      %v3704 = vadd.f32 %v2775, %v3703
      %v3705 = vpop.f32.mrf.mxu0
      %3706 = vmatprep.mubr.bf16.mxu0 %v3189
      %3707 = vmatmul.mubr.bf16.gmra.mxu0 %v3188
      %v3708 = vpop.f32.mrf.mxu0
      %v3709 = vadd.f32 %v2780, %v3708
      %v3710 = vpop.f32.mrf.mxu0
      %v3711 = vpop.f32.mrf.mxu0
      %v3712 = vadd.f32 %v2783, %v3711
      %v3713 = vpop.f32.mrf.mxu0
      %3714 = vmatprep.mubr.bf16.mxu0 %v3195
      %3715 = vmatmul.mubr.bf16.gmra.mxu0 %v3194
      %v3716 = vpop.f32.mrf.mxu0
      %v3717 = vadd.f32 %v2788, %v3716
      %v3718 = vpop.f32.mrf.mxu0
      %v3719 = vpop.f32.mrf.mxu0
      %v3720 = vadd.f32 %v2791, %v3719
      %v3721 = vpop.f32.mrf.mxu0
      %3722 = vmatprep.mubr.bf16.mxu0 %v3201
      %3723 = vmatmul.mubr.bf16.gmra.mxu0 %v3200
      %v3724 = vpop.f32.mrf.mxu0
      %v3725 = vadd.f32 %v2796, %v3724
      %v3726 = vpop.f32.mrf.mxu0
      %v3727 = vpop.f32.mrf.mxu0
      %v3728 = vadd.f32 %v2799, %v3727
      %v3729 = vpop.f32.mrf.mxu0
      %3730 = vmatprep.mubr.bf16.mxu0 %v3207
      %3731 = vmatmul.mubr.bf16.gmra.mxu0 %v3206
      %v3732 = vpop.f32.mrf.mxu0
      %v3733 = vadd.f32 %v2804, %v3732
      %v3734 = vpop.f32.mrf.mxu0
      %v3735 = vpop.f32.mrf.mxu0
      %v3736 = vadd.f32 %v2807, %v3735
      %v3737 = vpop.f32.mrf.mxu0
      %3738 = vmatprep.mubr.bf16.mxu0 %v3213
      %3739 = vmatmul.mubr.bf16.gmra.mxu0 %v3212
      %v3740 = vpop.f32.mrf.mxu0
      %v3741 = vadd.f32 %v2812, %v3740
      %v3742 = vpop.f32.mrf.mxu0
      %v3743 = vpop.f32.mrf.mxu0
      %v3744 = vadd.f32 %v2815, %v3743
      %v3745 = vpop.f32.mrf.mxu0
      %3746 = vmatprep.mubr.bf16.mxu0 %v3219
      %3747 = vmatmul.mubr.bf16.gmra.mxu0 %v3218
      %v3748 = vpop.f32.mrf.mxu0
      %v3749 = vadd.f32 %v2820, %v3748
      %v3750 = vpop.f32.mrf.mxu0
      %v3751 = vpop.f32.mrf.mxu0
      %v3752 = vadd.f32 %v2823, %v3751
      %v3753 = vpop.f32.mrf.mxu0
      %3754 = vmatprep.mubr.bf16.mxu0 %v3225
      %3755 = vmatmul.mubr.bf16.gmra.mxu0 %v3224
      %v3756 = vpop.f32.mrf.mxu0
      %v3757 = vadd.f32 %v2828, %v3756
      %v3758 = vpop.f32.mrf.mxu0
      %v3759 = vpop.f32.mrf.mxu0
      %v3760 = vadd.f32 %v2831, %v3759
      %v3761 = vpop.f32.mrf.mxu0
      %3762 = vmatprep.mubr.bf16.mxu0 %v3231
      %3763 = vmatmul.mubr.bf16.gmra.mxu0 %v3230
      %v3764 = vpop.f32.mrf.mxu0
      %v3765 = vadd.f32 %v2836, %v3764
      %v3766 = vpop.f32.mrf.mxu0
      %v3767 = vpop.f32.mrf.mxu0
      %v3768 = vadd.f32 %v2839, %v3767
      %v3769 = vpop.f32.mrf.mxu0
      %3770 = vmatprep.mubr.bf16.mxu0 %v3237
      %3771 = vmatmul.mubr.bf16.gmra.mxu0 %v3236
      %v3772 = vpop.f32.mrf.mxu0
      %v3773 = vadd.f32 %v2844, %v3772
      %v3774 = vpop.f32.mrf.mxu0
      %v3775 = vpop.f32.mrf.mxu0
      %v3776 = vadd.f32 %v2847, %v3775
      %v3777 = vpop.f32.mrf.mxu0
      %3778 = vmatprep.mubr.bf16.mxu0 %v3243
      %3779 = vmatmul.mubr.bf16.gmra.mxu0 %v3242
      %v3780 = vpop.f32.mrf.mxu0
      %v3781 = vadd.f32 %v2852, %v3780
      %v3782 = vpop.f32.mrf.mxu0
      %v3783 = vpop.f32.mrf.mxu0
      %v3784 = vadd.f32 %v2855, %v3783
      %v3785 = vpop.f32.mrf.mxu0
      %3786 = vmatprep.mubr.bf16.mxu0 %v3249
      %3787 = vmatmul.mubr.bf16.gmra.mxu0 %v3248
      %v3788 = vpop.f32.mrf.mxu0
      %v3789 = vadd.f32 %v2860, %v3788
      %v3790 = vpop.f32.mrf.mxu0
      %v3791 = vpop.f32.mrf.mxu0
      %v3792 = vadd.f32 %v2863, %v3791
      %v3793 = vpop.f32.mrf.mxu0
      %3794 = vmatprep.mubr.bf16.mxu0 %v3255
      %3795 = vmatmul.mubr.bf16.gmra.mxu0 %v3254
      %v3796 = vpop.f32.mrf.mxu0
      %v3797 = vadd.f32 %v2868, %v3796
      %v3798 = vpop.f32.mrf.mxu0
      %v3799 = vpop.f32.mrf.mxu0
      %v3800 = vadd.f32 %v2871, %v3799
      %v3801 = vpop.f32.mrf.mxu0
      %3802 = vmatprep.mubr.bf16.mxu0 %v3261
      %3803 = vmatmul.mubr.bf16.gmra.mxu0 %v3260
      %v3804 = vpop.f32.mrf.mxu0
      %v3805 = vadd.f32 %v2876, %v3804
      %v3806 = vpop.f32.mrf.mxu0
      %v3807 = vpop.f32.mrf.mxu0
      %v3808 = vadd.f32 %v2879, %v3807
      %v3809 = vpop.f32.mrf.mxu0
      %3810 = vdwg.mxu0
      %3811 = vmatprep.subr.bf16.mxu0 0
      %3812 = vmatpush1.bf16.msra.mxu0 %v3577
      %3813 = vmatprep.subr.bf16.mxu0 0
      %3814 = vmatpush1.bf16.msra.mxu0 %v3576
      %3815 = vmatprep.subr.bf16.mxu0 0
      %3816 = vmatpush1.bf16.msra.mxu0 %v3575
      %3817 = vmatprep.subr.bf16.mxu0 0
      %3818 = vmatpush1.bf16.msra.mxu0 %v3574
      %3819 = vmatprep.subr.bf16.mxu0 0
      %3820 = vmatpush1.bf16.msra.mxu0 %v3573
      %3821 = vmatprep.subr.bf16.mxu0 0
      %3822 = vmatpush1.bf16.msra.mxu0 %v3572
      %3823 = vmatprep.subr.bf16.mxu0 0
      %3824 = vmatpush1.bf16.msra.mxu0 %v3571
      %3825 = vmatprep.subr.bf16.mxu0 0
      %3826 = vmatpush1.bf16.msra.mxu0 %v3570
      %3827 = vmatprep.subr.bf16.mxu0 0
      %3828 = vmatpush2.bf16.msra.mxu0 %v3585
      %3829 = vmatprep.subr.bf16.mxu0 0
      %3830 = vmatpush2.bf16.msra.mxu0 %v3584
      %3831 = vmatprep.subr.bf16.mxu0 0
      %3832 = vmatpush2.bf16.msra.mxu0 %v3583
      %3833 = vmatprep.subr.bf16.mxu0 0
      %3834 = vmatpush2.bf16.msra.mxu0 %v3582
      %3835 = vmatprep.subr.bf16.mxu0 0
      %3836 = vmatpush2.bf16.msra.mxu0 %v3581
      %3837 = vmatprep.subr.bf16.mxu0 0
      %3838 = vmatpush2.bf16.msra.mxu0 %v3580
      %3839 = vmatprep.subr.bf16.mxu0 0
      %3840 = vmatpush2.bf16.msra.mxu0 %v3579
      %3841 = vmatprep.subr.bf16.mxu0 0
      %3842 = vmatpush2.bf16.msra.mxu0 %v3578
      %3843 = vmatprep.mubr.bf16.mxu0 %v3173
      %3844 = vmatmul.mubr.bf16.gmra.mxu0 %v3172
      %v3845 = vpop.f32.mrf.mxu0
      %v3846 = vadd.f32 %v3685, %v3845
      %v3847 = vpop.f32.mrf.mxu0
      %v3848 = vpop.f32.mrf.mxu0
      %v3849 = vadd.f32 %v3688, %v3848
      %v3850 = vpop.f32.mrf.mxu0
      %3851 = vmatprep.mubr.bf16.mxu0 %v3179
      %3852 = vmatmul.mubr.bf16.gmra.mxu0 %v3178
      %v3853 = vpop.f32.mrf.mxu0
      %v3854 = vadd.f32 %v3693, %v3853
      %v3855 = vpop.f32.mrf.mxu0
      %v3856 = vpop.f32.mrf.mxu0
      %v3857 = vadd.f32 %v3696, %v3856
      %v3858 = vpop.f32.mrf.mxu0
      %3859 = vmatprep.mubr.bf16.mxu0 %v3185
      %3860 = vmatmul.mubr.bf16.gmra.mxu0 %v3184
      %v3861 = vpop.f32.mrf.mxu0
      %v3862 = vadd.f32 %v3701, %v3861
      %v3863 = vpop.f32.mrf.mxu0
      %v3864 = vpop.f32.mrf.mxu0
      %v3865 = vadd.f32 %v3704, %v3864
      %v3866 = vpop.f32.mrf.mxu0
      %3867 = vmatprep.mubr.bf16.mxu0 %v3191
      %3868 = vmatmul.mubr.bf16.gmra.mxu0 %v3190
      %v3869 = vpop.f32.mrf.mxu0
      %v3870 = vadd.f32 %v3709, %v3869
      %v3871 = vpop.f32.mrf.mxu0
      %v3872 = vpop.f32.mrf.mxu0
      %v3873 = vadd.f32 %v3712, %v3872
      %v3874 = vpop.f32.mrf.mxu0
      %3875 = vmatprep.mubr.bf16.mxu0 %v3197
      %3876 = vmatmul.mubr.bf16.gmra.mxu0 %v3196
      %v3877 = vpop.f32.mrf.mxu0
      %v3878 = vadd.f32 %v3717, %v3877
      %v3879 = vpop.f32.mrf.mxu0
      %v3880 = vpop.f32.mrf.mxu0
      %v3881 = vadd.f32 %v3720, %v3880
      %v3882 = vpop.f32.mrf.mxu0
      %3883 = vmatprep.mubr.bf16.mxu0 %v3203
      %3884 = vmatmul.mubr.bf16.gmra.mxu0 %v3202
      %v3885 = vpop.f32.mrf.mxu0
      %v3886 = vadd.f32 %v3725, %v3885
      %v3887 = vpop.f32.mrf.mxu0
      %v3888 = vpop.f32.mrf.mxu0
      %v3889 = vadd.f32 %v3728, %v3888
      %v3890 = vpop.f32.mrf.mxu0
      %3891 = vmatprep.mubr.bf16.mxu0 %v3209
      %3892 = vmatmul.mubr.bf16.gmra.mxu0 %v3208
      %v3893 = vpop.f32.mrf.mxu0
      %v3894 = vadd.f32 %v3733, %v3893
      %v3895 = vpop.f32.mrf.mxu0
      %v3896 = vpop.f32.mrf.mxu0
      %v3897 = vadd.f32 %v3736, %v3896
      %v3898 = vpop.f32.mrf.mxu0
      %3899 = vmatprep.mubr.bf16.mxu0 %v3215
      %3900 = vmatmul.mubr.bf16.gmra.mxu0 %v3214
      %v3901 = vpop.f32.mrf.mxu0
      %v3902 = vadd.f32 %v3741, %v3901
      %v3903 = vpop.f32.mrf.mxu0
      %v3904 = vpop.f32.mrf.mxu0
      %v3905 = vadd.f32 %v3744, %v3904
      %v3906 = vpop.f32.mrf.mxu0
      %3907 = vmatprep.mubr.bf16.mxu0 %v3221
      %3908 = vmatmul.mubr.bf16.gmra.mxu0 %v3220
      %v3909 = vpop.f32.mrf.mxu0
      %v3910 = vadd.f32 %v3749, %v3909
      %v3911 = vpop.f32.mrf.mxu0
      %v3912 = vpop.f32.mrf.mxu0
      %v3913 = vadd.f32 %v3752, %v3912
      %v3914 = vpop.f32.mrf.mxu0
      %3915 = vmatprep.mubr.bf16.mxu0 %v3227
      %3916 = vmatmul.mubr.bf16.gmra.mxu0 %v3226
      %v3917 = vpop.f32.mrf.mxu0
      %v3918 = vadd.f32 %v3757, %v3917
      %v3919 = vpop.f32.mrf.mxu0
      %v3920 = vpop.f32.mrf.mxu0
      %v3921 = vadd.f32 %v3760, %v3920
      %v3922 = vpop.f32.mrf.mxu0
      %3923 = vmatprep.mubr.bf16.mxu0 %v3233
      %3924 = vmatmul.mubr.bf16.gmra.mxu0 %v3232
      %v3925 = vpop.f32.mrf.mxu0
      %v3926 = vadd.f32 %v3765, %v3925
      %v3927 = vpop.f32.mrf.mxu0
      %v3928 = vpop.f32.mrf.mxu0
      %v3929 = vadd.f32 %v3768, %v3928
      %v3930 = vpop.f32.mrf.mxu0
      %3931 = vmatprep.mubr.bf16.mxu0 %v3239
      %3932 = vmatmul.mubr.bf16.gmra.mxu0 %v3238
      %v3933 = vpop.f32.mrf.mxu0
      %v3934 = vadd.f32 %v3773, %v3933
      %v3935 = vpop.f32.mrf.mxu0
      %v3936 = vpop.f32.mrf.mxu0
      %v3937 = vadd.f32 %v3776, %v3936
      %v3938 = vpop.f32.mrf.mxu0
      %3939 = vmatprep.mubr.bf16.mxu0 %v3245
      %3940 = vmatmul.mubr.bf16.gmra.mxu0 %v3244
      %v3941 = vpop.f32.mrf.mxu0
      %v3942 = vadd.f32 %v3781, %v3941
      %v3943 = vpop.f32.mrf.mxu0
      %v3944 = vpop.f32.mrf.mxu0
      %v3945 = vadd.f32 %v3784, %v3944
      %v3946 = vpop.f32.mrf.mxu0
      %3947 = vmatprep.mubr.bf16.mxu0 %v3251
      %3948 = vmatmul.mubr.bf16.gmra.mxu0 %v3250
      %v3949 = vpop.f32.mrf.mxu0
      %v3950 = vadd.f32 %v3789, %v3949
      %v3951 = vpop.f32.mrf.mxu0
      %v3952 = vpop.f32.mrf.mxu0
      %v3953 = vadd.f32 %v3792, %v3952
      %v3954 = vpop.f32.mrf.mxu0
      %3955 = vmatprep.mubr.bf16.mxu0 %v3257
      %3956 = vmatmul.mubr.bf16.gmra.mxu0 %v3256
      %v3957 = vpop.f32.mrf.mxu0
      %v3958 = vadd.f32 %v3797, %v3957
      %v3959 = vpop.f32.mrf.mxu0
      %v3960 = vpop.f32.mrf.mxu0
      %v3961 = vadd.f32 %v3800, %v3960
      %v3962 = vpop.f32.mrf.mxu0
      %3963 = vmatprep.mubr.bf16.mxu0 %v3263
      %3964 = vmatmul.mubr.bf16.gmra.mxu0 %v3262
      %v3965 = vpop.f32.mrf.mxu0
      %v3966 = vadd.f32 %v3805, %v3965
      %v3967 = vpop.f32.mrf.mxu0
      %v3968 = vpop.f32.mrf.mxu0
      %v3969 = vadd.f32 %v3808, %v3968
      %v3970 = vpop.f32.mrf.mxu0
      %3971 = vdwg.mxu0
      %3972 = vmatprep.subr.bf16.mxu0 0
      %3973 = vmatpush1.bf16.msra.mxu0 %v3593
      %3974 = vmatprep.subr.bf16.mxu0 0
      %3975 = vmatpush1.bf16.msra.mxu0 %v3592
      %3976 = vmatprep.subr.bf16.mxu0 0
      %3977 = vmatpush1.bf16.msra.mxu0 %v3591
      %3978 = vmatprep.subr.bf16.mxu0 0
      %3979 = vmatpush1.bf16.msra.mxu0 %v3590
      %3980 = vmatprep.subr.bf16.mxu0 0
      %3981 = vmatpush1.bf16.msra.mxu0 %v3589
      %3982 = vmatprep.subr.bf16.mxu0 0
      %3983 = vmatpush1.bf16.msra.mxu0 %v3588
      %3984 = vmatprep.subr.bf16.mxu0 0
      %3985 = vmatpush1.bf16.msra.mxu0 %v3587
      %3986 = vmatprep.subr.bf16.mxu0 0
      %3987 = vmatpush1.bf16.msra.mxu0 %v3586
      %3988 = vmatprep.subr.bf16.mxu0 0
      %3989 = vmatpush2.bf16.msra.mxu0 %v3601
      %3990 = vmatprep.subr.bf16.mxu0 0
      %3991 = vmatpush2.bf16.msra.mxu0 %v3600
      %3992 = vmatprep.subr.bf16.mxu0 0
      %3993 = vmatpush2.bf16.msra.mxu0 %v3599
      %3994 = vmatprep.subr.bf16.mxu0 0
      %3995 = vmatpush2.bf16.msra.mxu0 %v3598
      %3996 = vmatprep.subr.bf16.mxu0 0
      %3997 = vmatpush2.bf16.msra.mxu0 %v3597
      %3998 = vmatprep.subr.bf16.mxu0 0
      %3999 = vmatpush2.bf16.msra.mxu0 %v3596
      %4000 = vmatprep.subr.bf16.mxu0 0
      %4001 = vmatpush2.bf16.msra.mxu0 %v3595
      %4002 = vmatprep.subr.bf16.mxu0 0
      %4003 = vmatpush2.bf16.msra.mxu0 %v3594
      %4004 = vmatprep.mubr.bf16.mxu0 %v3175
      %4005 = vmatmul.mubr.bf16.gmra.mxu0 %v3174
      %v4006 = vpop.f32.mrf.mxu0
      %v4007 = vadd.f32 %v3846, %v4006
      %v4008 = vpop.f32.mrf.mxu0
      %v4009 = vpop.f32.mrf.mxu0
      %v4010 = vadd.f32 %v3849, %v4009
      %v4011 = vpop.f32.mrf.mxu0
      %4012 = vmatprep.mubr.bf16.mxu0 %v3181
      %4013 = vmatmul.mubr.bf16.gmra.mxu0 %v3180
      %v4014 = vpop.f32.mrf.mxu0
      %v4015 = vadd.f32 %v3854, %v4014
      %v4016 = vpop.f32.mrf.mxu0
      %v4017 = vpop.f32.mrf.mxu0
      %v4018 = vadd.f32 %v3857, %v4017
      %v4019 = vpop.f32.mrf.mxu0
      %4020 = vmatprep.mubr.bf16.mxu0 %v3187
      %4021 = vmatmul.mubr.bf16.gmra.mxu0 %v3186
      %v4022 = vpop.f32.mrf.mxu0
      %v4023 = vadd.f32 %v3862, %v4022
      %v4024 = vpop.f32.mrf.mxu0
      %v4025 = vpop.f32.mrf.mxu0
      %v4026 = vadd.f32 %v3865, %v4025
      %v4027 = vpop.f32.mrf.mxu0
      %4028 = vmatprep.mubr.bf16.mxu0 %v3193
      %4029 = vmatmul.mubr.bf16.gmra.mxu0 %v3192
      %v4030 = vpop.f32.mrf.mxu0
      %v4031 = vadd.f32 %v3870, %v4030
      %v4032 = vpop.f32.mrf.mxu0
      %v4033 = vpop.f32.mrf.mxu0
      %v4034 = vadd.f32 %v3873, %v4033
      %v4035 = vpop.f32.mrf.mxu0
      %4036 = vmatprep.mubr.bf16.mxu0 %v3199
      %4037 = vmatmul.mubr.bf16.gmra.mxu0 %v3198
      %v4038 = vpop.f32.mrf.mxu0
      %v4039 = vadd.f32 %v3878, %v4038
      %v4040 = vpop.f32.mrf.mxu0
      %v4041 = vpop.f32.mrf.mxu0
      %v4042 = vadd.f32 %v3881, %v4041
      %v4043 = vpop.f32.mrf.mxu0
      %4044 = vmatprep.mubr.bf16.mxu0 %v3205
      %4045 = vmatmul.mubr.bf16.gmra.mxu0 %v3204
      %v4046 = vpop.f32.mrf.mxu0
      %v4047 = vadd.f32 %v3886, %v4046
      %v4048 = vpop.f32.mrf.mxu0
      %v4049 = vpop.f32.mrf.mxu0
      %v4050 = vadd.f32 %v3889, %v4049
      %v4051 = vpop.f32.mrf.mxu0
      %4052 = vmatprep.mubr.bf16.mxu0 %v3211
      %4053 = vmatmul.mubr.bf16.gmra.mxu0 %v3210
      %v4054 = vpop.f32.mrf.mxu0
      %v4055 = vadd.f32 %v3894, %v4054
      %v4056 = vpop.f32.mrf.mxu0
      %v4057 = vpop.f32.mrf.mxu0
      %v4058 = vadd.f32 %v3897, %v4057
      %v4059 = vpop.f32.mrf.mxu0
      %4060 = vmatprep.mubr.bf16.mxu0 %v3217
      %4061 = vmatmul.mubr.bf16.gmra.mxu0 %v3216
      %v4062 = vpop.f32.mrf.mxu0
      %v4063 = vadd.f32 %v3902, %v4062
      %v4064 = vpop.f32.mrf.mxu0
      %v4065 = vpop.f32.mrf.mxu0
      %v4066 = vadd.f32 %v3905, %v4065
      %v4067 = vpop.f32.mrf.mxu0
      %4068 = vmatprep.mubr.bf16.mxu0 %v3223
      %4069 = vmatmul.mubr.bf16.gmra.mxu0 %v3222
      %v4070 = vpop.f32.mrf.mxu0
      %v4071 = vadd.f32 %v3910, %v4070
      %v4072 = vpop.f32.mrf.mxu0
      %v4073 = vpop.f32.mrf.mxu0
      %v4074 = vadd.f32 %v3913, %v4073
      %v4075 = vpop.f32.mrf.mxu0
      %4076 = vmatprep.mubr.bf16.mxu0 %v3229
      %4077 = vmatmul.mubr.bf16.gmra.mxu0 %v3228
      %v4078 = vpop.f32.mrf.mxu0
      %v4079 = vadd.f32 %v3918, %v4078
      %v4080 = vpop.f32.mrf.mxu0
      %v4081 = vpop.f32.mrf.mxu0
      %v4082 = vadd.f32 %v3921, %v4081
      %v4083 = vpop.f32.mrf.mxu0
      %4084 = vmatprep.mubr.bf16.mxu0 %v3235
      %4085 = vmatmul.mubr.bf16.gmra.mxu0 %v3234
      %v4086 = vpop.f32.mrf.mxu0
      %v4087 = vadd.f32 %v3926, %v4086
      %v4088 = vpop.f32.mrf.mxu0
      %v4089 = vpop.f32.mrf.mxu0
      %v4090 = vadd.f32 %v3929, %v4089
      %v4091 = vpop.f32.mrf.mxu0
      %4092 = vmatprep.mubr.bf16.mxu0 %v3241
      %4093 = vmatmul.mubr.bf16.gmra.mxu0 %v3240
      %v4094 = vpop.f32.mrf.mxu0
      %v4095 = vadd.f32 %v3934, %v4094
      %v4096 = vpop.f32.mrf.mxu0
      %v4097 = vpop.f32.mrf.mxu0
      %v4098 = vadd.f32 %v3937, %v4097
      %v4099 = vpop.f32.mrf.mxu0
      %4100 = vmatprep.mubr.bf16.mxu0 %v3247
      %4101 = vmatmul.mubr.bf16.gmra.mxu0 %v3246
      %v4102 = vpop.f32.mrf.mxu0
      %v4103 = vadd.f32 %v3942, %v4102
      %v4104 = vpop.f32.mrf.mxu0
      %v4105 = vpop.f32.mrf.mxu0
      %v4106 = vadd.f32 %v3945, %v4105
      %v4107 = vpop.f32.mrf.mxu0
      %4108 = vmatprep.mubr.bf16.mxu0 %v3253
      %4109 = vmatmul.mubr.bf16.gmra.mxu0 %v3252
      %v4110 = vpop.f32.mrf.mxu0
      %v4111 = vadd.f32 %v3950, %v4110
      %v4112 = vpop.f32.mrf.mxu0
      %v4113 = vpop.f32.mrf.mxu0
      %v4114 = vadd.f32 %v3953, %v4113
      %v4115 = vpop.f32.mrf.mxu0
      %4116 = vmatprep.mubr.bf16.mxu0 %v3259
      %4117 = vmatmul.mubr.bf16.gmra.mxu0 %v3258
      %v4118 = vpop.f32.mrf.mxu0
      %v4119 = vadd.f32 %v3958, %v4118
      %v4120 = vpop.f32.mrf.mxu0
      %v4121 = vpop.f32.mrf.mxu0
      %v4122 = vadd.f32 %v3961, %v4121
      %v4123 = vpop.f32.mrf.mxu0
      %4124 = vmatprep.mubr.bf16.mxu0 %v3265
      %4125 = vmatmul.mubr.bf16.gmra.mxu0 %v3264
      %v4126 = vpop.f32.mrf.mxu0
      %v4127 = vadd.f32 %v3966, %v4126
      %v4128 = vpop.f32.mrf.mxu0
      %v4129 = vpop.f32.mrf.mxu0
      %v4130 = vadd.f32 %v3969, %v4129
      %v4131 = vpop.f32.mrf.mxu0
      %4132 = vdwg.mxu0
      %v4133 = vld [vmem:[%s214] sm:$0xee]
      %v4134 = vld [vmem:[%s214 + $0x8] sm:$0xee]
      %v4135 = vld [vmem:[%s214 + $0x10] sm:$0xee]
      %v4136 = vld [vmem:[%s214 + $0x48] sm:$0xee]
      %v4137 = vld [vmem:[%s214 + $0x50] sm:$0xee]
      %v4138 = vld [vmem:[%s214 + $0x58] sm:$0xee]
      %v4139 = vld [vmem:[%s214 + $0x90] sm:$0xee]
      %v4140 = vld [vmem:[%s214 + $0x98] sm:$0xee]
      %v4141 = vld [vmem:[%s214 + $0xa0] sm:$0xee]
      %v4142 = vld [vmem:[%s214 + $0xd8] sm:$0xee]
      %v4143 = vld [vmem:[%s214 + $0xe0] sm:$0xee]
      %v4144 = vld [vmem:[%s214 + $0xe8] sm:$0xee]
      %v4145 = vld [vmem:[%s214 + $0x120] sm:$0xee]
      %v4146 = vld [vmem:[%s214 + $0x128] sm:$0xee]
      %v4147 = vld [vmem:[%s214 + $0x130] sm:$0xee]
      %v4148 = vld [vmem:[%s214 + $0x168] sm:$0xee]
      %v4149 = vld [vmem:[%s214 + $0x170] sm:$0xee]
      %v4150 = vld [vmem:[%s214 + $0x178] sm:$0xee]
      %v4151 = vld [vmem:[%s214 + $0x1b0] sm:$0xee]
      %v4152 = vld [vmem:[%s214 + $0x1b8] sm:$0xee]
      %v4153 = vld [vmem:[%s214 + $0x1c0] sm:$0xee]
      %v4154 = vld [vmem:[%s214 + $0x1f8] sm:$0xee]
      %v4155 = vld [vmem:[%s214 + $0x200] sm:$0xee]
      %v4156 = vld [vmem:[%s214 + $0x208] sm:$0xee]
      %v4157 = vld [vmem:[%s214 + $0x240] sm:$0xee]
      %v4158 = vld [vmem:[%s214 + $0x248] sm:$0xee]
      %v4159 = vld [vmem:[%s214 + $0x250] sm:$0xee]
      %v4160 = vld [vmem:[%s214 + $0x288] sm:$0xee]
      %v4161 = vld [vmem:[%s214 + $0x290] sm:$0xee]
      %v4162 = vld [vmem:[%s214 + $0x298] sm:$0xee]
      %v4163 = vld [vmem:[%s214 + $0x2d0] sm:$0xee]
      %v4164 = vld [vmem:[%s214 + $0x2d8] sm:$0xee]
      %v4165 = vld [vmem:[%s214 + $0x2e0] sm:$0xee]
      %v4166 = vld [vmem:[%s214 + $0x318] sm:$0xee]
      %v4167 = vld [vmem:[%s214 + $0x320] sm:$0xee]
      %v4168 = vld [vmem:[%s214 + $0x328] sm:$0xee]
      %v4169 = vld [vmem:[%s214 + $0x360] sm:$0xee]
      %v4170 = vld [vmem:[%s214 + $0x368] sm:$0xee]
      %v4171 = vld [vmem:[%s214 + $0x370] sm:$0xee]
      %v4172 = vld [vmem:[%s214 + $0x3a8] sm:$0xee]
      %v4173 = vld [vmem:[%s214 + $0x3b0] sm:$0xee]
      %v4174 = vld [vmem:[%s214 + $0x3b8] sm:$0xee]
      %v4175 = vld [vmem:[%s214 + $0x3f0] sm:$0xee]
      %v4176 = vld [vmem:[%s214 + $0x3f8] sm:$0xee]
      %v4177 = vld [vmem:[%s214 + $0x400] sm:$0xee]
      %v4178 = vld [vmem:[%s214 + $0x438] sm:$0xee]
      %v4179 = vld [vmem:[%s214 + $0x440] sm:$0xee]
      %v4180 = vld [vmem:[%s214 + $0x448] sm:$0xee]
      %vm4277 = vcmask 1042432
      %vm4278 = vcmask 1046532
      %vm4279 = vmor %vm4277, %vm4278
      %v4280 = vrot.slane %v4133, 5
      %v4281 = vrot.slane %v4280, 4
      %v4282 = vrot.slane %v238, 5
      %v4283 = vsel %vm4279, %v4281, %v4282
      %v4284 = vrot.slane %v4134, 5
      %v4285 = vrot.slane %v4284, 4
      %v4286 = vrot.slane %v239, 5
      %v4287 = vsel %vm4279, %v4285, %v4286
      %v4288 = vrot.slane %v4135, 5
      %v4289 = vrot.slane %v4288, 4
      %v4290 = vrot.slane %v240, 5
      %v4291 = vsel %vm4279, %v4289, %v4290
      %v4292 = vrot.slane %v4282, 4
      %v4293 = vrot.slane %v427, 5
      %v4294 = vsel %vm4279, %v4292, %v4293
      %v4295 = vrot.slane %v4286, 4
      %v4296 = vrot.slane %v428, 5
      %v4297 = vsel %vm4279, %v4295, %v4296
      %v4298 = vrot.slane %v4290, 4
      %v4299 = vrot.slane %v429, 5
      %v4300 = vsel %vm4279, %v4298, %v4299
      %v4301 = vrot.slane %v4136, 5
      %v4302 = vrot.slane %v4301, 4
      %v4303 = vrot.slane %v244, 5
      %v4304 = vsel %vm4279, %v4302, %v4303
      %v4305 = vrot.slane %v4137, 5
      %v4306 = vrot.slane %v4305, 4
      %v4307 = vrot.slane %v245, 5
      %v4308 = vsel %vm4279, %v4306, %v4307
      %v4309 = vrot.slane %v4138, 5
      %v4310 = vrot.slane %v4309, 4
      %v4311 = vrot.slane %v246, 5
      %v4312 = vsel %vm4279, %v4310, %v4311
      %v4313 = vrot.slane %v4303, 4
      %v4314 = vrot.slane %v430, 5
      %v4315 = vsel %vm4279, %v4313, %v4314
      %v4316 = vrot.slane %v4307, 4
      %v4317 = vrot.slane %v431, 5
      %v4318 = vsel %vm4279, %v4316, %v4317
      %v4319 = vrot.slane %v4311, 4
      %v4320 = vrot.slane %v432, 5
      %v4321 = vsel %vm4279, %v4319, %v4320
      %v4322 = vrot.slane %v4139, 5
      %v4323 = vrot.slane %v4322, 4
      %v4324 = vrot.slane %v250, 5
      %v4325 = vsel %vm4279, %v4323, %v4324
      %v4326 = vrot.slane %v4140, 5
      %v4327 = vrot.slane %v4326, 4
      %v4328 = vrot.slane %v251, 5
      %v4329 = vsel %vm4279, %v4327, %v4328
      %v4330 = vrot.slane %v4141, 5
      %v4331 = vrot.slane %v4330, 4
      %v4332 = vrot.slane %v252, 5
      %v4333 = vsel %vm4279, %v4331, %v4332
      %v4334 = vrot.slane %v4324, 4
      %v4335 = vrot.slane %v433, 5
      %v4336 = vsel %vm4279, %v4334, %v4335
      %v4337 = vrot.slane %v4328, 4
      %v4338 = vrot.slane %v434, 5
      %v4339 = vsel %vm4279, %v4337, %v4338
      %v4340 = vrot.slane %v4332, 4
      %v4341 = vrot.slane %v435, 5
      %v4342 = vsel %vm4279, %v4340, %v4341
      %v4343 = vrot.slane %v4142, 5
      %v4344 = vrot.slane %v4343, 4
      %v4345 = vrot.slane %v256, 5
      %v4346 = vsel %vm4279, %v4344, %v4345
      %v4347 = vrot.slane %v4143, 5
      %v4348 = vrot.slane %v4347, 4
      %v4349 = vrot.slane %v257, 5
      %v4350 = vsel %vm4279, %v4348, %v4349
      %v4351 = vrot.slane %v4144, 5
      %v4352 = vrot.slane %v4351, 4
      %v4353 = vrot.slane %v258, 5
      %v4354 = vsel %vm4279, %v4352, %v4353
      %v4355 = vrot.slane %v4345, 4
      %v4356 = vrot.slane %v436, 5
      %v4357 = vsel %vm4279, %v4355, %v4356
      %v4358 = vrot.slane %v4349, 4
      %v4359 = vrot.slane %v437, 5
      %v4360 = vsel %vm4279, %v4358, %v4359
      %v4361 = vrot.slane %v4353, 4
      %v4362 = vrot.slane %v438, 5
      %v4363 = vsel %vm4279, %v4361, %v4362
      %v4364 = vrot.slane %v4145, 5
      %v4365 = vrot.slane %v4364, 4
      %v4366 = vrot.slane %v262, 5
      %v4367 = vsel %vm4279, %v4365, %v4366
      %v4368 = vrot.slane %v4146, 5
      %v4369 = vrot.slane %v4368, 4
      %v4370 = vrot.slane %v263, 5
      %v4371 = vsel %vm4279, %v4369, %v4370
      %v4372 = vrot.slane %v4147, 5
      %v4373 = vrot.slane %v4372, 4
      %v4374 = vrot.slane %v264, 5
      %v4375 = vsel %vm4279, %v4373, %v4374
      %v4376 = vrot.slane %v4366, 4
      %v4377 = vrot.slane %v439, 5
      %v4378 = vsel %vm4279, %v4376, %v4377
      %v4379 = vrot.slane %v4370, 4
      %v4380 = vrot.slane %v440, 5
      %v4381 = vsel %vm4279, %v4379, %v4380
      %v4382 = vrot.slane %v4374, 4
      %v4383 = vrot.slane %v441, 5
      %v4384 = vsel %vm4279, %v4382, %v4383
      %v4385 = vrot.slane %v4148, 5
      %v4386 = vrot.slane %v4385, 4
      %v4387 = vrot.slane %v268, 5
      %v4388 = vsel %vm4279, %v4386, %v4387
      %v4389 = vrot.slane %v4149, 5
      %v4390 = vrot.slane %v4389, 4
      %v4391 = vrot.slane %v269, 5
      %v4392 = vsel %vm4279, %v4390, %v4391
      %v4393 = vrot.slane %v4150, 5
      %v4394 = vrot.slane %v4393, 4
      %v4395 = vrot.slane %v270, 5
      %v4396 = vsel %vm4279, %v4394, %v4395
      %v4397 = vrot.slane %v4387, 4
      %v4398 = vrot.slane %v442, 5
      %v4399 = vsel %vm4279, %v4397, %v4398
      %v4400 = vrot.slane %v4391, 4
      %v4401 = vrot.slane %v443, 5
      %v4402 = vsel %vm4279, %v4400, %v4401
      %v4403 = vrot.slane %v4395, 4
      %v4404 = vrot.slane %v444, 5
      %v4405 = vsel %vm4279, %v4403, %v4404
      %v4406 = vrot.slane %v4151, 5
      %v4407 = vrot.slane %v4406, 4
      %v4408 = vrot.slane %v274, 5
      %v4409 = vsel %vm4279, %v4407, %v4408
      %v4410 = vrot.slane %v4152, 5
      %v4411 = vrot.slane %v4410, 4
      %v4412 = vrot.slane %v275, 5
      %v4413 = vsel %vm4279, %v4411, %v4412
      %v4414 = vrot.slane %v4153, 5
      %v4415 = vrot.slane %v4414, 4
      %v4416 = vrot.slane %v276, 5
      %v4417 = vsel %vm4279, %v4415, %v4416
      %v4418 = vrot.slane %v4408, 4
      %v4419 = vrot.slane %v445, 5
      %v4420 = vsel %vm4279, %v4418, %v4419
      %v4421 = vrot.slane %v4412, 4
      %v4422 = vrot.slane %v446, 5
      %v4423 = vsel %vm4279, %v4421, %v4422
      %v4424 = vrot.slane %v4416, 4
      %v4425 = vrot.slane %v447, 5
      %v4426 = vsel %vm4279, %v4424, %v4425
      %v4427 = vrot.slane %v4154, 5
      %v4428 = vrot.slane %v4427, 4
      %v4429 = vrot.slane %v280, 5
      %v4430 = vsel %vm4279, %v4428, %v4429
      %v4431 = vrot.slane %v4155, 5
      %v4432 = vrot.slane %v4431, 4
      %v4433 = vrot.slane %v281, 5
      %v4434 = vsel %vm4279, %v4432, %v4433
      %v4435 = vrot.slane %v4156, 5
      %v4436 = vrot.slane %v4435, 4
      %v4437 = vrot.slane %v282, 5
      %v4438 = vsel %vm4279, %v4436, %v4437
      %v4439 = vrot.slane %v4429, 4
      %v4440 = vrot.slane %v448, 5
      %v4441 = vsel %vm4279, %v4439, %v4440
      %v4442 = vrot.slane %v4433, 4
      %v4443 = vrot.slane %v449, 5
      %v4444 = vsel %vm4279, %v4442, %v4443
      %v4445 = vrot.slane %v4437, 4
      %v4446 = vrot.slane %v450, 5
      %v4447 = vsel %vm4279, %v4445, %v4446
      %v4448 = vrot.slane %v4157, 5
      %v4449 = vrot.slane %v4448, 4
      %v4450 = vrot.slane %v286, 5
      %v4451 = vsel %vm4279, %v4449, %v4450
      %v4452 = vrot.slane %v4158, 5
      %v4453 = vrot.slane %v4452, 4
      %v4454 = vrot.slane %v287, 5
      %v4455 = vsel %vm4279, %v4453, %v4454
      %v4456 = vrot.slane %v4159, 5
      %v4457 = vrot.slane %v4456, 4
      %v4458 = vrot.slane %v288, 5
      %v4459 = vsel %vm4279, %v4457, %v4458
      %v4460 = vrot.slane %v4450, 4
      %v4461 = vrot.slane %v451, 5
      %v4462 = vsel %vm4279, %v4460, %v4461
      %v4463 = vrot.slane %v4454, 4
      %v4464 = vrot.slane %v452, 5
      %v4465 = vsel %vm4279, %v4463, %v4464
      %v4466 = vrot.slane %v4458, 4
      %v4467 = vrot.slane %v453, 5
      %v4468 = vsel %vm4279, %v4466, %v4467
      %v4469 = vrot.slane %v4160, 5
      %v4470 = vrot.slane %v4469, 4
      %v4471 = vrot.slane %v292, 5
      %v4472 = vsel %vm4279, %v4470, %v4471
      %v4473 = vrot.slane %v4161, 5
      %v4474 = vrot.slane %v4473, 4
      %v4475 = vrot.slane %v293, 5
      %v4476 = vsel %vm4279, %v4474, %v4475
      %v4477 = vrot.slane %v4162, 5
      %v4478 = vrot.slane %v4477, 4
      %v4479 = vrot.slane %v294, 5
      %v4480 = vsel %vm4279, %v4478, %v4479
      %v4481 = vrot.slane %v4471, 4
      %v4482 = vrot.slane %v454, 5
      %v4483 = vsel %vm4279, %v4481, %v4482
      %v4484 = vrot.slane %v4475, 4
      %v4485 = vrot.slane %v455, 5
      %v4486 = vsel %vm4279, %v4484, %v4485
      %v4487 = vrot.slane %v4479, 4
      %v4488 = vrot.slane %v456, 5
      %v4489 = vsel %vm4279, %v4487, %v4488
      %v4490 = vrot.slane %v4163, 5
      %v4491 = vrot.slane %v4490, 4
      %v4492 = vrot.slane %v298, 5
      %v4493 = vsel %vm4279, %v4491, %v4492
      %v4494 = vrot.slane %v4164, 5
      %v4495 = vrot.slane %v4494, 4
      %v4496 = vrot.slane %v299, 5
      %v4497 = vsel %vm4279, %v4495, %v4496
      %v4498 = vrot.slane %v4165, 5
      %v4499 = vrot.slane %v4498, 4
      %v4500 = vrot.slane %v300, 5
      %v4501 = vsel %vm4279, %v4499, %v4500
      %v4502 = vrot.slane %v4492, 4
      %v4503 = vrot.slane %v457, 5
      %v4504 = vsel %vm4279, %v4502, %v4503
      %v4505 = vrot.slane %v4496, 4
      %v4506 = vrot.slane %v458, 5
      %v4507 = vsel %vm4279, %v4505, %v4506
      %v4508 = vrot.slane %v4500, 4
      %v4509 = vrot.slane %v459, 5
      %v4510 = vsel %vm4279, %v4508, %v4509
      %v4511 = vrot.slane %v4166, 5
      %v4512 = vrot.slane %v4511, 4
      %v4513 = vrot.slane %v304, 5
      %v4514 = vsel %vm4279, %v4512, %v4513
      %v4515 = vrot.slane %v4167, 5
      %v4516 = vrot.slane %v4515, 4
      %v4517 = vrot.slane %v305, 5
      %v4518 = vsel %vm4279, %v4516, %v4517
      %v4519 = vrot.slane %v4168, 5
      %v4520 = vrot.slane %v4519, 4
      %v4521 = vrot.slane %v306, 5
      %v4522 = vsel %vm4279, %v4520, %v4521
      %v4523 = vrot.slane %v4513, 4
      %v4524 = vrot.slane %v460, 5
      %v4525 = vsel %vm4279, %v4523, %v4524
      %v4526 = vrot.slane %v4517, 4
      %v4527 = vrot.slane %v461, 5
      %v4528 = vsel %vm4279, %v4526, %v4527
      %v4529 = vrot.slane %v4521, 4
      %v4530 = vrot.slane %v462, 5
      %v4531 = vsel %vm4279, %v4529, %v4530
      %v4532 = vrot.slane %v4169, 5
      %v4533 = vrot.slane %v4532, 4
      %v4534 = vrot.slane %v310, 5
      %v4535 = vsel %vm4279, %v4533, %v4534
      %v4536 = vrot.slane %v4170, 5
      %v4537 = vrot.slane %v4536, 4
      %v4538 = vrot.slane %v311, 5
      %v4539 = vsel %vm4279, %v4537, %v4538
      %v4540 = vrot.slane %v4171, 5
      %v4541 = vrot.slane %v4540, 4
      %v4542 = vrot.slane %v312, 5
      %v4543 = vsel %vm4279, %v4541, %v4542
      %v4544 = vrot.slane %v4534, 4
      %v4545 = vrot.slane %v463, 5
      %v4546 = vsel %vm4279, %v4544, %v4545
      %v4547 = vrot.slane %v4538, 4
      %v4548 = vrot.slane %v464, 5
      %v4549 = vsel %vm4279, %v4547, %v4548
      %v4550 = vrot.slane %v4542, 4
      %v4551 = vrot.slane %v465, 5
      %v4552 = vsel %vm4279, %v4550, %v4551
      %v4553 = vrot.slane %v4172, 5
      %v4554 = vrot.slane %v4553, 4
      %v4555 = vrot.slane %v316, 5
      %v4556 = vsel %vm4279, %v4554, %v4555
      %v4557 = vrot.slane %v4173, 5
      %v4558 = vrot.slane %v4557, 4
      %v4559 = vrot.slane %v317, 5
      %v4560 = vsel %vm4279, %v4558, %v4559
      %v4561 = vrot.slane %v4174, 5
      %v4562 = vrot.slane %v4561, 4
      %v4563 = vrot.slane %v318, 5
      %v4564 = vsel %vm4279, %v4562, %v4563
      %v4565 = vrot.slane %v4555, 4
      %v4566 = vrot.slane %v466, 5
      %v4567 = vsel %vm4279, %v4565, %v4566
      %v4568 = vrot.slane %v4559, 4
      %v4569 = vrot.slane %v467, 5
      %v4570 = vsel %vm4279, %v4568, %v4569
      %v4571 = vrot.slane %v4563, 4
      %v4572 = vrot.slane %v468, 5
      %v4573 = vsel %vm4279, %v4571, %v4572
      %v4574 = vrot.slane %v4175, 5
      %v4575 = vrot.slane %v4574, 4
      %v4576 = vrot.slane %v322, 5
      %v4577 = vsel %vm4279, %v4575, %v4576
      %v4578 = vrot.slane %v4176, 5
      %v4579 = vrot.slane %v4578, 4
      %v4580 = vrot.slane %v323, 5
      %v4581 = vsel %vm4279, %v4579, %v4580
      %v4582 = vrot.slane %v4177, 5
      %v4583 = vrot.slane %v4582, 4
      %v4584 = vrot.slane %v324, 5
      %v4585 = vsel %vm4279, %v4583, %v4584
      %v4586 = vrot.slane %v4576, 4
      %v4587 = vrot.slane %v469, 5
      %v4588 = vsel %vm4279, %v4586, %v4587
      %v4589 = vrot.slane %v4580, 4
      %v4590 = vrot.slane %v470, 5
      %v4591 = vsel %vm4279, %v4589, %v4590
      %v4592 = vrot.slane %v4584, 4
      %v4593 = vrot.slane %v471, 5
      %v4594 = vsel %vm4279, %v4592, %v4593
      %v4595 = vrot.slane %v4178, 5
      %v4596 = vrot.slane %v4595, 4
      %v4597 = vrot.slane %v328, 5
      %v4598 = vsel %vm4279, %v4596, %v4597
      %v4599 = vrot.slane %v4179, 5
      %v4600 = vrot.slane %v4599, 4
      %v4601 = vrot.slane %v329, 5
      %v4602 = vsel %vm4279, %v4600, %v4601
      %v4603 = vrot.slane %v4180, 5
      %v4604 = vrot.slane %v4603, 4
      %v4605 = vrot.slane %v330, 5
      %v4606 = vsel %vm4279, %v4604, %v4605
      %v4607 = vrot.slane %v4597, 4
      %v4608 = vrot.slane %v472, 5
      %v4609 = vsel %vm4279, %v4607, %v4608
      %v4610 = vrot.slane %v4601, 4
      %v4611 = vrot.slane %v473, 5
      %v4612 = vsel %vm4279, %v4610, %v4611
      %v4613 = vrot.slane %v4605, 4
      %v4614 = vrot.slane %v474, 5
      %v4615 = vsel %vm4279, %v4613, %v4614
      %s4616 = scalar_lea.vmem %s1, 768
      %v4617 = vld [vmem:[%s4616] sm:$0xf]
      %v4618 = vld [vmem:[%s4616 + $0x4] sm:$0xf]
      %v4619 = vld [vmem:[%s4616 + $0x8] sm:$0xf]
      %v4620 = vld [vmem:[%s4616 + $0xc] sm:$0xf]
      %v4621 = vld [vmem:[%s4616 + $0x10] sm:$0xf]
      %v4622 = vld [vmem:[%s4616 + $0x14] sm:$0xf]
      %v4623 = vld [vmem:[%s4616 + $0x18] sm:$0xf]
      %v4624 = vld [vmem:[%s4616 + $0x1c] sm:$0xf]
      %v4625 = vld [vmem:[%s4616 + $0x20] sm:$0xf]
      %v4626 = vld [vmem:[%s4616 + $0x24] sm:$0xf]
      %v4627 = vld [vmem:[%s4616 + $0x28] sm:$0xf]
      %v4628 = vld [vmem:[%s4616 + $0x2c] sm:$0xf]
      %v4629 = vld [vmem:[%s4616 + $0x30] sm:$0xf]
      %v4630 = vld [vmem:[%s4616 + $0x34] sm:$0xf]
      %v4631 = vld [vmem:[%s4616 + $0x38] sm:$0xf]
      %v4632 = vld [vmem:[%s4616 + $0x3c] sm:$0xf]
      %v4633 = vld [vmem:[%s4616 + $0x40] sm:$0xf]
      %v4634 = vld [vmem:[%s4616 + $0x44] sm:$0xf]
      %v4635 = vld [vmem:[%s4616 + $0x48] sm:$0xf]
      %v4636 = vld [vmem:[%s4616 + $0x4c] sm:$0xf]
      %v4637 = vld [vmem:[%s4616 + $0x50] sm:$0xf]
      %v4638 = vld [vmem:[%s4616 + $0x54] sm:$0xf]
      %v4639 = vld [vmem:[%s4616 + $0x58] sm:$0xf]
      %v4640 = vld [vmem:[%s4616 + $0x5c] sm:$0xf]
      %v4641 = vld [vmem:[%s4616 + $0x60] sm:$0xf]
      %v4642 = vld [vmem:[%s4616 + $0x64] sm:$0xf]
      %v4643 = vld [vmem:[%s4616 + $0x68] sm:$0xf]
      %v4644 = vld [vmem:[%s4616 + $0x6c] sm:$0xf]
      %v4645 = vld [vmem:[%s4616 + $0x70] sm:$0xf]
      %v4646 = vld [vmem:[%s4616 + $0x74] sm:$0xf]
      %v4647 = vld [vmem:[%s4616 + $0x78] sm:$0xf]
      %v4648 = vld [vmem:[%s4616 + $0x7c] sm:$0xf]
      %v4649 = vld [vmem:[%s4616 + $0x80] sm:$0xf]
      %v4650 = vld [vmem:[%s4616 + $0x84] sm:$0xf]
      %v4651 = vld [vmem:[%s4616 + $0x88] sm:$0xf]
      %v4652 = vld [vmem:[%s4616 + $0x8c] sm:$0xf]
      %v4653 = vld [vmem:[%s4616 + $0x90] sm:$0xf]
      %v4654 = vld [vmem:[%s4616 + $0x94] sm:$0xf]
      %v4655 = vld [vmem:[%s4616 + $0x98] sm:$0xf]
      %v4656 = vld [vmem:[%s4616 + $0x9c] sm:$0xf]
      %v4657 = vld [vmem:[%s4616 + $0xa0] sm:$0xf]
      %v4658 = vld [vmem:[%s4616 + $0xa4] sm:$0xf]
      %v4659 = vld [vmem:[%s4616 + $0xa8] sm:$0xf]
      %v4660 = vld [vmem:[%s4616 + $0xac] sm:$0xf]
      %v4661 = vld [vmem:[%s4616 + $0xb0] sm:$0xf]
      %v4662 = vld [vmem:[%s4616 + $0xb4] sm:$0xf]
      %v4663 = vld [vmem:[%s4616 + $0xb8] sm:$0xf]
      %v4664 = vld [vmem:[%s4616 + $0xbc] sm:$0xf]
      %v4665 = vld [vmem:[%s4616 + $0xc0] sm:$0xf]
      %v4666 = vld [vmem:[%s4616 + $0xc4] sm:$0xf]
      %v4667 = vld [vmem:[%s4616 + $0xc8] sm:$0xf]
      %v4668 = vld [vmem:[%s4616 + $0xcc] sm:$0xf]
      %v4669 = vld [vmem:[%s4616 + $0xd0] sm:$0xf]
      %v4670 = vld [vmem:[%s4616 + $0xd4] sm:$0xf]
      %v4671 = vld [vmem:[%s4616 + $0xd8] sm:$0xf]
      %v4672 = vld [vmem:[%s4616 + $0xdc] sm:$0xf]
      %v4673 = vld [vmem:[%s4616 + $0xe0] sm:$0xf]
      %v4674 = vld [vmem:[%s4616 + $0xe4] sm:$0xf]
      %v4675 = vld [vmem:[%s4616 + $0xe8] sm:$0xf]
      %v4676 = vld [vmem:[%s4616 + $0xec] sm:$0xf]
      %v4677 = vld [vmem:[%s4616 + $0xf0] sm:$0xf]
      %v4678 = vld [vmem:[%s4616 + $0xf4] sm:$0xf]
      %v4679 = vld [vmem:[%s4616 + $0xf8] sm:$0xf]
      %v4680 = vld [vmem:[%s4616 + $0xfc] sm:$0xf]
      %v4681 = vld [vmem:[%s4616 + $0x100] sm:$0xf]
      %v4682 = vld [vmem:[%s4616 + $0x104] sm:$0xf]
      %v4683 = vld [vmem:[%s4616 + $0x108] sm:$0xf]
      %v4684 = vld [vmem:[%s4616 + $0x10c] sm:$0xf]
      %v4685 = vld [vmem:[%s4616 + $0x110] sm:$0xf]
      %v4686 = vld [vmem:[%s4616 + $0x114] sm:$0xf]
      %v4687 = vld [vmem:[%s4616 + $0x118] sm:$0xf]
      %v4688 = vld [vmem:[%s4616 + $0x11c] sm:$0xf]
      %v4689 = vld [vmem:[%s4616 + $0x120] sm:$0xf]
      %v4690 = vld [vmem:[%s4616 + $0x124] sm:$0xf]
      %v4691 = vld [vmem:[%s4616 + $0x128] sm:$0xf]
      %v4692 = vld [vmem:[%s4616 + $0x12c] sm:$0xf]
      %v4693 = vld [vmem:[%s4616 + $0x130] sm:$0xf]
      %v4694 = vld [vmem:[%s4616 + $0x134] sm:$0xf]
      %v4695 = vld [vmem:[%s4616 + $0x138] sm:$0xf]
      %v4696 = vld [vmem:[%s4616 + $0x13c] sm:$0xf]
      %v4697 = vld [vmem:[%s4616 + $0x140] sm:$0xf]
      %v4698 = vld [vmem:[%s4616 + $0x144] sm:$0xf]
      %v4699 = vld [vmem:[%s4616 + $0x148] sm:$0xf]
      %v4700 = vld [vmem:[%s4616 + $0x14c] sm:$0xf]
      %v4701 = vld [vmem:[%s4616 + $0x150] sm:$0xf]
      %v4702 = vld [vmem:[%s4616 + $0x154] sm:$0xf]
      %v4703 = vld [vmem:[%s4616 + $0x158] sm:$0xf]
      %v4704 = vld [vmem:[%s4616 + $0x15c] sm:$0xf]
      %v4705 = vld [vmem:[%s4616 + $0x160] sm:$0xf]
      %v4706 = vld [vmem:[%s4616 + $0x164] sm:$0xf]
      %v4707 = vld [vmem:[%s4616 + $0x168] sm:$0xf]
      %v4708 = vld [vmem:[%s4616 + $0x16c] sm:$0xf]
      %v4709 = vld [vmem:[%s4616 + $0x170] sm:$0xf]
      %v4710 = vld [vmem:[%s4616 + $0x174] sm:$0xf]
      %v4711 = vld [vmem:[%s4616 + $0x178] sm:$0xf]
      %v4712 = vld [vmem:[%s4616 + $0x17c] sm:$0xf]
      %v4713 = vunpack.c.l.b16 %v4283
      %v4714 = vunpack.c.h.b16 %v4283
      %v4715 = vunpack.c.l.b16 %v4287
      %v4716 = vunpack.c.h.b16 %v4287
      %v4717 = vunpack.c.l.b16 %v4291
      %v4718 = vunpack.c.h.b16 %v4291
      %v4719 = vunpack.c.l.b16 %v4294
      %v4720 = vunpack.c.h.b16 %v4294
      %v4721 = vunpack.c.l.b16 %v4297
      %v4722 = vunpack.c.h.b16 %v4297
      %v4723 = vunpack.c.l.b16 %v4300
      %v4724 = vunpack.c.h.b16 %v4300
      %v4725 = vunpack.c.l.b16 %v4304
      %v4726 = vunpack.c.h.b16 %v4304
      %v4727 = vunpack.c.l.b16 %v4308
      %v4728 = vunpack.c.h.b16 %v4308
      %v4729 = vunpack.c.l.b16 %v4312
      %v4730 = vunpack.c.h.b16 %v4312
      %v4731 = vunpack.c.l.b16 %v4315
      %v4732 = vunpack.c.h.b16 %v4315
      %v4733 = vunpack.c.l.b16 %v4318
      %v4734 = vunpack.c.h.b16 %v4318
      %v4735 = vunpack.c.l.b16 %v4321
      %v4736 = vunpack.c.h.b16 %v4321
      %v4737 = vunpack.c.l.b16 %v4325
      %v4738 = vunpack.c.h.b16 %v4325
      %v4739 = vunpack.c.l.b16 %v4329
      %v4740 = vunpack.c.h.b16 %v4329
      %v4741 = vunpack.c.l.b16 %v4333
      %v4742 = vunpack.c.h.b16 %v4333
      %v4743 = vunpack.c.l.b16 %v4336
      %v4744 = vunpack.c.h.b16 %v4336
      %v4745 = vunpack.c.l.b16 %v4339
      %v4746 = vunpack.c.h.b16 %v4339
      %v4747 = vunpack.c.l.b16 %v4342
      %v4748 = vunpack.c.h.b16 %v4342
      %v4749 = vunpack.c.l.b16 %v4346
      %v4750 = vunpack.c.h.b16 %v4346
      %v4751 = vunpack.c.l.b16 %v4350
      %v4752 = vunpack.c.h.b16 %v4350
      %v4753 = vunpack.c.l.b16 %v4354
      %v4754 = vunpack.c.h.b16 %v4354
      %v4755 = vunpack.c.l.b16 %v4357
      %v4756 = vunpack.c.h.b16 %v4357
      %v4757 = vunpack.c.l.b16 %v4360
      %v4758 = vunpack.c.h.b16 %v4360
      %v4759 = vunpack.c.l.b16 %v4363
      %v4760 = vunpack.c.h.b16 %v4363
      %v4761 = vunpack.c.l.b16 %v4367
      %v4762 = vunpack.c.h.b16 %v4367
      %v4763 = vunpack.c.l.b16 %v4371
      %v4764 = vunpack.c.h.b16 %v4371
      %v4765 = vunpack.c.l.b16 %v4375
      %v4766 = vunpack.c.h.b16 %v4375
      %v4767 = vunpack.c.l.b16 %v4378
      %v4768 = vunpack.c.h.b16 %v4378
      %v4769 = vunpack.c.l.b16 %v4381
      %v4770 = vunpack.c.h.b16 %v4381
      %v4771 = vunpack.c.l.b16 %v4384
      %v4772 = vunpack.c.h.b16 %v4384
      %v4773 = vunpack.c.l.b16 %v4388
      %v4774 = vunpack.c.h.b16 %v4388
      %v4775 = vunpack.c.l.b16 %v4392
      %v4776 = vunpack.c.h.b16 %v4392
      %v4777 = vunpack.c.l.b16 %v4396
      %v4778 = vunpack.c.h.b16 %v4396
      %v4779 = vunpack.c.l.b16 %v4399
      %v4780 = vunpack.c.h.b16 %v4399
      %v4781 = vunpack.c.l.b16 %v4402
      %v4782 = vunpack.c.h.b16 %v4402
      %v4783 = vunpack.c.l.b16 %v4405
      %v4784 = vunpack.c.h.b16 %v4405
      %v4785 = vunpack.c.l.b16 %v4409
      %v4786 = vunpack.c.h.b16 %v4409
      %v4787 = vunpack.c.l.b16 %v4413
      %v4788 = vunpack.c.h.b16 %v4413
      %v4789 = vunpack.c.l.b16 %v4417
      %v4790 = vunpack.c.h.b16 %v4417
      %v4791 = vunpack.c.l.b16 %v4420
      %v4792 = vunpack.c.h.b16 %v4420
      %v4793 = vunpack.c.l.b16 %v4423
      %v4794 = vunpack.c.h.b16 %v4423
      %v4795 = vunpack.c.l.b16 %v4426
      %v4796 = vunpack.c.h.b16 %v4426
      %v4797 = vunpack.c.l.b16 %v4430
      %v4798 = vunpack.c.h.b16 %v4430
      %v4799 = vunpack.c.l.b16 %v4434
      %v4800 = vunpack.c.h.b16 %v4434
      %v4801 = vunpack.c.l.b16 %v4438
      %v4802 = vunpack.c.h.b16 %v4438
      %v4803 = vunpack.c.l.b16 %v4441
      %v4804 = vunpack.c.h.b16 %v4441
      %v4805 = vunpack.c.l.b16 %v4444
      %v4806 = vunpack.c.h.b16 %v4444
      %v4807 = vunpack.c.l.b16 %v4447
      %v4808 = vunpack.c.h.b16 %v4447
      %v4809 = vunpack.c.l.b16 %v4451
      %v4810 = vunpack.c.h.b16 %v4451
      %v4811 = vunpack.c.l.b16 %v4455
      %v4812 = vunpack.c.h.b16 %v4455
      %v4813 = vunpack.c.l.b16 %v4459
      %v4814 = vunpack.c.h.b16 %v4459
      %v4815 = vunpack.c.l.b16 %v4462
      %v4816 = vunpack.c.h.b16 %v4462
      %v4817 = vunpack.c.l.b16 %v4465
      %v4818 = vunpack.c.h.b16 %v4465
      %v4819 = vunpack.c.l.b16 %v4468
      %v4820 = vunpack.c.h.b16 %v4468
      %v4821 = vunpack.c.l.b16 %v4472
      %v4822 = vunpack.c.h.b16 %v4472
      %v4823 = vunpack.c.l.b16 %v4476
      %v4824 = vunpack.c.h.b16 %v4476
      %v4825 = vunpack.c.l.b16 %v4480
      %v4826 = vunpack.c.h.b16 %v4480
      %v4827 = vunpack.c.l.b16 %v4483
      %v4828 = vunpack.c.h.b16 %v4483
      %v4829 = vunpack.c.l.b16 %v4486
      %v4830 = vunpack.c.h.b16 %v4486
      %v4831 = vunpack.c.l.b16 %v4489
      %v4832 = vunpack.c.h.b16 %v4489
      %v4833 = vunpack.c.l.b16 %v4493
      %v4834 = vunpack.c.h.b16 %v4493
      %v4835 = vunpack.c.l.b16 %v4497
      %v4836 = vunpack.c.h.b16 %v4497
      %v4837 = vunpack.c.l.b16 %v4501
      %v4838 = vunpack.c.h.b16 %v4501
      %v4839 = vunpack.c.l.b16 %v4504
      %v4840 = vunpack.c.h.b16 %v4504
      %v4841 = vunpack.c.l.b16 %v4507
      %v4842 = vunpack.c.h.b16 %v4507
      %v4843 = vunpack.c.l.b16 %v4510
      %v4844 = vunpack.c.h.b16 %v4510
      %v4845 = vunpack.c.l.b16 %v4514
      %v4846 = vunpack.c.h.b16 %v4514
      %v4847 = vunpack.c.l.b16 %v4518
      %v4848 = vunpack.c.h.b16 %v4518
      %v4849 = vunpack.c.l.b16 %v4522
      %v4850 = vunpack.c.h.b16 %v4522
      %v4851 = vunpack.c.l.b16 %v4525
      %v4852 = vunpack.c.h.b16 %v4525
      %v4853 = vunpack.c.l.b16 %v4528
      %v4854 = vunpack.c.h.b16 %v4528
      %v4855 = vunpack.c.l.b16 %v4531
      %v4856 = vunpack.c.h.b16 %v4531
      %v4857 = vunpack.c.l.b16 %v4535
      %v4858 = vunpack.c.h.b16 %v4535
      %v4859 = vunpack.c.l.b16 %v4539
      %v4860 = vunpack.c.h.b16 %v4539
      %v4861 = vunpack.c.l.b16 %v4543
      %v4862 = vunpack.c.h.b16 %v4543
      %v4863 = vunpack.c.l.b16 %v4546
      %v4864 = vunpack.c.h.b16 %v4546
      %v4865 = vunpack.c.l.b16 %v4549
      %v4866 = vunpack.c.h.b16 %v4549
      %v4867 = vunpack.c.l.b16 %v4552
      %v4868 = vunpack.c.h.b16 %v4552
      %v4869 = vunpack.c.l.b16 %v4556
      %v4870 = vunpack.c.h.b16 %v4556
      %v4871 = vunpack.c.l.b16 %v4560
      %v4872 = vunpack.c.h.b16 %v4560
      %v4873 = vunpack.c.l.b16 %v4564
      %v4874 = vunpack.c.h.b16 %v4564
      %v4875 = vunpack.c.l.b16 %v4567
      %v4876 = vunpack.c.h.b16 %v4567
      %v4877 = vunpack.c.l.b16 %v4570
      %v4878 = vunpack.c.h.b16 %v4570
      %v4879 = vunpack.c.l.b16 %v4573
      %v4880 = vunpack.c.h.b16 %v4573
      %v4881 = vunpack.c.l.b16 %v4577
      %v4882 = vunpack.c.h.b16 %v4577
      %v4883 = vunpack.c.l.b16 %v4581
      %v4884 = vunpack.c.h.b16 %v4581
      %v4885 = vunpack.c.l.b16 %v4585
      %v4886 = vunpack.c.h.b16 %v4585
      %v4887 = vunpack.c.l.b16 %v4588
      %v4888 = vunpack.c.h.b16 %v4588
      %v4889 = vunpack.c.l.b16 %v4591
      %v4890 = vunpack.c.h.b16 %v4591
      %v4891 = vunpack.c.l.b16 %v4594
      %v4892 = vunpack.c.h.b16 %v4594
      %v4893 = vunpack.c.l.b16 %v4598
      %v4894 = vunpack.c.h.b16 %v4598
      %v4895 = vunpack.c.l.b16 %v4602
      %v4896 = vunpack.c.h.b16 %v4602
      %v4897 = vunpack.c.l.b16 %v4606
      %v4898 = vunpack.c.h.b16 %v4606
      %v4899 = vunpack.c.l.b16 %v4609
      %v4900 = vunpack.c.h.b16 %v4609
      %v4901 = vunpack.c.l.b16 %v4612
      %v4902 = vunpack.c.h.b16 %v4612
      %v4903 = vunpack.c.l.b16 %v4615
      %v4904 = vunpack.c.h.b16 %v4615
      %v4905 = vpack.c.b16 %v4719, %v4713
      %v4906 = vpack.c.b16 %v4720, %v4714
      %v4907 = vpack.c.b16 %v4721, %v4715
      %v4908 = vpack.c.b16 %v4722, %v4716
      %v4909 = vpack.c.b16 %v4723, %v4717
      %v4910 = vpack.c.b16 %v4724, %v4718
      %v4911 = vpack.c.b16 %v4731, %v4725
      %v4912 = vpack.c.b16 %v4732, %v4726
      %v4913 = vpack.c.b16 %v4733, %v4727
      %v4914 = vpack.c.b16 %v4734, %v4728
      %v4915 = vpack.c.b16 %v4735, %v4729
      %v4916 = vpack.c.b16 %v4736, %v4730
      %v4917 = vpack.c.b16 %v4743, %v4737
      %v4918 = vpack.c.b16 %v4744, %v4738
      %v4919 = vpack.c.b16 %v4745, %v4739
      %v4920 = vpack.c.b16 %v4746, %v4740
      %v4921 = vpack.c.b16 %v4747, %v4741
      %v4922 = vpack.c.b16 %v4748, %v4742
      %v4923 = vpack.c.b16 %v4755, %v4749
      %v4924 = vpack.c.b16 %v4756, %v4750
      %v4925 = vpack.c.b16 %v4757, %v4751
      %v4926 = vpack.c.b16 %v4758, %v4752
      %v4927 = vpack.c.b16 %v4759, %v4753
      %v4928 = vpack.c.b16 %v4760, %v4754
      %v4929 = vpack.c.b16 %v4767, %v4761
      %v4930 = vpack.c.b16 %v4768, %v4762
      %v4931 = vpack.c.b16 %v4769, %v4763
      %v4932 = vpack.c.b16 %v4770, %v4764
      %v4933 = vpack.c.b16 %v4771, %v4765
      %v4934 = vpack.c.b16 %v4772, %v4766
      %v4935 = vpack.c.b16 %v4779, %v4773
      %v4936 = vpack.c.b16 %v4780, %v4774
      %v4937 = vpack.c.b16 %v4781, %v4775
      %v4938 = vpack.c.b16 %v4782, %v4776
      %v4939 = vpack.c.b16 %v4783, %v4777
      %v4940 = vpack.c.b16 %v4784, %v4778
      %v4941 = vpack.c.b16 %v4791, %v4785
      %v4942 = vpack.c.b16 %v4792, %v4786
      %v4943 = vpack.c.b16 %v4793, %v4787
      %v4944 = vpack.c.b16 %v4794, %v4788
      %v4945 = vpack.c.b16 %v4795, %v4789
      %v4946 = vpack.c.b16 %v4796, %v4790
      %v4947 = vpack.c.b16 %v4803, %v4797
      %v4948 = vpack.c.b16 %v4804, %v4798
      %v4949 = vpack.c.b16 %v4805, %v4799
      %v4950 = vpack.c.b16 %v4806, %v4800
      %v4951 = vpack.c.b16 %v4807, %v4801
      %v4952 = vpack.c.b16 %v4808, %v4802
      %v4953 = vpack.c.b16 %v4815, %v4809
      %v4954 = vpack.c.b16 %v4816, %v4810
      %v4955 = vpack.c.b16 %v4817, %v4811
      %v4956 = vpack.c.b16 %v4818, %v4812
      %v4957 = vpack.c.b16 %v4819, %v4813
      %v4958 = vpack.c.b16 %v4820, %v4814
      %v4959 = vpack.c.b16 %v4827, %v4821
      %v4960 = vpack.c.b16 %v4828, %v4822
      %v4961 = vpack.c.b16 %v4829, %v4823
      %v4962 = vpack.c.b16 %v4830, %v4824
      %v4963 = vpack.c.b16 %v4831, %v4825
      %v4964 = vpack.c.b16 %v4832, %v4826
      %v4965 = vpack.c.b16 %v4839, %v4833
      %v4966 = vpack.c.b16 %v4840, %v4834
      %v4967 = vpack.c.b16 %v4841, %v4835
      %v4968 = vpack.c.b16 %v4842, %v4836
      %v4969 = vpack.c.b16 %v4843, %v4837
      %v4970 = vpack.c.b16 %v4844, %v4838
      %v4971 = vpack.c.b16 %v4851, %v4845
      %v4972 = vpack.c.b16 %v4852, %v4846
      %v4973 = vpack.c.b16 %v4853, %v4847
      %v4974 = vpack.c.b16 %v4854, %v4848
      %v4975 = vpack.c.b16 %v4855, %v4849
      %v4976 = vpack.c.b16 %v4856, %v4850
      %v4977 = vpack.c.b16 %v4863, %v4857
      %v4978 = vpack.c.b16 %v4864, %v4858
      %v4979 = vpack.c.b16 %v4865, %v4859
      %v4980 = vpack.c.b16 %v4866, %v4860
      %v4981 = vpack.c.b16 %v4867, %v4861
      %v4982 = vpack.c.b16 %v4868, %v4862
      %v4983 = vpack.c.b16 %v4875, %v4869
      %v4984 = vpack.c.b16 %v4876, %v4870
      %v4985 = vpack.c.b16 %v4877, %v4871
      %v4986 = vpack.c.b16 %v4878, %v4872
      %v4987 = vpack.c.b16 %v4879, %v4873
      %v4988 = vpack.c.b16 %v4880, %v4874
      %v4989 = vpack.c.b16 %v4887, %v4881
      %v4990 = vpack.c.b16 %v4888, %v4882
      %v4991 = vpack.c.b16 %v4889, %v4883
      %v4992 = vpack.c.b16 %v4890, %v4884
      %v4993 = vpack.c.b16 %v4891, %v4885
      %v4994 = vpack.c.b16 %v4892, %v4886
      %v4995 = vpack.c.b16 %v4899, %v4893
      %v4996 = vpack.c.b16 %v4900, %v4894
      %v4997 = vpack.c.b16 %v4901, %v4895
      %v4998 = vpack.c.b16 %v4902, %v4896
      %v4999 = vpack.c.b16 %v4903, %v4897
      %v5000 = vpack.c.b16 %v4904, %v4898
      %v5193 = vunpack.c.l.b16 %v4617
      %v5194 = vunpack.c.l.b16 %v4618
      %v5195 = vunpack.c.l.b16 %v4619
      %v5196 = vunpack.c.l.b16 %v4620
      %v5197 = vunpack.c.l.b16 %v4621
      %v5198 = vunpack.c.l.b16 %v4622
      %v5199 = vunpack.c.l.b16 %v4623
      %v5200 = vunpack.c.l.b16 %v4624
      %v5201 = vunpack.c.l.b16 %v4625
      %v5202 = vunpack.c.l.b16 %v4626
      %v5203 = vunpack.c.l.b16 %v4627
      %v5204 = vunpack.c.l.b16 %v4628
      %v5205 = vunpack.c.l.b16 %v4629
      %v5206 = vunpack.c.l.b16 %v4630
      %v5207 = vunpack.c.l.b16 %v4631
      %v5208 = vunpack.c.l.b16 %v4632
      %v5209 = vunpack.c.l.b16 %v4633
      %v5210 = vunpack.c.l.b16 %v4634
      %v5211 = vunpack.c.l.b16 %v4635
      %v5212 = vunpack.c.l.b16 %v4636
      %v5213 = vunpack.c.l.b16 %v4637
      %v5214 = vunpack.c.l.b16 %v4638
      %v5215 = vunpack.c.l.b16 %v4639
      %v5216 = vunpack.c.l.b16 %v4640
      %v5217 = vunpack.c.l.b16 %v4641
      %v5218 = vunpack.c.l.b16 %v4642
      %v5219 = vunpack.c.l.b16 %v4643
      %v5220 = vunpack.c.l.b16 %v4644
      %v5221 = vunpack.c.l.b16 %v4645
      %v5222 = vunpack.c.l.b16 %v4646
      %v5223 = vunpack.c.l.b16 %v4647
      %v5224 = vunpack.c.l.b16 %v4648
      %v5225 = vunpack.c.l.b16 %v4649
      %v5226 = vunpack.c.l.b16 %v4650
      %v5227 = vunpack.c.l.b16 %v4651
      %v5228 = vunpack.c.l.b16 %v4652
      %v5229 = vunpack.c.l.b16 %v4653
      %v5230 = vunpack.c.l.b16 %v4654
      %v5231 = vunpack.c.l.b16 %v4655
      %v5232 = vunpack.c.l.b16 %v4656
      %v5233 = vunpack.c.l.b16 %v4657
      %v5234 = vunpack.c.l.b16 %v4658
      %v5235 = vunpack.c.l.b16 %v4659
      %v5236 = vunpack.c.l.b16 %v4660
      %v5237 = vunpack.c.l.b16 %v4661
      %v5238 = vunpack.c.l.b16 %v4662
      %v5239 = vunpack.c.l.b16 %v4663
      %v5240 = vunpack.c.l.b16 %v4664
      %v5241 = vunpack.c.l.b16 %v4665
      %v5242 = vunpack.c.l.b16 %v4666
      %v5243 = vunpack.c.l.b16 %v4667
      %v5244 = vunpack.c.l.b16 %v4668
      %v5245 = vunpack.c.l.b16 %v4669
      %v5246 = vunpack.c.l.b16 %v4670
      %v5247 = vunpack.c.l.b16 %v4671
      %v5248 = vunpack.c.l.b16 %v4672
      %v5249 = vunpack.c.l.b16 %v4673
      %v5250 = vunpack.c.l.b16 %v4674
      %v5251 = vunpack.c.l.b16 %v4675
      %v5252 = vunpack.c.l.b16 %v4676
      %v5253 = vunpack.c.l.b16 %v4677
      %v5254 = vunpack.c.l.b16 %v4678
      %v5255 = vunpack.c.l.b16 %v4679
      %v5256 = vunpack.c.l.b16 %v4680
      %v5257 = vunpack.c.l.b16 %v4681
      %v5258 = vunpack.c.l.b16 %v4682
      %v5259 = vunpack.c.l.b16 %v4683
      %v5260 = vunpack.c.l.b16 %v4684
      %v5261 = vunpack.c.l.b16 %v4685
      %v5262 = vunpack.c.l.b16 %v4686
      %v5263 = vunpack.c.l.b16 %v4687
      %v5264 = vunpack.c.l.b16 %v4688
      %v5265 = vunpack.c.l.b16 %v4689
      %v5266 = vunpack.c.l.b16 %v4690
      %v5267 = vunpack.c.l.b16 %v4691
      %v5268 = vunpack.c.l.b16 %v4692
      %v5269 = vunpack.c.l.b16 %v4693
      %v5270 = vunpack.c.l.b16 %v4694
      %v5271 = vunpack.c.l.b16 %v4695
      %v5272 = vunpack.c.l.b16 %v4696
      %v5273 = vunpack.c.l.b16 %v4697
      %v5274 = vunpack.c.l.b16 %v4698
      %v5275 = vunpack.c.l.b16 %v4699
      %v5276 = vunpack.c.l.b16 %v4700
      %v5277 = vunpack.c.l.b16 %v4701
      %v5278 = vunpack.c.l.b16 %v4702
      %v5279 = vunpack.c.l.b16 %v4703
      %v5280 = vunpack.c.l.b16 %v4704
      %v5281 = vunpack.c.l.b16 %v4705
      %v5282 = vunpack.c.l.b16 %v4706
      %v5283 = vunpack.c.l.b16 %v4707
      %v5284 = vunpack.c.l.b16 %v4708
      %v5285 = vunpack.c.l.b16 %v4709
      %v5286 = vunpack.c.l.b16 %v4710
      %v5287 = vunpack.c.l.b16 %v4711
      %v5288 = vunpack.c.l.b16 %v4712
      %v5289 = vpack.c.b16 %v5194, %v5193
      %v5290 = vpack.c.b16 %v5196, %v5195
      %v5291 = vpack.c.b16 %v5198, %v5197
      %v5292 = vpack.c.b16 %v5200, %v5199
      %v5293 = vpack.c.b16 %v5202, %v5201
      %v5294 = vpack.c.b16 %v5204, %v5203
      %v5295 = vpack.c.b16 %v5206, %v5205
      %v5296 = vpack.c.b16 %v5208, %v5207
      %v5297 = vpack.c.b16 %v5210, %v5209
      %v5298 = vpack.c.b16 %v5212, %v5211
      %v5299 = vpack.c.b16 %v5214, %v5213
      %v5300 = vpack.c.b16 %v5216, %v5215
      %v5301 = vpack.c.b16 %v5218, %v5217
      %v5302 = vpack.c.b16 %v5220, %v5219
      %v5303 = vpack.c.b16 %v5222, %v5221
      %v5304 = vpack.c.b16 %v5224, %v5223
      %v5305 = vpack.c.b16 %v5226, %v5225
      %v5306 = vpack.c.b16 %v5228, %v5227
      %v5307 = vpack.c.b16 %v5230, %v5229
      %v5308 = vpack.c.b16 %v5232, %v5231
      %v5309 = vpack.c.b16 %v5234, %v5233
      %v5310 = vpack.c.b16 %v5236, %v5235
      %v5311 = vpack.c.b16 %v5238, %v5237
      %v5312 = vpack.c.b16 %v5240, %v5239
      %v5313 = vpack.c.b16 %v5242, %v5241
      %v5314 = vpack.c.b16 %v5244, %v5243
      %v5315 = vpack.c.b16 %v5246, %v5245
      %v5316 = vpack.c.b16 %v5248, %v5247
      %v5317 = vpack.c.b16 %v5250, %v5249
      %v5318 = vpack.c.b16 %v5252, %v5251
      %v5319 = vpack.c.b16 %v5254, %v5253
      %v5320 = vpack.c.b16 %v5256, %v5255
      %v5321 = vpack.c.b16 %v5258, %v5257
      %v5322 = vpack.c.b16 %v5260, %v5259
      %v5323 = vpack.c.b16 %v5262, %v5261
      %v5324 = vpack.c.b16 %v5264, %v5263
      %v5325 = vpack.c.b16 %v5266, %v5265
      %v5326 = vpack.c.b16 %v5268, %v5267
      %v5327 = vpack.c.b16 %v5270, %v5269
      %v5328 = vpack.c.b16 %v5272, %v5271
      %v5329 = vpack.c.b16 %v5274, %v5273
      %v5330 = vpack.c.b16 %v5276, %v5275
      %v5331 = vpack.c.b16 %v5278, %v5277
      %v5332 = vpack.c.b16 %v5280, %v5279
      %v5333 = vpack.c.b16 %v5282, %v5281
      %v5334 = vpack.c.b16 %v5284, %v5283
      %v5335 = vpack.c.b16 %v5286, %v5285
      %v5336 = vpack.c.b16 %v5288, %v5287
      %5385 = vmatprep.subr.bf16.mxu0 0
      %5386 = vmatpush1.bf16.msra.mxu0 %v5296
      %5387 = vmatprep.subr.bf16.mxu0 0
      %5388 = vmatpush1.bf16.msra.mxu0 %v5295
      %5389 = vmatprep.subr.bf16.mxu0 0
      %5390 = vmatpush1.bf16.msra.mxu0 %v5294
      %5391 = vmatprep.subr.bf16.mxu0 0
      %5392 = vmatpush1.bf16.msra.mxu0 %v5293
      %5393 = vmatprep.subr.bf16.mxu0 0
      %5394 = vmatpush1.bf16.msra.mxu0 %v5292
      %5395 = vmatprep.subr.bf16.mxu0 0
      %5396 = vmatpush1.bf16.msra.mxu0 %v5291
      %5397 = vmatprep.subr.bf16.mxu0 0
      %5398 = vmatpush1.bf16.msra.mxu0 %v5290
      %5399 = vmatprep.subr.bf16.mxu0 0
      %5400 = vmatpush1.bf16.msra.mxu0 %v5289
      %5401 = vmatprep.subr.bf16.mxu0 0
      %5402 = vmatpush2.bf16.msra.mxu0 %v5304
      %5403 = vmatprep.subr.bf16.mxu0 0
      %5404 = vmatpush2.bf16.msra.mxu0 %v5303
      %5405 = vmatprep.subr.bf16.mxu0 0
      %5406 = vmatpush2.bf16.msra.mxu0 %v5302
      %5407 = vmatprep.subr.bf16.mxu0 0
      %5408 = vmatpush2.bf16.msra.mxu0 %v5301
      %5409 = vmatprep.subr.bf16.mxu0 0
      %5410 = vmatpush2.bf16.msra.mxu0 %v5300
      %5411 = vmatprep.subr.bf16.mxu0 0
      %5412 = vmatpush2.bf16.msra.mxu0 %v5299
      %5413 = vmatprep.subr.bf16.mxu0 0
      %5414 = vmatpush2.bf16.msra.mxu0 %v5298
      %5415 = vmatprep.subr.bf16.mxu0 0
      %5416 = vmatpush2.bf16.msra.mxu0 %v5297
      %5417 = vmatprep.mubr.bf16.mxu0 %v4906
      %5418 = vmatmul.mubr.bf16.gmra.mxu0 %v4905
      %v5419 = vpop.f32.mrf.mxu0
      %v5420 = vadd.f32 0.0, %v5419
      %v5421 = vpop.f32.mrf.mxu0
      %v5422 = vpop.f32.mrf.mxu0
      %v5423 = vadd.f32 0.0, %v5422
      %v5424 = vpop.f32.mrf.mxu0
      %5425 = vmatprep.mubr.bf16.mxu0 %v4912
      %5426 = vmatmul.mubr.bf16.gmra.mxu0 %v4911
      %v5427 = vpop.f32.mrf.mxu0
      %v5428 = vadd.f32 0.0, %v5427
      %v5429 = vpop.f32.mrf.mxu0
      %v5430 = vpop.f32.mrf.mxu0
      %v5431 = vadd.f32 0.0, %v5430
      %v5432 = vpop.f32.mrf.mxu0
      %5433 = vmatprep.mubr.bf16.mxu0 %v4918
      %5434 = vmatmul.mubr.bf16.gmra.mxu0 %v4917
      %v5435 = vpop.f32.mrf.mxu0
      %v5436 = vadd.f32 0.0, %v5435
      %v5437 = vpop.f32.mrf.mxu0
      %v5438 = vpop.f32.mrf.mxu0
      %v5439 = vadd.f32 0.0, %v5438
      %v5440 = vpop.f32.mrf.mxu0
      %5441 = vmatprep.mubr.bf16.mxu0 %v4924
      %5442 = vmatmul.mubr.bf16.gmra.mxu0 %v4923
      %v5443 = vpop.f32.mrf.mxu0
      %v5444 = vadd.f32 0.0, %v5443
      %v5445 = vpop.f32.mrf.mxu0
      %v5446 = vpop.f32.mrf.mxu0
      %v5447 = vadd.f32 0.0, %v5446
      %v5448 = vpop.f32.mrf.mxu0
      %5449 = vmatprep.mubr.bf16.mxu0 %v4930
      %5450 = vmatmul.mubr.bf16.gmra.mxu0 %v4929
      %v5451 = vpop.f32.mrf.mxu0
      %v5452 = vadd.f32 0.0, %v5451
      %v5453 = vpop.f32.mrf.mxu0
      %v5454 = vpop.f32.mrf.mxu0
      %v5455 = vadd.f32 0.0, %v5454
      %v5456 = vpop.f32.mrf.mxu0
      %5457 = vmatprep.mubr.bf16.mxu0 %v4936
      %5458 = vmatmul.mubr.bf16.gmra.mxu0 %v4935
      %v5459 = vpop.f32.mrf.mxu0
      %v5460 = vadd.f32 0.0, %v5459
      %v5461 = vpop.f32.mrf.mxu0
      %v5462 = vpop.f32.mrf.mxu0
      %v5463 = vadd.f32 0.0, %v5462
      %v5464 = vpop.f32.mrf.mxu0
      %5465 = vmatprep.mubr.bf16.mxu0 %v4942
      %5466 = vmatmul.mubr.bf16.gmra.mxu0 %v4941
      %v5467 = vpop.f32.mrf.mxu0
      %v5468 = vadd.f32 0.0, %v5467
      %v5469 = vpop.f32.mrf.mxu0
      %v5470 = vpop.f32.mrf.mxu0
      %v5471 = vadd.f32 0.0, %v5470
      %v5472 = vpop.f32.mrf.mxu0
      %5473 = vmatprep.mubr.bf16.mxu0 %v4948
      %5474 = vmatmul.mubr.bf16.gmra.mxu0 %v4947
      %v5475 = vpop.f32.mrf.mxu0
      %v5476 = vadd.f32 0.0, %v5475
      %v5477 = vpop.f32.mrf.mxu0
      %v5478 = vpop.f32.mrf.mxu0
      %v5479 = vadd.f32 0.0, %v5478
      %v5480 = vpop.f32.mrf.mxu0
      %5481 = vmatprep.mubr.bf16.mxu0 %v4954
      %5482 = vmatmul.mubr.bf16.gmra.mxu0 %v4953
      %v5483 = vpop.f32.mrf.mxu0
      %v5484 = vadd.f32 0.0, %v5483
      %v5485 = vpop.f32.mrf.mxu0
      %v5486 = vpop.f32.mrf.mxu0
      %v5487 = vadd.f32 0.0, %v5486
      %v5488 = vpop.f32.mrf.mxu0
      %5489 = vmatprep.mubr.bf16.mxu0 %v4960
      %5490 = vmatmul.mubr.bf16.gmra.mxu0 %v4959
      %v5491 = vpop.f32.mrf.mxu0
      %v5492 = vadd.f32 0.0, %v5491
      %v5493 = vpop.f32.mrf.mxu0
      %v5494 = vpop.f32.mrf.mxu0
      %v5495 = vadd.f32 0.0, %v5494
      %v5496 = vpop.f32.mrf.mxu0
      %5497 = vmatprep.mubr.bf16.mxu0 %v4966
      %5498 = vmatmul.mubr.bf16.gmra.mxu0 %v4965
      %v5499 = vpop.f32.mrf.mxu0
      %v5500 = vadd.f32 0.0, %v5499
      %v5501 = vpop.f32.mrf.mxu0
      %v5502 = vpop.f32.mrf.mxu0
      %v5503 = vadd.f32 0.0, %v5502
      %v5504 = vpop.f32.mrf.mxu0
      %5505 = vmatprep.mubr.bf16.mxu0 %v4972
      %5506 = vmatmul.mubr.bf16.gmra.mxu0 %v4971
      %v5507 = vpop.f32.mrf.mxu0
      %v5508 = vadd.f32 0.0, %v5507
      %v5509 = vpop.f32.mrf.mxu0
      %v5510 = vpop.f32.mrf.mxu0
      %v5511 = vadd.f32 0.0, %v5510
      %v5512 = vpop.f32.mrf.mxu0
      %5513 = vmatprep.mubr.bf16.mxu0 %v4978
      %5514 = vmatmul.mubr.bf16.gmra.mxu0 %v4977
      %v5515 = vpop.f32.mrf.mxu0
      %v5516 = vadd.f32 0.0, %v5515
      %v5517 = vpop.f32.mrf.mxu0
      %v5518 = vpop.f32.mrf.mxu0
      %v5519 = vadd.f32 0.0, %v5518
      %v5520 = vpop.f32.mrf.mxu0
      %5521 = vmatprep.mubr.bf16.mxu0 %v4984
      %5522 = vmatmul.mubr.bf16.gmra.mxu0 %v4983
      %v5523 = vpop.f32.mrf.mxu0
      %v5524 = vadd.f32 0.0, %v5523
      %v5525 = vpop.f32.mrf.mxu0
      %v5526 = vpop.f32.mrf.mxu0
      %v5527 = vadd.f32 0.0, %v5526
      %v5528 = vpop.f32.mrf.mxu0
      %5529 = vmatprep.mubr.bf16.mxu0 %v4990
      %5530 = vmatmul.mubr.bf16.gmra.mxu0 %v4989
      %v5531 = vpop.f32.mrf.mxu0
      %v5532 = vadd.f32 0.0, %v5531
      %v5533 = vpop.f32.mrf.mxu0
      %v5534 = vpop.f32.mrf.mxu0
      %v5535 = vadd.f32 0.0, %v5534
      %v5536 = vpop.f32.mrf.mxu0
      %5537 = vmatprep.mubr.bf16.mxu0 %v4996
      %5538 = vmatmul.mubr.bf16.gmra.mxu0 %v4995
      %v5539 = vpop.f32.mrf.mxu0
      %v5540 = vadd.f32 0.0, %v5539
      %v5541 = vpop.f32.mrf.mxu0
      %v5542 = vpop.f32.mrf.mxu0
      %v5543 = vadd.f32 0.0, %v5542
      %v5544 = vpop.f32.mrf.mxu0
      %5545 = vdwg.mxu0
      %5546 = vmatprep.subr.bf16.mxu0 0
      %5547 = vmatpush1.bf16.msra.mxu0 %v5312
      %5548 = vmatprep.subr.bf16.mxu0 0
      %5549 = vmatpush1.bf16.msra.mxu0 %v5311
      %5550 = vmatprep.subr.bf16.mxu0 0
      %5551 = vmatpush1.bf16.msra.mxu0 %v5310
      %5552 = vmatprep.subr.bf16.mxu0 0
      %5553 = vmatpush1.bf16.msra.mxu0 %v5309
      %5554 = vmatprep.subr.bf16.mxu0 0
      %5555 = vmatpush1.bf16.msra.mxu0 %v5308
      %5556 = vmatprep.subr.bf16.mxu0 0
      %5557 = vmatpush1.bf16.msra.mxu0 %v5307
      %5558 = vmatprep.subr.bf16.mxu0 0
      %5559 = vmatpush1.bf16.msra.mxu0 %v5306
      %5560 = vmatprep.subr.bf16.mxu0 0
      %5561 = vmatpush1.bf16.msra.mxu0 %v5305
      %5562 = vmatprep.subr.bf16.mxu0 0
      %5563 = vmatpush2.bf16.msra.mxu0 %v5320
      %5564 = vmatprep.subr.bf16.mxu0 0
      %5565 = vmatpush2.bf16.msra.mxu0 %v5319
      %5566 = vmatprep.subr.bf16.mxu0 0
      %5567 = vmatpush2.bf16.msra.mxu0 %v5318
      %5568 = vmatprep.subr.bf16.mxu0 0
      %5569 = vmatpush2.bf16.msra.mxu0 %v5317
      %5570 = vmatprep.subr.bf16.mxu0 0
      %5571 = vmatpush2.bf16.msra.mxu0 %v5316
      %5572 = vmatprep.subr.bf16.mxu0 0
      %5573 = vmatpush2.bf16.msra.mxu0 %v5315
      %5574 = vmatprep.subr.bf16.mxu0 0
      %5575 = vmatpush2.bf16.msra.mxu0 %v5314
      %5576 = vmatprep.subr.bf16.mxu0 0
      %5577 = vmatpush2.bf16.msra.mxu0 %v5313
      %5578 = vmatprep.mubr.bf16.mxu0 %v4908
      %5579 = vmatmul.mubr.bf16.gmra.mxu0 %v4907
      %v5580 = vpop.f32.mrf.mxu0
      %v5581 = vadd.f32 %v5420, %v5580
      %v5582 = vpop.f32.mrf.mxu0
      %v5583 = vpop.f32.mrf.mxu0
      %v5584 = vadd.f32 %v5423, %v5583
      %v5585 = vpop.f32.mrf.mxu0
      %5586 = vmatprep.mubr.bf16.mxu0 %v4914
      %5587 = vmatmul.mubr.bf16.gmra.mxu0 %v4913
      %v5588 = vpop.f32.mrf.mxu0
      %v5589 = vadd.f32 %v5428, %v5588
      %v5590 = vpop.f32.mrf.mxu0
      %v5591 = vpop.f32.mrf.mxu0
      %v5592 = vadd.f32 %v5431, %v5591
      %v5593 = vpop.f32.mrf.mxu0
      %5594 = vmatprep.mubr.bf16.mxu0 %v4920
      %5595 = vmatmul.mubr.bf16.gmra.mxu0 %v4919
      %v5596 = vpop.f32.mrf.mxu0
      %v5597 = vadd.f32 %v5436, %v5596
      %v5598 = vpop.f32.mrf.mxu0
      %v5599 = vpop.f32.mrf.mxu0
      %v5600 = vadd.f32 %v5439, %v5599
      %v5601 = vpop.f32.mrf.mxu0
      %5602 = vmatprep.mubr.bf16.mxu0 %v4926
      %5603 = vmatmul.mubr.bf16.gmra.mxu0 %v4925
      %v5604 = vpop.f32.mrf.mxu0
      %v5605 = vadd.f32 %v5444, %v5604
      %v5606 = vpop.f32.mrf.mxu0
      %v5607 = vpop.f32.mrf.mxu0
      %v5608 = vadd.f32 %v5447, %v5607
      %v5609 = vpop.f32.mrf.mxu0
      %5610 = vmatprep.mubr.bf16.mxu0 %v4932
      %5611 = vmatmul.mubr.bf16.gmra.mxu0 %v4931
      %v5612 = vpop.f32.mrf.mxu0
      %v5613 = vadd.f32 %v5452, %v5612
      %v5614 = vpop.f32.mrf.mxu0
      %v5615 = vpop.f32.mrf.mxu0
      %v5616 = vadd.f32 %v5455, %v5615
      %v5617 = vpop.f32.mrf.mxu0
      %5618 = vmatprep.mubr.bf16.mxu0 %v4938
      %5619 = vmatmul.mubr.bf16.gmra.mxu0 %v4937
      %v5620 = vpop.f32.mrf.mxu0
      %v5621 = vadd.f32 %v5460, %v5620
      %v5622 = vpop.f32.mrf.mxu0
      %v5623 = vpop.f32.mrf.mxu0
      %v5624 = vadd.f32 %v5463, %v5623
      %v5625 = vpop.f32.mrf.mxu0
      %5626 = vmatprep.mubr.bf16.mxu0 %v4944
      %5627 = vmatmul.mubr.bf16.gmra.mxu0 %v4943
      %v5628 = vpop.f32.mrf.mxu0
      %v5629 = vadd.f32 %v5468, %v5628
      %v5630 = vpop.f32.mrf.mxu0
      %v5631 = vpop.f32.mrf.mxu0
      %v5632 = vadd.f32 %v5471, %v5631
      %v5633 = vpop.f32.mrf.mxu0
      %5634 = vmatprep.mubr.bf16.mxu0 %v4950
      %5635 = vmatmul.mubr.bf16.gmra.mxu0 %v4949
      %v5636 = vpop.f32.mrf.mxu0
      %v5637 = vadd.f32 %v5476, %v5636
      %v5638 = vpop.f32.mrf.mxu0
      %v5639 = vpop.f32.mrf.mxu0
      %v5640 = vadd.f32 %v5479, %v5639
      %v5641 = vpop.f32.mrf.mxu0
      %5642 = vmatprep.mubr.bf16.mxu0 %v4956
      %5643 = vmatmul.mubr.bf16.gmra.mxu0 %v4955
      %v5644 = vpop.f32.mrf.mxu0
      %v5645 = vadd.f32 %v5484, %v5644
      %v5646 = vpop.f32.mrf.mxu0
      %v5647 = vpop.f32.mrf.mxu0
      %v5648 = vadd.f32 %v5487, %v5647
      %v5649 = vpop.f32.mrf.mxu0
      %5650 = vmatprep.mubr.bf16.mxu0 %v4962
      %5651 = vmatmul.mubr.bf16.gmra.mxu0 %v4961
      %v5652 = vpop.f32.mrf.mxu0
      %v5653 = vadd.f32 %v5492, %v5652
      %v5654 = vpop.f32.mrf.mxu0
      %v5655 = vpop.f32.mrf.mxu0
      %v5656 = vadd.f32 %v5495, %v5655
      %v5657 = vpop.f32.mrf.mxu0
      %5658 = vmatprep.mubr.bf16.mxu0 %v4968
      %5659 = vmatmul.mubr.bf16.gmra.mxu0 %v4967
      %v5660 = vpop.f32.mrf.mxu0
      %v5661 = vadd.f32 %v5500, %v5660
      %v5662 = vpop.f32.mrf.mxu0
      %v5663 = vpop.f32.mrf.mxu0
      %v5664 = vadd.f32 %v5503, %v5663
      %v5665 = vpop.f32.mrf.mxu0
      %5666 = vmatprep.mubr.bf16.mxu0 %v4974
      %5667 = vmatmul.mubr.bf16.gmra.mxu0 %v4973
      %v5668 = vpop.f32.mrf.mxu0
      %v5669 = vadd.f32 %v5508, %v5668
      %v5670 = vpop.f32.mrf.mxu0
      %v5671 = vpop.f32.mrf.mxu0
      %v5672 = vadd.f32 %v5511, %v5671
      %v5673 = vpop.f32.mrf.mxu0
      %5674 = vmatprep.mubr.bf16.mxu0 %v4980
      %5675 = vmatmul.mubr.bf16.gmra.mxu0 %v4979
      %v5676 = vpop.f32.mrf.mxu0
      %v5677 = vadd.f32 %v5516, %v5676
      %v5678 = vpop.f32.mrf.mxu0
      %v5679 = vpop.f32.mrf.mxu0
      %v5680 = vadd.f32 %v5519, %v5679
      %v5681 = vpop.f32.mrf.mxu0
      %5682 = vmatprep.mubr.bf16.mxu0 %v4986
      %5683 = vmatmul.mubr.bf16.gmra.mxu0 %v4985
      %v5684 = vpop.f32.mrf.mxu0
      %v5685 = vadd.f32 %v5524, %v5684
      %v5686 = vpop.f32.mrf.mxu0
      %v5687 = vpop.f32.mrf.mxu0
      %v5688 = vadd.f32 %v5527, %v5687
      %v5689 = vpop.f32.mrf.mxu0
      %5690 = vmatprep.mubr.bf16.mxu0 %v4992
      %5691 = vmatmul.mubr.bf16.gmra.mxu0 %v4991
      %v5692 = vpop.f32.mrf.mxu0
      %v5693 = vadd.f32 %v5532, %v5692
      %v5694 = vpop.f32.mrf.mxu0
      %v5695 = vpop.f32.mrf.mxu0
      %v5696 = vadd.f32 %v5535, %v5695
      %v5697 = vpop.f32.mrf.mxu0
      %5698 = vmatprep.mubr.bf16.mxu0 %v4998
      %5699 = vmatmul.mubr.bf16.gmra.mxu0 %v4997
      %v5700 = vpop.f32.mrf.mxu0
      %v5701 = vadd.f32 %v5540, %v5700
      %v5702 = vpop.f32.mrf.mxu0
      %v5703 = vpop.f32.mrf.mxu0
      %v5704 = vadd.f32 %v5543, %v5703
      %v5705 = vpop.f32.mrf.mxu0
      %5706 = vdwg.mxu0
      %5707 = vmatprep.subr.bf16.mxu0 0
      %5708 = vmatpush1.bf16.msra.mxu0 %v5328
      %5709 = vmatprep.subr.bf16.mxu0 0
      %5710 = vmatpush1.bf16.msra.mxu0 %v5327
      %5711 = vmatprep.subr.bf16.mxu0 0
      %5712 = vmatpush1.bf16.msra.mxu0 %v5326
      %5713 = vmatprep.subr.bf16.mxu0 0
      %5714 = vmatpush1.bf16.msra.mxu0 %v5325
      %5715 = vmatprep.subr.bf16.mxu0 0
      %5716 = vmatpush1.bf16.msra.mxu0 %v5324
      %5717 = vmatprep.subr.bf16.mxu0 0
      %5718 = vmatpush1.bf16.msra.mxu0 %v5323
      %5719 = vmatprep.subr.bf16.mxu0 0
      %5720 = vmatpush1.bf16.msra.mxu0 %v5322
      %5721 = vmatprep.subr.bf16.mxu0 0
      %5722 = vmatpush1.bf16.msra.mxu0 %v5321
      %5723 = vmatprep.subr.bf16.mxu0 0
      %5724 = vmatpush2.bf16.msra.mxu0 %v5336
      %5725 = vmatprep.subr.bf16.mxu0 0
      %5726 = vmatpush2.bf16.msra.mxu0 %v5335
      %5727 = vmatprep.subr.bf16.mxu0 0
      %5728 = vmatpush2.bf16.msra.mxu0 %v5334
      %5729 = vmatprep.subr.bf16.mxu0 0
      %5730 = vmatpush2.bf16.msra.mxu0 %v5333
      %5731 = vmatprep.subr.bf16.mxu0 0
      %5732 = vmatpush2.bf16.msra.mxu0 %v5332
      %5733 = vmatprep.subr.bf16.mxu0 0
      %5734 = vmatpush2.bf16.msra.mxu0 %v5331
      %5735 = vmatprep.subr.bf16.mxu0 0
      %5736 = vmatpush2.bf16.msra.mxu0 %v5330
      %5737 = vmatprep.subr.bf16.mxu0 0
      %5738 = vmatpush2.bf16.msra.mxu0 %v5329
      %5739 = vmatprep.mubr.bf16.mxu0 %v4910
      %5740 = vmatmul.mubr.bf16.gmra.mxu0 %v4909
      %v5741 = vpop.f32.mrf.mxu0
      %v5742 = vadd.f32 %v5581, %v5741
      %v5743 = vpop.f32.mrf.mxu0
      %v5744 = vpop.f32.mrf.mxu0
      %v5745 = vadd.f32 %v5584, %v5744
      %v5746 = vpop.f32.mrf.mxu0
      %5747 = vmatprep.mubr.bf16.mxu0 %v4916
      %5748 = vmatmul.mubr.bf16.gmra.mxu0 %v4915
      %v5749 = vpop.f32.mrf.mxu0
      %v5750 = vadd.f32 %v5589, %v5749
      %v5751 = vpop.f32.mrf.mxu0
      %v5752 = vpop.f32.mrf.mxu0
      %v5753 = vadd.f32 %v5592, %v5752
      %v5754 = vpop.f32.mrf.mxu0
      %5755 = vmatprep.mubr.bf16.mxu0 %v4922
      %5756 = vmatmul.mubr.bf16.gmra.mxu0 %v4921
      %v5757 = vpop.f32.mrf.mxu0
      %v5758 = vadd.f32 %v5597, %v5757
      %v5759 = vpop.f32.mrf.mxu0
      %v5760 = vpop.f32.mrf.mxu0
      %v5761 = vadd.f32 %v5600, %v5760
      %v5762 = vpop.f32.mrf.mxu0
      %5763 = vmatprep.mubr.bf16.mxu0 %v4928
      %5764 = vmatmul.mubr.bf16.gmra.mxu0 %v4927
      %v5765 = vpop.f32.mrf.mxu0
      %v5766 = vadd.f32 %v5605, %v5765
      %v5767 = vpop.f32.mrf.mxu0
      %v5768 = vpop.f32.mrf.mxu0
      %v5769 = vadd.f32 %v5608, %v5768
      %v5770 = vpop.f32.mrf.mxu0
      %5771 = vmatprep.mubr.bf16.mxu0 %v4934
      %5772 = vmatmul.mubr.bf16.gmra.mxu0 %v4933
      %v5773 = vpop.f32.mrf.mxu0
      %v5774 = vadd.f32 %v5613, %v5773
      %v5775 = vpop.f32.mrf.mxu0
      %v5776 = vpop.f32.mrf.mxu0
      %v5777 = vadd.f32 %v5616, %v5776
      %v5778 = vpop.f32.mrf.mxu0
      %5779 = vmatprep.mubr.bf16.mxu0 %v4940
      %5780 = vmatmul.mubr.bf16.gmra.mxu0 %v4939
      %v5781 = vpop.f32.mrf.mxu0
      %v5782 = vadd.f32 %v5621, %v5781
      %v5783 = vpop.f32.mrf.mxu0
      %v5784 = vpop.f32.mrf.mxu0
      %v5785 = vadd.f32 %v5624, %v5784
      %v5786 = vpop.f32.mrf.mxu0
      %5787 = vmatprep.mubr.bf16.mxu0 %v4946
      %5788 = vmatmul.mubr.bf16.gmra.mxu0 %v4945
      %v5789 = vpop.f32.mrf.mxu0
      %v5790 = vadd.f32 %v5629, %v5789
      %v5791 = vpop.f32.mrf.mxu0
      %v5792 = vpop.f32.mrf.mxu0
      %v5793 = vadd.f32 %v5632, %v5792
      %v5794 = vpop.f32.mrf.mxu0
      %5795 = vmatprep.mubr.bf16.mxu0 %v4952
      %5796 = vmatmul.mubr.bf16.gmra.mxu0 %v4951
      %v5797 = vpop.f32.mrf.mxu0
      %v5798 = vadd.f32 %v5637, %v5797
      %v5799 = vpop.f32.mrf.mxu0
      %v5800 = vpop.f32.mrf.mxu0
      %v5801 = vadd.f32 %v5640, %v5800
      %v5802 = vpop.f32.mrf.mxu0
      %5803 = vmatprep.mubr.bf16.mxu0 %v4958
      %5804 = vmatmul.mubr.bf16.gmra.mxu0 %v4957
      %v5805 = vpop.f32.mrf.mxu0
      %v5806 = vadd.f32 %v5645, %v5805
      %v5807 = vpop.f32.mrf.mxu0
      %v5808 = vpop.f32.mrf.mxu0
      %v5809 = vadd.f32 %v5648, %v5808
      %v5810 = vpop.f32.mrf.mxu0
      %5811 = vmatprep.mubr.bf16.mxu0 %v4964
      %5812 = vmatmul.mubr.bf16.gmra.mxu0 %v4963
      %v5813 = vpop.f32.mrf.mxu0
      %v5814 = vadd.f32 %v5653, %v5813
      %v5815 = vpop.f32.mrf.mxu0
      %v5816 = vpop.f32.mrf.mxu0
      %v5817 = vadd.f32 %v5656, %v5816
      %v5818 = vpop.f32.mrf.mxu0
      %5819 = vmatprep.mubr.bf16.mxu0 %v4970
      %5820 = vmatmul.mubr.bf16.gmra.mxu0 %v4969
      %v5821 = vpop.f32.mrf.mxu0
      %v5822 = vadd.f32 %v5661, %v5821
      %v5823 = vpop.f32.mrf.mxu0
      %v5824 = vpop.f32.mrf.mxu0
      %v5825 = vadd.f32 %v5664, %v5824
      %v5826 = vpop.f32.mrf.mxu0
      %5827 = vmatprep.mubr.bf16.mxu0 %v4976
      %5828 = vmatmul.mubr.bf16.gmra.mxu0 %v4975
      %v5829 = vpop.f32.mrf.mxu0
      %v5830 = vadd.f32 %v5669, %v5829
      %v5831 = vpop.f32.mrf.mxu0
      %v5832 = vpop.f32.mrf.mxu0
      %v5833 = vadd.f32 %v5672, %v5832
      %v5834 = vpop.f32.mrf.mxu0
      %5835 = vmatprep.mubr.bf16.mxu0 %v4982
      %5836 = vmatmul.mubr.bf16.gmra.mxu0 %v4981
      %v5837 = vpop.f32.mrf.mxu0
      %v5838 = vadd.f32 %v5677, %v5837
      %v5839 = vpop.f32.mrf.mxu0
      %v5840 = vpop.f32.mrf.mxu0
      %v5841 = vadd.f32 %v5680, %v5840
      %v5842 = vpop.f32.mrf.mxu0
      %5843 = vmatprep.mubr.bf16.mxu0 %v4988
      %5844 = vmatmul.mubr.bf16.gmra.mxu0 %v4987
      %v5845 = vpop.f32.mrf.mxu0
      %v5846 = vadd.f32 %v5685, %v5845
      %v5847 = vpop.f32.mrf.mxu0
      %v5848 = vpop.f32.mrf.mxu0
      %v5849 = vadd.f32 %v5688, %v5848
      %v5850 = vpop.f32.mrf.mxu0
      %5851 = vmatprep.mubr.bf16.mxu0 %v4994
      %5852 = vmatmul.mubr.bf16.gmra.mxu0 %v4993
      %v5853 = vpop.f32.mrf.mxu0
      %v5854 = vadd.f32 %v5693, %v5853
      %v5855 = vpop.f32.mrf.mxu0
      %v5856 = vpop.f32.mrf.mxu0
      %v5857 = vadd.f32 %v5696, %v5856
      %v5858 = vpop.f32.mrf.mxu0
      %5859 = vmatprep.mubr.bf16.mxu0 %v5000
      %5860 = vmatmul.mubr.bf16.gmra.mxu0 %v4999
      %v5861 = vpop.f32.mrf.mxu0
      %v5862 = vadd.f32 %v5701, %v5861
      %v5863 = vpop.f32.mrf.mxu0
      %v5864 = vpop.f32.mrf.mxu0
      %v5865 = vadd.f32 %v5704, %v5864
      %v5866 = vpop.f32.mrf.mxu0
      %5867 = vdwg.mxu0
      %v5868 = vadd.f32 %v4007, %v5742
      %v5869 = vadd.f32 %v4010, %v5745
      %v5870 = vadd.f32 %v4015, %v5750
      %v5871 = vadd.f32 %v4018, %v5753
      %v5872 = vadd.f32 %v4023, %v5758
      %v5873 = vadd.f32 %v4026, %v5761
      %v5874 = vadd.f32 %v4031, %v5766
      %v5875 = vadd.f32 %v4034, %v5769
      %v5876 = vadd.f32 %v4039, %v5774
      %v5877 = vadd.f32 %v4042, %v5777
      %v5878 = vadd.f32 %v4047, %v5782
      %v5879 = vadd.f32 %v4050, %v5785
      %v5880 = vadd.f32 %v4055, %v5790
      %v5881 = vadd.f32 %v4058, %v5793
      %v5882 = vadd.f32 %v4063, %v5798
      %v5883 = vadd.f32 %v4066, %v5801
      %v5884 = vadd.f32 %v4071, %v5806
      %v5885 = vadd.f32 %v4074, %v5809
      %v5886 = vadd.f32 %v4079, %v5814
      %v5887 = vadd.f32 %v4082, %v5817
      %v5888 = vadd.f32 %v4087, %v5822
      %v5889 = vadd.f32 %v4090, %v5825
      %v5890 = vadd.f32 %v4095, %v5830
      %v5891 = vadd.f32 %v4098, %v5833
      %v5892 = vadd.f32 %v4103, %v5838
      %v5893 = vadd.f32 %v4106, %v5841
      %v5894 = vadd.f32 %v4111, %v5846
      %v5895 = vadd.f32 %v4114, %v5849
      %v5896 = vadd.f32 %v4119, %v5854
      %v5897 = vadd.f32 %v4122, %v5857
      %v5898 = vadd.f32 %v4127, %v5862
      %v5899 = vadd.f32 %v4130, %v5865
      %v5900 = vpack.c.bf16 %v5869, %v5868
      %v5901 = vpack.c.bf16 %v5871, %v5870
      %v5902 = vpack.c.bf16 %v5873, %v5872
      %v5903 = vpack.c.bf16 %v5875, %v5874
      %v5904 = vpack.c.bf16 %v5877, %v5876
      %v5905 = vpack.c.bf16 %v5879, %v5878
      %v5906 = vpack.c.bf16 %v5881, %v5880
      %v5907 = vpack.c.bf16 %v5883, %v5882
      %v5908 = vpack.c.bf16 %v5885, %v5884
      %v5909 = vpack.c.bf16 %v5887, %v5886
      %v5910 = vpack.c.bf16 %v5889, %v5888
      %v5911 = vpack.c.bf16 %v5891, %v5890
      %v5912 = vpack.c.bf16 %v5893, %v5892
      %v5913 = vpack.c.bf16 %v5895, %v5894
      %v5914 = vpack.c.bf16 %v5897, %v5896
      %v5915 = vpack.c.bf16 %v5899, %v5898
      %v5932 = vunpack.c.l.b16 %v5900
      %v5933 = vunpack.c.h.b16 %v5900
      %v5934 = vunpack.c.l.b16 %v5901
      %v5935 = vunpack.c.h.b16 %v5901
      %v5936 = vunpack.c.l.b16 %v5902
      %v5937 = vunpack.c.h.b16 %v5902
      %v5938 = vunpack.c.l.b16 %v5903
      %v5939 = vunpack.c.h.b16 %v5903
      %v5940 = vunpack.c.l.b16 %v5904
      %v5941 = vunpack.c.h.b16 %v5904
      %v5942 = vunpack.c.l.b16 %v5905
      %v5943 = vunpack.c.h.b16 %v5905
      %v5944 = vunpack.c.l.b16 %v5906
      %v5945 = vunpack.c.h.b16 %v5906
      %v5946 = vunpack.c.l.b16 %v5907
      %v5947 = vunpack.c.h.b16 %v5907
      %v5948 = vunpack.c.l.b16 %v5908
      %v5949 = vunpack.c.h.b16 %v5908
      %v5950 = vunpack.c.l.b16 %v5909
      %v5951 = vunpack.c.h.b16 %v5909
      %v5952 = vunpack.c.l.b16 %v5910
      %v5953 = vunpack.c.h.b16 %v5910
      %v5954 = vunpack.c.l.b16 %v5911
      %v5955 = vunpack.c.h.b16 %v5911
      %v5956 = vunpack.c.l.b16 %v5912
      %v5957 = vunpack.c.h.b16 %v5912
      %v5958 = vunpack.c.l.b16 %v5913
      %v5959 = vunpack.c.h.b16 %v5913
      %v5960 = vunpack.c.l.b16 %v5914
      %v5961 = vunpack.c.h.b16 %v5914
      %v5962 = vunpack.c.l.b16 %v5915
      %v5963 = vunpack.c.h.b16 %v5915
      %v5964 = vpack.c.b16 %v5932, %v5932
      %v5965 = vpack.c.b16 %v5933, %v5933
      %v5966 = vpack.c.b16 %v5934, %v5934
      %v5967 = vpack.c.b16 %v5935, %v5935
      %v5968 = vpack.c.b16 %v5936, %v5936
      %v5969 = vpack.c.b16 %v5937, %v5937
      %v5970 = vpack.c.b16 %v5938, %v5938
      %v5971 = vpack.c.b16 %v5939, %v5939
      %v5972 = vpack.c.b16 %v5940, %v5940
      %v5973 = vpack.c.b16 %v5941, %v5941
      %v5974 = vpack.c.b16 %v5942, %v5942
      %v5975 = vpack.c.b16 %v5943, %v5943
      %v5976 = vpack.c.b16 %v5944, %v5944
      %v5977 = vpack.c.b16 %v5945, %v5945
      %v5978 = vpack.c.b16 %v5946, %v5946
      %v5979 = vpack.c.b16 %v5947, %v5947
      %v5980 = vpack.c.b16 %v5948, %v5948
      %v5981 = vpack.c.b16 %v5949, %v5949
      %v5982 = vpack.c.b16 %v5950, %v5950
      %v5983 = vpack.c.b16 %v5951, %v5951
      %v5984 = vpack.c.b16 %v5952, %v5952
      %v5985 = vpack.c.b16 %v5953, %v5953
      %v5986 = vpack.c.b16 %v5954, %v5954
      %v5987 = vpack.c.b16 %v5955, %v5955
      %v5988 = vpack.c.b16 %v5956, %v5956
      %v5989 = vpack.c.b16 %v5957, %v5957
      %v5990 = vpack.c.b16 %v5958, %v5958
      %v5991 = vpack.c.b16 %v5959, %v5959
      %v5992 = vpack.c.b16 %v5960, %v5960
      %v5993 = vpack.c.b16 %v5961, %v5961
      %v5994 = vpack.c.b16 %v5962, %v5962
      %v5995 = vpack.c.b16 %v5963, %v5963
      %6028 = vst [vmem:[%s225] sm:$0xf] %v5964
      %6029 = vst [vmem:[%s225 + $0x4] sm:$0xf] %v5965
      %6030 = vst [vmem:[%s225 + $0x8] sm:$0xf] %v5966
      %6031 = vst [vmem:[%s225 + $0xc] sm:$0xf] %v5967
      %6032 = vst [vmem:[%s225 + $0x10] sm:$0xf] %v5968
      %6033 = vst [vmem:[%s225 + $0x14] sm:$0xf] %v5969
      %6034 = vst [vmem:[%s225 + $0x18] sm:$0xf] %v5970
      %6035 = vst [vmem:[%s225 + $0x1c] sm:$0xf] %v5971
      %6036 = vst [vmem:[%s225 + $0x20] sm:$0xf] %v5972
      %6037 = vst [vmem:[%s225 + $0x24] sm:$0xf] %v5973
      %6038 = vst [vmem:[%s225 + $0x28] sm:$0xf] %v5974
      %6039 = vst [vmem:[%s225 + $0x2c] sm:$0xf] %v5975
      %6040 = vst [vmem:[%s225 + $0x30] sm:$0xf] %v5976
      %6041 = vst [vmem:[%s225 + $0x34] sm:$0xf] %v5977
      %6042 = vst [vmem:[%s225 + $0x38] sm:$0xf] %v5978
      %6043 = vst [vmem:[%s225 + $0x3c] sm:$0xf] %v5979
      %6044 = vst [vmem:[%s225 + $0x40] sm:$0xf] %v5980
      %6045 = vst [vmem:[%s225 + $0x44] sm:$0xf] %v5981
      %6046 = vst [vmem:[%s225 + $0x48] sm:$0xf] %v5982
      %6047 = vst [vmem:[%s225 + $0x4c] sm:$0xf] %v5983
      %6048 = vst [vmem:[%s225 + $0x50] sm:$0xf] %v5984
      %6049 = vst [vmem:[%s225 + $0x54] sm:$0xf] %v5985
      %6050 = vst [vmem:[%s225 + $0x58] sm:$0xf] %v5986
      %6051 = vst [vmem:[%s225 + $0x5c] sm:$0xf] %v5987
      %6052 = vst [vmem:[%s225 + $0x60] sm:$0xf] %v5988
      %6053 = vst [vmem:[%s225 + $0x64] sm:$0xf] %v5989
      %6054 = vst [vmem:[%s225 + $0x68] sm:$0xf] %v5990
      %6055 = vst [vmem:[%s225 + $0x6c] sm:$0xf] %v5991
      %6056 = vst [vmem:[%s225 + $0x70] sm:$0xf] %v5992
      %6057 = vst [vmem:[%s225 + $0x74] sm:$0xf] %v5993
      %6058 = vst [vmem:[%s225 + $0x78] sm:$0xf] %v5994
      %6059 = vst [vmem:[%s225 + $0x7c] sm:$0xf] %v5995
      %v6060 = vadd.f32 %v5868, %v5869
      %v6061 = vadd.f32 %v6060, %v5870
      %v6062 = vadd.f32 %v6061, %v5871
      %v6063 = vadd.f32 %v6062, %v5872
      %v6064 = vadd.f32 %v6063, %v5873
      %v6065 = vadd.f32 %v6064, %v5874
      %v6066 = vadd.f32 %v6065, %v5875
      %v6067 = vadd.f32 %v6066, %v5876
      %v6068 = vadd.f32 %v6067, %v5877
      %v6069 = vadd.f32 %v6068, %v5878
      %v6070 = vadd.f32 %v6069, %v5879
      %v6071 = vadd.f32 %v6070, %v5880
      %v6072 = vadd.f32 %v6071, %v5881
      %v6073 = vadd.f32 %v6072, %v5882
      %v6074 = vadd.f32 %v6073, %v5883
      %v6075 = vadd.f32 %v6074, %v5884
      %v6076 = vadd.f32 %v6075, %v5885
      %v6077 = vadd.f32 %v6076, %v5886
      %v6078 = vadd.f32 %v6077, %v5887
      %v6079 = vadd.f32 %v6078, %v5888
      %v6080 = vadd.f32 %v6079, %v5889
      %v6081 = vadd.f32 %v6080, %v5890
      %v6082 = vadd.f32 %v6081, %v5891
      %v6083 = vadd.f32 %v6082, %v5892
      %v6084 = vadd.f32 %v6083, %v5893
      %v6085 = vadd.f32 %v6084, %v5894
      %v6086 = vadd.f32 %v6085, %v5895
      %v6087 = vadd.f32 %v6086, %v5896
      %v6088 = vadd.f32 %v6087, %v5897
      %v6089 = vadd.f32 %v6088, %v5898
      %v6090 = vadd.f32 %v6089, %v5899
      %v6091 = vrot.slane %v6090, 4
      %v6092 = vadd.f32 %v6090, %v6091
      %v6093 = vrot.slane %v6092, 2
      %v6094 = vadd.f32 %v6092, %v6093
      %v6095 = vrot.slane %v6094, 1
      %v6096 = vadd.f32 %v6094, %v6095
      %6097 = vst [vmem:[%s233] sm:$0x1] %v6096
      %v6098 = vmul.f32 %v5868, %v5868
      %v6099 = vmul.f32 %v5869, %v5869
      %v6100 = vmul.f32 %v5870, %v5870
      %v6101 = vmul.f32 %v5871, %v5871
      %v6102 = vmul.f32 %v5872, %v5872
      %v6103 = vmul.f32 %v5873, %v5873
      %v6104 = vmul.f32 %v5874, %v5874
      %v6105 = vmul.f32 %v5875, %v5875
      %v6106 = vmul.f32 %v5876, %v5876
      %v6107 = vmul.f32 %v5877, %v5877
      %v6108 = vmul.f32 %v5878, %v5878
      %v6109 = vmul.f32 %v5879, %v5879
      %v6110 = vmul.f32 %v5880, %v5880
      %v6111 = vmul.f32 %v5881, %v5881
      %v6112 = vmul.f32 %v5882, %v5882
      %v6113 = vmul.f32 %v5883, %v5883
      %v6114 = vmul.f32 %v5884, %v5884
      %v6115 = vmul.f32 %v5885, %v5885
      %v6116 = vmul.f32 %v5886, %v5886
      %v6117 = vmul.f32 %v5887, %v5887
      %v6118 = vmul.f32 %v5888, %v5888
      %v6119 = vmul.f32 %v5889, %v5889
      %v6120 = vmul.f32 %v5890, %v5890
      %v6121 = vmul.f32 %v5891, %v5891
      %v6122 = vmul.f32 %v5892, %v5892
      %v6123 = vmul.f32 %v5893, %v5893
      %v6124 = vmul.f32 %v5894, %v5894
      %v6125 = vmul.f32 %v5895, %v5895
      %v6126 = vmul.f32 %v5896, %v5896
      %v6127 = vmul.f32 %v5897, %v5897
      %v6128 = vmul.f32 %v5898, %v5898
      %v6129 = vmul.f32 %v5899, %v5899
      %v6130 = vadd.f32 %v6098, %v6099
      %v6131 = vadd.f32 %v6130, %v6100
      %v6132 = vadd.f32 %v6131, %v6101
      %v6133 = vadd.f32 %v6132, %v6102
      %v6134 = vadd.f32 %v6133, %v6103
      %v6135 = vadd.f32 %v6134, %v6104
      %v6136 = vadd.f32 %v6135, %v6105
      %v6137 = vadd.f32 %v6136, %v6106
      %v6138 = vadd.f32 %v6137, %v6107
      %v6139 = vadd.f32 %v6138, %v6108
      %v6140 = vadd.f32 %v6139, %v6109
      %v6141 = vadd.f32 %v6140, %v6110
      %v6142 = vadd.f32 %v6141, %v6111
      %v6143 = vadd.f32 %v6142, %v6112
      %v6144 = vadd.f32 %v6143, %v6113
      %v6145 = vadd.f32 %v6144, %v6114
      %v6146 = vadd.f32 %v6145, %v6115
      %v6147 = vadd.f32 %v6146, %v6116
      %v6148 = vadd.f32 %v6147, %v6117
      %v6149 = vadd.f32 %v6148, %v6118
      %v6150 = vadd.f32 %v6149, %v6119
      %v6151 = vadd.f32 %v6150, %v6120
      %v6152 = vadd.f32 %v6151, %v6121
      %v6153 = vadd.f32 %v6152, %v6122
      %v6154 = vadd.f32 %v6153, %v6123
      %v6155 = vadd.f32 %v6154, %v6124
      %v6156 = vadd.f32 %v6155, %v6125
      %v6157 = vadd.f32 %v6156, %v6126
      %v6158 = vadd.f32 %v6157, %v6127
      %v6159 = vadd.f32 %v6158, %v6128
      %v6160 = vadd.f32 %v6159, %v6129
      %v6161 = vrot.slane %v6160, 4
      %v6162 = vadd.f32 %v6160, %v6161
      %v6163 = vrot.slane %v6162, 2
      %v6164 = vadd.f32 %v6162, %v6163
      %v6165 = vrot.slane %v6164, 1
      %v6166 = vadd.f32 %v6164, %v6165
      %6167 = vst [vmem:[%s233 + $0x1] sm:$0x1] %v6166
      %s6168 = smul.u32 16, %s20
      %p6169 = scmp.lt.s32.totalorder %s19, 1
      %s6170 = scalar_select %p6169, %s19, 1
      %p6171 = scmp.lt.s32.totalorder %s6168, 15
      %s6172 = scalar_select %p6171, %s6168, 15
      %s6173 = smul.addr %s6172, 2
      %s6174 = smul.addr %s6170, 32
      %s6175 = sadd.s32 %s6173, %s6174
      %s6176 = smul.addr %s6175, 4
      %s6177 = scalar_lea.vmem %s2, %s6176
      %p6178 = scmp.lt.s32.totalorder %s19, 1
      %s6179 = scalar_select %p6178, %s19, 1
      %p6180 = scmp.lt.s32.totalorder %s20, 0
      %s6181 = scalar_select %p6180, %s20, 0
      %s6182 = sadd.s32 %s6181, %s6179
      %s6183 = smul.addr %s6182, 2
      %s6184 = scalar_lea.vmem %s3, %s6183
      // Predicated region
      $region29: #{up_forward.6} parent=27 // pred_check
        %p6185 = pneg %p96
      $region30: #{up_forward.6} parent=27 // pred_check_branch
        %6187 = sbr.rel (%p6185) target = $region32
      $region31: #{up_forward.6} parent=27 // pred_region
        %s6188 = smul.u32 16, %s20
      $region32: #{up_forward.6} parent=27 // pred_fallthru
        _
      // Predicated region
      $region33: #{up_forward.6} parent=27 // pred_check
        %p6189 = pneg %p124
      $region34: #{up_forward.6} parent=27 // pred_check_branch
        %6191 = sbr.rel (%p6189) target = $region36
      $region35: #{up_forward.6} parent=27 // pred_region
        _
      $region36: #{up_forward.6} parent=27 // pred_fallthru
        _
    $region28: #{up_forward.6} parent=5 // pred_fallthru
      _
    %p6192 = scmp.le.s32.totalorder 2, %s10
    // Predicated region
    $region37: #{up_forward.6} parent=5 // pred_check
      %p6193 = pneg %p6192
    $region38: #{up_forward.6} parent=5 // pred_check_branch
      %6195 = sbr.rel (%p6193) target = $region40
    $region39: #{up_forward.6} parent=5 // pred_region
      %s6196 = ssub.s32 %s10, 2
      // Predicated region
      $region41: #{up_forward.6} parent=39 // pred_check
        %p6197 = pneg %p102
      $region42: #{up_forward.6} parent=39 // pred_check_branch
        %6199 = sbr.rel (%p6197) target = $region44
      $region43: #{up_forward.6} parent=39 // pred_region
        %s6200 = smul.u32 16, %s22
        %p6201 = scmp.lt.s32.totalorder %s21, 1
        %s6202 = scalar_select %p6201, %s21, 1
        %p6203 = scmp.lt.s32.totalorder %s6200, 15
        %s6204 = scalar_select %p6203, %s6200, 15
        %s6205 = smul.addr %s6204, 2
        %s6206 = smul.addr %s6202, 32
        %s6207 = sadd.s32 %s6205, %s6206
        %s6208 = smul.addr %s6207, 4
        %s6209 = scalar_lea.vmem %s2, %s6208
      $region44: #{up_forward.6} parent=39 // pred_fallthru
        _
      // Predicated region
      $region45: #{up_forward.6} parent=39 // pred_check
        %p6210 = pneg %p130
      $region46: #{up_forward.6} parent=39 // pred_check_branch
        %6212 = sbr.rel (%p6210) target = $region48
      $region47: #{up_forward.6} parent=39 // pred_region
        %p6213 = scmp.lt.s32.totalorder %s21, 1
        %s6214 = scalar_select %p6213, %s21, 1
        %p6215 = scmp.lt.s32.totalorder %s22, 0
        %s6216 = scalar_select %p6215, %s22, 0
        %s6217 = sadd.s32 %s6216, %s6214
        %s6218 = smul.addr %s6217, 2
        %s6219 = scalar_lea.vmem %s3, %s6218
      $region48: #{up_forward.6} parent=39 // pred_fallthru
        _
    $region40: #{up_forward.6} parent=5 // pred_fallthru
      _
  $region6: #{up_forward.6} parent=0 // loop_footer
    %s14 = sadd.s32 1, %s10
  $region7: #{up_forward.6} parent=0 // loop_footer_branch
    %9 = sbr.rel target = $region3
  $region8: #{up_forward.6} parent=0 // loop_exit
    _

// kernel: up_forward.8
$region0: #{up_forward.8}
  #allocation0 [shape = 'u32[]', space=smem, size = 0x4, offset = 0x4, fixed_abs, tag = 'smem constant byte address 0x4 - core index']
  #allocation1 [shape = 'u32[144,128]{1,0:T(1,128)}', space=vmem, size = 0x12000, scoped, tag = 'internal scratch']
  %s0 = inlined_call_operand.vmem [shape: bf16[2,16,18,384], index: 0, kind: input, shape index: {}]
  %s1 = inlined_call_operand.vmem [shape: bf16[3,384,128], index: 1, kind: input, shape index: {}]
  %s2 = inlined_call_operand.vmem [shape: bf16[2,16,16,128], index: 2, kind: output, shape index: {0}]
  %s3 = inlined_call_operand.vmem [shape: f32[2,1,2,128], index: 3, kind: output, shape index: {1}]
  %4 = xla_tuple %s2, %s3
  %s5 = sld [smem:[#allocation0]]
  $region49: #{up_forward.8} parent=0
    _
  %s7 = ssub.s32 1, %s5
  %s8 = scalar_select 0, %s7, %s5
  loop: start=0, step=1, limit=4
  $region2: #{up_forward.8} parent=0 // loop_pre_header
    _
  $region3: #{up_forward.8} parent=0 // loop_header
    %s10 = sphi 0, %s14
    %p11 = scmp.ge.s32.totalorder %s10, 4
    %s17 = sphi 0, %s29
    %s18 = sphi 0, %s25
    %s19 = sphi 0, %s17
    %s20 = sphi 0, %s18
    %s21 = sphi 0, %s19
    %s22 = sphi 0, %s20
    %s34 = sphi 0, %s36
    %s37 = sphi 0, %s34
    %s38 = sphi 0, %s37
    %s54 = sphi 0, %s38
    %s58 = sphi 0, %s58
    %s60 = sphi 0, %s58
    %s61 = sphi 0, %s60
    %s75 = sphi 0, %s61
    %s83 = sphi 0, %s85
    %s86 = sphi 0, %s83
    %s87 = sphi 0, %s86
    %s103 = sphi 0, %s87
    %s111 = sphi 0, %s113
    %s114 = sphi 0, %s111
    %s115 = sphi 0, %s114
    %s131 = sphi 0, %s115
  $region4: #{up_forward.8} parent=0 // loop_header_branch
    %13 = sbr.rel (%p11) target = $region8
  $region5: #{up_forward.8} parent=0 // loop_body
    %s15 = ssub.s32 %s10, 1
    %s16 = ssub.s32 %s10, 2
    %s23 = sadd.s32 1, %s18
    %p24 = scmp.ge.s32.totalorder %s23, 1
    %s25 = scalar_select %p24, 0, %s23
    %s26 = sadd.s32 1, %s17
    %s27 = scalar_select %p24, %s26, %s17
    %p28 = scmp.ge.s32.totalorder %s27, 2
    %s29 = scalar_select %p28, 0, %s27
    %s30 = ssub.s32 %s17, %s29
    %s31 = ssub.s32 %s18, %s25
    %s32 = sor.u32 %s30, %s31
    %p33 = scmp.eq.s32.totalorder %s32, 0
    %s35 = sadd.s32 %s34, 1
    %s36 = scalar_select %p33, %s34, %s35
    %p39 = pneg %p33
    %p40 = scmp.eq.s32.totalorder %s10, 1
    %p41 = por %p39, %p40
    %p42 = scmp.ne.s32.totalorder %s34, %s37
    %p43 = scmp.eq.s32.totalorder %s10, 0
    %p44 = por %p42, %p43
    %p45 = scmp.ne.s32.totalorder %s34, %s37
    %p46 = scmp.eq.s32.totalorder %s15, 1
    %p47 = por %p45, %p46
    %p48 = scmp.ne.s32.totalorder %s37, %s38
    %p49 = scmp.eq.s32.totalorder %s15, 0
    %p50 = por %p48, %p49
    %p51 = scmp.ne.s32.totalorder %s37, %s38
    %p52 = scmp.eq.s32.totalorder %s16, 1
    %p53 = por %p51, %p52
    %p55 = scmp.ne.s32.totalorder %s38, %s54
    %p56 = scmp.eq.s32.totalorder %s16, 0
    %p57 = por %p55, %p56
    %s59 = sadd.s32 %s58, 1
    %p62 = scmp.eq.s32.totalorder %s10, 1
    %p63 = scmp.ne.s32.totalorder %s58, %s60
    %p64 = scmp.eq.s32.totalorder %s10, 0
    %p65 = por %p63, %p64
    %p66 = scmp.ne.s32.totalorder %s58, %s60
    %p67 = scmp.eq.s32.totalorder %s15, 1
    %p68 = por %p66, %p67
    %p69 = scmp.ne.s32.totalorder %s60, %s61
    %p70 = scmp.eq.s32.totalorder %s15, 0
    %p71 = por %p69, %p70
    %p72 = scmp.ne.s32.totalorder %s60, %s61
    %p73 = scmp.eq.s32.totalorder %s16, 1
    %p74 = por %p72, %p73
    %p76 = scmp.ne.s32.totalorder %s61, %s75
    %p77 = scmp.eq.s32.totalorder %s16, 0
    %p78 = por %p76, %p77
    %s79 = ssub.s32 %s17, %s29
    %s80 = ssub.s32 %s18, %s25
    %s81 = sor.u32 %s79, %s80
    %p82 = scmp.eq.s32.totalorder %s81, 0
    %s84 = sadd.s32 %s83, 1
    %s85 = scalar_select %p82, %s83, %s84
    %p88 = pneg %p82
    %p89 = scmp.eq.s32.totalorder %s10, 1
    %p90 = por %p88, %p89
    %p91 = scmp.ne.s32.totalorder %s83, %s86
    %p92 = scmp.eq.s32.totalorder %s10, 0
    %p93 = por %p91, %p92
    %p94 = scmp.ne.s32.totalorder %s83, %s86
    %p95 = scmp.eq.s32.totalorder %s15, 1
    %p96 = por %p94, %p95
    %p97 = scmp.ne.s32.totalorder %s86, %s87
    %p98 = scmp.eq.s32.totalorder %s15, 0
    %p99 = por %p97, %p98
    %p100 = scmp.ne.s32.totalorder %s86, %s87
    %p101 = scmp.eq.s32.totalorder %s16, 1
    %p102 = por %p100, %p101
    %p104 = scmp.ne.s32.totalorder %s87, %s103
    %p105 = scmp.eq.s32.totalorder %s16, 0
    %p106 = por %p104, %p105
    %s107 = ssub.s32 %s17, %s29
    %s108 = ssub.s32 %s18, %s25
    %s109 = sor.u32 %s107, %s108
    %p110 = scmp.eq.s32.totalorder %s109, 0
    %s112 = sadd.s32 %s111, 1
    %s113 = scalar_select %p110, %s111, %s112
    %p116 = pneg %p110
    %p117 = scmp.eq.s32.totalorder %s10, 1
    %p118 = por %p116, %p117
    %p119 = scmp.ne.s32.totalorder %s111, %s114
    %p120 = scmp.eq.s32.totalorder %s10, 0
    %p121 = por %p119, %p120
    %p122 = scmp.ne.s32.totalorder %s111, %s114
    %p123 = scmp.eq.s32.totalorder %s15, 1
    %p124 = por %p122, %p123
    %p125 = scmp.ne.s32.totalorder %s114, %s115
    %p126 = scmp.eq.s32.totalorder %s15, 0
    %p127 = por %p125, %p126
    %p128 = scmp.ne.s32.totalorder %s114, %s115
    %p129 = scmp.eq.s32.totalorder %s16, 1
    %p130 = por %p128, %p129
    %p132 = scmp.ne.s32.totalorder %s115, %s131
    %p133 = scmp.eq.s32.totalorder %s16, 0
    %p134 = por %p132, %p133
    %p135 = scmp.le.s32.totalorder 1, %s10
    %p136 = scmp.lt.s32.totalorder %s10, 3
    %p137 = pnand %p135, %p136
    %p138 = pneg %p137
    // Predicated region
    $region9: #{up_forward.8} parent=5 // pred_check
      _
    $region10: #{up_forward.8} parent=5 // pred_check_branch
      %140 = sbr.rel (%p137) target = $region12
    $region11: #{up_forward.8} parent=5 // pred_region
      %s141 = ssub.s32 %s10, 1
      // Predicated region
      $region13: #{up_forward.8} parent=11 // pred_check
        %p142 = pneg %p71
      $region14: #{up_forward.8} parent=11 // pred_check_branch
        %144 = sbr.rel (%p142) target = $region16
      $region15: #{up_forward.8} parent=11 // pred_region
        _
      $region16: #{up_forward.8} parent=11 // pred_fallthru
        _
    $region12: #{up_forward.8} parent=5 // pred_fallthru
      _
    %p145 = scmp.lt.s32.totalorder %s10, 2
    // Predicated region
    $region17: #{up_forward.8} parent=5 // pred_check
      %p146 = pneg %p145
    $region18: #{up_forward.8} parent=5 // pred_check_branch
      %148 = sbr.rel (%p146) target = $region20
    $region19: #{up_forward.8} parent=5 // pred_region
      // Predicated region
      $region21: #{up_forward.8} parent=19 // pred_check
        %p149 = pneg %p44
      $region22: #{up_forward.8} parent=19 // pred_check_branch
        %151 = sbr.rel (%p149) target = $region24
      $region23: #{up_forward.8} parent=19 // pred_region
        %s152 = smul.u32 16, %s18
        %p153 = scmp.lt.s32.totalorder %s17, 1
        %s154 = scalar_select %p153, %s17, 1
        %p155 = scmp.lt.s32.totalorder %s152, 15
        %s156 = scalar_select %p155, %s152, 15
        %s157 = smul.addr %s156, 9
        %s158 = smul.addr %s154, 144
        %s159 = sadd.s32 %s157, %s158
        %s160 = smul.addr %s159, 4
        %s161 = scalar_lea.vmem %s0, %s160
        %s162 = smul.u32 16, %s18
      $region24: #{up_forward.8} parent=19 // pred_fallthru
        _
    $region20: #{up_forward.8} parent=5 // pred_fallthru
      _
    %p163 = scmp.le.s32.totalorder 1, %s10
    %p164 = scmp.lt.s32.totalorder %s10, 3
    %p165 = pnand %p163, %p164
    %p166 = pneg %p165
    // Predicated region
    $region25: #{up_forward.8} parent=5 // pred_check
      _
    $region26: #{up_forward.8} parent=5 // pred_check_branch
      %168 = sbr.rel (%p165) target = $region28
    $region27: #{up_forward.8} parent=5 // pred_region
      %s169 = ssub.s32 %s10, 1
      %s170 = smul.u32 16, %s20
      %p171 = scmp.lt.s32.totalorder %s19, 1
      %s172 = scalar_select %p171, %s19, 1
      %p173 = scmp.lt.s32.totalorder %s170, 15
      %s174 = scalar_select %p173, %s170, 15
      %s175 = smul.addr %s174, 9
      %s176 = smul.addr %s172, 144
      %s177 = sadd.s32 %s175, %s176
      %s178 = smul.addr %s177, 4
      %s179 = scalar_lea.vmem %s0, %s178
      %p180 = pneg %p50
      %p181 = pneg %p47
      %p182 = pneg %p71
      %p183 = pneg %p68
      %p184 = pneg %p99
      %p185 = pneg %p96
      %s186 = smul.u32 16, %s20
      %p187 = scmp.lt.s32.totalorder %s19, 1
      %s188 = scalar_select %p187, %s19, 1
      %p189 = scmp.lt.s32.totalorder %s186, 15
      %s190 = scalar_select %p189, %s186, 15
      %s191 = smul.addr %s190, 2
      %s192 = smul.addr %s188, 32
      %s193 = sadd.s32 %s191, %s192
      %s194 = smul.addr %s193, 4
      %s195 = scalar_lea.vmem %s2, %s194
      %p196 = pneg %p127
      %p197 = pneg %p124
      %p198 = scmp.lt.s32.totalorder %s19, 1
      %s199 = scalar_select %p198, %s19, 1
      %p200 = scmp.lt.s32.totalorder %s20, 0
      %s201 = scalar_select %p200, %s20, 0
      %s202 = sadd.s32 %s201, %s199
      %s203 = smul.addr %s202, 2
      %s204 = scalar_lea.vmem %s3, %s203
      %s205 = smul.u32 16, %s20
      %p206 = scmp.lt.s32.totalorder %s19, 1
      %s207 = scalar_select %p206, %s19, 1
      %p208 = scmp.lt.s32.totalorder %s205, 15
      %s209 = scalar_select %p208, %s205, 15
      %s210 = smul.addr %s209, 9
      %s211 = smul.addr %s207, 144
      %s212 = sadd.s32 %s210, %s211
      %s213 = smul.addr %s212, 4
      %s214 = scalar_lea.vmem %s0, %s213
      %s215 = smul.u32 16, %s20
      %s216 = smul.u32 16, %s20
      %p217 = scmp.lt.s32.totalorder %s19, 1
      %s218 = scalar_select %p217, %s19, 1
      %p219 = scmp.lt.s32.totalorder %s216, 15
      %s220 = scalar_select %p219, %s216, 15
      %s221 = smul.addr %s220, 2
      %s222 = smul.addr %s218, 32
      %s223 = sadd.s32 %s221, %s222
      %s224 = smul.addr %s223, 4
      %s225 = scalar_lea.vmem %s2, %s224
      %s226 = smul.u32 16, %s20
      %p227 = scmp.lt.s32.totalorder %s19, 1
      %s228 = scalar_select %p227, %s19, 1
      %p229 = scmp.lt.s32.totalorder %s20, 0
      %s230 = scalar_select %p229, %s20, 0
      %s231 = sadd.s32 %s230, %s228
      %s232 = smul.addr %s231, 2
      %s233 = scalar_lea.vmem %s3, %s232
      %v235 = vld [vmem:[%s214] sm:$0xff]
      %v236 = vld [vmem:[%s214 + $0x8] sm:$0xf]
      %v237 = vld [vmem:[%s214 + $0xc] sm:$0xff]
      %v238 = vld [vmem:[%s214 + $0x14] sm:$0xf]
      %v239 = vld [vmem:[%s214 + $0x24] sm:$0xff]
      %v240 = vld [vmem:[%s214 + $0x2c] sm:$0xf]
      %v241 = vld [vmem:[%s214 + $0x30] sm:$0xff]
      %v242 = vld [vmem:[%s214 + $0x38] sm:$0xf]
      %v243 = vld [vmem:[%s214 + $0x48] sm:$0xff]
      %v244 = vld [vmem:[%s214 + $0x50] sm:$0xf]
      %v245 = vld [vmem:[%s214 + $0x54] sm:$0xff]
      %v246 = vld [vmem:[%s214 + $0x5c] sm:$0xf]
      %v247 = vld [vmem:[%s214 + $0x6c] sm:$0xff]
      %v248 = vld [vmem:[%s214 + $0x74] sm:$0xf]
      %v249 = vld [vmem:[%s214 + $0x78] sm:$0xff]
      %v250 = vld [vmem:[%s214 + $0x80] sm:$0xf]
      %v251 = vld [vmem:[%s214 + $0x90] sm:$0xff]
      %v252 = vld [vmem:[%s214 + $0x98] sm:$0xf]
      %v253 = vld [vmem:[%s214 + $0x9c] sm:$0xff]
      %v254 = vld [vmem:[%s214 + $0xa4] sm:$0xf]
      %v255 = vld [vmem:[%s214 + $0xb4] sm:$0xff]
      %v256 = vld [vmem:[%s214 + $0xbc] sm:$0xf]
      %v257 = vld [vmem:[%s214 + $0xc0] sm:$0xff]
      %v258 = vld [vmem:[%s214 + $0xc8] sm:$0xf]
      %v259 = vld [vmem:[%s214 + $0xd8] sm:$0xff]
      %v260 = vld [vmem:[%s214 + $0xe0] sm:$0xf]
      %v261 = vld [vmem:[%s214 + $0xe4] sm:$0xff]
      %v262 = vld [vmem:[%s214 + $0xec] sm:$0xf]
      %v263 = vld [vmem:[%s214 + $0xfc] sm:$0xff]
      %v264 = vld [vmem:[%s214 + $0x104] sm:$0xf]
      %v265 = vld [vmem:[%s214 + $0x108] sm:$0xff]
      %v266 = vld [vmem:[%s214 + $0x110] sm:$0xf]
      %v267 = vld [vmem:[%s214 + $0x120] sm:$0xff]
      %v268 = vld [vmem:[%s214 + $0x128] sm:$0xf]
      %v269 = vld [vmem:[%s214 + $0x12c] sm:$0xff]
      %v270 = vld [vmem:[%s214 + $0x134] sm:$0xf]
      %v271 = vld [vmem:[%s214 + $0x144] sm:$0xff]
      %v272 = vld [vmem:[%s214 + $0x14c] sm:$0xf]
      %v273 = vld [vmem:[%s214 + $0x150] sm:$0xff]
      %v274 = vld [vmem:[%s214 + $0x158] sm:$0xf]
      %v275 = vld [vmem:[%s214 + $0x168] sm:$0xff]
      %v276 = vld [vmem:[%s214 + $0x170] sm:$0xf]
      %v277 = vld [vmem:[%s214 + $0x174] sm:$0xff]
      %v278 = vld [vmem:[%s214 + $0x17c] sm:$0xf]
      %v279 = vld [vmem:[%s214 + $0x18c] sm:$0xff]
      %v280 = vld [vmem:[%s214 + $0x194] sm:$0xf]
      %v281 = vld [vmem:[%s214 + $0x198] sm:$0xff]
      %v282 = vld [vmem:[%s214 + $0x1a0] sm:$0xf]
      %v283 = vld [vmem:[%s214 + $0x1b0] sm:$0xff]
      %v284 = vld [vmem:[%s214 + $0x1b8] sm:$0xf]
      %v285 = vld [vmem:[%s214 + $0x1bc] sm:$0xff]
      %v286 = vld [vmem:[%s214 + $0x1c4] sm:$0xf]
      %v287 = vld [vmem:[%s214 + $0x1d4] sm:$0xff]
      %v288 = vld [vmem:[%s214 + $0x1dc] sm:$0xf]
      %v289 = vld [vmem:[%s214 + $0x1e0] sm:$0xff]
      %v290 = vld [vmem:[%s214 + $0x1e8] sm:$0xf]
      %v291 = vld [vmem:[%s214 + $0x1f8] sm:$0xff]
      %v292 = vld [vmem:[%s214 + $0x200] sm:$0xf]
      %v293 = vld [vmem:[%s214 + $0x204] sm:$0xff]
      %v294 = vld [vmem:[%s214 + $0x20c] sm:$0xf]
      %v295 = vld [vmem:[%s214 + $0x21c] sm:$0xff]
      %v296 = vld [vmem:[%s214 + $0x224] sm:$0xf]
      %v297 = vld [vmem:[%s214 + $0x228] sm:$0xff]
      %v298 = vld [vmem:[%s214 + $0x230] sm:$0xf]
      %v299 = vld [vmem:[%s1] sm:$0xf]
      %v300 = vld [vmem:[%s1 + $0x4] sm:$0xf]
      %v301 = vld [vmem:[%s1 + $0x8] sm:$0xf]
      %v302 = vld [vmem:[%s1 + $0xc] sm:$0xf]
      %v303 = vld [vmem:[%s1 + $0x10] sm:$0xf]
      %v304 = vld [vmem:[%s1 + $0x14] sm:$0xf]
      %v305 = vld [vmem:[%s1 + $0x18] sm:$0xf]
      %v306 = vld [vmem:[%s1 + $0x1c] sm:$0xf]
      %v307 = vld [vmem:[%s1 + $0x20] sm:$0xf]
      %v308 = vld [vmem:[%s1 + $0x24] sm:$0xf]
      %v309 = vld [vmem:[%s1 + $0x28] sm:$0xf]
      %v310 = vld [vmem:[%s1 + $0x2c] sm:$0xf]
      %v311 = vld [vmem:[%s1 + $0x30] sm:$0xf]
      %v312 = vld [vmem:[%s1 + $0x34] sm:$0xf]
      %v313 = vld [vmem:[%s1 + $0x38] sm:$0xf]
      %v314 = vld [vmem:[%s1 + $0x3c] sm:$0xf]
      %v315 = vld [vmem:[%s1 + $0x40] sm:$0xf]
      %v316 = vld [vmem:[%s1 + $0x44] sm:$0xf]
      %v317 = vld [vmem:[%s1 + $0x48] sm:$0xf]
      %v318 = vld [vmem:[%s1 + $0x4c] sm:$0xf]
      %v319 = vld [vmem:[%s1 + $0x50] sm:$0xf]
      %v320 = vld [vmem:[%s1 + $0x54] sm:$0xf]
      %v321 = vld [vmem:[%s1 + $0x58] sm:$0xf]
      %v322 = vld [vmem:[%s1 + $0x5c] sm:$0xf]
      %v323 = vld [vmem:[%s1 + $0x60] sm:$0xf]
      %v324 = vld [vmem:[%s1 + $0x64] sm:$0xf]
      %v325 = vld [vmem:[%s1 + $0x68] sm:$0xf]
      %v326 = vld [vmem:[%s1 + $0x6c] sm:$0xf]
      %v327 = vld [vmem:[%s1 + $0x70] sm:$0xf]
      %v328 = vld [vmem:[%s1 + $0x74] sm:$0xf]
      %v329 = vld [vmem:[%s1 + $0x78] sm:$0xf]
      %v330 = vld [vmem:[%s1 + $0x7c] sm:$0xf]
      %v331 = vld [vmem:[%s1 + $0x80] sm:$0xf]
      %v332 = vld [vmem:[%s1 + $0x84] sm:$0xf]
      %v333 = vld [vmem:[%s1 + $0x88] sm:$0xf]
      %v334 = vld [vmem:[%s1 + $0x8c] sm:$0xf]
      %v335 = vld [vmem:[%s1 + $0x90] sm:$0xf]
      %v336 = vld [vmem:[%s1 + $0x94] sm:$0xf]
      %v337 = vld [vmem:[%s1 + $0x98] sm:$0xf]
      %v338 = vld [vmem:[%s1 + $0x9c] sm:$0xf]
      %v339 = vld [vmem:[%s1 + $0xa0] sm:$0xf]
      %v340 = vld [vmem:[%s1 + $0xa4] sm:$0xf]
      %v341 = vld [vmem:[%s1 + $0xa8] sm:$0xf]
      %v342 = vld [vmem:[%s1 + $0xac] sm:$0xf]
      %v343 = vld [vmem:[%s1 + $0xb0] sm:$0xf]
      %v344 = vld [vmem:[%s1 + $0xb4] sm:$0xf]
      %v345 = vld [vmem:[%s1 + $0xb8] sm:$0xf]
      %v346 = vld [vmem:[%s1 + $0xbc] sm:$0xf]
      %v347 = vld [vmem:[%s214 + $0x18] sm:$0x11]
      %v348 = vld [vmem:[%s214 + $0x20] sm:$0x1]
      %v349 = vld [vmem:[%s214 + $0x3c] sm:$0x11]
      %v350 = vld [vmem:[%s214 + $0x44] sm:$0x1]
      %v351 = vld [vmem:[%s214 + $0x60] sm:$0x11]
      %v352 = vld [vmem:[%s214 + $0x68] sm:$0x1]
      %v353 = vld [vmem:[%s214 + $0x84] sm:$0x11]
      %v354 = vld [vmem:[%s214 + $0x8c] sm:$0x1]
      %v355 = vld [vmem:[%s214 + $0xa8] sm:$0x11]
      %v356 = vld [vmem:[%s214 + $0xb0] sm:$0x1]
      %v357 = vld [vmem:[%s214 + $0xcc] sm:$0x11]
      %v358 = vld [vmem:[%s214 + $0xd4] sm:$0x1]
      %v359 = vld [vmem:[%s214 + $0xf0] sm:$0x11]
      %v360 = vld [vmem:[%s214 + $0xf8] sm:$0x1]
      %v361 = vld [vmem:[%s214 + $0x114] sm:$0x11]
      %v362 = vld [vmem:[%s214 + $0x11c] sm:$0x1]
      %v363 = vld [vmem:[%s214 + $0x138] sm:$0x11]
      %v364 = vld [vmem:[%s214 + $0x140] sm:$0x1]
      %v365 = vld [vmem:[%s214 + $0x15c] sm:$0x11]
      %v366 = vld [vmem:[%s214 + $0x164] sm:$0x1]
      %v367 = vld [vmem:[%s214 + $0x180] sm:$0x11]
      %v368 = vld [vmem:[%s214 + $0x188] sm:$0x1]
      %v369 = vld [vmem:[%s214 + $0x1a4] sm:$0x11]
      %v370 = vld [vmem:[%s214 + $0x1ac] sm:$0x1]
      %v371 = vld [vmem:[%s214 + $0x1c8] sm:$0x11]
      %v372 = vld [vmem:[%s214 + $0x1d0] sm:$0x1]
      %v373 = vld [vmem:[%s214 + $0x1ec] sm:$0x11]
      %v374 = vld [vmem:[%s214 + $0x1f4] sm:$0x1]
      %v375 = vld [vmem:[%s214 + $0x210] sm:$0x11]
      %v376 = vld [vmem:[%s214 + $0x218] sm:$0x1]
      %v377 = vld [vmem:[%s214 + $0x234] sm:$0x11]
      %v378 = vld [vmem:[%s214 + $0x23c] sm:$0x1]
      %vm379 = vsmask.f32 3328
      %vm380 = vsmask.f32 7440
      %vm381 = vmor %vm379, %vm380
      %v383 = vshrl.u32 %v235, 16
      %v385 = vrot.slane %v383, 4
      %v386 = vshll.u32 %v235, 16
      %v388 = vrot.slane %v386, 5
      %v389 = vor.u32 %v385, %v388
      %v390 = vrot.slane %v389, 4
      %v392 = vshll.u32 %v237, 16
      %v394 = vrot.slane %v392, 5
      %v395 = vsel %vm381, %v390, %v394
      %v397 = vshrl.u32 %v236, 16
      %v399 = vrot.slane %v397, 4
      %v400 = vshll.u32 %v236, 16
      %v402 = vrot.slane %v400, 5
      %v403 = vor.u32 %v399, %v402
      %v404 = vrot.slane %v403, 4
      %v406 = vshll.u32 %v238, 16
      %v408 = vrot.slane %v406, 5
      %v409 = vsel %vm381, %v404, %v408
      %v410 = vshrl.u32 %v237, 16
      %v412 = vrot.slane %v410, 4
      %v413 = vor.u32 %v412, %v394
      %v414 = vrot.slane %v413, 4
      %v416 = vshll.u32 %v347, 16
      %v418 = vrot.slane %v416, 5
      %v419 = vsel %vm381, %v414, %v418
      %v420 = vshrl.u32 %v238, 16
      %v422 = vrot.slane %v420, 4
      %v423 = vor.u32 %v422, %v408
      %v424 = vrot.slane %v423, 4
      %v426 = vshll.u32 %v348, 16
      %v428 = vrot.slane %v426, 5
      %v429 = vsel %vm381, %v424, %v428
      %v431 = vshrl.u32 %v239, 16
      %v433 = vrot.slane %v431, 4
      %v434 = vshll.u32 %v239, 16
      %v436 = vrot.slane %v434, 5
      %v437 = vor.u32 %v433, %v436
      %v438 = vrot.slane %v437, 4
      %v440 = vshll.u32 %v241, 16
      %v442 = vrot.slane %v440, 5
      %v443 = vsel %vm381, %v438, %v442
      %v445 = vshrl.u32 %v240, 16
      %v447 = vrot.slane %v445, 4
      %v448 = vshll.u32 %v240, 16
      %v450 = vrot.slane %v448, 5
      %v451 = vor.u32 %v447, %v450
      %v452 = vrot.slane %v451, 4
      %v454 = vshll.u32 %v242, 16
      %v456 = vrot.slane %v454, 5
      %v457 = vsel %vm381, %v452, %v456
      %v458 = vshrl.u32 %v241, 16
      %v460 = vrot.slane %v458, 4
      %v461 = vor.u32 %v460, %v442
      %v462 = vrot.slane %v461, 4
      %v464 = vshll.u32 %v349, 16
      %v466 = vrot.slane %v464, 5
      %v467 = vsel %vm381, %v462, %v466
      %v468 = vshrl.u32 %v242, 16
      %v470 = vrot.slane %v468, 4
      %v471 = vor.u32 %v470, %v456
      %v472 = vrot.slane %v471, 4
      %v474 = vshll.u32 %v350, 16
      %v476 = vrot.slane %v474, 5
      %v477 = vsel %vm381, %v472, %v476
      %v479 = vshrl.u32 %v243, 16
      %v481 = vrot.slane %v479, 4
      %v482 = vshll.u32 %v243, 16
      %v484 = vrot.slane %v482, 5
      %v485 = vor.u32 %v481, %v484
      %v486 = vrot.slane %v485, 4
      %v488 = vshll.u32 %v245, 16
      %v490 = vrot.slane %v488, 5
      %v491 = vsel %vm381, %v486, %v490
      %v493 = vshrl.u32 %v244, 16
      %v495 = vrot.slane %v493, 4
      %v496 = vshll.u32 %v244, 16
      %v498 = vrot.slane %v496, 5
      %v499 = vor.u32 %v495, %v498
      %v500 = vrot.slane %v499, 4
      %v502 = vshll.u32 %v246, 16
      %v504 = vrot.slane %v502, 5
      %v505 = vsel %vm381, %v500, %v504
      %v506 = vshrl.u32 %v245, 16
      %v508 = vrot.slane %v506, 4
      %v509 = vor.u32 %v508, %v490
      %v510 = vrot.slane %v509, 4
      %v512 = vshll.u32 %v351, 16
      %v514 = vrot.slane %v512, 5
      %v515 = vsel %vm381, %v510, %v514
      %v516 = vshrl.u32 %v246, 16
      %v518 = vrot.slane %v516, 4
      %v519 = vor.u32 %v518, %v504
      %v520 = vrot.slane %v519, 4
      %v522 = vshll.u32 %v352, 16
      %v524 = vrot.slane %v522, 5
      %v525 = vsel %vm381, %v520, %v524
      %v527 = vshrl.u32 %v247, 16
      %v529 = vrot.slane %v527, 4
      %v530 = vshll.u32 %v247, 16
      %v532 = vrot.slane %v530, 5
      %v533 = vor.u32 %v529, %v532
      %v534 = vrot.slane %v533, 4
      %v536 = vshll.u32 %v249, 16
      %v538 = vrot.slane %v536, 5
      %v539 = vsel %vm381, %v534, %v538
      %v541 = vshrl.u32 %v248, 16
      %v543 = vrot.slane %v541, 4
      %v544 = vshll.u32 %v248, 16
      %v546 = vrot.slane %v544, 5
      %v547 = vor.u32 %v543, %v546
      %v548 = vrot.slane %v547, 4
      %v550 = vshll.u32 %v250, 16
      %v552 = vrot.slane %v550, 5
      %v553 = vsel %vm381, %v548, %v552
      %v554 = vshrl.u32 %v249, 16
      %v556 = vrot.slane %v554, 4
      %v557 = vor.u32 %v556, %v538
      %v558 = vrot.slane %v557, 4
      %v560 = vshll.u32 %v353, 16
      %v562 = vrot.slane %v560, 5
      %v563 = vsel %vm381, %v558, %v562
      %v564 = vshrl.u32 %v250, 16
      %v566 = vrot.slane %v564, 4
      %v567 = vor.u32 %v566, %v552
      %v568 = vrot.slane %v567, 4
      %v570 = vshll.u32 %v354, 16
      %v572 = vrot.slane %v570, 5
      %v573 = vsel %vm381, %v568, %v572
      %v575 = vshrl.u32 %v251, 16
      %v577 = vrot.slane %v575, 4
      %v578 = vshll.u32 %v251, 16
      %v580 = vrot.slane %v578, 5
      %v581 = vor.u32 %v577, %v580
      %v582 = vrot.slane %v581, 4
      %v584 = vshll.u32 %v253, 16
      %v586 = vrot.slane %v584, 5
      %v587 = vsel %vm381, %v582, %v586
      %v589 = vshrl.u32 %v252, 16
      %v591 = vrot.slane %v589, 4
      %v592 = vshll.u32 %v252, 16
      %v594 = vrot.slane %v592, 5
      %v595 = vor.u32 %v591, %v594
      %v596 = vrot.slane %v595, 4
      %v598 = vshll.u32 %v254, 16
      %v600 = vrot.slane %v598, 5
      %v601 = vsel %vm381, %v596, %v600
      %v602 = vshrl.u32 %v253, 16
      %v604 = vrot.slane %v602, 4
      %v605 = vor.u32 %v604, %v586
      %v606 = vrot.slane %v605, 4
      %v608 = vshll.u32 %v355, 16
      %v610 = vrot.slane %v608, 5
      %v611 = vsel %vm381, %v606, %v610
      %v612 = vshrl.u32 %v254, 16
      %v614 = vrot.slane %v612, 4
      %v615 = vor.u32 %v614, %v600
      %v616 = vrot.slane %v615, 4
      %v618 = vshll.u32 %v356, 16
      %v620 = vrot.slane %v618, 5
      %v621 = vsel %vm381, %v616, %v620
      %v623 = vshrl.u32 %v255, 16
      %v625 = vrot.slane %v623, 4
      %v626 = vshll.u32 %v255, 16
      %v628 = vrot.slane %v626, 5
      %v629 = vor.u32 %v625, %v628
      %v630 = vrot.slane %v629, 4
      %v632 = vshll.u32 %v257, 16
      %v634 = vrot.slane %v632, 5
      %v635 = vsel %vm381, %v630, %v634
      %v637 = vshrl.u32 %v256, 16
      %v639 = vrot.slane %v637, 4
      %v640 = vshll.u32 %v256, 16
      %v642 = vrot.slane %v640, 5
      %v643 = vor.u32 %v639, %v642
      %v644 = vrot.slane %v643, 4
      %v646 = vshll.u32 %v258, 16
      %v648 = vrot.slane %v646, 5
      %v649 = vsel %vm381, %v644, %v648
      %v650 = vshrl.u32 %v257, 16
      %v652 = vrot.slane %v650, 4
      %v653 = vor.u32 %v652, %v634
      %v654 = vrot.slane %v653, 4
      %v656 = vshll.u32 %v357, 16
      %v658 = vrot.slane %v656, 5
      %v659 = vsel %vm381, %v654, %v658
      %v660 = vshrl.u32 %v258, 16
      %v662 = vrot.slane %v660, 4
      %v663 = vor.u32 %v662, %v648
      %v664 = vrot.slane %v663, 4
      %v666 = vshll.u32 %v358, 16
      %v668 = vrot.slane %v666, 5
      %v669 = vsel %vm381, %v664, %v668
      %v671 = vshrl.u32 %v259, 16
      %v673 = vrot.slane %v671, 4
      %v674 = vshll.u32 %v259, 16
      %v676 = vrot.slane %v674, 5
      %v677 = vor.u32 %v673, %v676
      %v678 = vrot.slane %v677, 4
      %v680 = vshll.u32 %v261, 16
      %v682 = vrot.slane %v680, 5
      %v683 = vsel %vm381, %v678, %v682
      %v685 = vshrl.u32 %v260, 16
      %v687 = vrot.slane %v685, 4
      %v688 = vshll.u32 %v260, 16
      %v690 = vrot.slane %v688, 5
      %v691 = vor.u32 %v687, %v690
      %v692 = vrot.slane %v691, 4
      %v694 = vshll.u32 %v262, 16
      %v696 = vrot.slane %v694, 5
      %v697 = vsel %vm381, %v692, %v696
      %v698 = vshrl.u32 %v261, 16
      %v700 = vrot.slane %v698, 4
      %v701 = vor.u32 %v700, %v682
      %v702 = vrot.slane %v701, 4
      %v704 = vshll.u32 %v359, 16
      %v706 = vrot.slane %v704, 5
      %v707 = vsel %vm381, %v702, %v706
      %v708 = vshrl.u32 %v262, 16
      %v710 = vrot.slane %v708, 4
      %v711 = vor.u32 %v710, %v696
      %v712 = vrot.slane %v711, 4
      %v714 = vshll.u32 %v360, 16
      %v716 = vrot.slane %v714, 5
      %v717 = vsel %vm381, %v712, %v716
      %v719 = vshrl.u32 %v263, 16
      %v721 = vrot.slane %v719, 4
      %v722 = vshll.u32 %v263, 16
      %v724 = vrot.slane %v722, 5
      %v725 = vor.u32 %v721, %v724
      %v726 = vrot.slane %v725, 4
      %v728 = vshll.u32 %v265, 16
      %v730 = vrot.slane %v728, 5
      %v731 = vsel %vm381, %v726, %v730
      %v733 = vshrl.u32 %v264, 16
      %v735 = vrot.slane %v733, 4
      %v736 = vshll.u32 %v264, 16
      %v738 = vrot.slane %v736, 5
      %v739 = vor.u32 %v735, %v738
      %v740 = vrot.slane %v739, 4
      %v742 = vshll.u32 %v266, 16
      %v744 = vrot.slane %v742, 5
      %v745 = vsel %vm381, %v740, %v744
      %v746 = vshrl.u32 %v265, 16
      %v748 = vrot.slane %v746, 4
      %v749 = vor.u32 %v748, %v730
      %v750 = vrot.slane %v749, 4
      %v752 = vshll.u32 %v361, 16
      %v754 = vrot.slane %v752, 5
      %v755 = vsel %vm381, %v750, %v754
      %v756 = vshrl.u32 %v266, 16
      %v758 = vrot.slane %v756, 4
      %v759 = vor.u32 %v758, %v744
      %v760 = vrot.slane %v759, 4
      %v762 = vshll.u32 %v362, 16
      %v764 = vrot.slane %v762, 5
      %v765 = vsel %vm381, %v760, %v764
      %v767 = vshrl.u32 %v267, 16
      %v769 = vrot.slane %v767, 4
      %v770 = vshll.u32 %v267, 16
      %v772 = vrot.slane %v770, 5
      %v773 = vor.u32 %v769, %v772
      %v774 = vrot.slane %v773, 4
      %v776 = vshll.u32 %v269, 16
      %v778 = vrot.slane %v776, 5
      %v779 = vsel %vm381, %v774, %v778
      %v781 = vshrl.u32 %v268, 16
      %v783 = vrot.slane %v781, 4
      %v784 = vshll.u32 %v268, 16
      %v786 = vrot.slane %v784, 5
      %v787 = vor.u32 %v783, %v786
      %v788 = vrot.slane %v787, 4
      %v790 = vshll.u32 %v270, 16
      %v792 = vrot.slane %v790, 5
      %v793 = vsel %vm381, %v788, %v792
      %v794 = vshrl.u32 %v269, 16
      %v796 = vrot.slane %v794, 4
      %v797 = vor.u32 %v796, %v778
      %v798 = vrot.slane %v797, 4
      %v800 = vshll.u32 %v363, 16
      %v802 = vrot.slane %v800, 5
      %v803 = vsel %vm381, %v798, %v802
      %v804 = vshrl.u32 %v270, 16
      %v806 = vrot.slane %v804, 4
      %v807 = vor.u32 %v806, %v792
      %v808 = vrot.slane %v807, 4
      %v810 = vshll.u32 %v364, 16
      %v812 = vrot.slane %v810, 5
      %v813 = vsel %vm381, %v808, %v812
      %v815 = vshrl.u32 %v271, 16
      %v817 = vrot.slane %v815, 4
      %v818 = vshll.u32 %v271, 16
      %v820 = vrot.slane %v818, 5
      %v821 = vor.u32 %v817, %v820
      %v822 = vrot.slane %v821, 4
      %v824 = vshll.u32 %v273, 16
      %v826 = vrot.slane %v824, 5
      %v827 = vsel %vm381, %v822, %v826
      %v829 = vshrl.u32 %v272, 16
      %v831 = vrot.slane %v829, 4
      %v832 = vshll.u32 %v272, 16
      %v834 = vrot.slane %v832, 5
      %v835 = vor.u32 %v831, %v834
      %v836 = vrot.slane %v835, 4
      %v838 = vshll.u32 %v274, 16
      %v840 = vrot.slane %v838, 5
      %v841 = vsel %vm381, %v836, %v840
      %v842 = vshrl.u32 %v273, 16
      %v844 = vrot.slane %v842, 4
      %v845 = vor.u32 %v844, %v826
      %v846 = vrot.slane %v845, 4
      %v848 = vshll.u32 %v365, 16
      %v850 = vrot.slane %v848, 5
      %v851 = vsel %vm381, %v846, %v850
      %v852 = vshrl.u32 %v274, 16
      %v854 = vrot.slane %v852, 4
      %v855 = vor.u32 %v854, %v840
      %v856 = vrot.slane %v855, 4
      %v858 = vshll.u32 %v366, 16
      %v860 = vrot.slane %v858, 5
      %v861 = vsel %vm381, %v856, %v860
      %v863 = vshrl.u32 %v275, 16
      %v865 = vrot.slane %v863, 4
      %v866 = vshll.u32 %v275, 16
      %v868 = vrot.slane %v866, 5
      %v869 = vor.u32 %v865, %v868
      %v870 = vrot.slane %v869, 4
      %v872 = vshll.u32 %v277, 16
      %v874 = vrot.slane %v872, 5
      %v875 = vsel %vm381, %v870, %v874
      %v877 = vshrl.u32 %v276, 16
      %v879 = vrot.slane %v877, 4
      %v880 = vshll.u32 %v276, 16
      %v882 = vrot.slane %v880, 5
      %v883 = vor.u32 %v879, %v882
      %v884 = vrot.slane %v883, 4
      %v886 = vshll.u32 %v278, 16
      %v888 = vrot.slane %v886, 5
      %v889 = vsel %vm381, %v884, %v888
      %v890 = vshrl.u32 %v277, 16
      %v892 = vrot.slane %v890, 4
      %v893 = vor.u32 %v892, %v874
      %v894 = vrot.slane %v893, 4
      %v896 = vshll.u32 %v367, 16
      %v898 = vrot.slane %v896, 5
      %v899 = vsel %vm381, %v894, %v898
      %v900 = vshrl.u32 %v278, 16
      %v902 = vrot.slane %v900, 4
      %v903 = vor.u32 %v902, %v888
      %v904 = vrot.slane %v903, 4
      %v906 = vshll.u32 %v368, 16
      %v908 = vrot.slane %v906, 5
      %v909 = vsel %vm381, %v904, %v908
      %v911 = vshrl.u32 %v279, 16
      %v913 = vrot.slane %v911, 4
      %v914 = vshll.u32 %v279, 16
      %v916 = vrot.slane %v914, 5
      %v917 = vor.u32 %v913, %v916
      %v918 = vrot.slane %v917, 4
      %v920 = vshll.u32 %v281, 16
      %v922 = vrot.slane %v920, 5
      %v923 = vsel %vm381, %v918, %v922
      %v925 = vshrl.u32 %v280, 16
      %v927 = vrot.slane %v925, 4
      %v928 = vshll.u32 %v280, 16
      %v930 = vrot.slane %v928, 5
      %v931 = vor.u32 %v927, %v930
      %v932 = vrot.slane %v931, 4
      %v934 = vshll.u32 %v282, 16
      %v936 = vrot.slane %v934, 5
      %v937 = vsel %vm381, %v932, %v936
      %v938 = vshrl.u32 %v281, 16
      %v940 = vrot.slane %v938, 4
      %v941 = vor.u32 %v940, %v922
      %v942 = vrot.slane %v941, 4
      %v944 = vshll.u32 %v369, 16
      %v946 = vrot.slane %v944, 5
      %v947 = vsel %vm381, %v942, %v946
      %v948 = vshrl.u32 %v282, 16
      %v950 = vrot.slane %v948, 4
      %v951 = vor.u32 %v950, %v936
      %v952 = vrot.slane %v951, 4
      %v954 = vshll.u32 %v370, 16
      %v956 = vrot.slane %v954, 5
      %v957 = vsel %vm381, %v952, %v956
      %v959 = vshrl.u32 %v283, 16
      %v961 = vrot.slane %v959, 4
      %v962 = vshll.u32 %v283, 16
      %v964 = vrot.slane %v962, 5
      %v965 = vor.u32 %v961, %v964
      %v966 = vrot.slane %v965, 4
      %v968 = vshll.u32 %v285, 16
      %v970 = vrot.slane %v968, 5
      %v971 = vsel %vm381, %v966, %v970
      %v973 = vshrl.u32 %v284, 16
      %v975 = vrot.slane %v973, 4
      %v976 = vshll.u32 %v284, 16
      %v978 = vrot.slane %v976, 5
      %v979 = vor.u32 %v975, %v978
      %v980 = vrot.slane %v979, 4
      %v982 = vshll.u32 %v286, 16
      %v984 = vrot.slane %v982, 5
      %v985 = vsel %vm381, %v980, %v984
      %v986 = vshrl.u32 %v285, 16
      %v988 = vrot.slane %v986, 4
      %v989 = vor.u32 %v988, %v970
      %v990 = vrot.slane %v989, 4
      %v992 = vshll.u32 %v371, 16
      %v994 = vrot.slane %v992, 5
      %v995 = vsel %vm381, %v990, %v994
      %v996 = vshrl.u32 %v286, 16
      %v998 = vrot.slane %v996, 4
      %v999 = vor.u32 %v998, %v984
      %v1000 = vrot.slane %v999, 4
      %v1002 = vshll.u32 %v372, 16
      %v1004 = vrot.slane %v1002, 5
      %v1005 = vsel %vm381, %v1000, %v1004
      %v1007 = vshrl.u32 %v287, 16
      %v1009 = vrot.slane %v1007, 4
      %v1010 = vshll.u32 %v287, 16
      %v1012 = vrot.slane %v1010, 5
      %v1013 = vor.u32 %v1009, %v1012
      %v1014 = vrot.slane %v1013, 4
      %v1016 = vshll.u32 %v289, 16
      %v1018 = vrot.slane %v1016, 5
      %v1019 = vsel %vm381, %v1014, %v1018
      %v1021 = vshrl.u32 %v288, 16
      %v1023 = vrot.slane %v1021, 4
      %v1024 = vshll.u32 %v288, 16
      %v1026 = vrot.slane %v1024, 5
      %v1027 = vor.u32 %v1023, %v1026
      %v1028 = vrot.slane %v1027, 4
      %v1030 = vshll.u32 %v290, 16
      %v1032 = vrot.slane %v1030, 5
      %v1033 = vsel %vm381, %v1028, %v1032
      %v1034 = vshrl.u32 %v289, 16
      %v1036 = vrot.slane %v1034, 4
      %v1037 = vor.u32 %v1036, %v1018
      %v1038 = vrot.slane %v1037, 4
      %v1040 = vshll.u32 %v373, 16
      %v1042 = vrot.slane %v1040, 5
      %v1043 = vsel %vm381, %v1038, %v1042
      %v1044 = vshrl.u32 %v290, 16
      %v1046 = vrot.slane %v1044, 4
      %v1047 = vor.u32 %v1046, %v1032
      %v1048 = vrot.slane %v1047, 4
      %v1050 = vshll.u32 %v374, 16
      %v1052 = vrot.slane %v1050, 5
      %v1053 = vsel %vm381, %v1048, %v1052
      %v1055 = vshrl.u32 %v291, 16
      %v1057 = vrot.slane %v1055, 4
      %v1058 = vshll.u32 %v291, 16
      %v1060 = vrot.slane %v1058, 5
      %v1061 = vor.u32 %v1057, %v1060
      %v1062 = vrot.slane %v1061, 4
      %v1064 = vshll.u32 %v293, 16
      %v1066 = vrot.slane %v1064, 5
      %v1067 = vsel %vm381, %v1062, %v1066
      %v1069 = vshrl.u32 %v292, 16
      %v1071 = vrot.slane %v1069, 4
      %v1072 = vshll.u32 %v292, 16
      %v1074 = vrot.slane %v1072, 5
      %v1075 = vor.u32 %v1071, %v1074
      %v1076 = vrot.slane %v1075, 4
      %v1078 = vshll.u32 %v294, 16
      %v1080 = vrot.slane %v1078, 5
      %v1081 = vsel %vm381, %v1076, %v1080
      %v1082 = vshrl.u32 %v293, 16
      %v1084 = vrot.slane %v1082, 4
      %v1085 = vor.u32 %v1084, %v1066
      %v1086 = vrot.slane %v1085, 4
      %v1088 = vshll.u32 %v375, 16
      %v1090 = vrot.slane %v1088, 5
      %v1091 = vsel %vm381, %v1086, %v1090
      %v1092 = vshrl.u32 %v294, 16
      %v1094 = vrot.slane %v1092, 4
      %v1095 = vor.u32 %v1094, %v1080
      %v1096 = vrot.slane %v1095, 4
      %v1098 = vshll.u32 %v376, 16
      %v1100 = vrot.slane %v1098, 5
      %v1101 = vsel %vm381, %v1096, %v1100
      %v1103 = vshrl.u32 %v295, 16
      %v1105 = vrot.slane %v1103, 4
      %v1106 = vshll.u32 %v295, 16
      %v1108 = vrot.slane %v1106, 5
      %v1109 = vor.u32 %v1105, %v1108
      %v1110 = vrot.slane %v1109, 4
      %v1112 = vshll.u32 %v297, 16
      %v1114 = vrot.slane %v1112, 5
      %v1115 = vsel %vm381, %v1110, %v1114
      %v1117 = vshrl.u32 %v296, 16
      %v1119 = vrot.slane %v1117, 4
      %v1120 = vshll.u32 %v296, 16
      %v1122 = vrot.slane %v1120, 5
      %v1123 = vor.u32 %v1119, %v1122
      %v1124 = vrot.slane %v1123, 4
      %v1126 = vshll.u32 %v298, 16
      %v1128 = vrot.slane %v1126, 5
      %v1129 = vsel %vm381, %v1124, %v1128
      %v1130 = vshrl.u32 %v297, 16
      %v1132 = vrot.slane %v1130, 4
      %v1133 = vor.u32 %v1132, %v1114
      %v1134 = vrot.slane %v1133, 4
      %v1136 = vshll.u32 %v377, 16
      %v1138 = vrot.slane %v1136, 5
      %v1139 = vsel %vm381, %v1134, %v1138
      %v1140 = vshrl.u32 %v298, 16
      %v1142 = vrot.slane %v1140, 4
      %v1143 = vor.u32 %v1142, %v1128
      %v1144 = vrot.slane %v1143, 4
      %v1146 = vshll.u32 %v378, 16
      %v1148 = vrot.slane %v1146, 5
      %v1149 = vsel %vm381, %v1144, %v1148
      %s1150 = scalar_lea.vmem %s1, 192
      %v1151 = vld [vmem:[%s1150] sm:$0xf]
      %v1152 = vld [vmem:[%s1150 + $0x4] sm:$0xf]
      %v1153 = vld [vmem:[%s1150 + $0x8] sm:$0xf]
      %v1154 = vld [vmem:[%s1150 + $0xc] sm:$0xf]
      %v1155 = vld [vmem:[%s1150 + $0x10] sm:$0xf]
      %v1156 = vld [vmem:[%s1150 + $0x14] sm:$0xf]
      %v1157 = vld [vmem:[%s1150 + $0x18] sm:$0xf]
      %v1158 = vld [vmem:[%s1150 + $0x1c] sm:$0xf]
      %v1159 = vld [vmem:[%s1150 + $0x20] sm:$0xf]
      %v1160 = vld [vmem:[%s1150 + $0x24] sm:$0xf]
      %v1161 = vld [vmem:[%s1150 + $0x28] sm:$0xf]
      %v1162 = vld [vmem:[%s1150 + $0x2c] sm:$0xf]
      %v1163 = vld [vmem:[%s1150 + $0x30] sm:$0xf]
      %v1164 = vld [vmem:[%s1150 + $0x34] sm:$0xf]
      %v1165 = vld [vmem:[%s1150 + $0x38] sm:$0xf]
      %v1166 = vld [vmem:[%s1150 + $0x3c] sm:$0xf]
      %v1167 = vld [vmem:[%s1150 + $0x40] sm:$0xf]
      %v1168 = vld [vmem:[%s1150 + $0x44] sm:$0xf]
      %v1169 = vld [vmem:[%s1150 + $0x48] sm:$0xf]
      %v1170 = vld [vmem:[%s1150 + $0x4c] sm:$0xf]
      %v1171 = vld [vmem:[%s1150 + $0x50] sm:$0xf]
      %v1172 = vld [vmem:[%s1150 + $0x54] sm:$0xf]
      %v1173 = vld [vmem:[%s1150 + $0x58] sm:$0xf]
      %v1174 = vld [vmem:[%s1150 + $0x5c] sm:$0xf]
      %v1175 = vld [vmem:[%s1150 + $0x60] sm:$0xf]
      %v1176 = vld [vmem:[%s1150 + $0x64] sm:$0xf]
      %v1177 = vld [vmem:[%s1150 + $0x68] sm:$0xf]
      %v1178 = vld [vmem:[%s1150 + $0x6c] sm:$0xf]
      %v1179 = vld [vmem:[%s1150 + $0x70] sm:$0xf]
      %v1180 = vld [vmem:[%s1150 + $0x74] sm:$0xf]
      %v1181 = vld [vmem:[%s1150 + $0x78] sm:$0xf]
      %v1182 = vld [vmem:[%s1150 + $0x7c] sm:$0xf]
      %v1183 = vld [vmem:[%s1150 + $0x80] sm:$0xf]
      %v1184 = vld [vmem:[%s1150 + $0x84] sm:$0xf]
      %v1185 = vld [vmem:[%s1150 + $0x88] sm:$0xf]
      %v1186 = vld [vmem:[%s1150 + $0x8c] sm:$0xf]
      %v1187 = vld [vmem:[%s1150 + $0x90] sm:$0xf]
      %v1188 = vld [vmem:[%s1150 + $0x94] sm:$0xf]
      %v1189 = vld [vmem:[%s1150 + $0x98] sm:$0xf]
      %v1190 = vld [vmem:[%s1150 + $0x9c] sm:$0xf]
      %v1191 = vld [vmem:[%s1150 + $0xa0] sm:$0xf]
      %v1192 = vld [vmem:[%s1150 + $0xa4] sm:$0xf]
      %v1193 = vld [vmem:[%s1150 + $0xa8] sm:$0xf]
      %v1194 = vld [vmem:[%s1150 + $0xac] sm:$0xf]
      %v1195 = vld [vmem:[%s1150 + $0xb0] sm:$0xf]
      %v1196 = vld [vmem:[%s1150 + $0xb4] sm:$0xf]
      %v1197 = vld [vmem:[%s1150 + $0xb8] sm:$0xf]
      %v1198 = vld [vmem:[%s1150 + $0xbc] sm:$0xf]
      %v1199 = vunpack.c.l.b16 %v395
      %v1200 = vunpack.c.h.b16 %v395
      %v1201 = vunpack.c.l.b16 %v409
      %v1202 = vunpack.c.l.b16 %v419
      %v1203 = vunpack.c.h.b16 %v419
      %v1204 = vunpack.c.l.b16 %v429
      %v1205 = vunpack.c.l.b16 %v443
      %v1206 = vunpack.c.h.b16 %v443
      %v1207 = vunpack.c.l.b16 %v457
      %v1208 = vunpack.c.l.b16 %v467
      %v1209 = vunpack.c.h.b16 %v467
      %v1210 = vunpack.c.l.b16 %v477
      %v1211 = vunpack.c.l.b16 %v491
      %v1212 = vunpack.c.h.b16 %v491
      %v1213 = vunpack.c.l.b16 %v505
      %v1214 = vunpack.c.l.b16 %v515
      %v1215 = vunpack.c.h.b16 %v515
      %v1216 = vunpack.c.l.b16 %v525
      %v1217 = vunpack.c.l.b16 %v539
      %v1218 = vunpack.c.h.b16 %v539
      %v1219 = vunpack.c.l.b16 %v553
      %v1220 = vunpack.c.l.b16 %v563
      %v1221 = vunpack.c.h.b16 %v563
      %v1222 = vunpack.c.l.b16 %v573
      %v1223 = vunpack.c.l.b16 %v587
      %v1224 = vunpack.c.h.b16 %v587
      %v1225 = vunpack.c.l.b16 %v601
      %v1226 = vunpack.c.l.b16 %v611
      %v1227 = vunpack.c.h.b16 %v611
      %v1228 = vunpack.c.l.b16 %v621
      %v1229 = vunpack.c.l.b16 %v635
      %v1230 = vunpack.c.h.b16 %v635
      %v1231 = vunpack.c.l.b16 %v649
      %v1232 = vunpack.c.l.b16 %v659
      %v1233 = vunpack.c.h.b16 %v659
      %v1234 = vunpack.c.l.b16 %v669
      %v1235 = vunpack.c.l.b16 %v683
      %v1236 = vunpack.c.h.b16 %v683
      %v1237 = vunpack.c.l.b16 %v697
      %v1238 = vunpack.c.l.b16 %v707
      %v1239 = vunpack.c.h.b16 %v707
      %v1240 = vunpack.c.l.b16 %v717
      %v1241 = vunpack.c.l.b16 %v731
      %v1242 = vunpack.c.h.b16 %v731
      %v1243 = vunpack.c.l.b16 %v745
      %v1244 = vunpack.c.l.b16 %v755
      %v1245 = vunpack.c.h.b16 %v755
      %v1246 = vunpack.c.l.b16 %v765
      %v1247 = vunpack.c.l.b16 %v779
      %v1248 = vunpack.c.h.b16 %v779
      %v1249 = vunpack.c.l.b16 %v793
      %v1250 = vunpack.c.l.b16 %v803
      %v1251 = vunpack.c.h.b16 %v803
      %v1252 = vunpack.c.l.b16 %v813
      %v1253 = vunpack.c.l.b16 %v827
      %v1254 = vunpack.c.h.b16 %v827
      %v1255 = vunpack.c.l.b16 %v841
      %v1256 = vunpack.c.l.b16 %v851
      %v1257 = vunpack.c.h.b16 %v851
      %v1258 = vunpack.c.l.b16 %v861
      %v1259 = vunpack.c.l.b16 %v875
      %v1260 = vunpack.c.h.b16 %v875
      %v1261 = vunpack.c.l.b16 %v889
      %v1262 = vunpack.c.l.b16 %v899
      %v1263 = vunpack.c.h.b16 %v899
      %v1264 = vunpack.c.l.b16 %v909
      %v1265 = vunpack.c.l.b16 %v923
      %v1266 = vunpack.c.h.b16 %v923
      %v1267 = vunpack.c.l.b16 %v937
      %v1268 = vunpack.c.l.b16 %v947
      %v1269 = vunpack.c.h.b16 %v947
      %v1270 = vunpack.c.l.b16 %v957
      %v1271 = vunpack.c.l.b16 %v971
      %v1272 = vunpack.c.h.b16 %v971
      %v1273 = vunpack.c.l.b16 %v985
      %v1274 = vunpack.c.l.b16 %v995
      %v1275 = vunpack.c.h.b16 %v995
      %v1276 = vunpack.c.l.b16 %v1005
      %v1277 = vunpack.c.l.b16 %v1019
      %v1278 = vunpack.c.h.b16 %v1019
      %v1279 = vunpack.c.l.b16 %v1033
      %v1280 = vunpack.c.l.b16 %v1043
      %v1281 = vunpack.c.h.b16 %v1043
      %v1282 = vunpack.c.l.b16 %v1053
      %v1283 = vunpack.c.l.b16 %v1067
      %v1284 = vunpack.c.h.b16 %v1067
      %v1285 = vunpack.c.l.b16 %v1081
      %v1286 = vunpack.c.l.b16 %v1091
      %v1287 = vunpack.c.h.b16 %v1091
      %v1288 = vunpack.c.l.b16 %v1101
      %v1289 = vunpack.c.l.b16 %v1115
      %v1290 = vunpack.c.h.b16 %v1115
      %v1291 = vunpack.c.l.b16 %v1129
      %v1292 = vunpack.c.l.b16 %v1139
      %v1293 = vunpack.c.h.b16 %v1139
      %v1294 = vunpack.c.l.b16 %v1149
      %v1295 = vpack.c.b16 %v1202, %v1199
      %v1296 = vpack.c.b16 %v1203, %v1200
      %v1297 = vpack.c.b16 %v1204, %v1201
      %v1298 = vpack.c.b16 %v1208, %v1205
      %v1299 = vpack.c.b16 %v1209, %v1206
      %v1300 = vpack.c.b16 %v1210, %v1207
      %v1301 = vpack.c.b16 %v1214, %v1211
      %v1302 = vpack.c.b16 %v1215, %v1212
      %v1303 = vpack.c.b16 %v1216, %v1213
      %v1304 = vpack.c.b16 %v1220, %v1217
      %v1305 = vpack.c.b16 %v1221, %v1218
      %v1306 = vpack.c.b16 %v1222, %v1219
      %v1307 = vpack.c.b16 %v1226, %v1223
      %v1308 = vpack.c.b16 %v1227, %v1224
      %v1309 = vpack.c.b16 %v1228, %v1225
      %v1310 = vpack.c.b16 %v1232, %v1229
      %v1311 = vpack.c.b16 %v1233, %v1230
      %v1312 = vpack.c.b16 %v1234, %v1231
      %v1313 = vpack.c.b16 %v1238, %v1235
      %v1314 = vpack.c.b16 %v1239, %v1236
      %v1315 = vpack.c.b16 %v1240, %v1237
      %v1316 = vpack.c.b16 %v1244, %v1241
      %v1317 = vpack.c.b16 %v1245, %v1242
      %v1318 = vpack.c.b16 %v1246, %v1243
      %v1319 = vpack.c.b16 %v1250, %v1247
      %v1320 = vpack.c.b16 %v1251, %v1248
      %v1321 = vpack.c.b16 %v1252, %v1249
      %v1322 = vpack.c.b16 %v1256, %v1253
      %v1323 = vpack.c.b16 %v1257, %v1254
      %v1324 = vpack.c.b16 %v1258, %v1255
      %v1325 = vpack.c.b16 %v1262, %v1259
      %v1326 = vpack.c.b16 %v1263, %v1260
      %v1327 = vpack.c.b16 %v1264, %v1261
      %v1328 = vpack.c.b16 %v1268, %v1265
      %v1329 = vpack.c.b16 %v1269, %v1266
      %v1330 = vpack.c.b16 %v1270, %v1267
      %v1331 = vpack.c.b16 %v1274, %v1271
      %v1332 = vpack.c.b16 %v1275, %v1272
      %v1333 = vpack.c.b16 %v1276, %v1273
      %v1334 = vpack.c.b16 %v1280, %v1277
      %v1335 = vpack.c.b16 %v1281, %v1278
      %v1336 = vpack.c.b16 %v1282, %v1279
      %v1337 = vpack.c.b16 %v1286, %v1283
      %v1338 = vpack.c.b16 %v1287, %v1284
      %v1339 = vpack.c.b16 %v1288, %v1285
      %v1340 = vpack.c.b16 %v1292, %v1289
      %v1341 = vpack.c.b16 %v1293, %v1290
      %v1342 = vpack.c.b16 %v1294, %v1291
      %v1439 = vunpack.c.l.b16 %v1151
      %v1440 = vunpack.c.l.b16 %v1152
      %v1441 = vunpack.c.l.b16 %v1153
      %v1442 = vunpack.c.l.b16 %v1154
      %v1443 = vunpack.c.l.b16 %v1155
      %v1444 = vunpack.c.l.b16 %v1156
      %v1445 = vunpack.c.l.b16 %v1157
      %v1446 = vunpack.c.l.b16 %v1158
      %v1447 = vunpack.c.l.b16 %v1159
      %v1448 = vunpack.c.l.b16 %v1160
      %v1449 = vunpack.c.l.b16 %v1161
      %v1450 = vunpack.c.l.b16 %v1162
      %v1451 = vunpack.c.l.b16 %v1163
      %v1452 = vunpack.c.l.b16 %v1164
      %v1453 = vunpack.c.l.b16 %v1165
      %v1454 = vunpack.c.l.b16 %v1166
      %v1455 = vunpack.c.l.b16 %v1167
      %v1456 = vunpack.c.l.b16 %v1168
      %v1457 = vunpack.c.l.b16 %v1169
      %v1458 = vunpack.c.l.b16 %v1170
      %v1459 = vunpack.c.l.b16 %v1171
      %v1460 = vunpack.c.l.b16 %v1172
      %v1461 = vunpack.c.l.b16 %v1173
      %v1462 = vunpack.c.l.b16 %v1174
      %v1463 = vunpack.c.l.b16 %v1175
      %v1464 = vunpack.c.l.b16 %v1176
      %v1465 = vunpack.c.l.b16 %v1177
      %v1466 = vunpack.c.l.b16 %v1178
      %v1467 = vunpack.c.l.b16 %v1179
      %v1468 = vunpack.c.l.b16 %v1180
      %v1469 = vunpack.c.l.b16 %v1181
      %v1470 = vunpack.c.l.b16 %v1182
      %v1471 = vunpack.c.l.b16 %v1183
      %v1472 = vunpack.c.l.b16 %v1184
      %v1473 = vunpack.c.l.b16 %v1185
      %v1474 = vunpack.c.l.b16 %v1186
      %v1475 = vunpack.c.l.b16 %v1187
      %v1476 = vunpack.c.l.b16 %v1188
      %v1477 = vunpack.c.l.b16 %v1189
      %v1478 = vunpack.c.l.b16 %v1190
      %v1479 = vunpack.c.l.b16 %v1191
      %v1480 = vunpack.c.l.b16 %v1192
      %v1481 = vunpack.c.l.b16 %v1193
      %v1482 = vunpack.c.l.b16 %v1194
      %v1483 = vunpack.c.l.b16 %v1195
      %v1484 = vunpack.c.l.b16 %v1196
      %v1485 = vunpack.c.l.b16 %v1197
      %v1486 = vunpack.c.l.b16 %v1198
      %v1487 = vpack.c.b16 %v1440, %v1439
      %v1488 = vpack.c.b16 %v1442, %v1441
      %v1489 = vpack.c.b16 %v1444, %v1443
      %v1490 = vpack.c.b16 %v1446, %v1445
      %v1491 = vpack.c.b16 %v1448, %v1447
      %v1492 = vpack.c.b16 %v1450, %v1449
      %v1493 = vpack.c.b16 %v1452, %v1451
      %v1494 = vpack.c.b16 %v1454, %v1453
      %v1495 = vpack.c.b16 %v1456, %v1455
      %v1496 = vpack.c.b16 %v1458, %v1457
      %v1497 = vpack.c.b16 %v1460, %v1459
      %v1498 = vpack.c.b16 %v1462, %v1461
      %v1499 = vpack.c.b16 %v1464, %v1463
      %v1500 = vpack.c.b16 %v1466, %v1465
      %v1501 = vpack.c.b16 %v1468, %v1467
      %v1502 = vpack.c.b16 %v1470, %v1469
      %v1503 = vpack.c.b16 %v1472, %v1471
      %v1504 = vpack.c.b16 %v1474, %v1473
      %v1505 = vpack.c.b16 %v1476, %v1475
      %v1506 = vpack.c.b16 %v1478, %v1477
      %v1507 = vpack.c.b16 %v1480, %v1479
      %v1508 = vpack.c.b16 %v1482, %v1481
      %v1509 = vpack.c.b16 %v1484, %v1483
      %v1510 = vpack.c.b16 %v1486, %v1485
      %1535 = vmatprep.subr.bf16.mxu0 0
      %1536 = vmatpush1.bf16.msra.mxu0 %v1494
      %1537 = vmatprep.subr.bf16.mxu0 0
      %1538 = vmatpush1.bf16.msra.mxu0 %v1493
      %1539 = vmatprep.subr.bf16.mxu0 0
      %1540 = vmatpush1.bf16.msra.mxu0 %v1492
      %1541 = vmatprep.subr.bf16.mxu0 0
      %1542 = vmatpush1.bf16.msra.mxu0 %v1491
      %1543 = vmatprep.subr.bf16.mxu0 0
      %1544 = vmatpush1.bf16.msra.mxu0 %v1490
      %1545 = vmatprep.subr.bf16.mxu0 0
      %1546 = vmatpush1.bf16.msra.mxu0 %v1489
      %1547 = vmatprep.subr.bf16.mxu0 0
      %1548 = vmatpush1.bf16.msra.mxu0 %v1488
      %1549 = vmatprep.subr.bf16.mxu0 0
      %1550 = vmatpush1.bf16.msra.mxu0 %v1487
      %1551 = vmatprep.subr.bf16.mxu0 0
      %1552 = vmatpush2.bf16.msra.mxu0 %v1502
      %1553 = vmatprep.subr.bf16.mxu0 0
      %1554 = vmatpush2.bf16.msra.mxu0 %v1501
      %1555 = vmatprep.subr.bf16.mxu0 0
      %1556 = vmatpush2.bf16.msra.mxu0 %v1500
      %1557 = vmatprep.subr.bf16.mxu0 0
      %1558 = vmatpush2.bf16.msra.mxu0 %v1499
      %1559 = vmatprep.subr.bf16.mxu0 0
      %1560 = vmatpush2.bf16.msra.mxu0 %v1498
      %1561 = vmatprep.subr.bf16.mxu0 0
      %1562 = vmatpush2.bf16.msra.mxu0 %v1497
      %1563 = vmatprep.subr.bf16.mxu0 0
      %1564 = vmatpush2.bf16.msra.mxu0 %v1496
      %1565 = vmatprep.subr.bf16.mxu0 0
      %1566 = vmatpush2.bf16.msra.mxu0 %v1495
      %1567 = vmatprep.mubr.bf16.mxu0 %v1296
      %1568 = vmatmul.mubr.bf16.gmra.mxu0 %v1295
      %v1569 = vpop.f32.mrf.mxu0
      %v1570 = vadd.f32 0.0, %v1569
      %v1571 = vpop.f32.mrf.mxu0
      %v1572 = vpop.f32.mrf.mxu0
      %v1573 = vadd.f32 0.0, %v1572
      %v1574 = vpop.f32.mrf.mxu0
      %1575 = vmatprep.mubr.bf16.mxu0 %v1299
      %1576 = vmatmul.mubr.bf16.gmra.mxu0 %v1298
      %v1577 = vpop.f32.mrf.mxu0
      %v1578 = vadd.f32 0.0, %v1577
      %v1579 = vpop.f32.mrf.mxu0
      %v1580 = vpop.f32.mrf.mxu0
      %v1581 = vadd.f32 0.0, %v1580
      %v1582 = vpop.f32.mrf.mxu0
      %1583 = vmatprep.mubr.bf16.mxu0 %v1302
      %1584 = vmatmul.mubr.bf16.gmra.mxu0 %v1301
      %v1585 = vpop.f32.mrf.mxu0
      %v1586 = vadd.f32 0.0, %v1585
      %v1587 = vpop.f32.mrf.mxu0
      %v1588 = vpop.f32.mrf.mxu0
      %v1589 = vadd.f32 0.0, %v1588
      %v1590 = vpop.f32.mrf.mxu0
      %1591 = vmatprep.mubr.bf16.mxu0 %v1305
      %1592 = vmatmul.mubr.bf16.gmra.mxu0 %v1304
      %v1593 = vpop.f32.mrf.mxu0
      %v1594 = vadd.f32 0.0, %v1593
      %v1595 = vpop.f32.mrf.mxu0
      %v1596 = vpop.f32.mrf.mxu0
      %v1597 = vadd.f32 0.0, %v1596
      %v1598 = vpop.f32.mrf.mxu0
      %1599 = vmatprep.mubr.bf16.mxu0 %v1308
      %1600 = vmatmul.mubr.bf16.gmra.mxu0 %v1307
      %v1601 = vpop.f32.mrf.mxu0
      %v1602 = vadd.f32 0.0, %v1601
      %v1603 = vpop.f32.mrf.mxu0
      %v1604 = vpop.f32.mrf.mxu0
      %v1605 = vadd.f32 0.0, %v1604
      %v1606 = vpop.f32.mrf.mxu0
      %1607 = vmatprep.mubr.bf16.mxu0 %v1311
      %1608 = vmatmul.mubr.bf16.gmra.mxu0 %v1310
      %v1609 = vpop.f32.mrf.mxu0
      %v1610 = vadd.f32 0.0, %v1609
      %v1611 = vpop.f32.mrf.mxu0
      %v1612 = vpop.f32.mrf.mxu0
      %v1613 = vadd.f32 0.0, %v1612
      %v1614 = vpop.f32.mrf.mxu0
      %1615 = vmatprep.mubr.bf16.mxu0 %v1314
      %1616 = vmatmul.mubr.bf16.gmra.mxu0 %v1313
      %v1617 = vpop.f32.mrf.mxu0
      %v1618 = vadd.f32 0.0, %v1617
      %v1619 = vpop.f32.mrf.mxu0
      %v1620 = vpop.f32.mrf.mxu0
      %v1621 = vadd.f32 0.0, %v1620
      %v1622 = vpop.f32.mrf.mxu0
      %1623 = vmatprep.mubr.bf16.mxu0 %v1317
      %1624 = vmatmul.mubr.bf16.gmra.mxu0 %v1316
      %v1625 = vpop.f32.mrf.mxu0
      %v1626 = vadd.f32 0.0, %v1625
      %v1627 = vpop.f32.mrf.mxu0
      %v1628 = vpop.f32.mrf.mxu0
      %v1629 = vadd.f32 0.0, %v1628
      %v1630 = vpop.f32.mrf.mxu0
      %1631 = vmatprep.mubr.bf16.mxu0 %v1320
      %1632 = vmatmul.mubr.bf16.gmra.mxu0 %v1319
      %v1633 = vpop.f32.mrf.mxu0
      %v1634 = vadd.f32 0.0, %v1633
      %v1635 = vpop.f32.mrf.mxu0
      %v1636 = vpop.f32.mrf.mxu0
      %v1637 = vadd.f32 0.0, %v1636
      %v1638 = vpop.f32.mrf.mxu0
      %1639 = vmatprep.mubr.bf16.mxu0 %v1323
      %1640 = vmatmul.mubr.bf16.gmra.mxu0 %v1322
      %v1641 = vpop.f32.mrf.mxu0
      %v1642 = vadd.f32 0.0, %v1641
      %v1643 = vpop.f32.mrf.mxu0
      %v1644 = vpop.f32.mrf.mxu0
      %v1645 = vadd.f32 0.0, %v1644
      %v1646 = vpop.f32.mrf.mxu0
      %1647 = vmatprep.mubr.bf16.mxu0 %v1326
      %1648 = vmatmul.mubr.bf16.gmra.mxu0 %v1325
      %v1649 = vpop.f32.mrf.mxu0
      %v1650 = vadd.f32 0.0, %v1649
      %v1651 = vpop.f32.mrf.mxu0
      %v1652 = vpop.f32.mrf.mxu0
      %v1653 = vadd.f32 0.0, %v1652
      %v1654 = vpop.f32.mrf.mxu0
      %1655 = vmatprep.mubr.bf16.mxu0 %v1329
      %1656 = vmatmul.mubr.bf16.gmra.mxu0 %v1328
      %v1657 = vpop.f32.mrf.mxu0
      %v1658 = vadd.f32 0.0, %v1657
      %v1659 = vpop.f32.mrf.mxu0
      %v1660 = vpop.f32.mrf.mxu0
      %v1661 = vadd.f32 0.0, %v1660
      %v1662 = vpop.f32.mrf.mxu0
      %1663 = vmatprep.mubr.bf16.mxu0 %v1332
      %1664 = vmatmul.mubr.bf16.gmra.mxu0 %v1331
      %v1665 = vpop.f32.mrf.mxu0
      %v1666 = vadd.f32 0.0, %v1665
      %v1667 = vpop.f32.mrf.mxu0
      %v1668 = vpop.f32.mrf.mxu0
      %v1669 = vadd.f32 0.0, %v1668
      %v1670 = vpop.f32.mrf.mxu0
      %1671 = vmatprep.mubr.bf16.mxu0 %v1335
      %1672 = vmatmul.mubr.bf16.gmra.mxu0 %v1334
      %v1673 = vpop.f32.mrf.mxu0
      %v1674 = vadd.f32 0.0, %v1673
      %v1675 = vpop.f32.mrf.mxu0
      %v1676 = vpop.f32.mrf.mxu0
      %v1677 = vadd.f32 0.0, %v1676
      %v1678 = vpop.f32.mrf.mxu0
      %1679 = vmatprep.mubr.bf16.mxu0 %v1338
      %1680 = vmatmul.mubr.bf16.gmra.mxu0 %v1337
      %v1681 = vpop.f32.mrf.mxu0
      %v1682 = vadd.f32 0.0, %v1681
      %v1683 = vpop.f32.mrf.mxu0
      %v1684 = vpop.f32.mrf.mxu0
      %v1685 = vadd.f32 0.0, %v1684
      %v1686 = vpop.f32.mrf.mxu0
      %1687 = vmatprep.mubr.bf16.mxu0 %v1341
      %1688 = vmatmul.mubr.bf16.gmra.mxu0 %v1340
      %v1689 = vpop.f32.mrf.mxu0
      %v1690 = vadd.f32 0.0, %v1689
      %v1691 = vpop.f32.mrf.mxu0
      %v1692 = vpop.f32.mrf.mxu0
      %v1693 = vadd.f32 0.0, %v1692
      %v1694 = vpop.f32.mrf.mxu0
      %1695 = vdwg.mxu0
      %1696 = vmatprep.subr.bf16.mxu0 0
      %1697 = vmatpush1.bf16.msra.mxu0 %v1510
      %1698 = vmatprep.subr.bf16.mxu0 0
      %1699 = vmatpush1.bf16.msra.mxu0 %v1509
      %1700 = vmatprep.subr.bf16.mxu0 0
      %1701 = vmatpush1.bf16.msra.mxu0 %v1508
      %1702 = vmatprep.subr.bf16.mxu0 0
      %1703 = vmatpush1.bf16.msra.mxu0 %v1507
      %1704 = vmatprep.subr.bf16.mxu0 0
      %1705 = vmatpush1.bf16.msra.mxu0 %v1506
      %1706 = vmatprep.subr.bf16.mxu0 0
      %1707 = vmatpush1.bf16.msra.mxu0 %v1505
      %1708 = vmatprep.subr.bf16.mxu0 0
      %1709 = vmatpush1.bf16.msra.mxu0 %v1504
      %1710 = vmatprep.subr.bf16.mxu0 0
      %1711 = vmatpush1.bf16.msra.mxu0 %v1503
      %1712 = vmatprep.subr.bf16.mxu0 0
      %1713 = vmatpush2.bf16.msra.mxu0 0
      %1714 = vmatprep.subr.bf16.mxu0 0
      %1715 = vmatpush2.bf16.msra.mxu0 0
      %1716 = vmatprep.subr.bf16.mxu0 0
      %1717 = vmatpush2.bf16.msra.mxu0 0
      %1718 = vmatprep.subr.bf16.mxu0 0
      %1719 = vmatpush2.bf16.msra.mxu0 0
      %1720 = vmatprep.subr.bf16.mxu0 0
      %1721 = vmatpush2.bf16.msra.mxu0 0
      %1722 = vmatprep.subr.bf16.mxu0 0
      %1723 = vmatpush2.bf16.msra.mxu0 0
      %1724 = vmatprep.subr.bf16.mxu0 0
      %1725 = vmatpush2.bf16.msra.mxu0 0
      %1726 = vmatprep.subr.bf16.mxu0 0
      %1727 = vmatpush2.bf16.msra.mxu0 0
      %1728 = vmatprep.mubr.bf16.mxu0 0
      %1729 = vmatmul.mubr.bf16.gmra.mxu0 %v1297
      %v1730 = vpop.f32.mrf.mxu0
      %v1731 = vadd.f32 %v1570, %v1730
      %v1732 = vpop.f32.mrf.mxu0
      %v1733 = vpop.f32.mrf.mxu0
      %v1734 = vadd.f32 %v1573, %v1733
      %v1735 = vpop.f32.mrf.mxu0
      %1736 = vmatprep.mubr.bf16.mxu0 0
      %1737 = vmatmul.mubr.bf16.gmra.mxu0 %v1300
      %v1738 = vpop.f32.mrf.mxu0
      %v1739 = vadd.f32 %v1578, %v1738
      %v1740 = vpop.f32.mrf.mxu0
      %v1741 = vpop.f32.mrf.mxu0
      %v1742 = vadd.f32 %v1581, %v1741
      %v1743 = vpop.f32.mrf.mxu0
      %1744 = vmatprep.mubr.bf16.mxu0 0
      %1745 = vmatmul.mubr.bf16.gmra.mxu0 %v1303
      %v1746 = vpop.f32.mrf.mxu0
      %v1747 = vadd.f32 %v1586, %v1746
      %v1748 = vpop.f32.mrf.mxu0
      %v1749 = vpop.f32.mrf.mxu0
      %v1750 = vadd.f32 %v1589, %v1749
      %v1751 = vpop.f32.mrf.mxu0
      %1752 = vmatprep.mubr.bf16.mxu0 0
      %1753 = vmatmul.mubr.bf16.gmra.mxu0 %v1306
      %v1754 = vpop.f32.mrf.mxu0
      %v1755 = vadd.f32 %v1594, %v1754
      %v1756 = vpop.f32.mrf.mxu0
      %v1757 = vpop.f32.mrf.mxu0
      %v1758 = vadd.f32 %v1597, %v1757
      %v1759 = vpop.f32.mrf.mxu0
      %1760 = vmatprep.mubr.bf16.mxu0 0
      %1761 = vmatmul.mubr.bf16.gmra.mxu0 %v1309
      %v1762 = vpop.f32.mrf.mxu0
      %v1763 = vadd.f32 %v1602, %v1762
      %v1764 = vpop.f32.mrf.mxu0
      %v1765 = vpop.f32.mrf.mxu0
      %v1766 = vadd.f32 %v1605, %v1765
      %v1767 = vpop.f32.mrf.mxu0
      %1768 = vmatprep.mubr.bf16.mxu0 0
      %1769 = vmatmul.mubr.bf16.gmra.mxu0 %v1312
      %v1770 = vpop.f32.mrf.mxu0
      %v1771 = vadd.f32 %v1610, %v1770
      %v1772 = vpop.f32.mrf.mxu0
      %v1773 = vpop.f32.mrf.mxu0
      %v1774 = vadd.f32 %v1613, %v1773
      %v1775 = vpop.f32.mrf.mxu0
      %1776 = vmatprep.mubr.bf16.mxu0 0
      %1777 = vmatmul.mubr.bf16.gmra.mxu0 %v1315
      %v1778 = vpop.f32.mrf.mxu0
      %v1779 = vadd.f32 %v1618, %v1778
      %v1780 = vpop.f32.mrf.mxu0
      %v1781 = vpop.f32.mrf.mxu0
      %v1782 = vadd.f32 %v1621, %v1781
      %v1783 = vpop.f32.mrf.mxu0
      %1784 = vmatprep.mubr.bf16.mxu0 0
      %1785 = vmatmul.mubr.bf16.gmra.mxu0 %v1318
      %v1786 = vpop.f32.mrf.mxu0
      %v1787 = vadd.f32 %v1626, %v1786
      %v1788 = vpop.f32.mrf.mxu0
      %v1789 = vpop.f32.mrf.mxu0
      %v1790 = vadd.f32 %v1629, %v1789
      %v1791 = vpop.f32.mrf.mxu0
      %1792 = vmatprep.mubr.bf16.mxu0 0
      %1793 = vmatmul.mubr.bf16.gmra.mxu0 %v1321
      %v1794 = vpop.f32.mrf.mxu0
      %v1795 = vadd.f32 %v1634, %v1794
      %v1796 = vpop.f32.mrf.mxu0
      %v1797 = vpop.f32.mrf.mxu0
      %v1798 = vadd.f32 %v1637, %v1797
      %v1799 = vpop.f32.mrf.mxu0
      %1800 = vmatprep.mubr.bf16.mxu0 0
      %1801 = vmatmul.mubr.bf16.gmra.mxu0 %v1324
      %v1802 = vpop.f32.mrf.mxu0
      %v1803 = vadd.f32 %v1642, %v1802
      %v1804 = vpop.f32.mrf.mxu0
      %v1805 = vpop.f32.mrf.mxu0
      %v1806 = vadd.f32 %v1645, %v1805
      %v1807 = vpop.f32.mrf.mxu0
      %1808 = vmatprep.mubr.bf16.mxu0 0
      %1809 = vmatmul.mubr.bf16.gmra.mxu0 %v1327
      %v1810 = vpop.f32.mrf.mxu0
      %v1811 = vadd.f32 %v1650, %v1810
      %v1812 = vpop.f32.mrf.mxu0
      %v1813 = vpop.f32.mrf.mxu0
      %v1814 = vadd.f32 %v1653, %v1813
      %v1815 = vpop.f32.mrf.mxu0
      %1816 = vmatprep.mubr.bf16.mxu0 0
      %1817 = vmatmul.mubr.bf16.gmra.mxu0 %v1330
      %v1818 = vpop.f32.mrf.mxu0
      %v1819 = vadd.f32 %v1658, %v1818
      %v1820 = vpop.f32.mrf.mxu0
      %v1821 = vpop.f32.mrf.mxu0
      %v1822 = vadd.f32 %v1661, %v1821
      %v1823 = vpop.f32.mrf.mxu0
      %1824 = vmatprep.mubr.bf16.mxu0 0
      %1825 = vmatmul.mubr.bf16.gmra.mxu0 %v1333
      %v1826 = vpop.f32.mrf.mxu0
      %v1827 = vadd.f32 %v1666, %v1826
      %v1828 = vpop.f32.mrf.mxu0
      %v1829 = vpop.f32.mrf.mxu0
      %v1830 = vadd.f32 %v1669, %v1829
      %v1831 = vpop.f32.mrf.mxu0
      %1832 = vmatprep.mubr.bf16.mxu0 0
      %1833 = vmatmul.mubr.bf16.gmra.mxu0 %v1336
      %v1834 = vpop.f32.mrf.mxu0
      %v1835 = vadd.f32 %v1674, %v1834
      %v1836 = vpop.f32.mrf.mxu0
      %v1837 = vpop.f32.mrf.mxu0
      %v1838 = vadd.f32 %v1677, %v1837
      %v1839 = vpop.f32.mrf.mxu0
      %1840 = vmatprep.mubr.bf16.mxu0 0
      %1841 = vmatmul.mubr.bf16.gmra.mxu0 %v1339
      %v1842 = vpop.f32.mrf.mxu0
      %v1843 = vadd.f32 %v1682, %v1842
      %v1844 = vpop.f32.mrf.mxu0
      %v1845 = vpop.f32.mrf.mxu0
      %v1846 = vadd.f32 %v1685, %v1845
      %v1847 = vpop.f32.mrf.mxu0
      %1848 = vmatprep.mubr.bf16.mxu0 0
      %1849 = vmatmul.mubr.bf16.gmra.mxu0 %v1342
      %v1850 = vpop.f32.mrf.mxu0
      %v1851 = vadd.f32 %v1690, %v1850
      %v1852 = vpop.f32.mrf.mxu0
      %v1853 = vpop.f32.mrf.mxu0
      %v1854 = vadd.f32 %v1693, %v1853
      %v1855 = vpop.f32.mrf.mxu0
      %1856 = vdwg.mxu0
      %v1921 = vunpack.c.l.b16 %v235
      %v1922 = vunpack.c.h.b16 %v235
      %v1923 = vunpack.c.l.b16 %v236
      %v1924 = vunpack.c.l.b16 %v237
      %v1925 = vunpack.c.h.b16 %v237
      %v1926 = vunpack.c.l.b16 %v238
      %v1927 = vunpack.c.l.b16 %v239
      %v1928 = vunpack.c.h.b16 %v239
      %v1929 = vunpack.c.l.b16 %v240
      %v1930 = vunpack.c.l.b16 %v241
      %v1931 = vunpack.c.h.b16 %v241
      %v1932 = vunpack.c.l.b16 %v242
      %v1933 = vunpack.c.l.b16 %v243
      %v1934 = vunpack.c.h.b16 %v243
      %v1935 = vunpack.c.l.b16 %v244
      %v1936 = vunpack.c.l.b16 %v245
      %v1937 = vunpack.c.h.b16 %v245
      %v1938 = vunpack.c.l.b16 %v246
      %v1939 = vunpack.c.l.b16 %v247
      %v1940 = vunpack.c.h.b16 %v247
      %v1941 = vunpack.c.l.b16 %v248
      %v1942 = vunpack.c.l.b16 %v249
      %v1943 = vunpack.c.h.b16 %v249
      %v1944 = vunpack.c.l.b16 %v250
      %v1945 = vunpack.c.l.b16 %v251
      %v1946 = vunpack.c.h.b16 %v251
      %v1947 = vunpack.c.l.b16 %v252
      %v1948 = vunpack.c.l.b16 %v253
      %v1949 = vunpack.c.h.b16 %v253
      %v1950 = vunpack.c.l.b16 %v254
      %v1951 = vunpack.c.l.b16 %v255
      %v1952 = vunpack.c.h.b16 %v255
      %v1953 = vunpack.c.l.b16 %v256
      %v1954 = vunpack.c.l.b16 %v257
      %v1955 = vunpack.c.h.b16 %v257
      %v1956 = vunpack.c.l.b16 %v258
      %v1957 = vunpack.c.l.b16 %v259
      %v1958 = vunpack.c.h.b16 %v259
      %v1959 = vunpack.c.l.b16 %v260
      %v1960 = vunpack.c.l.b16 %v261
      %v1961 = vunpack.c.h.b16 %v261
      %v1962 = vunpack.c.l.b16 %v262
      %v1963 = vunpack.c.l.b16 %v263
      %v1964 = vunpack.c.h.b16 %v263
      %v1965 = vunpack.c.l.b16 %v264
      %v1966 = vunpack.c.l.b16 %v265
      %v1967 = vunpack.c.h.b16 %v265
      %v1968 = vunpack.c.l.b16 %v266
      %v1969 = vunpack.c.l.b16 %v267
      %v1970 = vunpack.c.h.b16 %v267
      %v1971 = vunpack.c.l.b16 %v268
      %v1972 = vunpack.c.l.b16 %v269
      %v1973 = vunpack.c.h.b16 %v269
      %v1974 = vunpack.c.l.b16 %v270
      %v1975 = vunpack.c.l.b16 %v271
      %v1976 = vunpack.c.h.b16 %v271
      %v1977 = vunpack.c.l.b16 %v272
      %v1978 = vunpack.c.l.b16 %v273
      %v1979 = vunpack.c.h.b16 %v273
      %v1980 = vunpack.c.l.b16 %v274
      %v1981 = vunpack.c.l.b16 %v275
      %v1982 = vunpack.c.h.b16 %v275
      %v1983 = vunpack.c.l.b16 %v276
      %v1984 = vunpack.c.l.b16 %v277
      %v1985 = vunpack.c.h.b16 %v277
      %v1986 = vunpack.c.l.b16 %v278
      %v1987 = vunpack.c.l.b16 %v279
      %v1988 = vunpack.c.h.b16 %v279
      %v1989 = vunpack.c.l.b16 %v280
      %v1990 = vunpack.c.l.b16 %v281
      %v1991 = vunpack.c.h.b16 %v281
      %v1992 = vunpack.c.l.b16 %v282
      %v1993 = vunpack.c.l.b16 %v283
      %v1994 = vunpack.c.h.b16 %v283
      %v1995 = vunpack.c.l.b16 %v284
      %v1996 = vunpack.c.l.b16 %v285
      %v1997 = vunpack.c.h.b16 %v285
      %v1998 = vunpack.c.l.b16 %v286
      %v1999 = vunpack.c.l.b16 %v287
      %v2000 = vunpack.c.h.b16 %v287
      %v2001 = vunpack.c.l.b16 %v288
      %v2002 = vunpack.c.l.b16 %v289
      %v2003 = vunpack.c.h.b16 %v289
      %v2004 = vunpack.c.l.b16 %v290
      %v2005 = vunpack.c.l.b16 %v291
      %v2006 = vunpack.c.h.b16 %v291
      %v2007 = vunpack.c.l.b16 %v292
      %v2008 = vunpack.c.l.b16 %v293
      %v2009 = vunpack.c.h.b16 %v293
      %v2010 = vunpack.c.l.b16 %v294
      %v2011 = vunpack.c.l.b16 %v295
      %v2012 = vunpack.c.h.b16 %v295
      %v2013 = vunpack.c.l.b16 %v296
      %v2014 = vunpack.c.l.b16 %v297
      %v2015 = vunpack.c.h.b16 %v297
      %v2016 = vunpack.c.l.b16 %v298
      %v2017 = vpack.c.b16 %v1924, %v1921
      %v2018 = vpack.c.b16 %v1925, %v1922
      %v2019 = vpack.c.b16 %v1926, %v1923
      %v2020 = vpack.c.b16 %v1930, %v1927
      %v2021 = vpack.c.b16 %v1931, %v1928
      %v2022 = vpack.c.b16 %v1932, %v1929
      %v2023 = vpack.c.b16 %v1936, %v1933
      %v2024 = vpack.c.b16 %v1937, %v1934
      %v2025 = vpack.c.b16 %v1938, %v1935
      %v2026 = vpack.c.b16 %v1942, %v1939
      %v2027 = vpack.c.b16 %v1943, %v1940
      %v2028 = vpack.c.b16 %v1944, %v1941
      %v2029 = vpack.c.b16 %v1948, %v1945
      %v2030 = vpack.c.b16 %v1949, %v1946
      %v2031 = vpack.c.b16 %v1950, %v1947
      %v2032 = vpack.c.b16 %v1954, %v1951
      %v2033 = vpack.c.b16 %v1955, %v1952
      %v2034 = vpack.c.b16 %v1956, %v1953
      %v2035 = vpack.c.b16 %v1960, %v1957
      %v2036 = vpack.c.b16 %v1961, %v1958
      %v2037 = vpack.c.b16 %v1962, %v1959
      %v2038 = vpack.c.b16 %v1966, %v1963
      %v2039 = vpack.c.b16 %v1967, %v1964
      %v2040 = vpack.c.b16 %v1968, %v1965
      %v2041 = vpack.c.b16 %v1972, %v1969
      %v2042 = vpack.c.b16 %v1973, %v1970
      %v2043 = vpack.c.b16 %v1974, %v1971
      %v2044 = vpack.c.b16 %v1978, %v1975
      %v2045 = vpack.c.b16 %v1979, %v1976
      %v2046 = vpack.c.b16 %v1980, %v1977
      %v2047 = vpack.c.b16 %v1984, %v1981
      %v2048 = vpack.c.b16 %v1985, %v1982
      %v2049 = vpack.c.b16 %v1986, %v1983
      %v2050 = vpack.c.b16 %v1990, %v1987
      %v2051 = vpack.c.b16 %v1991, %v1988
      %v2052 = vpack.c.b16 %v1992, %v1989
      %v2053 = vpack.c.b16 %v1996, %v1993
      %v2054 = vpack.c.b16 %v1997, %v1994
      %v2055 = vpack.c.b16 %v1998, %v1995
      %v2056 = vpack.c.b16 %v2002, %v1999
      %v2057 = vpack.c.b16 %v2003, %v2000
      %v2058 = vpack.c.b16 %v2004, %v2001
      %v2059 = vpack.c.b16 %v2008, %v2005
      %v2060 = vpack.c.b16 %v2009, %v2006
      %v2061 = vpack.c.b16 %v2010, %v2007
      %v2062 = vpack.c.b16 %v2014, %v2011
      %v2063 = vpack.c.b16 %v2015, %v2012
      %v2064 = vpack.c.b16 %v2016, %v2013
      %v2161 = vunpack.c.l.b16 %v299
      %v2162 = vunpack.c.l.b16 %v300
      %v2163 = vunpack.c.l.b16 %v301
      %v2164 = vunpack.c.l.b16 %v302
      %v2165 = vunpack.c.l.b16 %v303
      %v2166 = vunpack.c.l.b16 %v304
      %v2167 = vunpack.c.l.b16 %v305
      %v2168 = vunpack.c.l.b16 %v306
      %v2169 = vunpack.c.l.b16 %v307
      %v2170 = vunpack.c.l.b16 %v308
      %v2171 = vunpack.c.l.b16 %v309
      %v2172 = vunpack.c.l.b16 %v310
      %v2173 = vunpack.c.l.b16 %v311
      %v2174 = vunpack.c.l.b16 %v312
      %v2175 = vunpack.c.l.b16 %v313
      %v2176 = vunpack.c.l.b16 %v314
      %v2177 = vunpack.c.l.b16 %v315
      %v2178 = vunpack.c.l.b16 %v316
      %v2179 = vunpack.c.l.b16 %v317
      %v2180 = vunpack.c.l.b16 %v318
      %v2181 = vunpack.c.l.b16 %v319
      %v2182 = vunpack.c.l.b16 %v320
      %v2183 = vunpack.c.l.b16 %v321
      %v2184 = vunpack.c.l.b16 %v322
      %v2185 = vunpack.c.l.b16 %v323
      %v2186 = vunpack.c.l.b16 %v324
      %v2187 = vunpack.c.l.b16 %v325
      %v2188 = vunpack.c.l.b16 %v326
      %v2189 = vunpack.c.l.b16 %v327
      %v2190 = vunpack.c.l.b16 %v328
      %v2191 = vunpack.c.l.b16 %v329
      %v2192 = vunpack.c.l.b16 %v330
      %v2193 = vunpack.c.l.b16 %v331
      %v2194 = vunpack.c.l.b16 %v332
      %v2195 = vunpack.c.l.b16 %v333
      %v2196 = vunpack.c.l.b16 %v334
      %v2197 = vunpack.c.l.b16 %v335
      %v2198 = vunpack.c.l.b16 %v336
      %v2199 = vunpack.c.l.b16 %v337
      %v2200 = vunpack.c.l.b16 %v338
      %v2201 = vunpack.c.l.b16 %v339
      %v2202 = vunpack.c.l.b16 %v340
      %v2203 = vunpack.c.l.b16 %v341
      %v2204 = vunpack.c.l.b16 %v342
      %v2205 = vunpack.c.l.b16 %v343
      %v2206 = vunpack.c.l.b16 %v344
      %v2207 = vunpack.c.l.b16 %v345
      %v2208 = vunpack.c.l.b16 %v346
      %v2209 = vpack.c.b16 %v2162, %v2161
      %v2210 = vpack.c.b16 %v2164, %v2163
      %v2211 = vpack.c.b16 %v2166, %v2165
      %v2212 = vpack.c.b16 %v2168, %v2167
      %v2213 = vpack.c.b16 %v2170, %v2169
      %v2214 = vpack.c.b16 %v2172, %v2171
      %v2215 = vpack.c.b16 %v2174, %v2173
      %v2216 = vpack.c.b16 %v2176, %v2175
      %v2217 = vpack.c.b16 %v2178, %v2177
      %v2218 = vpack.c.b16 %v2180, %v2179
      %v2219 = vpack.c.b16 %v2182, %v2181
      %v2220 = vpack.c.b16 %v2184, %v2183
      %v2221 = vpack.c.b16 %v2186, %v2185
      %v2222 = vpack.c.b16 %v2188, %v2187
      %v2223 = vpack.c.b16 %v2190, %v2189
      %v2224 = vpack.c.b16 %v2192, %v2191
      %v2225 = vpack.c.b16 %v2194, %v2193
      %v2226 = vpack.c.b16 %v2196, %v2195
      %v2227 = vpack.c.b16 %v2198, %v2197
      %v2228 = vpack.c.b16 %v2200, %v2199
      %v2229 = vpack.c.b16 %v2202, %v2201
      %v2230 = vpack.c.b16 %v2204, %v2203
      %v2231 = vpack.c.b16 %v2206, %v2205
      %v2232 = vpack.c.b16 %v2208, %v2207
      %2257 = vmatprep.subr.bf16.mxu0 0
      %2258 = vmatpush1.bf16.msra.mxu0 %v2216
      %2259 = vmatprep.subr.bf16.mxu0 0
      %2260 = vmatpush1.bf16.msra.mxu0 %v2215
      %2261 = vmatprep.subr.bf16.mxu0 0
      %2262 = vmatpush1.bf16.msra.mxu0 %v2214
      %2263 = vmatprep.subr.bf16.mxu0 0
      %2264 = vmatpush1.bf16.msra.mxu0 %v2213
      %2265 = vmatprep.subr.bf16.mxu0 0
      %2266 = vmatpush1.bf16.msra.mxu0 %v2212
      %2267 = vmatprep.subr.bf16.mxu0 0
      %2268 = vmatpush1.bf16.msra.mxu0 %v2211
      %2269 = vmatprep.subr.bf16.mxu0 0
      %2270 = vmatpush1.bf16.msra.mxu0 %v2210
      %2271 = vmatprep.subr.bf16.mxu0 0
      %2272 = vmatpush1.bf16.msra.mxu0 %v2209
      %2273 = vmatprep.subr.bf16.mxu0 0
      %2274 = vmatpush2.bf16.msra.mxu0 %v2224
      %2275 = vmatprep.subr.bf16.mxu0 0
      %2276 = vmatpush2.bf16.msra.mxu0 %v2223
      %2277 = vmatprep.subr.bf16.mxu0 0
      %2278 = vmatpush2.bf16.msra.mxu0 %v2222
      %2279 = vmatprep.subr.bf16.mxu0 0
      %2280 = vmatpush2.bf16.msra.mxu0 %v2221
      %2281 = vmatprep.subr.bf16.mxu0 0
      %2282 = vmatpush2.bf16.msra.mxu0 %v2220
      %2283 = vmatprep.subr.bf16.mxu0 0
      %2284 = vmatpush2.bf16.msra.mxu0 %v2219
      %2285 = vmatprep.subr.bf16.mxu0 0
      %2286 = vmatpush2.bf16.msra.mxu0 %v2218
      %2287 = vmatprep.subr.bf16.mxu0 0
      %2288 = vmatpush2.bf16.msra.mxu0 %v2217
      %2289 = vmatprep.mubr.bf16.mxu0 %v2018
      %2290 = vmatmul.mubr.bf16.gmra.mxu0 %v2017
      %v2291 = vpop.f32.mrf.mxu0
      %v2292 = vadd.f32 %v1731, %v2291
      %v2293 = vpop.f32.mrf.mxu0
      %v2294 = vpop.f32.mrf.mxu0
      %v2295 = vadd.f32 %v1734, %v2294
      %v2296 = vpop.f32.mrf.mxu0
      %2297 = vmatprep.mubr.bf16.mxu0 %v2021
      %2298 = vmatmul.mubr.bf16.gmra.mxu0 %v2020
      %v2299 = vpop.f32.mrf.mxu0
      %v2300 = vadd.f32 %v1739, %v2299
      %v2301 = vpop.f32.mrf.mxu0
      %v2302 = vpop.f32.mrf.mxu0
      %v2303 = vadd.f32 %v1742, %v2302
      %v2304 = vpop.f32.mrf.mxu0
      %2305 = vmatprep.mubr.bf16.mxu0 %v2024
      %2306 = vmatmul.mubr.bf16.gmra.mxu0 %v2023
      %v2307 = vpop.f32.mrf.mxu0
      %v2308 = vadd.f32 %v1747, %v2307
      %v2309 = vpop.f32.mrf.mxu0
      %v2310 = vpop.f32.mrf.mxu0
      %v2311 = vadd.f32 %v1750, %v2310
      %v2312 = vpop.f32.mrf.mxu0
      %2313 = vmatprep.mubr.bf16.mxu0 %v2027
      %2314 = vmatmul.mubr.bf16.gmra.mxu0 %v2026
      %v2315 = vpop.f32.mrf.mxu0
      %v2316 = vadd.f32 %v1755, %v2315
      %v2317 = vpop.f32.mrf.mxu0
      %v2318 = vpop.f32.mrf.mxu0
      %v2319 = vadd.f32 %v1758, %v2318
      %v2320 = vpop.f32.mrf.mxu0
      %2321 = vmatprep.mubr.bf16.mxu0 %v2030
      %2322 = vmatmul.mubr.bf16.gmra.mxu0 %v2029
      %v2323 = vpop.f32.mrf.mxu0
      %v2324 = vadd.f32 %v1763, %v2323
      %v2325 = vpop.f32.mrf.mxu0
      %v2326 = vpop.f32.mrf.mxu0
      %v2327 = vadd.f32 %v1766, %v2326
      %v2328 = vpop.f32.mrf.mxu0
      %2329 = vmatprep.mubr.bf16.mxu0 %v2033
      %2330 = vmatmul.mubr.bf16.gmra.mxu0 %v2032
      %v2331 = vpop.f32.mrf.mxu0
      %v2332 = vadd.f32 %v1771, %v2331
      %v2333 = vpop.f32.mrf.mxu0
      %v2334 = vpop.f32.mrf.mxu0
      %v2335 = vadd.f32 %v1774, %v2334
      %v2336 = vpop.f32.mrf.mxu0
      %2337 = vmatprep.mubr.bf16.mxu0 %v2036
      %2338 = vmatmul.mubr.bf16.gmra.mxu0 %v2035
      %v2339 = vpop.f32.mrf.mxu0
      %v2340 = vadd.f32 %v1779, %v2339
      %v2341 = vpop.f32.mrf.mxu0
      %v2342 = vpop.f32.mrf.mxu0
      %v2343 = vadd.f32 %v1782, %v2342
      %v2344 = vpop.f32.mrf.mxu0
      %2345 = vmatprep.mubr.bf16.mxu0 %v2039
      %2346 = vmatmul.mubr.bf16.gmra.mxu0 %v2038
      %v2347 = vpop.f32.mrf.mxu0
      %v2348 = vadd.f32 %v1787, %v2347
      %v2349 = vpop.f32.mrf.mxu0
      %v2350 = vpop.f32.mrf.mxu0
      %v2351 = vadd.f32 %v1790, %v2350
      %v2352 = vpop.f32.mrf.mxu0
      %2353 = vmatprep.mubr.bf16.mxu0 %v2042
      %2354 = vmatmul.mubr.bf16.gmra.mxu0 %v2041
      %v2355 = vpop.f32.mrf.mxu0
      %v2356 = vadd.f32 %v1795, %v2355
      %v2357 = vpop.f32.mrf.mxu0
      %v2358 = vpop.f32.mrf.mxu0
      %v2359 = vadd.f32 %v1798, %v2358
      %v2360 = vpop.f32.mrf.mxu0
      %2361 = vmatprep.mubr.bf16.mxu0 %v2045
      %2362 = vmatmul.mubr.bf16.gmra.mxu0 %v2044
      %v2363 = vpop.f32.mrf.mxu0
      %v2364 = vadd.f32 %v1803, %v2363
      %v2365 = vpop.f32.mrf.mxu0
      %v2366 = vpop.f32.mrf.mxu0
      %v2367 = vadd.f32 %v1806, %v2366
      %v2368 = vpop.f32.mrf.mxu0
      %2369 = vmatprep.mubr.bf16.mxu0 %v2048
      %2370 = vmatmul.mubr.bf16.gmra.mxu0 %v2047
      %v2371 = vpop.f32.mrf.mxu0
      %v2372 = vadd.f32 %v1811, %v2371
      %v2373 = vpop.f32.mrf.mxu0
      %v2374 = vpop.f32.mrf.mxu0
      %v2375 = vadd.f32 %v1814, %v2374
      %v2376 = vpop.f32.mrf.mxu0
      %2377 = vmatprep.mubr.bf16.mxu0 %v2051
      %2378 = vmatmul.mubr.bf16.gmra.mxu0 %v2050
      %v2379 = vpop.f32.mrf.mxu0
      %v2380 = vadd.f32 %v1819, %v2379
      %v2381 = vpop.f32.mrf.mxu0
      %v2382 = vpop.f32.mrf.mxu0
      %v2383 = vadd.f32 %v1822, %v2382
      %v2384 = vpop.f32.mrf.mxu0
      %2385 = vmatprep.mubr.bf16.mxu0 %v2054
      %2386 = vmatmul.mubr.bf16.gmra.mxu0 %v2053
      %v2387 = vpop.f32.mrf.mxu0
      %v2388 = vadd.f32 %v1827, %v2387
      %v2389 = vpop.f32.mrf.mxu0
      %v2390 = vpop.f32.mrf.mxu0
      %v2391 = vadd.f32 %v1830, %v2390
      %v2392 = vpop.f32.mrf.mxu0
      %2393 = vmatprep.mubr.bf16.mxu0 %v2057
      %2394 = vmatmul.mubr.bf16.gmra.mxu0 %v2056
      %v2395 = vpop.f32.mrf.mxu0
      %v2396 = vadd.f32 %v1835, %v2395
      %v2397 = vpop.f32.mrf.mxu0
      %v2398 = vpop.f32.mrf.mxu0
      %v2399 = vadd.f32 %v1838, %v2398
      %v2400 = vpop.f32.mrf.mxu0
      %2401 = vmatprep.mubr.bf16.mxu0 %v2060
      %2402 = vmatmul.mubr.bf16.gmra.mxu0 %v2059
      %v2403 = vpop.f32.mrf.mxu0
      %v2404 = vadd.f32 %v1843, %v2403
      %v2405 = vpop.f32.mrf.mxu0
      %v2406 = vpop.f32.mrf.mxu0
      %v2407 = vadd.f32 %v1846, %v2406
      %v2408 = vpop.f32.mrf.mxu0
      %2409 = vmatprep.mubr.bf16.mxu0 %v2063
      %2410 = vmatmul.mubr.bf16.gmra.mxu0 %v2062
      %v2411 = vpop.f32.mrf.mxu0
      %v2412 = vadd.f32 %v1851, %v2411
      %v2413 = vpop.f32.mrf.mxu0
      %v2414 = vpop.f32.mrf.mxu0
      %v2415 = vadd.f32 %v1854, %v2414
      %v2416 = vpop.f32.mrf.mxu0
      %2417 = vdwg.mxu0
      %2418 = vmatprep.subr.bf16.mxu0 0
      %2419 = vmatpush1.bf16.msra.mxu0 %v2232
      %2420 = vmatprep.subr.bf16.mxu0 0
      %2421 = vmatpush1.bf16.msra.mxu0 %v2231
      %2422 = vmatprep.subr.bf16.mxu0 0
      %2423 = vmatpush1.bf16.msra.mxu0 %v2230
      %2424 = vmatprep.subr.bf16.mxu0 0
      %2425 = vmatpush1.bf16.msra.mxu0 %v2229
      %2426 = vmatprep.subr.bf16.mxu0 0
      %2427 = vmatpush1.bf16.msra.mxu0 %v2228
      %2428 = vmatprep.subr.bf16.mxu0 0
      %2429 = vmatpush1.bf16.msra.mxu0 %v2227
      %2430 = vmatprep.subr.bf16.mxu0 0
      %2431 = vmatpush1.bf16.msra.mxu0 %v2226
      %2432 = vmatprep.subr.bf16.mxu0 0
      %2433 = vmatpush1.bf16.msra.mxu0 %v2225
      %2434 = vmatprep.subr.bf16.mxu0 0
      %2435 = vmatpush2.bf16.msra.mxu0 0
      %2436 = vmatprep.subr.bf16.mxu0 0
      %2437 = vmatpush2.bf16.msra.mxu0 0
      %2438 = vmatprep.subr.bf16.mxu0 0
      %2439 = vmatpush2.bf16.msra.mxu0 0
      %2440 = vmatprep.subr.bf16.mxu0 0
      %2441 = vmatpush2.bf16.msra.mxu0 0
      %2442 = vmatprep.subr.bf16.mxu0 0
      %2443 = vmatpush2.bf16.msra.mxu0 0
      %2444 = vmatprep.subr.bf16.mxu0 0
      %2445 = vmatpush2.bf16.msra.mxu0 0
      %2446 = vmatprep.subr.bf16.mxu0 0
      %2447 = vmatpush2.bf16.msra.mxu0 0
      %2448 = vmatprep.subr.bf16.mxu0 0
      %2449 = vmatpush2.bf16.msra.mxu0 0
      %2450 = vmatprep.mubr.bf16.mxu0 0
      %2451 = vmatmul.mubr.bf16.gmra.mxu0 %v2019
      %v2452 = vpop.f32.mrf.mxu0
      %v2453 = vadd.f32 %v2292, %v2452
      %v2454 = vpop.f32.mrf.mxu0
      %v2455 = vpop.f32.mrf.mxu0
      %v2456 = vadd.f32 %v2295, %v2455
      %v2457 = vpop.f32.mrf.mxu0
      %2458 = vmatprep.mubr.bf16.mxu0 0
      %2459 = vmatmul.mubr.bf16.gmra.mxu0 %v2022
      %v2460 = vpop.f32.mrf.mxu0
      %v2461 = vadd.f32 %v2300, %v2460
      %v2462 = vpop.f32.mrf.mxu0
      %v2463 = vpop.f32.mrf.mxu0
      %v2464 = vadd.f32 %v2303, %v2463
      %v2465 = vpop.f32.mrf.mxu0
      %2466 = vmatprep.mubr.bf16.mxu0 0
      %2467 = vmatmul.mubr.bf16.gmra.mxu0 %v2025
      %v2468 = vpop.f32.mrf.mxu0
      %v2469 = vadd.f32 %v2308, %v2468
      %v2470 = vpop.f32.mrf.mxu0
      %v2471 = vpop.f32.mrf.mxu0
      %v2472 = vadd.f32 %v2311, %v2471
      %v2473 = vpop.f32.mrf.mxu0
      %2474 = vmatprep.mubr.bf16.mxu0 0
      %2475 = vmatmul.mubr.bf16.gmra.mxu0 %v2028
      %v2476 = vpop.f32.mrf.mxu0
      %v2477 = vadd.f32 %v2316, %v2476
      %v2478 = vpop.f32.mrf.mxu0
      %v2479 = vpop.f32.mrf.mxu0
      %v2480 = vadd.f32 %v2319, %v2479
      %v2481 = vpop.f32.mrf.mxu0
      %2482 = vmatprep.mubr.bf16.mxu0 0
      %2483 = vmatmul.mubr.bf16.gmra.mxu0 %v2031
      %v2484 = vpop.f32.mrf.mxu0
      %v2485 = vadd.f32 %v2324, %v2484
      %v2486 = vpop.f32.mrf.mxu0
      %v2487 = vpop.f32.mrf.mxu0
      %v2488 = vadd.f32 %v2327, %v2487
      %v2489 = vpop.f32.mrf.mxu0
      %2490 = vmatprep.mubr.bf16.mxu0 0
      %2491 = vmatmul.mubr.bf16.gmra.mxu0 %v2034
      %v2492 = vpop.f32.mrf.mxu0
      %v2493 = vadd.f32 %v2332, %v2492
      %v2494 = vpop.f32.mrf.mxu0
      %v2495 = vpop.f32.mrf.mxu0
      %v2496 = vadd.f32 %v2335, %v2495
      %v2497 = vpop.f32.mrf.mxu0
      %2498 = vmatprep.mubr.bf16.mxu0 0
      %2499 = vmatmul.mubr.bf16.gmra.mxu0 %v2037
      %v2500 = vpop.f32.mrf.mxu0
      %v2501 = vadd.f32 %v2340, %v2500
      %v2502 = vpop.f32.mrf.mxu0
      %v2503 = vpop.f32.mrf.mxu0
      %v2504 = vadd.f32 %v2343, %v2503
      %v2505 = vpop.f32.mrf.mxu0
      %2506 = vmatprep.mubr.bf16.mxu0 0
      %2507 = vmatmul.mubr.bf16.gmra.mxu0 %v2040
      %v2508 = vpop.f32.mrf.mxu0
      %v2509 = vadd.f32 %v2348, %v2508
      %v2510 = vpop.f32.mrf.mxu0
      %v2511 = vpop.f32.mrf.mxu0
      %v2512 = vadd.f32 %v2351, %v2511
      %v2513 = vpop.f32.mrf.mxu0
      %2514 = vmatprep.mubr.bf16.mxu0 0
      %2515 = vmatmul.mubr.bf16.gmra.mxu0 %v2043
      %v2516 = vpop.f32.mrf.mxu0
      %v2517 = vadd.f32 %v2356, %v2516
      %v2518 = vpop.f32.mrf.mxu0
      %v2519 = vpop.f32.mrf.mxu0
      %v2520 = vadd.f32 %v2359, %v2519
      %v2521 = vpop.f32.mrf.mxu0
      %2522 = vmatprep.mubr.bf16.mxu0 0
      %2523 = vmatmul.mubr.bf16.gmra.mxu0 %v2046
      %v2524 = vpop.f32.mrf.mxu0
      %v2525 = vadd.f32 %v2364, %v2524
      %v2526 = vpop.f32.mrf.mxu0
      %v2527 = vpop.f32.mrf.mxu0
      %v2528 = vadd.f32 %v2367, %v2527
      %v2529 = vpop.f32.mrf.mxu0
      %2530 = vmatprep.mubr.bf16.mxu0 0
      %2531 = vmatmul.mubr.bf16.gmra.mxu0 %v2049
      %v2532 = vpop.f32.mrf.mxu0
      %v2533 = vadd.f32 %v2372, %v2532
      %v2534 = vpop.f32.mrf.mxu0
      %v2535 = vpop.f32.mrf.mxu0
      %v2536 = vadd.f32 %v2375, %v2535
      %v2537 = vpop.f32.mrf.mxu0
      %2538 = vmatprep.mubr.bf16.mxu0 0
      %2539 = vmatmul.mubr.bf16.gmra.mxu0 %v2052
      %v2540 = vpop.f32.mrf.mxu0
      %v2541 = vadd.f32 %v2380, %v2540
      %v2542 = vpop.f32.mrf.mxu0
      %v2543 = vpop.f32.mrf.mxu0
      %v2544 = vadd.f32 %v2383, %v2543
      %v2545 = vpop.f32.mrf.mxu0
      %2546 = vmatprep.mubr.bf16.mxu0 0
      %2547 = vmatmul.mubr.bf16.gmra.mxu0 %v2055
      %v2548 = vpop.f32.mrf.mxu0
      %v2549 = vadd.f32 %v2388, %v2548
      %v2550 = vpop.f32.mrf.mxu0
      %v2551 = vpop.f32.mrf.mxu0
      %v2552 = vadd.f32 %v2391, %v2551
      %v2553 = vpop.f32.mrf.mxu0
      %2554 = vmatprep.mubr.bf16.mxu0 0
      %2555 = vmatmul.mubr.bf16.gmra.mxu0 %v2058
      %v2556 = vpop.f32.mrf.mxu0
      %v2557 = vadd.f32 %v2396, %v2556
      %v2558 = vpop.f32.mrf.mxu0
      %v2559 = vpop.f32.mrf.mxu0
      %v2560 = vadd.f32 %v2399, %v2559
      %v2561 = vpop.f32.mrf.mxu0
      %2562 = vmatprep.mubr.bf16.mxu0 0
      %2563 = vmatmul.mubr.bf16.gmra.mxu0 %v2061
      %v2564 = vpop.f32.mrf.mxu0
      %v2565 = vadd.f32 %v2404, %v2564
      %v2566 = vpop.f32.mrf.mxu0
      %v2567 = vpop.f32.mrf.mxu0
      %v2568 = vadd.f32 %v2407, %v2567
      %v2569 = vpop.f32.mrf.mxu0
      %2570 = vmatprep.mubr.bf16.mxu0 0
      %2571 = vmatmul.mubr.bf16.gmra.mxu0 %v2064
      %v2572 = vpop.f32.mrf.mxu0
      %v2573 = vadd.f32 %v2412, %v2572
      %v2574 = vpop.f32.mrf.mxu0
      %v2575 = vpop.f32.mrf.mxu0
      %v2576 = vadd.f32 %v2415, %v2575
      %v2577 = vpop.f32.mrf.mxu0
      %2578 = vdwg.mxu0
      %v2579 = vld [vmem:[%s214] sm:$0xee]
      %v2580 = vld [vmem:[%s214 + $0x8] sm:$0xe]
      %v2581 = vld [vmem:[%s214 + $0x24] sm:$0xee]
      %v2582 = vld [vmem:[%s214 + $0x2c] sm:$0xe]
      %v2583 = vld [vmem:[%s214 + $0x48] sm:$0xee]
      %v2584 = vld [vmem:[%s214 + $0x50] sm:$0xe]
      %v2585 = vld [vmem:[%s214 + $0x6c] sm:$0xee]
      %v2586 = vld [vmem:[%s214 + $0x74] sm:$0xe]
      %v2587 = vld [vmem:[%s214 + $0x90] sm:$0xee]
      %v2588 = vld [vmem:[%s214 + $0x98] sm:$0xe]
      %v2589 = vld [vmem:[%s214 + $0xb4] sm:$0xee]
      %v2590 = vld [vmem:[%s214 + $0xbc] sm:$0xe]
      %v2591 = vld [vmem:[%s214 + $0xd8] sm:$0xee]
      %v2592 = vld [vmem:[%s214 + $0xe0] sm:$0xe]
      %v2593 = vld [vmem:[%s214 + $0xfc] sm:$0xee]
      %v2594 = vld [vmem:[%s214 + $0x104] sm:$0xe]
      %v2595 = vld [vmem:[%s214 + $0x120] sm:$0xee]
      %v2596 = vld [vmem:[%s214 + $0x128] sm:$0xe]
      %v2597 = vld [vmem:[%s214 + $0x144] sm:$0xee]
      %v2598 = vld [vmem:[%s214 + $0x14c] sm:$0xe]
      %v2599 = vld [vmem:[%s214 + $0x168] sm:$0xee]
      %v2600 = vld [vmem:[%s214 + $0x170] sm:$0xe]
      %v2601 = vld [vmem:[%s214 + $0x18c] sm:$0xee]
      %v2602 = vld [vmem:[%s214 + $0x194] sm:$0xe]
      %v2603 = vld [vmem:[%s214 + $0x1b0] sm:$0xee]
      %v2604 = vld [vmem:[%s214 + $0x1b8] sm:$0xe]
      %v2605 = vld [vmem:[%s214 + $0x1d4] sm:$0xee]
      %v2606 = vld [vmem:[%s214 + $0x1dc] sm:$0xe]
      %v2607 = vld [vmem:[%s214 + $0x1f8] sm:$0xee]
      %v2608 = vld [vmem:[%s214 + $0x200] sm:$0xe]
      %v2609 = vld [vmem:[%s214 + $0x21c] sm:$0xee]
      %v2610 = vld [vmem:[%s214 + $0x224] sm:$0xe]
      %vm2675 = vcmask 1042432
      %vm2676 = vcmask 1046532
      %vm2677 = vmor %vm2675, %vm2676
      %v2678 = vrot.slane %v2579, 5
      %v2679 = vrot.slane %v2678, 4
      %v2680 = vrot.slane %v237, 5
      %v2681 = vsel %vm2677, %v2679, %v2680
      %v2682 = vrot.slane %v2580, 5
      %v2683 = vrot.slane %v2682, 4
      %v2684 = vrot.slane %v238, 5
      %v2685 = vsel %vm2677, %v2683, %v2684
      %v2686 = vrot.slane %v2680, 4
      %v2687 = vrot.slane %v347, 5
      %v2688 = vsel %vm2677, %v2686, %v2687
      %v2689 = vrot.slane %v2684, 4
      %v2690 = vrot.slane %v348, 5
      %v2691 = vsel %vm2677, %v2689, %v2690
      %v2692 = vrot.slane %v2581, 5
      %v2693 = vrot.slane %v2692, 4
      %v2694 = vrot.slane %v241, 5
      %v2695 = vsel %vm2677, %v2693, %v2694
      %v2696 = vrot.slane %v2582, 5
      %v2697 = vrot.slane %v2696, 4
      %v2698 = vrot.slane %v242, 5
      %v2699 = vsel %vm2677, %v2697, %v2698
      %v2700 = vrot.slane %v2694, 4
      %v2701 = vrot.slane %v349, 5
      %v2702 = vsel %vm2677, %v2700, %v2701
      %v2703 = vrot.slane %v2698, 4
      %v2704 = vrot.slane %v350, 5
      %v2705 = vsel %vm2677, %v2703, %v2704
      %v2706 = vrot.slane %v2583, 5
      %v2707 = vrot.slane %v2706, 4
      %v2708 = vrot.slane %v245, 5
      %v2709 = vsel %vm2677, %v2707, %v2708
      %v2710 = vrot.slane %v2584, 5
      %v2711 = vrot.slane %v2710, 4
      %v2712 = vrot.slane %v246, 5
      %v2713 = vsel %vm2677, %v2711, %v2712
      %v2714 = vrot.slane %v2708, 4
      %v2715 = vrot.slane %v351, 5
      %v2716 = vsel %vm2677, %v2714, %v2715
      %v2717 = vrot.slane %v2712, 4
      %v2718 = vrot.slane %v352, 5
      %v2719 = vsel %vm2677, %v2717, %v2718
      %v2720 = vrot.slane %v2585, 5
      %v2721 = vrot.slane %v2720, 4
      %v2722 = vrot.slane %v249, 5
      %v2723 = vsel %vm2677, %v2721, %v2722
      %v2724 = vrot.slane %v2586, 5
      %v2725 = vrot.slane %v2724, 4
      %v2726 = vrot.slane %v250, 5
      %v2727 = vsel %vm2677, %v2725, %v2726
      %v2728 = vrot.slane %v2722, 4
      %v2729 = vrot.slane %v353, 5
      %v2730 = vsel %vm2677, %v2728, %v2729
      %v2731 = vrot.slane %v2726, 4
      %v2732 = vrot.slane %v354, 5
      %v2733 = vsel %vm2677, %v2731, %v2732
      %v2734 = vrot.slane %v2587, 5
      %v2735 = vrot.slane %v2734, 4
      %v2736 = vrot.slane %v253, 5
      %v2737 = vsel %vm2677, %v2735, %v2736
      %v2738 = vrot.slane %v2588, 5
      %v2739 = vrot.slane %v2738, 4
      %v2740 = vrot.slane %v254, 5
      %v2741 = vsel %vm2677, %v2739, %v2740
      %v2742 = vrot.slane %v2736, 4
      %v2743 = vrot.slane %v355, 5
      %v2744 = vsel %vm2677, %v2742, %v2743
      %v2745 = vrot.slane %v2740, 4
      %v2746 = vrot.slane %v356, 5
      %v2747 = vsel %vm2677, %v2745, %v2746
      %v2748 = vrot.slane %v2589, 5
      %v2749 = vrot.slane %v2748, 4
      %v2750 = vrot.slane %v257, 5
      %v2751 = vsel %vm2677, %v2749, %v2750
      %v2752 = vrot.slane %v2590, 5
      %v2753 = vrot.slane %v2752, 4
      %v2754 = vrot.slane %v258, 5
      %v2755 = vsel %vm2677, %v2753, %v2754
      %v2756 = vrot.slane %v2750, 4
      %v2757 = vrot.slane %v357, 5
      %v2758 = vsel %vm2677, %v2756, %v2757
      %v2759 = vrot.slane %v2754, 4
      %v2760 = vrot.slane %v358, 5
      %v2761 = vsel %vm2677, %v2759, %v2760
      %v2762 = vrot.slane %v2591, 5
      %v2763 = vrot.slane %v2762, 4
      %v2764 = vrot.slane %v261, 5
      %v2765 = vsel %vm2677, %v2763, %v2764
      %v2766 = vrot.slane %v2592, 5
      %v2767 = vrot.slane %v2766, 4
      %v2768 = vrot.slane %v262, 5
      %v2769 = vsel %vm2677, %v2767, %v2768
      %v2770 = vrot.slane %v2764, 4
      %v2771 = vrot.slane %v359, 5
      %v2772 = vsel %vm2677, %v2770, %v2771
      %v2773 = vrot.slane %v2768, 4
      %v2774 = vrot.slane %v360, 5
      %v2775 = vsel %vm2677, %v2773, %v2774
      %v2776 = vrot.slane %v2593, 5
      %v2777 = vrot.slane %v2776, 4
      %v2778 = vrot.slane %v265, 5
      %v2779 = vsel %vm2677, %v2777, %v2778
      %v2780 = vrot.slane %v2594, 5
      %v2781 = vrot.slane %v2780, 4
      %v2782 = vrot.slane %v266, 5
      %v2783 = vsel %vm2677, %v2781, %v2782
      %v2784 = vrot.slane %v2778, 4
      %v2785 = vrot.slane %v361, 5
      %v2786 = vsel %vm2677, %v2784, %v2785
      %v2787 = vrot.slane %v2782, 4
      %v2788 = vrot.slane %v362, 5
      %v2789 = vsel %vm2677, %v2787, %v2788
      %v2790 = vrot.slane %v2595, 5
      %v2791 = vrot.slane %v2790, 4
      %v2792 = vrot.slane %v269, 5
      %v2793 = vsel %vm2677, %v2791, %v2792
      %v2794 = vrot.slane %v2596, 5
      %v2795 = vrot.slane %v2794, 4
      %v2796 = vrot.slane %v270, 5
      %v2797 = vsel %vm2677, %v2795, %v2796
      %v2798 = vrot.slane %v2792, 4
      %v2799 = vrot.slane %v363, 5
      %v2800 = vsel %vm2677, %v2798, %v2799
      %v2801 = vrot.slane %v2796, 4
      %v2802 = vrot.slane %v364, 5
      %v2803 = vsel %vm2677, %v2801, %v2802
      %v2804 = vrot.slane %v2597, 5
      %v2805 = vrot.slane %v2804, 4
      %v2806 = vrot.slane %v273, 5
      %v2807 = vsel %vm2677, %v2805, %v2806
      %v2808 = vrot.slane %v2598, 5
      %v2809 = vrot.slane %v2808, 4
      %v2810 = vrot.slane %v274, 5
      %v2811 = vsel %vm2677, %v2809, %v2810
      %v2812 = vrot.slane %v2806, 4
      %v2813 = vrot.slane %v365, 5
      %v2814 = vsel %vm2677, %v2812, %v2813
      %v2815 = vrot.slane %v2810, 4
      %v2816 = vrot.slane %v366, 5
      %v2817 = vsel %vm2677, %v2815, %v2816
      %v2818 = vrot.slane %v2599, 5
      %v2819 = vrot.slane %v2818, 4
      %v2820 = vrot.slane %v277, 5
      %v2821 = vsel %vm2677, %v2819, %v2820
      %v2822 = vrot.slane %v2600, 5
      %v2823 = vrot.slane %v2822, 4
      %v2824 = vrot.slane %v278, 5
      %v2825 = vsel %vm2677, %v2823, %v2824
      %v2826 = vrot.slane %v2820, 4
      %v2827 = vrot.slane %v367, 5
      %v2828 = vsel %vm2677, %v2826, %v2827
      %v2829 = vrot.slane %v2824, 4
      %v2830 = vrot.slane %v368, 5
      %v2831 = vsel %vm2677, %v2829, %v2830
      %v2832 = vrot.slane %v2601, 5
      %v2833 = vrot.slane %v2832, 4
      %v2834 = vrot.slane %v281, 5
      %v2835 = vsel %vm2677, %v2833, %v2834
      %v2836 = vrot.slane %v2602, 5
      %v2837 = vrot.slane %v2836, 4
      %v2838 = vrot.slane %v282, 5
      %v2839 = vsel %vm2677, %v2837, %v2838
      %v2840 = vrot.slane %v2834, 4
      %v2841 = vrot.slane %v369, 5
      %v2842 = vsel %vm2677, %v2840, %v2841
      %v2843 = vrot.slane %v2838, 4
      %v2844 = vrot.slane %v370, 5
      %v2845 = vsel %vm2677, %v2843, %v2844
      %v2846 = vrot.slane %v2603, 5
      %v2847 = vrot.slane %v2846, 4
      %v2848 = vrot.slane %v285, 5
      %v2849 = vsel %vm2677, %v2847, %v2848
      %v2850 = vrot.slane %v2604, 5
      %v2851 = vrot.slane %v2850, 4
      %v2852 = vrot.slane %v286, 5
      %v2853 = vsel %vm2677, %v2851, %v2852
      %v2854 = vrot.slane %v2848, 4
      %v2855 = vrot.slane %v371, 5
      %v2856 = vsel %vm2677, %v2854, %v2855
      %v2857 = vrot.slane %v2852, 4
      %v2858 = vrot.slane %v372, 5
      %v2859 = vsel %vm2677, %v2857, %v2858
      %v2860 = vrot.slane %v2605, 5
      %v2861 = vrot.slane %v2860, 4
      %v2862 = vrot.slane %v289, 5
      %v2863 = vsel %vm2677, %v2861, %v2862
      %v2864 = vrot.slane %v2606, 5
      %v2865 = vrot.slane %v2864, 4
      %v2866 = vrot.slane %v290, 5
      %v2867 = vsel %vm2677, %v2865, %v2866
      %v2868 = vrot.slane %v2862, 4
      %v2869 = vrot.slane %v373, 5
      %v2870 = vsel %vm2677, %v2868, %v2869
      %v2871 = vrot.slane %v2866, 4
      %v2872 = vrot.slane %v374, 5
      %v2873 = vsel %vm2677, %v2871, %v2872
      %v2874 = vrot.slane %v2607, 5
      %v2875 = vrot.slane %v2874, 4
      %v2876 = vrot.slane %v293, 5
      %v2877 = vsel %vm2677, %v2875, %v2876
      %v2878 = vrot.slane %v2608, 5
      %v2879 = vrot.slane %v2878, 4
      %v2880 = vrot.slane %v294, 5
      %v2881 = vsel %vm2677, %v2879, %v2880
      %v2882 = vrot.slane %v2876, 4
      %v2883 = vrot.slane %v375, 5
      %v2884 = vsel %vm2677, %v2882, %v2883
      %v2885 = vrot.slane %v2880, 4
      %v2886 = vrot.slane %v376, 5
      %v2887 = vsel %vm2677, %v2885, %v2886
      %v2888 = vrot.slane %v2609, 5
      %v2889 = vrot.slane %v2888, 4
      %v2890 = vrot.slane %v297, 5
      %v2891 = vsel %vm2677, %v2889, %v2890
      %v2892 = vrot.slane %v2610, 5
      %v2893 = vrot.slane %v2892, 4
      %v2894 = vrot.slane %v298, 5
      %v2895 = vsel %vm2677, %v2893, %v2894
      %v2896 = vrot.slane %v2890, 4
      %v2897 = vrot.slane %v377, 5
      %v2898 = vsel %vm2677, %v2896, %v2897
      %v2899 = vrot.slane %v2894, 4
      %v2900 = vrot.slane %v378, 5
      %v2901 = vsel %vm2677, %v2899, %v2900
      %s2902 = scalar_lea.vmem %s1, 384
      %v2903 = vld [vmem:[%s2902] sm:$0xf]
      %v2904 = vld [vmem:[%s2902 + $0x4] sm:$0xf]
      %v2905 = vld [vmem:[%s2902 + $0x8] sm:$0xf]
      %v2906 = vld [vmem:[%s2902 + $0xc] sm:$0xf]
      %v2907 = vld [vmem:[%s2902 + $0x10] sm:$0xf]
      %v2908 = vld [vmem:[%s2902 + $0x14] sm:$0xf]
      %v2909 = vld [vmem:[%s2902 + $0x18] sm:$0xf]
      %v2910 = vld [vmem:[%s2902 + $0x1c] sm:$0xf]
      %v2911 = vld [vmem:[%s2902 + $0x20] sm:$0xf]
      %v2912 = vld [vmem:[%s2902 + $0x24] sm:$0xf]
      %v2913 = vld [vmem:[%s2902 + $0x28] sm:$0xf]
      %v2914 = vld [vmem:[%s2902 + $0x2c] sm:$0xf]
      %v2915 = vld [vmem:[%s2902 + $0x30] sm:$0xf]
      %v2916 = vld [vmem:[%s2902 + $0x34] sm:$0xf]
      %v2917 = vld [vmem:[%s2902 + $0x38] sm:$0xf]
      %v2918 = vld [vmem:[%s2902 + $0x3c] sm:$0xf]
      %v2919 = vld [vmem:[%s2902 + $0x40] sm:$0xf]
      %v2920 = vld [vmem:[%s2902 + $0x44] sm:$0xf]
      %v2921 = vld [vmem:[%s2902 + $0x48] sm:$0xf]
      %v2922 = vld [vmem:[%s2902 + $0x4c] sm:$0xf]
      %v2923 = vld [vmem:[%s2902 + $0x50] sm:$0xf]
      %v2924 = vld [vmem:[%s2902 + $0x54] sm:$0xf]
      %v2925 = vld [vmem:[%s2902 + $0x58] sm:$0xf]
      %v2926 = vld [vmem:[%s2902 + $0x5c] sm:$0xf]
      %v2927 = vld [vmem:[%s2902 + $0x60] sm:$0xf]
      %v2928 = vld [vmem:[%s2902 + $0x64] sm:$0xf]
      %v2929 = vld [vmem:[%s2902 + $0x68] sm:$0xf]
      %v2930 = vld [vmem:[%s2902 + $0x6c] sm:$0xf]
      %v2931 = vld [vmem:[%s2902 + $0x70] sm:$0xf]
      %v2932 = vld [vmem:[%s2902 + $0x74] sm:$0xf]
      %v2933 = vld [vmem:[%s2902 + $0x78] sm:$0xf]
      %v2934 = vld [vmem:[%s2902 + $0x7c] sm:$0xf]
      %v2935 = vld [vmem:[%s2902 + $0x80] sm:$0xf]
      %v2936 = vld [vmem:[%s2902 + $0x84] sm:$0xf]
      %v2937 = vld [vmem:[%s2902 + $0x88] sm:$0xf]
      %v2938 = vld [vmem:[%s2902 + $0x8c] sm:$0xf]
      %v2939 = vld [vmem:[%s2902 + $0x90] sm:$0xf]
      %v2940 = vld [vmem:[%s2902 + $0x94] sm:$0xf]
      %v2941 = vld [vmem:[%s2902 + $0x98] sm:$0xf]
      %v2942 = vld [vmem:[%s2902 + $0x9c] sm:$0xf]
      %v2943 = vld [vmem:[%s2902 + $0xa0] sm:$0xf]
      %v2944 = vld [vmem:[%s2902 + $0xa4] sm:$0xf]
      %v2945 = vld [vmem:[%s2902 + $0xa8] sm:$0xf]
      %v2946 = vld [vmem:[%s2902 + $0xac] sm:$0xf]
      %v2947 = vld [vmem:[%s2902 + $0xb0] sm:$0xf]
      %v2948 = vld [vmem:[%s2902 + $0xb4] sm:$0xf]
      %v2949 = vld [vmem:[%s2902 + $0xb8] sm:$0xf]
      %v2950 = vld [vmem:[%s2902 + $0xbc] sm:$0xf]
      %v2951 = vunpack.c.l.b16 %v2681
      %v2952 = vunpack.c.h.b16 %v2681
      %v2953 = vunpack.c.l.b16 %v2685
      %v2954 = vunpack.c.l.b16 %v2688
      %v2955 = vunpack.c.h.b16 %v2688
      %v2956 = vunpack.c.l.b16 %v2691
      %v2957 = vunpack.c.l.b16 %v2695
      %v2958 = vunpack.c.h.b16 %v2695
      %v2959 = vunpack.c.l.b16 %v2699
      %v2960 = vunpack.c.l.b16 %v2702
      %v2961 = vunpack.c.h.b16 %v2702
      %v2962 = vunpack.c.l.b16 %v2705
      %v2963 = vunpack.c.l.b16 %v2709
      %v2964 = vunpack.c.h.b16 %v2709
      %v2965 = vunpack.c.l.b16 %v2713
      %v2966 = vunpack.c.l.b16 %v2716
      %v2967 = vunpack.c.h.b16 %v2716
      %v2968 = vunpack.c.l.b16 %v2719
      %v2969 = vunpack.c.l.b16 %v2723
      %v2970 = vunpack.c.h.b16 %v2723
      %v2971 = vunpack.c.l.b16 %v2727
      %v2972 = vunpack.c.l.b16 %v2730
      %v2973 = vunpack.c.h.b16 %v2730
      %v2974 = vunpack.c.l.b16 %v2733
      %v2975 = vunpack.c.l.b16 %v2737
      %v2976 = vunpack.c.h.b16 %v2737
      %v2977 = vunpack.c.l.b16 %v2741
      %v2978 = vunpack.c.l.b16 %v2744
      %v2979 = vunpack.c.h.b16 %v2744
      %v2980 = vunpack.c.l.b16 %v2747
      %v2981 = vunpack.c.l.b16 %v2751
      %v2982 = vunpack.c.h.b16 %v2751
      %v2983 = vunpack.c.l.b16 %v2755
      %v2984 = vunpack.c.l.b16 %v2758
      %v2985 = vunpack.c.h.b16 %v2758
      %v2986 = vunpack.c.l.b16 %v2761
      %v2987 = vunpack.c.l.b16 %v2765
      %v2988 = vunpack.c.h.b16 %v2765
      %v2989 = vunpack.c.l.b16 %v2769
      %v2990 = vunpack.c.l.b16 %v2772
      %v2991 = vunpack.c.h.b16 %v2772
      %v2992 = vunpack.c.l.b16 %v2775
      %v2993 = vunpack.c.l.b16 %v2779
      %v2994 = vunpack.c.h.b16 %v2779
      %v2995 = vunpack.c.l.b16 %v2783
      %v2996 = vunpack.c.l.b16 %v2786
      %v2997 = vunpack.c.h.b16 %v2786
      %v2998 = vunpack.c.l.b16 %v2789
      %v2999 = vunpack.c.l.b16 %v2793
      %v3000 = vunpack.c.h.b16 %v2793
      %v3001 = vunpack.c.l.b16 %v2797
      %v3002 = vunpack.c.l.b16 %v2800
      %v3003 = vunpack.c.h.b16 %v2800
      %v3004 = vunpack.c.l.b16 %v2803
      %v3005 = vunpack.c.l.b16 %v2807
      %v3006 = vunpack.c.h.b16 %v2807
      %v3007 = vunpack.c.l.b16 %v2811
      %v3008 = vunpack.c.l.b16 %v2814
      %v3009 = vunpack.c.h.b16 %v2814
      %v3010 = vunpack.c.l.b16 %v2817
      %v3011 = vunpack.c.l.b16 %v2821
      %v3012 = vunpack.c.h.b16 %v2821
      %v3013 = vunpack.c.l.b16 %v2825
      %v3014 = vunpack.c.l.b16 %v2828
      %v3015 = vunpack.c.h.b16 %v2828
      %v3016 = vunpack.c.l.b16 %v2831
      %v3017 = vunpack.c.l.b16 %v2835
      %v3018 = vunpack.c.h.b16 %v2835
      %v3019 = vunpack.c.l.b16 %v2839
      %v3020 = vunpack.c.l.b16 %v2842
      %v3021 = vunpack.c.h.b16 %v2842
      %v3022 = vunpack.c.l.b16 %v2845
      %v3023 = vunpack.c.l.b16 %v2849
      %v3024 = vunpack.c.h.b16 %v2849
      %v3025 = vunpack.c.l.b16 %v2853
      %v3026 = vunpack.c.l.b16 %v2856
      %v3027 = vunpack.c.h.b16 %v2856
      %v3028 = vunpack.c.l.b16 %v2859
      %v3029 = vunpack.c.l.b16 %v2863
      %v3030 = vunpack.c.h.b16 %v2863
      %v3031 = vunpack.c.l.b16 %v2867
      %v3032 = vunpack.c.l.b16 %v2870
      %v3033 = vunpack.c.h.b16 %v2870
      %v3034 = vunpack.c.l.b16 %v2873
      %v3035 = vunpack.c.l.b16 %v2877
      %v3036 = vunpack.c.h.b16 %v2877
      %v3037 = vunpack.c.l.b16 %v2881
      %v3038 = vunpack.c.l.b16 %v2884
      %v3039 = vunpack.c.h.b16 %v2884
      %v3040 = vunpack.c.l.b16 %v2887
      %v3041 = vunpack.c.l.b16 %v2891
      %v3042 = vunpack.c.h.b16 %v2891
      %v3043 = vunpack.c.l.b16 %v2895
      %v3044 = vunpack.c.l.b16 %v2898
      %v3045 = vunpack.c.h.b16 %v2898
      %v3046 = vunpack.c.l.b16 %v2901
      %v3047 = vpack.c.b16 %v2954, %v2951
      %v3048 = vpack.c.b16 %v2955, %v2952
      %v3049 = vpack.c.b16 %v2956, %v2953
      %v3050 = vpack.c.b16 %v2960, %v2957
      %v3051 = vpack.c.b16 %v2961, %v2958
      %v3052 = vpack.c.b16 %v2962, %v2959
      %v3053 = vpack.c.b16 %v2966, %v2963
      %v3054 = vpack.c.b16 %v2967, %v2964
      %v3055 = vpack.c.b16 %v2968, %v2965
      %v3056 = vpack.c.b16 %v2972, %v2969
      %v3057 = vpack.c.b16 %v2973, %v2970
      %v3058 = vpack.c.b16 %v2974, %v2971
      %v3059 = vpack.c.b16 %v2978, %v2975
      %v3060 = vpack.c.b16 %v2979, %v2976
      %v3061 = vpack.c.b16 %v2980, %v2977
      %v3062 = vpack.c.b16 %v2984, %v2981
      %v3063 = vpack.c.b16 %v2985, %v2982
      %v3064 = vpack.c.b16 %v2986, %v2983
      %v3065 = vpack.c.b16 %v2990, %v2987
      %v3066 = vpack.c.b16 %v2991, %v2988
      %v3067 = vpack.c.b16 %v2992, %v2989
      %v3068 = vpack.c.b16 %v2996, %v2993
      %v3069 = vpack.c.b16 %v2997, %v2994
      %v3070 = vpack.c.b16 %v2998, %v2995
      %v3071 = vpack.c.b16 %v3002, %v2999
      %v3072 = vpack.c.b16 %v3003, %v3000
      %v3073 = vpack.c.b16 %v3004, %v3001
      %v3074 = vpack.c.b16 %v3008, %v3005
      %v3075 = vpack.c.b16 %v3009, %v3006
      %v3076 = vpack.c.b16 %v3010, %v3007
      %v3077 = vpack.c.b16 %v3014, %v3011
      %v3078 = vpack.c.b16 %v3015, %v3012
      %v3079 = vpack.c.b16 %v3016, %v3013
      %v3080 = vpack.c.b16 %v3020, %v3017
      %v3081 = vpack.c.b16 %v3021, %v3018
      %v3082 = vpack.c.b16 %v3022, %v3019
      %v3083 = vpack.c.b16 %v3026, %v3023
      %v3084 = vpack.c.b16 %v3027, %v3024
      %v3085 = vpack.c.b16 %v3028, %v3025
      %v3086 = vpack.c.b16 %v3032, %v3029
      %v3087 = vpack.c.b16 %v3033, %v3030
      %v3088 = vpack.c.b16 %v3034, %v3031
      %v3089 = vpack.c.b16 %v3038, %v3035
      %v3090 = vpack.c.b16 %v3039, %v3036
      %v3091 = vpack.c.b16 %v3040, %v3037
      %v3092 = vpack.c.b16 %v3044, %v3041
      %v3093 = vpack.c.b16 %v3045, %v3042
      %v3094 = vpack.c.b16 %v3046, %v3043
      %v3191 = vunpack.c.l.b16 %v2903
      %v3192 = vunpack.c.l.b16 %v2904
      %v3193 = vunpack.c.l.b16 %v2905
      %v3194 = vunpack.c.l.b16 %v2906
      %v3195 = vunpack.c.l.b16 %v2907
      %v3196 = vunpack.c.l.b16 %v2908
      %v3197 = vunpack.c.l.b16 %v2909
      %v3198 = vunpack.c.l.b16 %v2910
      %v3199 = vunpack.c.l.b16 %v2911
      %v3200 = vunpack.c.l.b16 %v2912
      %v3201 = vunpack.c.l.b16 %v2913
      %v3202 = vunpack.c.l.b16 %v2914
      %v3203 = vunpack.c.l.b16 %v2915
      %v3204 = vunpack.c.l.b16 %v2916
      %v3205 = vunpack.c.l.b16 %v2917
      %v3206 = vunpack.c.l.b16 %v2918
      %v3207 = vunpack.c.l.b16 %v2919
      %v3208 = vunpack.c.l.b16 %v2920
      %v3209 = vunpack.c.l.b16 %v2921
      %v3210 = vunpack.c.l.b16 %v2922
      %v3211 = vunpack.c.l.b16 %v2923
      %v3212 = vunpack.c.l.b16 %v2924
      %v3213 = vunpack.c.l.b16 %v2925
      %v3214 = vunpack.c.l.b16 %v2926
      %v3215 = vunpack.c.l.b16 %v2927
      %v3216 = vunpack.c.l.b16 %v2928
      %v3217 = vunpack.c.l.b16 %v2929
      %v3218 = vunpack.c.l.b16 %v2930
      %v3219 = vunpack.c.l.b16 %v2931
      %v3220 = vunpack.c.l.b16 %v2932
      %v3221 = vunpack.c.l.b16 %v2933
      %v3222 = vunpack.c.l.b16 %v2934
      %v3223 = vunpack.c.l.b16 %v2935
      %v3224 = vunpack.c.l.b16 %v2936
      %v3225 = vunpack.c.l.b16 %v2937
      %v3226 = vunpack.c.l.b16 %v2938
      %v3227 = vunpack.c.l.b16 %v2939
      %v3228 = vunpack.c.l.b16 %v2940
      %v3229 = vunpack.c.l.b16 %v2941
      %v3230 = vunpack.c.l.b16 %v2942
      %v3231 = vunpack.c.l.b16 %v2943
      %v3232 = vunpack.c.l.b16 %v2944
      %v3233 = vunpack.c.l.b16 %v2945
      %v3234 = vunpack.c.l.b16 %v2946
      %v3235 = vunpack.c.l.b16 %v2947
      %v3236 = vunpack.c.l.b16 %v2948
      %v3237 = vunpack.c.l.b16 %v2949
      %v3238 = vunpack.c.l.b16 %v2950
      %v3239 = vpack.c.b16 %v3192, %v3191
      %v3240 = vpack.c.b16 %v3194, %v3193
      %v3241 = vpack.c.b16 %v3196, %v3195
      %v3242 = vpack.c.b16 %v3198, %v3197
      %v3243 = vpack.c.b16 %v3200, %v3199
      %v3244 = vpack.c.b16 %v3202, %v3201
      %v3245 = vpack.c.b16 %v3204, %v3203
      %v3246 = vpack.c.b16 %v3206, %v3205
      %v3247 = vpack.c.b16 %v3208, %v3207
      %v3248 = vpack.c.b16 %v3210, %v3209
      %v3249 = vpack.c.b16 %v3212, %v3211
      %v3250 = vpack.c.b16 %v3214, %v3213
      %v3251 = vpack.c.b16 %v3216, %v3215
      %v3252 = vpack.c.b16 %v3218, %v3217
      %v3253 = vpack.c.b16 %v3220, %v3219
      %v3254 = vpack.c.b16 %v3222, %v3221
      %v3255 = vpack.c.b16 %v3224, %v3223
      %v3256 = vpack.c.b16 %v3226, %v3225
      %v3257 = vpack.c.b16 %v3228, %v3227
      %v3258 = vpack.c.b16 %v3230, %v3229
      %v3259 = vpack.c.b16 %v3232, %v3231
      %v3260 = vpack.c.b16 %v3234, %v3233
      %v3261 = vpack.c.b16 %v3236, %v3235
      %v3262 = vpack.c.b16 %v3238, %v3237
      %3287 = vmatprep.subr.bf16.mxu0 0
      %3288 = vmatpush1.bf16.msra.mxu0 %v3246
      %3289 = vmatprep.subr.bf16.mxu0 0
      %3290 = vmatpush1.bf16.msra.mxu0 %v3245
      %3291 = vmatprep.subr.bf16.mxu0 0
      %3292 = vmatpush1.bf16.msra.mxu0 %v3244
      %3293 = vmatprep.subr.bf16.mxu0 0
      %3294 = vmatpush1.bf16.msra.mxu0 %v3243
      %3295 = vmatprep.subr.bf16.mxu0 0
      %3296 = vmatpush1.bf16.msra.mxu0 %v3242
      %3297 = vmatprep.subr.bf16.mxu0 0
      %3298 = vmatpush1.bf16.msra.mxu0 %v3241
      %3299 = vmatprep.subr.bf16.mxu0 0
      %3300 = vmatpush1.bf16.msra.mxu0 %v3240
      %3301 = vmatprep.subr.bf16.mxu0 0
      %3302 = vmatpush1.bf16.msra.mxu0 %v3239
      %3303 = vmatprep.subr.bf16.mxu0 0
      %3304 = vmatpush2.bf16.msra.mxu0 %v3254
      %3305 = vmatprep.subr.bf16.mxu0 0
      %3306 = vmatpush2.bf16.msra.mxu0 %v3253
      %3307 = vmatprep.subr.bf16.mxu0 0
      %3308 = vmatpush2.bf16.msra.mxu0 %v3252
      %3309 = vmatprep.subr.bf16.mxu0 0
      %3310 = vmatpush2.bf16.msra.mxu0 %v3251
      %3311 = vmatprep.subr.bf16.mxu0 0
      %3312 = vmatpush2.bf16.msra.mxu0 %v3250
      %3313 = vmatprep.subr.bf16.mxu0 0
      %3314 = vmatpush2.bf16.msra.mxu0 %v3249
      %3315 = vmatprep.subr.bf16.mxu0 0
      %3316 = vmatpush2.bf16.msra.mxu0 %v3248
      %3317 = vmatprep.subr.bf16.mxu0 0
      %3318 = vmatpush2.bf16.msra.mxu0 %v3247
      %3319 = vmatprep.mubr.bf16.mxu0 %v3048
      %3320 = vmatmul.mubr.bf16.gmra.mxu0 %v3047
      %v3321 = vpop.f32.mrf.mxu0
      %v3322 = vadd.f32 0.0, %v3321
      %v3323 = vpop.f32.mrf.mxu0
      %v3324 = vpop.f32.mrf.mxu0
      %v3325 = vadd.f32 0.0, %v3324
      %v3326 = vpop.f32.mrf.mxu0
      %3327 = vmatprep.mubr.bf16.mxu0 %v3051
      %3328 = vmatmul.mubr.bf16.gmra.mxu0 %v3050
      %v3329 = vpop.f32.mrf.mxu0
      %v3330 = vadd.f32 0.0, %v3329
      %v3331 = vpop.f32.mrf.mxu0
      %v3332 = vpop.f32.mrf.mxu0
      %v3333 = vadd.f32 0.0, %v3332
      %v3334 = vpop.f32.mrf.mxu0
      %3335 = vmatprep.mubr.bf16.mxu0 %v3054
      %3336 = vmatmul.mubr.bf16.gmra.mxu0 %v3053
      %v3337 = vpop.f32.mrf.mxu0
      %v3338 = vadd.f32 0.0, %v3337
      %v3339 = vpop.f32.mrf.mxu0
      %v3340 = vpop.f32.mrf.mxu0
      %v3341 = vadd.f32 0.0, %v3340
      %v3342 = vpop.f32.mrf.mxu0
      %3343 = vmatprep.mubr.bf16.mxu0 %v3057
      %3344 = vmatmul.mubr.bf16.gmra.mxu0 %v3056
      %v3345 = vpop.f32.mrf.mxu0
      %v3346 = vadd.f32 0.0, %v3345
      %v3347 = vpop.f32.mrf.mxu0
      %v3348 = vpop.f32.mrf.mxu0
      %v3349 = vadd.f32 0.0, %v3348
      %v3350 = vpop.f32.mrf.mxu0
      %3351 = vmatprep.mubr.bf16.mxu0 %v3060
      %3352 = vmatmul.mubr.bf16.gmra.mxu0 %v3059
      %v3353 = vpop.f32.mrf.mxu0
      %v3354 = vadd.f32 0.0, %v3353
      %v3355 = vpop.f32.mrf.mxu0
      %v3356 = vpop.f32.mrf.mxu0
      %v3357 = vadd.f32 0.0, %v3356
      %v3358 = vpop.f32.mrf.mxu0
      %3359 = vmatprep.mubr.bf16.mxu0 %v3063
      %3360 = vmatmul.mubr.bf16.gmra.mxu0 %v3062
      %v3361 = vpop.f32.mrf.mxu0
      %v3362 = vadd.f32 0.0, %v3361
      %v3363 = vpop.f32.mrf.mxu0
      %v3364 = vpop.f32.mrf.mxu0
      %v3365 = vadd.f32 0.0, %v3364
      %v3366 = vpop.f32.mrf.mxu0
      %3367 = vmatprep.mubr.bf16.mxu0 %v3066
      %3368 = vmatmul.mubr.bf16.gmra.mxu0 %v3065
      %v3369 = vpop.f32.mrf.mxu0
      %v3370 = vadd.f32 0.0, %v3369
      %v3371 = vpop.f32.mrf.mxu0
      %v3372 = vpop.f32.mrf.mxu0
      %v3373 = vadd.f32 0.0, %v3372
      %v3374 = vpop.f32.mrf.mxu0
      %3375 = vmatprep.mubr.bf16.mxu0 %v3069
      %3376 = vmatmul.mubr.bf16.gmra.mxu0 %v3068
      %v3377 = vpop.f32.mrf.mxu0
      %v3378 = vadd.f32 0.0, %v3377
      %v3379 = vpop.f32.mrf.mxu0
      %v3380 = vpop.f32.mrf.mxu0
      %v3381 = vadd.f32 0.0, %v3380
      %v3382 = vpop.f32.mrf.mxu0
      %3383 = vmatprep.mubr.bf16.mxu0 %v3072
      %3384 = vmatmul.mubr.bf16.gmra.mxu0 %v3071
      %v3385 = vpop.f32.mrf.mxu0
      %v3386 = vadd.f32 0.0, %v3385
      %v3387 = vpop.f32.mrf.mxu0
      %v3388 = vpop.f32.mrf.mxu0
      %v3389 = vadd.f32 0.0, %v3388
      %v3390 = vpop.f32.mrf.mxu0
      %3391 = vmatprep.mubr.bf16.mxu0 %v3075
      %3392 = vmatmul.mubr.bf16.gmra.mxu0 %v3074
      %v3393 = vpop.f32.mrf.mxu0
      %v3394 = vadd.f32 0.0, %v3393
      %v3395 = vpop.f32.mrf.mxu0
      %v3396 = vpop.f32.mrf.mxu0
      %v3397 = vadd.f32 0.0, %v3396
      %v3398 = vpop.f32.mrf.mxu0
      %3399 = vmatprep.mubr.bf16.mxu0 %v3078
      %3400 = vmatmul.mubr.bf16.gmra.mxu0 %v3077
      %v3401 = vpop.f32.mrf.mxu0
      %v3402 = vadd.f32 0.0, %v3401
      %v3403 = vpop.f32.mrf.mxu0
      %v3404 = vpop.f32.mrf.mxu0
      %v3405 = vadd.f32 0.0, %v3404
      %v3406 = vpop.f32.mrf.mxu0
      %3407 = vmatprep.mubr.bf16.mxu0 %v3081
      %3408 = vmatmul.mubr.bf16.gmra.mxu0 %v3080
      %v3409 = vpop.f32.mrf.mxu0
      %v3410 = vadd.f32 0.0, %v3409
      %v3411 = vpop.f32.mrf.mxu0
      %v3412 = vpop.f32.mrf.mxu0
      %v3413 = vadd.f32 0.0, %v3412
      %v3414 = vpop.f32.mrf.mxu0
      %3415 = vmatprep.mubr.bf16.mxu0 %v3084
      %3416 = vmatmul.mubr.bf16.gmra.mxu0 %v3083
      %v3417 = vpop.f32.mrf.mxu0
      %v3418 = vadd.f32 0.0, %v3417
      %v3419 = vpop.f32.mrf.mxu0
      %v3420 = vpop.f32.mrf.mxu0
      %v3421 = vadd.f32 0.0, %v3420
      %v3422 = vpop.f32.mrf.mxu0
      %3423 = vmatprep.mubr.bf16.mxu0 %v3087
      %3424 = vmatmul.mubr.bf16.gmra.mxu0 %v3086
      %v3425 = vpop.f32.mrf.mxu0
      %v3426 = vadd.f32 0.0, %v3425
      %v3427 = vpop.f32.mrf.mxu0
      %v3428 = vpop.f32.mrf.mxu0
      %v3429 = vadd.f32 0.0, %v3428
      %v3430 = vpop.f32.mrf.mxu0
      %3431 = vmatprep.mubr.bf16.mxu0 %v3090
      %3432 = vmatmul.mubr.bf16.gmra.mxu0 %v3089
      %v3433 = vpop.f32.mrf.mxu0
      %v3434 = vadd.f32 0.0, %v3433
      %v3435 = vpop.f32.mrf.mxu0
      %v3436 = vpop.f32.mrf.mxu0
      %v3437 = vadd.f32 0.0, %v3436
      %v3438 = vpop.f32.mrf.mxu0
      %3439 = vmatprep.mubr.bf16.mxu0 %v3093
      %3440 = vmatmul.mubr.bf16.gmra.mxu0 %v3092
      %v3441 = vpop.f32.mrf.mxu0
      %v3442 = vadd.f32 0.0, %v3441
      %v3443 = vpop.f32.mrf.mxu0
      %v3444 = vpop.f32.mrf.mxu0
      %v3445 = vadd.f32 0.0, %v3444
      %v3446 = vpop.f32.mrf.mxu0
      %3447 = vdwg.mxu0
      %3448 = vmatprep.subr.bf16.mxu0 0
      %3449 = vmatpush1.bf16.msra.mxu0 %v3262
      %3450 = vmatprep.subr.bf16.mxu0 0
      %3451 = vmatpush1.bf16.msra.mxu0 %v3261
      %3452 = vmatprep.subr.bf16.mxu0 0
      %3453 = vmatpush1.bf16.msra.mxu0 %v3260
      %3454 = vmatprep.subr.bf16.mxu0 0
      %3455 = vmatpush1.bf16.msra.mxu0 %v3259
      %3456 = vmatprep.subr.bf16.mxu0 0
      %3457 = vmatpush1.bf16.msra.mxu0 %v3258
      %3458 = vmatprep.subr.bf16.mxu0 0
      %3459 = vmatpush1.bf16.msra.mxu0 %v3257
      %3460 = vmatprep.subr.bf16.mxu0 0
      %3461 = vmatpush1.bf16.msra.mxu0 %v3256
      %3462 = vmatprep.subr.bf16.mxu0 0
      %3463 = vmatpush1.bf16.msra.mxu0 %v3255
      %3464 = vmatprep.subr.bf16.mxu0 0
      %3465 = vmatpush2.bf16.msra.mxu0 0
      %3466 = vmatprep.subr.bf16.mxu0 0
      %3467 = vmatpush2.bf16.msra.mxu0 0
      %3468 = vmatprep.subr.bf16.mxu0 0
      %3469 = vmatpush2.bf16.msra.mxu0 0
      %3470 = vmatprep.subr.bf16.mxu0 0
      %3471 = vmatpush2.bf16.msra.mxu0 0
      %3472 = vmatprep.subr.bf16.mxu0 0
      %3473 = vmatpush2.bf16.msra.mxu0 0
      %3474 = vmatprep.subr.bf16.mxu0 0
      %3475 = vmatpush2.bf16.msra.mxu0 0
      %3476 = vmatprep.subr.bf16.mxu0 0
      %3477 = vmatpush2.bf16.msra.mxu0 0
      %3478 = vmatprep.subr.bf16.mxu0 0
      %3479 = vmatpush2.bf16.msra.mxu0 0
      %3480 = vmatprep.mubr.bf16.mxu0 0
      %3481 = vmatmul.mubr.bf16.gmra.mxu0 %v3049
      %v3482 = vpop.f32.mrf.mxu0
      %v3483 = vadd.f32 %v3322, %v3482
      %v3484 = vpop.f32.mrf.mxu0
      %v3485 = vpop.f32.mrf.mxu0
      %v3486 = vadd.f32 %v3325, %v3485
      %v3487 = vpop.f32.mrf.mxu0
      %3488 = vmatprep.mubr.bf16.mxu0 0
      %3489 = vmatmul.mubr.bf16.gmra.mxu0 %v3052
      %v3490 = vpop.f32.mrf.mxu0
      %v3491 = vadd.f32 %v3330, %v3490
      %v3492 = vpop.f32.mrf.mxu0
      %v3493 = vpop.f32.mrf.mxu0
      %v3494 = vadd.f32 %v3333, %v3493
      %v3495 = vpop.f32.mrf.mxu0
      %3496 = vmatprep.mubr.bf16.mxu0 0
      %3497 = vmatmul.mubr.bf16.gmra.mxu0 %v3055
      %v3498 = vpop.f32.mrf.mxu0
      %v3499 = vadd.f32 %v3338, %v3498
      %v3500 = vpop.f32.mrf.mxu0
      %v3501 = vpop.f32.mrf.mxu0
      %v3502 = vadd.f32 %v3341, %v3501
      %v3503 = vpop.f32.mrf.mxu0
      %3504 = vmatprep.mubr.bf16.mxu0 0
      %3505 = vmatmul.mubr.bf16.gmra.mxu0 %v3058
      %v3506 = vpop.f32.mrf.mxu0
      %v3507 = vadd.f32 %v3346, %v3506
      %v3508 = vpop.f32.mrf.mxu0
      %v3509 = vpop.f32.mrf.mxu0
      %v3510 = vadd.f32 %v3349, %v3509
      %v3511 = vpop.f32.mrf.mxu0
      %3512 = vmatprep.mubr.bf16.mxu0 0
      %3513 = vmatmul.mubr.bf16.gmra.mxu0 %v3061
      %v3514 = vpop.f32.mrf.mxu0
      %v3515 = vadd.f32 %v3354, %v3514
      %v3516 = vpop.f32.mrf.mxu0
      %v3517 = vpop.f32.mrf.mxu0
      %v3518 = vadd.f32 %v3357, %v3517
      %v3519 = vpop.f32.mrf.mxu0
      %3520 = vmatprep.mubr.bf16.mxu0 0
      %3521 = vmatmul.mubr.bf16.gmra.mxu0 %v3064
      %v3522 = vpop.f32.mrf.mxu0
      %v3523 = vadd.f32 %v3362, %v3522
      %v3524 = vpop.f32.mrf.mxu0
      %v3525 = vpop.f32.mrf.mxu0
      %v3526 = vadd.f32 %v3365, %v3525
      %v3527 = vpop.f32.mrf.mxu0
      %3528 = vmatprep.mubr.bf16.mxu0 0
      %3529 = vmatmul.mubr.bf16.gmra.mxu0 %v3067
      %v3530 = vpop.f32.mrf.mxu0
      %v3531 = vadd.f32 %v3370, %v3530
      %v3532 = vpop.f32.mrf.mxu0
      %v3533 = vpop.f32.mrf.mxu0
      %v3534 = vadd.f32 %v3373, %v3533
      %v3535 = vpop.f32.mrf.mxu0
      %3536 = vmatprep.mubr.bf16.mxu0 0
      %3537 = vmatmul.mubr.bf16.gmra.mxu0 %v3070
      %v3538 = vpop.f32.mrf.mxu0
      %v3539 = vadd.f32 %v3378, %v3538
      %v3540 = vpop.f32.mrf.mxu0
      %v3541 = vpop.f32.mrf.mxu0
      %v3542 = vadd.f32 %v3381, %v3541
      %v3543 = vpop.f32.mrf.mxu0
      %3544 = vmatprep.mubr.bf16.mxu0 0
      %3545 = vmatmul.mubr.bf16.gmra.mxu0 %v3073
      %v3546 = vpop.f32.mrf.mxu0
      %v3547 = vadd.f32 %v3386, %v3546
      %v3548 = vpop.f32.mrf.mxu0
      %v3549 = vpop.f32.mrf.mxu0
      %v3550 = vadd.f32 %v3389, %v3549
      %v3551 = vpop.f32.mrf.mxu0
      %3552 = vmatprep.mubr.bf16.mxu0 0
      %3553 = vmatmul.mubr.bf16.gmra.mxu0 %v3076
      %v3554 = vpop.f32.mrf.mxu0
      %v3555 = vadd.f32 %v3394, %v3554
      %v3556 = vpop.f32.mrf.mxu0
      %v3557 = vpop.f32.mrf.mxu0
      %v3558 = vadd.f32 %v3397, %v3557
      %v3559 = vpop.f32.mrf.mxu0
      %3560 = vmatprep.mubr.bf16.mxu0 0
      %3561 = vmatmul.mubr.bf16.gmra.mxu0 %v3079
      %v3562 = vpop.f32.mrf.mxu0
      %v3563 = vadd.f32 %v3402, %v3562
      %v3564 = vpop.f32.mrf.mxu0
      %v3565 = vpop.f32.mrf.mxu0
      %v3566 = vadd.f32 %v3405, %v3565
      %v3567 = vpop.f32.mrf.mxu0
      %3568 = vmatprep.mubr.bf16.mxu0 0
      %3569 = vmatmul.mubr.bf16.gmra.mxu0 %v3082
      %v3570 = vpop.f32.mrf.mxu0
      %v3571 = vadd.f32 %v3410, %v3570
      %v3572 = vpop.f32.mrf.mxu0
      %v3573 = vpop.f32.mrf.mxu0
      %v3574 = vadd.f32 %v3413, %v3573
      %v3575 = vpop.f32.mrf.mxu0
      %3576 = vmatprep.mubr.bf16.mxu0 0
      %3577 = vmatmul.mubr.bf16.gmra.mxu0 %v3085
      %v3578 = vpop.f32.mrf.mxu0
      %v3579 = vadd.f32 %v3418, %v3578
      %v3580 = vpop.f32.mrf.mxu0
      %v3581 = vpop.f32.mrf.mxu0
      %v3582 = vadd.f32 %v3421, %v3581
      %v3583 = vpop.f32.mrf.mxu0
      %3584 = vmatprep.mubr.bf16.mxu0 0
      %3585 = vmatmul.mubr.bf16.gmra.mxu0 %v3088
      %v3586 = vpop.f32.mrf.mxu0
      %v3587 = vadd.f32 %v3426, %v3586
      %v3588 = vpop.f32.mrf.mxu0
      %v3589 = vpop.f32.mrf.mxu0
      %v3590 = vadd.f32 %v3429, %v3589
      %v3591 = vpop.f32.mrf.mxu0
      %3592 = vmatprep.mubr.bf16.mxu0 0
      %3593 = vmatmul.mubr.bf16.gmra.mxu0 %v3091
      %v3594 = vpop.f32.mrf.mxu0
      %v3595 = vadd.f32 %v3434, %v3594
      %v3596 = vpop.f32.mrf.mxu0
      %v3597 = vpop.f32.mrf.mxu0
      %v3598 = vadd.f32 %v3437, %v3597
      %v3599 = vpop.f32.mrf.mxu0
      %3600 = vmatprep.mubr.bf16.mxu0 0
      %3601 = vmatmul.mubr.bf16.gmra.mxu0 %v3094
      %v3602 = vpop.f32.mrf.mxu0
      %v3603 = vadd.f32 %v3442, %v3602
      %v3604 = vpop.f32.mrf.mxu0
      %v3605 = vpop.f32.mrf.mxu0
      %v3606 = vadd.f32 %v3445, %v3605
      %v3607 = vpop.f32.mrf.mxu0
      %3608 = vdwg.mxu0
      %v3609 = vadd.f32 %v2453, %v3483
      %v3610 = vadd.f32 %v2456, %v3486
      %v3611 = vadd.f32 %v2461, %v3491
      %v3612 = vadd.f32 %v2464, %v3494
      %v3613 = vadd.f32 %v2469, %v3499
      %v3614 = vadd.f32 %v2472, %v3502
      %v3615 = vadd.f32 %v2477, %v3507
      %v3616 = vadd.f32 %v2480, %v3510
      %v3617 = vadd.f32 %v2485, %v3515
      %v3618 = vadd.f32 %v2488, %v3518
      %v3619 = vadd.f32 %v2493, %v3523
      %v3620 = vadd.f32 %v2496, %v3526
      %v3621 = vadd.f32 %v2501, %v3531
      %v3622 = vadd.f32 %v2504, %v3534
      %v3623 = vadd.f32 %v2509, %v3539
      %v3624 = vadd.f32 %v2512, %v3542
      %v3625 = vadd.f32 %v2517, %v3547
      %v3626 = vadd.f32 %v2520, %v3550
      %v3627 = vadd.f32 %v2525, %v3555
      %v3628 = vadd.f32 %v2528, %v3558
      %v3629 = vadd.f32 %v2533, %v3563
      %v3630 = vadd.f32 %v2536, %v3566
      %v3631 = vadd.f32 %v2541, %v3571
      %v3632 = vadd.f32 %v2544, %v3574
      %v3633 = vadd.f32 %v2549, %v3579
      %v3634 = vadd.f32 %v2552, %v3582
      %v3635 = vadd.f32 %v2557, %v3587
      %v3636 = vadd.f32 %v2560, %v3590
      %v3637 = vadd.f32 %v2565, %v3595
      %v3638 = vadd.f32 %v2568, %v3598
      %v3639 = vadd.f32 %v2573, %v3603
      %v3640 = vadd.f32 %v2576, %v3606
      %v3641 = vpack.c.bf16 %v3610, %v3609
      %v3642 = vpack.c.bf16 %v3612, %v3611
      %v3643 = vpack.c.bf16 %v3614, %v3613
      %v3644 = vpack.c.bf16 %v3616, %v3615
      %v3645 = vpack.c.bf16 %v3618, %v3617
      %v3646 = vpack.c.bf16 %v3620, %v3619
      %v3647 = vpack.c.bf16 %v3622, %v3621
      %v3648 = vpack.c.bf16 %v3624, %v3623
      %v3649 = vpack.c.bf16 %v3626, %v3625
      %v3650 = vpack.c.bf16 %v3628, %v3627
      %v3651 = vpack.c.bf16 %v3630, %v3629
      %v3652 = vpack.c.bf16 %v3632, %v3631
      %v3653 = vpack.c.bf16 %v3634, %v3633
      %v3654 = vpack.c.bf16 %v3636, %v3635
      %v3655 = vpack.c.bf16 %v3638, %v3637
      %v3656 = vpack.c.bf16 %v3640, %v3639
      %v3673 = vunpack.c.l.b16 %v3641
      %v3674 = vunpack.c.h.b16 %v3641
      %v3675 = vunpack.c.l.b16 %v3642
      %v3676 = vunpack.c.h.b16 %v3642
      %v3677 = vunpack.c.l.b16 %v3643
      %v3678 = vunpack.c.h.b16 %v3643
      %v3679 = vunpack.c.l.b16 %v3644
      %v3680 = vunpack.c.h.b16 %v3644
      %v3681 = vunpack.c.l.b16 %v3645
      %v3682 = vunpack.c.h.b16 %v3645
      %v3683 = vunpack.c.l.b16 %v3646
      %v3684 = vunpack.c.h.b16 %v3646
      %v3685 = vunpack.c.l.b16 %v3647
      %v3686 = vunpack.c.h.b16 %v3647
      %v3687 = vunpack.c.l.b16 %v3648
      %v3688 = vunpack.c.h.b16 %v3648
      %v3689 = vunpack.c.l.b16 %v3649
      %v3690 = vunpack.c.h.b16 %v3649
      %v3691 = vunpack.c.l.b16 %v3650
      %v3692 = vunpack.c.h.b16 %v3650
      %v3693 = vunpack.c.l.b16 %v3651
      %v3694 = vunpack.c.h.b16 %v3651
      %v3695 = vunpack.c.l.b16 %v3652
      %v3696 = vunpack.c.h.b16 %v3652
      %v3697 = vunpack.c.l.b16 %v3653
      %v3698 = vunpack.c.h.b16 %v3653
      %v3699 = vunpack.c.l.b16 %v3654
      %v3700 = vunpack.c.h.b16 %v3654
      %v3701 = vunpack.c.l.b16 %v3655
      %v3702 = vunpack.c.h.b16 %v3655
      %v3703 = vunpack.c.l.b16 %v3656
      %v3704 = vunpack.c.h.b16 %v3656
      %v3705 = vpack.c.b16 %v3673, %v3673
      %v3706 = vpack.c.b16 %v3674, %v3674
      %v3707 = vpack.c.b16 %v3675, %v3675
      %v3708 = vpack.c.b16 %v3676, %v3676
      %v3709 = vpack.c.b16 %v3677, %v3677
      %v3710 = vpack.c.b16 %v3678, %v3678
      %v3711 = vpack.c.b16 %v3679, %v3679
      %v3712 = vpack.c.b16 %v3680, %v3680
      %v3713 = vpack.c.b16 %v3681, %v3681
      %v3714 = vpack.c.b16 %v3682, %v3682
      %v3715 = vpack.c.b16 %v3683, %v3683
      %v3716 = vpack.c.b16 %v3684, %v3684
      %v3717 = vpack.c.b16 %v3685, %v3685
      %v3718 = vpack.c.b16 %v3686, %v3686
      %v3719 = vpack.c.b16 %v3687, %v3687
      %v3720 = vpack.c.b16 %v3688, %v3688
      %v3721 = vpack.c.b16 %v3689, %v3689
      %v3722 = vpack.c.b16 %v3690, %v3690
      %v3723 = vpack.c.b16 %v3691, %v3691
      %v3724 = vpack.c.b16 %v3692, %v3692
      %v3725 = vpack.c.b16 %v3693, %v3693
      %v3726 = vpack.c.b16 %v3694, %v3694
      %v3727 = vpack.c.b16 %v3695, %v3695
      %v3728 = vpack.c.b16 %v3696, %v3696
      %v3729 = vpack.c.b16 %v3697, %v3697
      %v3730 = vpack.c.b16 %v3698, %v3698
      %v3731 = vpack.c.b16 %v3699, %v3699
      %v3732 = vpack.c.b16 %v3700, %v3700
      %v3733 = vpack.c.b16 %v3701, %v3701
      %v3734 = vpack.c.b16 %v3702, %v3702
      %v3735 = vpack.c.b16 %v3703, %v3703
      %v3736 = vpack.c.b16 %v3704, %v3704
      %3769 = vst [vmem:[%s225] sm:$0xf] %v3705
      %3770 = vst [vmem:[%s225 + $0x4] sm:$0xf] %v3706
      %3771 = vst [vmem:[%s225 + $0x8] sm:$0xf] %v3707
      %3772 = vst [vmem:[%s225 + $0xc] sm:$0xf] %v3708
      %3773 = vst [vmem:[%s225 + $0x10] sm:$0xf] %v3709
      %3774 = vst [vmem:[%s225 + $0x14] sm:$0xf] %v3710
      %3775 = vst [vmem:[%s225 + $0x18] sm:$0xf] %v3711
      %3776 = vst [vmem:[%s225 + $0x1c] sm:$0xf] %v3712
      %3777 = vst [vmem:[%s225 + $0x20] sm:$0xf] %v3713
      %3778 = vst [vmem:[%s225 + $0x24] sm:$0xf] %v3714
      %3779 = vst [vmem:[%s225 + $0x28] sm:$0xf] %v3715
      %3780 = vst [vmem:[%s225 + $0x2c] sm:$0xf] %v3716
      %3781 = vst [vmem:[%s225 + $0x30] sm:$0xf] %v3717
      %3782 = vst [vmem:[%s225 + $0x34] sm:$0xf] %v3718
      %3783 = vst [vmem:[%s225 + $0x38] sm:$0xf] %v3719
      %3784 = vst [vmem:[%s225 + $0x3c] sm:$0xf] %v3720
      %3785 = vst [vmem:[%s225 + $0x40] sm:$0xf] %v3721
      %3786 = vst [vmem:[%s225 + $0x44] sm:$0xf] %v3722
      %3787 = vst [vmem:[%s225 + $0x48] sm:$0xf] %v3723
      %3788 = vst [vmem:[%s225 + $0x4c] sm:$0xf] %v3724
      %3789 = vst [vmem:[%s225 + $0x50] sm:$0xf] %v3725
      %3790 = vst [vmem:[%s225 + $0x54] sm:$0xf] %v3726
      %3791 = vst [vmem:[%s225 + $0x58] sm:$0xf] %v3727
      %3792 = vst [vmem:[%s225 + $0x5c] sm:$0xf] %v3728
      %3793 = vst [vmem:[%s225 + $0x60] sm:$0xf] %v3729
      %3794 = vst [vmem:[%s225 + $0x64] sm:$0xf] %v3730
      %3795 = vst [vmem:[%s225 + $0x68] sm:$0xf] %v3731
      %3796 = vst [vmem:[%s225 + $0x6c] sm:$0xf] %v3732
      %3797 = vst [vmem:[%s225 + $0x70] sm:$0xf] %v3733
      %3798 = vst [vmem:[%s225 + $0x74] sm:$0xf] %v3734
      %3799 = vst [vmem:[%s225 + $0x78] sm:$0xf] %v3735
      %3800 = vst [vmem:[%s225 + $0x7c] sm:$0xf] %v3736
      %v3801 = vadd.f32 %v3609, %v3610
      %v3802 = vadd.f32 %v3801, %v3611
      %v3803 = vadd.f32 %v3802, %v3612
      %v3804 = vadd.f32 %v3803, %v3613
      %v3805 = vadd.f32 %v3804, %v3614
      %v3806 = vadd.f32 %v3805, %v3615
      %v3807 = vadd.f32 %v3806, %v3616
      %v3808 = vadd.f32 %v3807, %v3617
      %v3809 = vadd.f32 %v3808, %v3618
      %v3810 = vadd.f32 %v3809, %v3619
      %v3811 = vadd.f32 %v3810, %v3620
      %v3812 = vadd.f32 %v3811, %v3621
      %v3813 = vadd.f32 %v3812, %v3622
      %v3814 = vadd.f32 %v3813, %v3623
      %v3815 = vadd.f32 %v3814, %v3624
      %v3816 = vadd.f32 %v3815, %v3625
      %v3817 = vadd.f32 %v3816, %v3626
      %v3818 = vadd.f32 %v3817, %v3627
      %v3819 = vadd.f32 %v3818, %v3628
      %v3820 = vadd.f32 %v3819, %v3629
      %v3821 = vadd.f32 %v3820, %v3630
      %v3822 = vadd.f32 %v3821, %v3631
      %v3823 = vadd.f32 %v3822, %v3632
      %v3824 = vadd.f32 %v3823, %v3633
      %v3825 = vadd.f32 %v3824, %v3634
      %v3826 = vadd.f32 %v3825, %v3635
      %v3827 = vadd.f32 %v3826, %v3636
      %v3828 = vadd.f32 %v3827, %v3637
      %v3829 = vadd.f32 %v3828, %v3638
      %v3830 = vadd.f32 %v3829, %v3639
      %v3831 = vadd.f32 %v3830, %v3640
      %v3832 = vrot.slane %v3831, 4
      %v3833 = vadd.f32 %v3831, %v3832
      %v3834 = vrot.slane %v3833, 2
      %v3835 = vadd.f32 %v3833, %v3834
      %v3836 = vrot.slane %v3835, 1
      %v3837 = vadd.f32 %v3835, %v3836
      %3838 = vst [vmem:[%s233] sm:$0x1] %v3837
      %v3839 = vmul.f32 %v3609, %v3609
      %v3840 = vmul.f32 %v3610, %v3610
      %v3841 = vmul.f32 %v3611, %v3611
      %v3842 = vmul.f32 %v3612, %v3612
      %v3843 = vmul.f32 %v3613, %v3613
      %v3844 = vmul.f32 %v3614, %v3614
      %v3845 = vmul.f32 %v3615, %v3615
      %v3846 = vmul.f32 %v3616, %v3616
      %v3847 = vmul.f32 %v3617, %v3617
      %v3848 = vmul.f32 %v3618, %v3618
      %v3849 = vmul.f32 %v3619, %v3619
      %v3850 = vmul.f32 %v3620, %v3620
      %v3851 = vmul.f32 %v3621, %v3621
      %v3852 = vmul.f32 %v3622, %v3622
      %v3853 = vmul.f32 %v3623, %v3623
      %v3854 = vmul.f32 %v3624, %v3624
      %v3855 = vmul.f32 %v3625, %v3625
      %v3856 = vmul.f32 %v3626, %v3626
      %v3857 = vmul.f32 %v3627, %v3627
      %v3858 = vmul.f32 %v3628, %v3628
      %v3859 = vmul.f32 %v3629, %v3629
      %v3860 = vmul.f32 %v3630, %v3630
      %v3861 = vmul.f32 %v3631, %v3631
      %v3862 = vmul.f32 %v3632, %v3632
      %v3863 = vmul.f32 %v3633, %v3633
      %v3864 = vmul.f32 %v3634, %v3634
      %v3865 = vmul.f32 %v3635, %v3635
      %v3866 = vmul.f32 %v3636, %v3636
      %v3867 = vmul.f32 %v3637, %v3637
      %v3868 = vmul.f32 %v3638, %v3638
      %v3869 = vmul.f32 %v3639, %v3639
      %v3870 = vmul.f32 %v3640, %v3640
      %v3871 = vadd.f32 %v3839, %v3840
      %v3872 = vadd.f32 %v3871, %v3841
      %v3873 = vadd.f32 %v3872, %v3842
      %v3874 = vadd.f32 %v3873, %v3843
      %v3875 = vadd.f32 %v3874, %v3844
      %v3876 = vadd.f32 %v3875, %v3845
      %v3877 = vadd.f32 %v3876, %v3846
      %v3878 = vadd.f32 %v3877, %v3847
      %v3879 = vadd.f32 %v3878, %v3848
      %v3880 = vadd.f32 %v3879, %v3849
      %v3881 = vadd.f32 %v3880, %v3850
      %v3882 = vadd.f32 %v3881, %v3851
      %v3883 = vadd.f32 %v3882, %v3852
      %v3884 = vadd.f32 %v3883, %v3853
      %v3885 = vadd.f32 %v3884, %v3854
      %v3886 = vadd.f32 %v3885, %v3855
      %v3887 = vadd.f32 %v3886, %v3856
      %v3888 = vadd.f32 %v3887, %v3857
      %v3889 = vadd.f32 %v3888, %v3858
      %v3890 = vadd.f32 %v3889, %v3859
      %v3891 = vadd.f32 %v3890, %v3860
      %v3892 = vadd.f32 %v3891, %v3861
      %v3893 = vadd.f32 %v3892, %v3862
      %v3894 = vadd.f32 %v3893, %v3863
      %v3895 = vadd.f32 %v3894, %v3864
      %v3896 = vadd.f32 %v3895, %v3865
      %v3897 = vadd.f32 %v3896, %v3866
      %v3898 = vadd.f32 %v3897, %v3867
      %v3899 = vadd.f32 %v3898, %v3868
      %v3900 = vadd.f32 %v3899, %v3869
      %v3901 = vadd.f32 %v3900, %v3870
      %v3902 = vrot.slane %v3901, 4
      %v3903 = vadd.f32 %v3901, %v3902
      %v3904 = vrot.slane %v3903, 2
      %v3905 = vadd.f32 %v3903, %v3904
      %v3906 = vrot.slane %v3905, 1
      %v3907 = vadd.f32 %v3905, %v3906
      %3908 = vst [vmem:[%s233 + $0x1] sm:$0x1] %v3907
      %s3909 = smul.u32 16, %s20
      %p3910 = scmp.lt.s32.totalorder %s19, 1
      %s3911 = scalar_select %p3910, %s19, 1
      %p3912 = scmp.lt.s32.totalorder %s3909, 15
      %s3913 = scalar_select %p3912, %s3909, 15
      %s3914 = smul.addr %s3913, 2
      %s3915 = smul.addr %s3911, 32
      %s3916 = sadd.s32 %s3914, %s3915
      %s3917 = smul.addr %s3916, 4
      %s3918 = scalar_lea.vmem %s2, %s3917
      %p3919 = scmp.lt.s32.totalorder %s19, 1
      %s3920 = scalar_select %p3919, %s19, 1
      %p3921 = scmp.lt.s32.totalorder %s20, 0
      %s3922 = scalar_select %p3921, %s20, 0
      %s3923 = sadd.s32 %s3922, %s3920
      %s3924 = smul.addr %s3923, 2
      %s3925 = scalar_lea.vmem %s3, %s3924
      // Predicated region
      $region29: #{up_forward.8} parent=27 // pred_check
        %p3926 = pneg %p96
      $region30: #{up_forward.8} parent=27 // pred_check_branch
        %3928 = sbr.rel (%p3926) target = $region32
      $region31: #{up_forward.8} parent=27 // pred_region
        %s3929 = smul.u32 16, %s20
      $region32: #{up_forward.8} parent=27 // pred_fallthru
        _
      // Predicated region
      $region33: #{up_forward.8} parent=27 // pred_check
        %p3930 = pneg %p124
      $region34: #{up_forward.8} parent=27 // pred_check_branch
        %3932 = sbr.rel (%p3930) target = $region36
      $region35: #{up_forward.8} parent=27 // pred_region
        _
      $region36: #{up_forward.8} parent=27 // pred_fallthru
        _
    $region28: #{up_forward.8} parent=5 // pred_fallthru
      _
    %p3933 = scmp.le.s32.totalorder 2, %s10
    // Predicated region
    $region37: #{up_forward.8} parent=5 // pred_check
      %p3934 = pneg %p3933
    $region38: #{up_forward.8} parent=5 // pred_check_branch
      %3936 = sbr.rel (%p3934) target = $region40
    $region39: #{up_forward.8} parent=5 // pred_region
      %s3937 = ssub.s32 %s10, 2
      // Predicated region
      $region41: #{up_forward.8} parent=39 // pred_check
        %p3938 = pneg %p102
      $region42: #{up_forward.8} parent=39 // pred_check_branch
        %3940 = sbr.rel (%p3938) target = $region44
      $region43: #{up_forward.8} parent=39 // pred_region
        %s3941 = smul.u32 16, %s22
        %p3942 = scmp.lt.s32.totalorder %s21, 1
        %s3943 = scalar_select %p3942, %s21, 1
        %p3944 = scmp.lt.s32.totalorder %s3941, 15
        %s3945 = scalar_select %p3944, %s3941, 15
        %s3946 = smul.addr %s3945, 2
        %s3947 = smul.addr %s3943, 32
        %s3948 = sadd.s32 %s3946, %s3947
        %s3949 = smul.addr %s3948, 4
        %s3950 = scalar_lea.vmem %s2, %s3949
      $region44: #{up_forward.8} parent=39 // pred_fallthru
        _
      // Predicated region
      $region45: #{up_forward.8} parent=39 // pred_check
        %p3951 = pneg %p130
      $region46: #{up_forward.8} parent=39 // pred_check_branch
        %3953 = sbr.rel (%p3951) target = $region48
      $region47: #{up_forward.8} parent=39 // pred_region
        %p3954 = scmp.lt.s32.totalorder %s21, 1
        %s3955 = scalar_select %p3954, %s21, 1
        %p3956 = scmp.lt.s32.totalorder %s22, 0
        %s3957 = scalar_select %p3956, %s22, 0
        %s3958 = sadd.s32 %s3957, %s3955
        %s3959 = smul.addr %s3958, 2
        %s3960 = scalar_lea.vmem %s3, %s3959
      $region48: #{up_forward.8} parent=39 // pred_fallthru
        _
    $region40: #{up_forward.8} parent=5 // pred_fallthru
      _
  $region6: #{up_forward.8} parent=0 // loop_footer
    %s14 = sadd.s32 1, %s10
  $region7: #{up_forward.8} parent=0 // loop_footer_branch
    %9 = sbr.rel target = $region3
  $region8: #{up_forward.8} parent=0 // loop_exit
    _

</llo_original>
